<compile_context>
chip_gen: v5e
topology: v5e:2x2
jax: 0.10.0
libtpu: 0.0.40
codegen_flags: <defaults>
</compile_context>

<pallas_src>
import numpy as np
import jax
import jax.numpy as jnp
from jax import lax
from jax.experimental import pallas as pl
from jax.experimental.pallas import tpu as pltpu


# ----------------------------------------------------------------------------
# Generation-aware VMEM budgets
# ----------------------------------------------------------------------------
def _tpu_vmem_bytes():
    try:
        info = pltpu.get_tpu_info()
        v = getattr(info, "vmem_capacity_bytes", None)
        if v:
            return int(v)
    except Exception:
        pass
    return 64 << 20  # conservative fallback (v7x per-core)


_PHYS_VMEM = _tpu_vmem_bytes()
# Scoped-VMEM request: 64 MiB on v5e/v6e (128 MiB physical), 32 MiB on v7x.
_VMEM_LIMIT = min(_PHYS_VMEM // 2, 64 << 20)
# Per-grid-step tile budget with >=30% headroom inside the scoped limit.
_TILE_BUDGET = int(_VMEM_LIMIT * 0.7)


# ----------------------------------------------------------------------------
# Pallas kernels
# ----------------------------------------------------------------------------
def _cgemm_stats_kernel(a_ref, w_ref, y_ref, stats_ref):
    """Packed complex GEMM (single bf16 MXU matmul) + fused BN statistics.

    a_ref     : (tm, 2K)  bf16  packed patches, per tap [real cin | imag cin]
    w_ref     : (2K, 2C)  bf16  packed weights, per tap [[wr, wi], [-wi, wr]]
    y_ref     : (tm, 2C)  bf16  packed output [yr | yi] (lane-dense store)
    stats_ref : (1, 3, 2C) f32  resident accumulator, rows:
                0: [sum yr | sum yi]  1: [sum yr^2 | sum yi^2]  2: [sum yr*yi | dup]
    """
    @pl.when(pl.program_id(1) == 0)
    def _():
        stats_ref[...] = jnp.zeros_like(stats_ref)

    y = jnp.dot(a_ref[...], w_ref[...], preferred_element_type=jnp.float32)
    y_ref[...] = y.astype(y_ref.dtype)

    c2 = y.shape[1]
    c = c2 // 2
    yr = y[:, :c]
    yi = y[:, c:]
    s0 = jnp.sum(y, axis=0, keepdims=True)                 # [sr  | si ]
    s1 = jnp.sum(y * y, axis=0, keepdims=True)             # [srr | sii]
    cross = jnp.sum(yr * yi, axis=0, keepdims=True)        # (1, C)
    s2 = jnp.concatenate([cross, cross], axis=1)           # [sri | sri]
    partial = jnp.concatenate([s0, s1, s2], axis=0)        # (3, 2C), no dead pad
    stats_ref[...] += partial.reshape(1, 3, c2)


def _bn_modrelu_kernel(y_ref, p_ref, o_ref):
    """Fused complex-BN whitening affine + modReLU on packed [yr | yi] tiles."""
    p = p_ref[...]
    c = p.shape[1]
    mr, mi = p[0:1, :], p[1:2, :]
    arr, ari = p[2:3, :], p[3:4, :]
    air, aii = p[4:5, :], p[5:6, :]
    br, bi = p[6:7, :], p[7:8, :]
    bmod = p[8:9, :]

    y = y_ref[...].astype(jnp.float32)
    zr = y[:, :c] - mr
    zi = y[:, c:] - mi
    nr = arr * zr + ari * zi + br
    ni = air * zr + aii * zi + bi

    # modReLU via rsqrt (EUP slot) instead of sqrt + divide; consistent eps.
    sq = nr * nr + ni * ni
    inv = lax.rsqrt(sq + 1e-12)
    mag = sq * inv
    scale = jnp.maximum(mag + bmod, 0.0) * inv
    # Direct half stores (no lane concat / extra VMEM copy).
    o_ref[:, :c] = (nr * scale).astype(o_ref.dtype)
    o_ref[:, c:] = (ni * scale).astype(o_ref.dtype)


# ----------------------------------------------------------------------------
# Pallas wrappers
# ----------------------------------------------------------------------------
def _round_up(x, m):
    return ((x + m - 1) // m) * m


def _choose_tm(n, k2, c2):
    """GEMM row tile: big enough to amortize per-grid-step cost, with an
    accurate per-step footprint (A + y double-buffered, resident W + stats)
    kept inside the generation-aware tile budget.  Capped so tiny problems
    aren't padded absurdly."""
    resident = 2 * (k2 * c2 * 2) + 2 * (3 * c2 * 4)        # weight + stats blocks
    cap = max(256, _round_up((n + 1) // 2, 256))
    tm = 256
    for t in (256, 512, 1024, 2048):
        if t > cap:
            break
        step = 2 * (t * k2 * 2) + 2 * (t * c2 * 2) + resident
        if step > _TILE_BUDGET:
            break
        tm = t
    return tm


def _choose_epilogue_rows(n_pad, tm, c2, in_bytes, out_bytes, cpad):
    """Epilogue row tile, decoupled from the GEMM tm (pure elementwise pass)."""
    te = tm
    while True:
        cand = te * 2
        if cand > n_pad or (n_pad % cand) != 0 or cand > 8192:
            break
        step = 2 * cand * c2 * (in_bytes + out_bytes) + 2 * 9 * cpad * 4
        if step > _TILE_BUDGET:
            break
        te = cand
    return te


def complex_gemm_with_stats(a, w):
    """a: (n, 2K) bf16 packed patches; w: (2K, 2C) bf16 packed weights.
    Returns (y_packed (n_pad, 2C) bf16, stats (3, 2C) f32, tm, n_pad)."""
    n, k2 = a.shape
    c2 = w.shape[1]
    tm = _choose_tm(n, k2, c2)
    # Unconditional 2-way split of the row axis (both v7x TensorCores get
    # work); padded rows are zero -> y = 0 -> no contribution to the BN sums.
    n_pad = _round_up(n, 2 * tm)
    if n_pad != n:
        a = jnp.pad(a, ((0, n_pad - n), (0, 0)))
    tiles = n_pad // tm
    ncores = 2
    tpc = tiles // ncores

    y, stats = pl.pallas_call(
        _cgemm_stats_kernel,
        out_shape=(jax.ShapeDtypeStruct((n_pad, c2), jnp.bfloat16),
                   jax.ShapeDtypeStruct((ncores, 3, c2), jnp.float32)),
        grid=(ncores, tpc),
        in_specs=[pl.BlockSpec((tm, k2), lambda p, i: (p * tpc + i, 0)),
                  pl.BlockSpec((k2, c2), lambda p, i: (0, 0))],
        out_specs=(pl.BlockSpec((tm, c2), lambda p, i: (p * tpc + i, 0)),
                   pl.BlockSpec((1, 3, c2), lambda p, i: (p, 0, 0))),
        compiler_params=pltpu.CompilerParams(
            dimension_semantics=("parallel", "arbitrary"),
            vmem_limit_bytes=_VMEM_LIMIT),
    )(a, w)
    return y, jnp.sum(stats, axis=0), tm, n_pad


def bn_modrelu_apply(y, p9, tm, out_dtype):
    n_pad, c2 = y.shape
    cpad = p9.shape[1]
    in_b = jnp.dtype(y.dtype).itemsize
    out_b = jnp.dtype(out_dtype).itemsize
    te = _choose_epilogue_rows(n_pad, tm, c2, in_b, out_b, cpad)
    row_in = pl.BlockSpec((te, c2), lambda i: (i, 0))
    row_out = pl.BlockSpec((te, c2), lambda i: (i, 0))
    return pl.pallas_call(
        _bn_modrelu_kernel,
        out_shape=jax.ShapeDtypeStruct((n_pad, c2), out_dtype),
        grid=(n_pad // te,),
        in_specs=[row_in, pl.BlockSpec(p9.shape, lambda i: (0, 0))],
        out_specs=row_out,
        compiler_params=pltpu.CompilerParams(
            dimension_semantics=("parallel",),
            vmem_limit_bytes=_VMEM_LIMIT),
    )(y, p9)


# ----------------------------------------------------------------------------
# Plain-JAX glue: im2col, packed weights, BN-parameter finalization, layers
# ----------------------------------------------------------------------------
def _im2col(x, kh, kw, stride, pad):
    """x: (B, H, W, C) -> (B, Ho, Wo, kh*kw*C); column order (tap_i, tap_j, C)."""
    x = jnp.pad(x, ((0, 0), (pad, pad), (pad, pad), (0, 0)))
    b, hp, wp, c = x.shape
    ho = (hp - kh) // stride + 1
    wo = (wp - kw) // stride + 1
    cols = [x[:, i:i + ho * stride:stride, j:j + wo * stride:stride, :]
            for i in range(kh) for j in range(kw)]
    patches = jnp.stack(cols, axis=3)                      # (B,Ho,Wo,kh*kw,C)
    return patches.reshape(b, ho, wo, kh * kw * c), ho, wo


def _pack_complex_weights(wr, wi, cpad):
    """(kh,kw,cin,cout) real/imag -> (kh*kw*2*cin, 2*cpad) real matrix so that
    [pr | pi] @ W = [yr | yi] for channel-packed [real|imag] patches.  Output
    channels are zero-padded to cpad so the store axis is lane-dense."""
    kh, kw, cin, cout = wr.shape
    if cpad != cout:
        padw = ((0, 0), (0, 0), (0, 0), (0, cpad - cout))
        wr = jnp.pad(wr, padw)
        wi = jnp.pad(wi, padw)
    top = jnp.concatenate([wr, wi], axis=-1)               # rows for real cin
    bot = jnp.concatenate([-wi, wr], axis=-1)              # rows for imag cin
    return jnp.concatenate([top, bot], axis=2).reshape(kh * kw * 2 * cin,
                                                       2 * cpad)


def _bn_modrelu_params(stats, n, layer, cpad, eps=1e-5):
    """Finalize whitening BN (2x2 per-channel inverse sqrt of covariance) and
    combine with the learned affine; pack as a (9, cpad) parameter tile.
    NOTE: single-pass f32 sum/sum-of-squares statistics (adequate at these
    activation scales; switch to Welford if precision ever matters)."""
    c2 = stats.shape[1]
    c = c2 // 2
    sr, si = stats[0, :c], stats[0, c:]
    srr, sii = stats[1, :c], stats[1, c:]
    sri = stats[2, :c]
    nf = jnp.float32(n)
    mr, mi = sr / nf, si / nf
    crr = srr / nf - mr * mr + eps
    cii = sii / nf - mi * mi + eps
    cri = sri / nf - mr * mi
    det = crr * cii - cri * cri
    s = jnp.sqrt(det)
    t = jnp.sqrt(crr + cii + 2.0 * s)
    inv = 1.0 / (s * t)
    rrr = (cii + s) * inv
    rii = (crr + s) * inv
    rri = -cri * inv

    def padc(v):
        return jnp.pad(v, (0, cpad - v.shape[0])) if v.shape[0] != cpad else v

    wrr, wri, wii = padc(layer["bn_wrr"]), padc(layer["bn_wri"]), padc(layer["bn_wii"])
    arr = wrr * rrr + wri * rri
    ari = wrr * rri + wri * rii
    air = wri * rrr + wii * rri
    aii = wri * rri + wii * rii
    return jnp.stack([mr, mi, arr, ari, air, aii,
                      padc(layer["bn_br"]), padc(layer["bn_bi"]),
                      padc(layer["mod_b"])], axis=0)


def conv_bn_modrelu_layer(xp, layer, stride, pad, out_dtype):
    """xp: (B, H, W, 2*cin) packed [real|imag] -> (B, Ho, Wo, 2*cpad)."""
    wr, wi = layer["wr"], layer["wi"]
    kh, kw, cin, cout = wr.shape
    cpad = cout if cout >= 64 else 64      # lane-dense 2*cout (>=128 lanes)
    b = xp.shape[0]
    # TODO(synk): im2col patches are materialized in HBM (bf16) — in-kernel
    # tap fusion needs transposed in-VMEM patch assembly, see header comment.
    patches, ho, wo = _im2col(xp.astype(jnp.bfloat16), kh, kw, stride, pad)
    n = b * ho * wo
    a = patches.reshape(n, kh * kw * 2 * cin)
    wp = _pack_complex_weights(wr, wi, cpad).astype(jnp.bfloat16)
    # Conv bias intentionally omitted (cancelled by batch-stats BN mean).
    y, stats, tm, _ = complex_gemm_with_stats(a, wp)
    p9 = _bn_modrelu_params(stats, n, layer, cpad)
    o = bn_modrelu_apply(y, p9, tm, out_dtype)
    o = o[:n].reshape(b, ho, wo, 2 * cpad)
    return o, cout, cpad


def _strip_cpad(o, cout, cpad):
    if cpad == cout:
        return o
    return jnp.concatenate([o[..., :cout], o[..., cpad:cpad + cout]], axis=-1)


def conv_stem_forward(x, params, patch_size):
    """x: (B, Cin, H, W) complex64 -> (B, H'*W', hidden_dim) complex64."""
    xr = jnp.transpose(jnp.real(x), (0, 2, 3, 1)).astype(jnp.float32)
    xi = jnp.transpose(jnp.imag(x), (0, 2, 3, 1)).astype(jnp.float32)
    xp = jnp.concatenate([xr, xi], axis=-1)                # (B, H, W, 2*Cin)

    o1, c1, c1p = conv_bn_modrelu_layer(xp, params["layer1"], stride=2, pad=3,
                                        out_dtype=jnp.bfloat16)
    xp1 = _strip_cpad(o1, c1, c1p)                         # bf16, fed to layer2

    o2, c2o, c2p = conv_bn_modrelu_layer(xp1, params["layer2"],
                                         stride=patch_size // 2, pad=1,
                                         out_dtype=jnp.float32)
    b, h, w, _ = o2.shape
    real = o2[..., :c2o]
    imag = o2[..., c2p:c2p + c2o]
    # PyTorch: (B, C, H, W) -> flatten(2) -> transpose(1, 2) == (B, H*W, C)
    return lax.complex(real, imag).reshape(b, h * w, c2o)


# ----------------------------------------------------------------------------
# Deterministic parameter init (synthetic; shapes from ConvStem.__init__)
# ----------------------------------------------------------------------------
def init_params(key, in_channels, hidden_dim):
    c1 = hidden_dim // 2

    def make_layer(k, kh, kw, cin, cout):
        kr, ki = jax.random.split(k)
        std = 1.0 / np.sqrt(kh * kw * cin)
        return dict(
            wr=jax.random.normal(kr, (kh, kw, cin, cout), jnp.float32) * std,
            wi=jax.random.normal(ki, (kh, kw, cin, cout), jnp.float32) * std,
            bn_wrr=jnp.full((cout,), 1.0 / np.sqrt(2.0), jnp.float32),
            bn_wri=jnp.zeros((cout,), jnp.float32),
            bn_wii=jnp.full((cout,), 1.0 / np.sqrt(2.0), jnp.float32),
            bn_br=jnp.zeros((cout,), jnp.float32),
            bn_bi=jnp.zeros((cout,), jnp.float32),
            mod_b=jnp.full((cout,), -0.1, jnp.float32),
        )

    k1, k2 = jax.random.split(key)
    return dict(layer1=make_layer(k1, 7, 7, in_channels, c1),
                layer2=make_layer(k2, 3, 3, c1, hidden_dim))


if __name__ == "__main__":
    B, Cin, H, W = 2, 2, 16, 16
    hidden_dim, patch_size = 32, 4

    key = jax.random.PRNGKey(0)
    kx, kp = jax.random.split(key)
    xr = jax.random.normal(jax.random.fold_in(kx, 0), (B, Cin, H, W), jnp.float32)
    xi = jax.random.normal(jax.random.fold_in(kx, 1), (B, Cin, H, W), jnp.float32)
    x = lax.complex(xr, xi)                               # (B, Cin, H, W) complex64

    params = init_params(kp, Cin, hidden_dim)
    fwd = jax.jit(conv_stem_forward, static_argnames=("patch_size",))
    out = fwd(x, params, patch_size=patch_size)
    out = jax.block_until_ready(out)

    h1 = (H + 2 * 3 - 7) // 2 + 1
    h2 = (h1 + 2 * 1 - 3) // (patch_size // 2) + 1
    assert out.shape == (B, h2 * h2, hidden_dim), out.shape
    assert out.dtype == jnp.complex64, out.dtype
    assert bool(jnp.all(jnp.isfinite(jnp.abs(out))))
    print("KERNEL_OK")
</pallas_src>

<mosaic_0001>
module attributes {stable_mosaic.version = 11 : i64} {
  func.func @_cgemm_stats_kernel(%arg0: i32, %arg1: i32, %arg2: memref<256x196xbf16, #tpu.memory_space<vmem>>, %arg3: memref<196x128xbf16, #tpu.memory_space<vmem>>, %arg4: memref<256x128xbf16, #tpu.memory_space<vmem>>, %arg5: memref<1x3x128xf32, #tpu.memory_space<vmem>>) attributes {dimension_semantics = [#tpu.dimension_semantics<parallel>, #tpu.dimension_semantics<arbitrary>], iteration_bounds = array<i64: 2, 1>, scalar_prefetch = 0 : i64, scratch_operands = 0 : i64, tpu.core_type = #tpu.core_type<tc>, window_params = [{transform_indices = @transform_0, window_bounds = array<i64: 256, 196>}, {pipeline_mode = #tpu.pipeline_mode<synchronous>, transform_indices = @transform_1, window_bounds = array<i64: 196, 128>}, {transform_indices = @transform_2, window_bounds = array<i64: 256, 128>}, {transform_indices = @transform_3, window_bounds = array<i64: 1, 3, 128>}]} {
    %c0_i32 = arith.constant 0 : i32
    %0 = arith.cmpi eq, %arg1, %c0_i32 : i32
    %1 = arith.extui %0 : i1 to i32
    %c0_i32_0 = arith.constant 0 : i32
    %2 = arith.cmpi ne, %1, %c0_i32_0 : i32
    scf.if %2 {
      %cst_15 = arith.constant 0.000000e+00 : f32
      %24 = vector.broadcast %cst_15 : f32 to vector<1x3x128xf32>
      %c0_16 = arith.constant 0 : index
      %c0_17 = arith.constant 0 : index
      %c0_18 = arith.constant 0 : index
      %25 = vector.load %arg5[%c0_16, %c0_17, %c0_18] : memref<1x3x128xf32, #tpu.memory_space<vmem>>, vector<1x3x128xf32>
      tpu.vector_store %arg5[%c0_16, %c0_17, %c0_18], %24 {strides = array<i32>} : memref<1x3x128xf32, #tpu.memory_space<vmem>>, vector<1x3x128xf32>,
    } else {
    }
    %c0 = arith.constant 0 : index
    %c0_1 = arith.constant 0 : index
    %3 = vector.load %arg2[%c0, %c0_1] : memref<256x196xbf16, #tpu.memory_space<vmem>>, vector<256x196xbf16>
    %c0_2 = arith.constant 0 : index
    %c0_3 = arith.constant 0 : index
    %4 = vector.load %arg3[%c0_2, %c0_3] : memref<196x128xbf16, #tpu.memory_space<vmem>>, vector<196x128xbf16>
    %cst = arith.constant dense<0.000000e+00> : vector<256x128xf32>
    %5 = tpu.matmul %3, %4, %cst {dimension_numbers = #tpu.dot_dimension_numbers<[1], [0], [0], [1], [0, 0, 1, 1], [], []>} : vector<256x196xbf16>, vector<196x128xbf16>, vector<256x128xf32> -> vector<256x128xf32>
    %6 = arith.truncf %5 : vector<256x128xf32> to vector<256x128xbf16>
    %c0_4 = arith.constant 0 : index
    %c0_5 = arith.constant 0 : index
    %7 = vector.load %arg4[%c0_4, %c0_5] : memref<256x128xbf16, #tpu.memory_space<vmem>>, vector<256x128xbf16>
    tpu.vector_store %arg4[%c0_4, %c0_5], %6 {strides = array<i32>} : memref<256x128xbf16, #tpu.memory_space<vmem>>, vector<256x128xbf16>,
    %8 = vector.extract_strided_slice %5 {offsets = [0, 0], sizes = [256, 64], strides = [1, 1]} : vector<256x128xf32> to vector<256x64xf32>
    %9 = vector.extract_strided_slice %5 {offsets = [0, 64], sizes = [256, 64], strides = [1, 1]} : vector<256x128xf32> to vector<256x64xf32>
    %cst_6 = arith.constant dense<0.000000e+00> : vector<128xf32>
    %10 = vector.multi_reduction <add>, %5, %cst_6 [0] : vector<256x128xf32> to vector<128xf32>
    %11 = vector.shape_cast %10 : vector<128xf32> to vector<1x128xf32>
    %12 = arith.mulf %5, %5 : vector<256x128xf32>
    %cst_7 = arith.constant dense<0.000000e+00> : vector<128xf32>
    %13 = vector.multi_reduction <add>, %12, %cst_7 [0] : vector<256x128xf32> to vector<128xf32>
    %14 = vector.shape_cast %13 : vector<128xf32> to vector<1x128xf32>
    %15 = arith.mulf %8, %9 : vector<256x64xf32>
    %cst_8 = arith.constant dense<0.000000e+00> : vector<64xf32>
    %16 = vector.multi_reduction <add>, %15, %cst_8 [0] : vector<256x64xf32> to vector<64xf32>
    %17 = vector.shape_cast %16 : vector<64xf32> to vector<1x64xf32>
    %18 = tpu.concatenate %17, %17 in 1 : vector<1x64xf32>, vector<1x64xf32> -> vector<1x128xf32>
    %19 = tpu.concatenate %11, %14, %18 in 0 : vector<1x128xf32>, vector<1x128xf32>, vector<1x128xf32> -> vector<3x128xf32>
    %c0_9 = arith.constant 0 : index
    %c0_10 = arith.constant 0 : index
    %c0_11 = arith.constant 0 : index
    %20 = vector.load %arg5[%c0_9, %c0_10, %c0_11] : memref<1x3x128xf32, #tpu.memory_space<vmem>>, vector<1x3x128xf32>
    %21 = vector.shape_cast %19 : vector<3x128xf32> to vector<1x3x128xf32>
    %22 = arith.addf %20, %21 : vector<1x3x128xf32>
    %c0_12 = arith.constant 0 : index
    %c0_13 = arith.constant 0 : index
    %c0_14 = arith.constant 0 : index
    %23 = vector.load %arg5[%c0_12, %c0_13, %c0_14] : memref<1x3x128xf32, #tpu.memory_space<vmem>>, vector<1x3x128xf32>
    tpu.vector_store %arg5[%c0_12, %c0_13, %c0_14], %22 {strides = array<i32>} : memref<1x3x128xf32, #tpu.memory_space<vmem>>, vector<1x3x128xf32>,
    return
  }
  func.func @transform_0(%arg0: i32, %arg1: i32) -> (i32, i32) {
    %c1_i32 = arith.constant 1 : i32
    %0 = arith.muli %arg0, %c1_i32 : i32
    %1 = arith.addi %0, %arg1 : i32
    %c0_i32 = arith.constant 0 : i32
    %c0_i32_0 = arith.constant 0 : i32
    return %1, %c0_i32 : i32, i32
  }
  func.func @transform_1(%arg0: i32, %arg1: i32) -> (i32, i32) {
    %c0_i32 = arith.constant 0 : i32
    %c0_i32_0 = arith.constant 0 : i32
    %c0_i32_1 = arith.constant 0 : i32
    return %c0_i32, %c0_i32_0 : i32, i32
  }
  func.func @transform_2(%arg0: i32, %arg1: i32) -> (i32, i32) {
    %c1_i32 = arith.constant 1 : i32
    %0 = arith.muli %arg0, %c1_i32 : i32
    %1 = arith.addi %0, %arg1 : i32
    %c0_i32 = arith.constant 0 : i32
    %c0_i32_0 = arith.constant 0 : i32
    return %1, %c0_i32 : i32, i32
  }
  func.func @transform_3(%arg0: i32, %arg1: i32) -> (i32, i32, i32) {
    %c0_i32 = arith.constant 0 : i32
    %c0_i32_0 = arith.constant 0 : i32
    %c0_i32_1 = arith.constant 0 : i32
    return %arg0, %c0_i32, %c0_i32_0 : i32, i32, i32
  }
}

module attributes {stable_mosaic.version = 11 : i64} {
  func.func @_bn_modrelu_kernel(%arg0: i32, %arg1: memref<512x128xbf16, #tpu.memory_space<vmem>>, %arg2: memref<9x64xf32, #tpu.memory_space<vmem>>, %arg3: memref<512x128xbf16, #tpu.memory_space<vmem>>) attributes {dimension_semantics = [#tpu.dimension_semantics<parallel>], iteration_bounds = array<i64: 1>, scalar_prefetch = 0 : i64, scratch_operands = 0 : i64, tpu.core_type = #tpu.core_type<tc>, window_params = [{transform_indices = @transform_0, window_bounds = array<i64: 512, 128>}, {pipeline_mode = #tpu.pipeline_mode<synchronous>, transform_indices = @transform_1, window_bounds = array<i64: 9, 64>}, {transform_indices = @transform_2, window_bounds = array<i64: 512, 128>}]} {
    %c0 = arith.constant 0 : index
    %c0_0 = arith.constant 0 : index
    %0 = vector.load %arg2[%c0, %c0_0] : memref<9x64xf32, #tpu.memory_space<vmem>>, vector<9x64xf32>
    %1 = vector.extract_strided_slice %0 {offsets = [0, 0], sizes = [1, 64], strides = [1, 1]} : vector<9x64xf32> to vector<1x64xf32>
    %2 = vector.extract_strided_slice %0 {offsets = [1, 0], sizes = [1, 64], strides = [1, 1]} : vector<9x64xf32> to vector<1x64xf32>
    %3 = vector.extract_strided_slice %0 {offsets = [2, 0], sizes = [1, 64], strides = [1, 1]} : vector<9x64xf32> to vector<1x64xf32>
    %4 = vector.extract_strided_slice %0 {offsets = [3, 0], sizes = [1, 64], strides = [1, 1]} : vector<9x64xf32> to vector<1x64xf32>
    %5 = vector.extract_strided_slice %0 {offsets = [4, 0], sizes = [1, 64], strides = [1, 1]} : vector<9x64xf32> to vector<1x64xf32>
    %6 = vector.extract_strided_slice %0 {offsets = [5, 0], sizes = [1, 64], strides = [1, 1]} : vector<9x64xf32> to vector<1x64xf32>
    %7 = vector.extract_strided_slice %0 {offsets = [6, 0], sizes = [1, 64], strides = [1, 1]} : vector<9x64xf32> to vector<1x64xf32>
    %8 = vector.extract_strided_slice %0 {offsets = [7, 0], sizes = [1, 64], strides = [1, 1]} : vector<9x64xf32> to vector<1x64xf32>
    %9 = vector.extract_strided_slice %0 {offsets = [8, 0], sizes = [1, 64], strides = [1, 1]} : vector<9x64xf32> to vector<1x64xf32>
    %c0_1 = arith.constant 0 : index
    %c0_2 = arith.constant 0 : index
    %10 = vector.load %arg1[%c0_1, %c0_2] : memref<512x128xbf16, #tpu.memory_space<vmem>>, vector<512x128xbf16>
    %11 = arith.extf %10 : vector<512x128xbf16> to vector<512x128xf32>
    %12 = vector.extract_strided_slice %11 {offsets = [0, 0], sizes = [512, 64], strides = [1, 1]} : vector<512x128xf32> to vector<512x64xf32>
    %13 = vector.broadcast %1 : vector<1x64xf32> to vector<512x64xf32>
    %14 = arith.subf %12, %13 : vector<512x64xf32>
    %15 = vector.extract_strided_slice %11 {offsets = [0, 64], sizes = [512, 64], strides = [1, 1]} : vector<512x128xf32> to vector<512x64xf32>
    %16 = vector.broadcast %2 : vector<1x64xf32> to vector<512x64xf32>
    %17 = arith.subf %15, %16 : vector<512x64xf32>
    %18 = vector.broadcast %3 : vector<1x64xf32> to vector<512x64xf32>
    %19 = arith.mulf %18, %14 : vector<512x64xf32>
    %20 = vector.broadcast %4 : vector<1x64xf32> to vector<512x64xf32>
    %21 = arith.mulf %20, %17 : vector<512x64xf32>
    %22 = arith.addf %19, %21 : vector<512x64xf32>
    %23 = vector.broadcast %7 : vector<1x64xf32> to vector<512x64xf32>
    %24 = arith.addf %22, %23 : vector<512x64xf32>
    %25 = vector.broadcast %5 : vector<1x64xf32> to vector<512x64xf32>
    %26 = arith.mulf %25, %14 : vector<512x64xf32>
    %27 = vector.broadcast %6 : vector<1x64xf32> to vector<512x64xf32>
    %28 = arith.mulf %27, %17 : vector<512x64xf32>
    %29 = arith.addf %26, %28 : vector<512x64xf32>
    %30 = vector.broadcast %8 : vector<1x64xf32> to vector<512x64xf32>
    %31 = arith.addf %29, %30 : vector<512x64xf32>
    %32 = arith.mulf %24, %24 : vector<512x64xf32>
    %33 = arith.mulf %31, %31 : vector<512x64xf32>
    %34 = arith.addf %32, %33 : vector<512x64xf32>
    %cst = arith.constant 9.99999996E-13 : f32
    %35 = vector.broadcast %cst : f32 to vector<512x64xf32>
    %36 = arith.addf %34, %35 : vector<512x64xf32>
    %37 = math.rsqrt %36 : vector<512x64xf32>
    %38 = arith.mulf %34, %37 : vector<512x64xf32>
    %39 = vector.broadcast %9 : vector<1x64xf32> to vector<512x64xf32>
    %40 = arith.addf %38, %39 : vector<512x64xf32>
    %cst_3 = arith.constant 0.000000e+00 : f32
    %41 = vector.broadcast %cst_3 : f32 to vector<512x64xf32>
    %42 = arith.maximumf %40, %41 : vector<512x64xf32>
    %43 = arith.mulf %42, %37 : vector<512x64xf32>
    %44 = arith.mulf %24, %43 : vector<512x64xf32>
    %45 = arith.truncf %44 : vector<512x64xf32> to vector<512x64xbf16>
    %c0_4 = arith.constant 0 : index
    %c0_5 = arith.constant 0 : index
    %46 = vector.load %arg3[%c0_4, %c0_5] : memref<512x128xbf16, #tpu.memory_space<vmem>>, vector<512x64xbf16>
    tpu.vector_store %arg3[%c0_4, %c0_5], %45 {strides = array<i32>} : memref<512x128xbf16, #tpu.memory_space<vmem>>, vector<512x64xbf16>,
    %47 = arith.mulf %31, %43 : vector<512x64xf32>
    %48 = arith.truncf %47 : vector<512x64xf32> to vector<512x64xbf16>
    %c0_6 = arith.constant 0 : index
    %c64 = arith.constant 64 : index
    %49 = vector.load %arg3[%c0_6, %c64] : memref<512x128xbf16, #tpu.memory_space<vmem>>, vector<512x64xbf16>
    tpu.vector_store %arg3[%c0_6, %c64], %48 {strides = array<i32>} : memref<512x128xbf16, #tpu.memory_space<vmem>>, vector<512x64xbf16>,
    return
  }
  func.func @transform_0(%arg0: i32) -> (i32, i32) {
    %c0_i32 = arith.constant 0 : i32
    %c0_i32_0 = arith.constant 0 : i32
    return %arg0, %c0_i32 : i32, i32
  }
  func.func @transform_1(%arg0: i32) -> (i32, i32) {
    %c0_i32 = arith.constant 0 : i32
    %c0_i32_0 = arith.constant 0 : i32
    %c0_i32_1 = arith.constant 0 : i32
    return %c0_i32, %c0_i32_0 : i32, i32
  }
  func.func @transform_2(%arg0: i32) -> (i32, i32) {
    %c0_i32 = arith.constant 0 : i32
    %c0_i32_0 = arith.constant 0 : i32
    return %arg0, %c0_i32 : i32, i32
  }
}

module attributes {stable_mosaic.version = 11 : i64} {
  func.func @_cgemm_stats_kernel(%arg0: i32, %arg1: i32, %arg2: memref<256x288xbf16, #tpu.memory_space<vmem>>, %arg3: memref<288x128xbf16, #tpu.memory_space<vmem>>, %arg4: memref<256x128xbf16, #tpu.memory_space<vmem>>, %arg5: memref<1x3x128xf32, #tpu.memory_space<vmem>>) attributes {dimension_semantics = [#tpu.dimension_semantics<parallel>, #tpu.dimension_semantics<arbitrary>], iteration_bounds = array<i64: 2, 1>, scalar_prefetch = 0 : i64, scratch_operands = 0 : i64, tpu.core_type = #tpu.core_type<tc>, window_params = [{transform_indices = @transform_0, window_bounds = array<i64: 256, 288>}, {pipeline_mode = #tpu.pipeline_mode<synchronous>, transform_indices = @transform_1, window_bounds = array<i64: 288, 128>}, {transform_indices = @transform_2, window_bounds = array<i64: 256, 128>}, {transform_indices = @transform_3, window_bounds = array<i64: 1, 3, 128>}]} {
    %c0_i32 = arith.constant 0 : i32
    %0 = arith.cmpi eq, %arg1, %c0_i32 : i32
    %1 = arith.extui %0 : i1 to i32
    %c0_i32_0 = arith.constant 0 : i32
    %2 = arith.cmpi ne, %1, %c0_i32_0 : i32
    scf.if %2 {
      %cst_15 = arith.constant 0.000000e+00 : f32
      %24 = vector.broadcast %cst_15 : f32 to vector<1x3x128xf32>
      %c0_16 = arith.constant 0 : index
      %c0_17 = arith.constant 0 : index
      %c0_18 = arith.constant 0 : index
      %25 = vector.load %arg5[%c0_16, %c0_17, %c0_18] : memref<1x3x128xf32, #tpu.memory_space<vmem>>, vector<1x3x128xf32>
      tpu.vector_store %arg5[%c0_16, %c0_17, %c0_18], %24 {strides = array<i32>} : memref<1x3x128xf32, #tpu.memory_space<vmem>>, vector<1x3x128xf32>,
    } else {
    }
    %c0 = arith.constant 0 : index
    %c0_1 = arith.constant 0 : index
    %3 = vector.load %arg2[%c0, %c0_1] : memref<256x288xbf16, #tpu.memory_space<vmem>>, vector<256x288xbf16>
    %c0_2 = arith.constant 0 : index
    %c0_3 = arith.constant 0 : index
    %4 = vector.load %arg3[%c0_2, %c0_3] : memref<288x128xbf16, #tpu.memory_space<vmem>>, vector<288x128xbf16>
    %cst = arith.constant dense<0.000000e+00> : vector<256x128xf32>
    %5 = tpu.matmul %3, %4, %cst {dimension_numbers = #tpu.dot_dimension_numbers<[1], [0], [0], [1], [0, 0, 1, 1], [], []>} : vector<256x288xbf16>, vector<288x128xbf16>, vector<256x128xf32> -> vector<256x128xf32>
    %6 = arith.truncf %5 : vector<256x128xf32> to vector<256x128xbf16>
    %c0_4 = arith.constant 0 : index
    %c0_5 = arith.constant 0 : index
    %7 = vector.load %arg4[%c0_4, %c0_5] : memref<256x128xbf16, #tpu.memory_space<vmem>>, vector<256x128xbf16>
    tpu.vector_store %arg4[%c0_4, %c0_5], %6 {strides = array<i32>} : memref<256x128xbf16, #tpu.memory_space<vmem>>, vector<256x128xbf16>,
    %8 = vector.extract_strided_slice %5 {offsets = [0, 0], sizes = [256, 64], strides = [1, 1]} : vector<256x128xf32> to vector<256x64xf32>
    %9 = vector.extract_strided_slice %5 {offsets = [0, 64], sizes = [256, 64], strides = [1, 1]} : vector<256x128xf32> to vector<256x64xf32>
    %cst_6 = arith.constant dense<0.000000e+00> : vector<128xf32>
    %10 = vector.multi_reduction <add>, %5, %cst_6 [0] : vector<256x128xf32> to vector<128xf32>
    %11 = vector.shape_cast %10 : vector<128xf32> to vector<1x128xf32>
    %12 = arith.mulf %5, %5 : vector<256x128xf32>
    %cst_7 = arith.constant dense<0.000000e+00> : vector<128xf32>
    %13 = vector.multi_reduction <add>, %12, %cst_7 [0] : vector<256x128xf32> to vector<128xf32>
    %14 = vector.shape_cast %13 : vector<128xf32> to vector<1x128xf32>
    %15 = arith.mulf %8, %9 : vector<256x64xf32>
    %cst_8 = arith.constant dense<0.000000e+00> : vector<64xf32>
    %16 = vector.multi_reduction <add>, %15, %cst_8 [0] : vector<256x64xf32> to vector<64xf32>
    %17 = vector.shape_cast %16 : vector<64xf32> to vector<1x64xf32>
    %18 = tpu.concatenate %17, %17 in 1 : vector<1x64xf32>, vector<1x64xf32> -> vector<1x128xf32>
    %19 = tpu.concatenate %11, %14, %18 in 0 : vector<1x128xf32>, vector<1x128xf32>, vector<1x128xf32> -> vector<3x128xf32>
    %c0_9 = arith.constant 0 : index
    %c0_10 = arith.constant 0 : index
    %c0_11 = arith.constant 0 : index
    %20 = vector.load %arg5[%c0_9, %c0_10, %c0_11] : memref<1x3x128xf32, #tpu.memory_space<vmem>>, vector<1x3x128xf32>
    %21 = vector.shape_cast %19 : vector<3x128xf32> to vector<1x3x128xf32>
    %22 = arith.addf %20, %21 : vector<1x3x128xf32>
    %c0_12 = arith.constant 0 : index
    %c0_13 = arith.constant 0 : index
    %c0_14 = arith.constant 0 : index
    %23 = vector.load %arg5[%c0_12, %c0_13, %c0_14] : memref<1x3x128xf32, #tpu.memory_space<vmem>>, vector<1x3x128xf32>
    tpu.vector_store %arg5[%c0_12, %c0_13, %c0_14], %22 {strides = array<i32>} : memref<1x3x128xf32, #tpu.memory_space<vmem>>, vector<1x3x128xf32>,
    return
  }
  func.func @transform_0(%arg0: i32, %arg1: i32) -> (i32, i32) {
    %c1_i32 = arith.constant 1 : i32
    %0 = arith.muli %arg0, %c1_i32 : i32
    %1 = arith.addi %0, %arg1 : i32
    %c0_i32 = arith.constant 0 : i32
    %c0_i32_0 = arith.constant 0 : i32
    return %1, %c0_i32 : i32, i32
  }
  func.func @transform_1(%arg0: i32, %arg1: i32) -> (i32, i32) {
    %c0_i32 = arith.constant 0 : i32
    %c0_i32_0 = arith.constant 0 : i32
    %c0_i32_1 = arith.constant 0 : i32
    return %c0_i32, %c0_i32_0 : i32, i32
  }
  func.func @transform_2(%arg0: i32, %arg1: i32) -> (i32, i32) {
    %c1_i32 = arith.constant 1 : i32
    %0 = arith.muli %arg0, %c1_i32 : i32
    %1 = arith.addi %0, %arg1 : i32
    %c0_i32 = arith.constant 0 : i32
    %c0_i32_0 = arith.constant 0 : i32
    return %1, %c0_i32 : i32, i32
  }
  func.func @transform_3(%arg0: i32, %arg1: i32) -> (i32, i32, i32) {
    %c0_i32 = arith.constant 0 : i32
    %c0_i32_0 = arith.constant 0 : i32
    %c0_i32_1 = arith.constant 0 : i32
    return %arg0, %c0_i32, %c0_i32_0 : i32, i32, i32
  }
}

module attributes {stable_mosaic.version = 11 : i64} {
  func.func @_bn_modrelu_kernel(%arg0: i32, %arg1: memref<512x128xbf16, #tpu.memory_space<vmem>>, %arg2: memref<9x64xf32, #tpu.memory_space<vmem>>, %arg3: memref<512x128xf32, #tpu.memory_space<vmem>>) attributes {dimension_semantics = [#tpu.dimension_semantics<parallel>], iteration_bounds = array<i64: 1>, scalar_prefetch = 0 : i64, scratch_operands = 0 : i64, tpu.core_type = #tpu.core_type<tc>, window_params = [{transform_indices = @transform_0, window_bounds = array<i64: 512, 128>}, {pipeline_mode = #tpu.pipeline_mode<synchronous>, transform_indices = @transform_1, window_bounds = array<i64: 9, 64>}, {transform_indices = @transform_2, window_bounds = array<i64: 512, 128>}]} {
    %c0 = arith.constant 0 : index
    %c0_0 = arith.constant 0 : index
    %0 = vector.load %arg2[%c0, %c0_0] : memref<9x64xf32, #tpu.memory_space<vmem>>, vector<9x64xf32>
    %1 = vector.extract_strided_slice %0 {offsets = [0, 0], sizes = [1, 64], strides = [1, 1]} : vector<9x64xf32> to vector<1x64xf32>
    %2 = vector.extract_strided_slice %0 {offsets = [1, 0], sizes = [1, 64], strides = [1, 1]} : vector<9x64xf32> to vector<1x64xf32>
    %3 = vector.extract_strided_slice %0 {offsets = [2, 0], sizes = [1, 64], strides = [1, 1]} : vector<9x64xf32> to vector<1x64xf32>
    %4 = vector.extract_strided_slice %0 {offsets = [3, 0], sizes = [1, 64], strides = [1, 1]} : vector<9x64xf32> to vector<1x64xf32>
    %5 = vector.extract_strided_slice %0 {offsets = [4, 0], sizes = [1, 64], strides = [1, 1]} : vector<9x64xf32> to vector<1x64xf32>
    %6 = vector.extract_strided_slice %0 {offsets = [5, 0], sizes = [1, 64], strides = [1, 1]} : vector<9x64xf32> to vector<1x64xf32>
    %7 = vector.extract_strided_slice %0 {offsets = [6, 0], sizes = [1, 64], strides = [1, 1]} : vector<9x64xf32> to vector<1x64xf32>
    %8 = vector.extract_strided_slice %0 {offsets = [7, 0], sizes = [1, 64], strides = [1, 1]} : vector<9x64xf32> to vector<1x64xf32>
    %9 = vector.extract_strided_slice %0 {offsets = [8, 0], sizes = [1, 64], strides = [1, 1]} : vector<9x64xf32> to vector<1x64xf32>
    %c0_1 = arith.constant 0 : index
    %c0_2 = arith.constant 0 : index
    %10 = vector.load %arg1[%c0_1, %c0_2] : memref<512x128xbf16, #tpu.memory_space<vmem>>, vector<512x128xbf16>
    %11 = arith.extf %10 : vector<512x128xbf16> to vector<512x128xf32>
    %12 = vector.extract_strided_slice %11 {offsets = [0, 0], sizes = [512, 64], strides = [1, 1]} : vector<512x128xf32> to vector<512x64xf32>
    %13 = vector.broadcast %1 : vector<1x64xf32> to vector<512x64xf32>
    %14 = arith.subf %12, %13 : vector<512x64xf32>
    %15 = vector.extract_strided_slice %11 {offsets = [0, 64], sizes = [512, 64], strides = [1, 1]} : vector<512x128xf32> to vector<512x64xf32>
    %16 = vector.broadcast %2 : vector<1x64xf32> to vector<512x64xf32>
    %17 = arith.subf %15, %16 : vector<512x64xf32>
    %18 = vector.broadcast %3 : vector<1x64xf32> to vector<512x64xf32>
    %19 = arith.mulf %18, %14 : vector<512x64xf32>
    %20 = vector.broadcast %4 : vector<1x64xf32> to vector<512x64xf32>
    %21 = arith.mulf %20, %17 : vector<512x64xf32>
    %22 = arith.addf %19, %21 : vector<512x64xf32>
    %23 = vector.broadcast %7 : vector<1x64xf32> to vector<512x64xf32>
    %24 = arith.addf %22, %23 : vector<512x64xf32>
    %25 = vector.broadcast %5 : vector<1x64xf32> to vector<512x64xf32>
    %26 = arith.mulf %25, %14 : vector<512x64xf32>
    %27 = vector.broadcast %6 : vector<1x64xf32> to vector<512x64xf32>
    %28 = arith.mulf %27, %17 : vector<512x64xf32>
    %29 = arith.addf %26, %28 : vector<512x64xf32>
    %30 = vector.broadcast %8 : vector<1x64xf32> to vector<512x64xf32>
    %31 = arith.addf %29, %30 : vector<512x64xf32>
    %32 = arith.mulf %24, %24 : vector<512x64xf32>
    %33 = arith.mulf %31, %31 : vector<512x64xf32>
    %34 = arith.addf %32, %33 : vector<512x64xf32>
    %cst = arith.constant 9.99999996E-13 : f32
    %35 = vector.broadcast %cst : f32 to vector<512x64xf32>
    %36 = arith.addf %34, %35 : vector<512x64xf32>
    %37 = math.rsqrt %36 : vector<512x64xf32>
    %38 = arith.mulf %34, %37 : vector<512x64xf32>
    %39 = vector.broadcast %9 : vector<1x64xf32> to vector<512x64xf32>
    %40 = arith.addf %38, %39 : vector<512x64xf32>
    %cst_3 = arith.constant 0.000000e+00 : f32
    %41 = vector.broadcast %cst_3 : f32 to vector<512x64xf32>
    %42 = arith.maximumf %40, %41 : vector<512x64xf32>
    %43 = arith.mulf %42, %37 : vector<512x64xf32>
    %44 = arith.mulf %24, %43 : vector<512x64xf32>
    %c0_4 = arith.constant 0 : index
    %c0_5 = arith.constant 0 : index
    %45 = vector.load %arg3[%c0_4, %c0_5] : memref<512x128xf32, #tpu.memory_space<vmem>>, vector<512x64xf32>
    tpu.vector_store %arg3[%c0_4, %c0_5], %44 {strides = array<i32>} : memref<512x128xf32, #tpu.memory_space<vmem>>, vector<512x64xf32>,
    %46 = arith.mulf %31, %43 : vector<512x64xf32>
    %c0_6 = arith.constant 0 : index
    %c64 = arith.constant 64 : index
    %47 = vector.load %arg3[%c0_6, %c64] : memref<512x128xf32, #tpu.memory_space<vmem>>, vector<512x64xf32>
    tpu.vector_store %arg3[%c0_6, %c64], %46 {strides = array<i32>} : memref<512x128xf32, #tpu.memory_space<vmem>>, vector<512x64xf32>,
    return
  }
  func.func @transform_0(%arg0: i32) -> (i32, i32) {
    %c0_i32 = arith.constant 0 : i32
    %c0_i32_0 = arith.constant 0 : i32
    return %arg0, %c0_i32 : i32, i32
  }
  func.func @transform_1(%arg0: i32) -> (i32, i32) {
    %c0_i32 = arith.constant 0 : i32
    %c0_i32_0 = arith.constant 0 : i32
    %c0_i32_1 = arith.constant 0 : i32
    return %c0_i32, %c0_i32_0 : i32, i32
  }
  func.func @transform_2(%arg0: i32) -> (i32, i32) {
    %c0_i32 = arith.constant 0 : i32
    %c0_i32_0 = arith.constant 0 : i32
    return %arg0, %c0_i32 : i32, i32
  }
}

</mosaic_0001>

<llo_original>
// kernel: custom-call
$region0: #{custom-call}
  %s0 = inlined_call_operand.hbm [shape: c64[2,2,16,16], index: 0, kind: input, shape index: {}]
  %s1 = inlined_call_operand.vmem [shape: f32[2,2,16,16], index: 1, kind: output, shape index: {}]
  $region1: #{custom-call} parent=0
    #allocation0 [shape = 's32[1]{0}', space=sflag, size = 0x4, scoped, tag = 'scoped memory for custom-call']
    %2 = vsyncpa [#allocation0], 0
    %s4 = sshll.u32 %s0, 4
    %s5 = int_to_ptr.hbm [resolvable:$true] %s4
    %s6 = sshll.u32 %s1, 4
    %s7 = int_to_ptr.vmem [resolvable:$true] %s6
    %9 = dma.hbm_to_vmem [thread:$0]  %s5, 1024, %s7, [#allocation0]
    %11 = dma.done [#allocation0], 1024
    %12 = vsyncpa [#allocation0], 1

// kernel: custom-call.1
$region0: #{custom-call.1}
  %s0 = inlined_call_operand.hbm [shape: c64[2,2,16,16], index: 0, kind: input, shape index: {}]
  %s1 = inlined_call_operand.vmem [shape: f32[2,2,16,16], index: 1, kind: output, shape index: {}]
  %s2 = scalar_lea.hbm %s0, 64
  $region1: #{custom-call.1} parent=0
    #allocation0 [shape = 's32[1]{0}', space=sflag, size = 0x4, scoped, tag = 'scoped memory for custom-call.1']
    %3 = vsyncpa [#allocation0], 0
    %s5 = sshll.u32 %s2, 4
    %s6 = int_to_ptr.hbm [resolvable:$true] %s5
    %s7 = sshll.u32 %s1, 4
    %s8 = int_to_ptr.vmem [resolvable:$true] %s7
    %10 = dma.hbm_to_vmem [thread:$0]  %s6, 1024, %s8, [#allocation0]
    %12 = dma.done [#allocation0], 1024
    %13 = vsyncpa [#allocation0], 1

// kernel: conv_stem_forward.4
$region0: #{conv_stem_forward.4}
  #allocation0 [shape = 'u32[]', space=smem, size = 0x4, offset = 0x4, fixed_abs, tag = 'smem constant byte address 0x4 - core index']
  #allocation1 [shape = 'u32[72,128]{1,0:T(1,128)}', space=vmem, size = 0x9000, scoped, tag = 'internal scratch']
  %s0 = inlined_call_operand.vmem [shape: bf16[512,196], index: 0, kind: input, shape index: {}]
  %s1 = inlined_call_operand.vmem [shape: bf16[196,128], index: 1, kind: input, shape index: {}]
  %s2 = inlined_call_operand.vmem [shape: bf16[512,128], index: 2, kind: output, shape index: {0}]
  %s3 = inlined_call_operand.vmem [shape: f32[2,3,128], index: 3, kind: output, shape index: {1}]
  %4 = xla_tuple %s2, %s3
  %s5 = sld [smem:[#allocation0]]
  $region53: #{conv_stem_forward.4} parent=0
    _
  %s7 = ssub.s32 1, %s5
  %s8 = scalar_select 0, %s7, %s5
  loop: start=0, step=1, limit=4
  $region2: #{conv_stem_forward.4} parent=0 // loop_pre_header
    _
  $region3: #{conv_stem_forward.4} parent=0 // loop_header
    %s10 = sphi 0, %s14
    %p11 = scmp.ge.s32.totalorder %s10, 4
    %s17 = sphi 0, %s29
    %s18 = sphi 0, %s25
    %s19 = sphi 0, %s17
    %s20 = sphi 0, %s18
    %s21 = sphi 0, %s19
    %s22 = sphi 0, %s20
    %s34 = sphi 0, %s36
    %s37 = sphi 0, %s34
    %s38 = sphi 0, %s37
    %s54 = sphi 0, %s38
    %s58 = sphi 0, %s58
    %s60 = sphi 0, %s58
    %s61 = sphi 0, %s60
    %s75 = sphi 0, %s61
    %s83 = sphi 0, %s85
    %s86 = sphi 0, %s83
    %s87 = sphi 0, %s86
    %s103 = sphi 0, %s87
    %s109 = sphi 0, %s111
    %s112 = sphi 0, %s109
    %s113 = sphi 0, %s112
    %s129 = sphi 0, %s113
  $region4: #{conv_stem_forward.4} parent=0 // loop_header_branch
    %13 = sbr.rel (%p11) target = $region8
  $region5: #{conv_stem_forward.4} parent=0 // loop_body
    %s15 = ssub.s32 %s10, 1
    %s16 = ssub.s32 %s10, 2
    %s23 = sadd.s32 1, %s18
    %p24 = scmp.ge.s32.totalorder %s23, 1
    %s25 = scalar_select %p24, 0, %s23
    %s26 = sadd.s32 1, %s17
    %s27 = scalar_select %p24, %s26, %s17
    %p28 = scmp.ge.s32.totalorder %s27, 2
    %s29 = scalar_select %p28, 0, %s27
    %s30 = sadd.s32 %s17, %s18
    %s31 = sadd.s32 %s29, %s25
    %s32 = ssub.s32 %s30, %s31
    %p33 = scmp.eq.s32.totalorder %s32, 0
    %s35 = sadd.s32 %s34, 1
    %s36 = scalar_select %p33, %s34, %s35
    %p39 = pneg %p33
    %p40 = scmp.eq.s32.totalorder %s10, 1
    %p41 = por %p39, %p40
    %p42 = scmp.ne.s32.totalorder %s34, %s37
    %p43 = scmp.eq.s32.totalorder %s10, 0
    %p44 = por %p42, %p43
    %p45 = scmp.ne.s32.totalorder %s34, %s37
    %p46 = scmp.eq.s32.totalorder %s15, 1
    %p47 = por %p45, %p46
    %p48 = scmp.ne.s32.totalorder %s37, %s38
    %p49 = scmp.eq.s32.totalorder %s15, 0
    %p50 = por %p48, %p49
    %p51 = scmp.ne.s32.totalorder %s37, %s38
    %p52 = scmp.eq.s32.totalorder %s16, 1
    %p53 = por %p51, %p52
    %p55 = scmp.ne.s32.totalorder %s38, %s54
    %p56 = scmp.eq.s32.totalorder %s16, 0
    %p57 = por %p55, %p56
    %s59 = sadd.s32 %s58, 1
    %p62 = scmp.eq.s32.totalorder %s10, 1
    %p63 = scmp.ne.s32.totalorder %s58, %s60
    %p64 = scmp.eq.s32.totalorder %s10, 0
    %p65 = por %p63, %p64
    %p66 = scmp.ne.s32.totalorder %s58, %s60
    %p67 = scmp.eq.s32.totalorder %s15, 1
    %p68 = por %p66, %p67
    %p69 = scmp.ne.s32.totalorder %s60, %s61
    %p70 = scmp.eq.s32.totalorder %s15, 0
    %p71 = por %p69, %p70
    %p72 = scmp.ne.s32.totalorder %s60, %s61
    %p73 = scmp.eq.s32.totalorder %s16, 1
    %p74 = por %p72, %p73
    %p76 = scmp.ne.s32.totalorder %s61, %s75
    %p77 = scmp.eq.s32.totalorder %s16, 0
    %p78 = por %p76, %p77
    %s79 = sadd.s32 %s17, %s18
    %s80 = sadd.s32 %s29, %s25
    %s81 = ssub.s32 %s79, %s80
    %p82 = scmp.eq.s32.totalorder %s81, 0
    %s84 = sadd.s32 %s83, 1
    %s85 = scalar_select %p82, %s83, %s84
    %p88 = pneg %p82
    %p89 = scmp.eq.s32.totalorder %s10, 1
    %p90 = por %p88, %p89
    %p91 = scmp.ne.s32.totalorder %s83, %s86
    %p92 = scmp.eq.s32.totalorder %s10, 0
    %p93 = por %p91, %p92
    %p94 = scmp.ne.s32.totalorder %s83, %s86
    %p95 = scmp.eq.s32.totalorder %s15, 1
    %p96 = por %p94, %p95
    %p97 = scmp.ne.s32.totalorder %s86, %s87
    %p98 = scmp.eq.s32.totalorder %s15, 0
    %p99 = por %p97, %p98
    %p100 = scmp.ne.s32.totalorder %s86, %s87
    %p101 = scmp.eq.s32.totalorder %s16, 1
    %p102 = por %p100, %p101
    %p104 = scmp.ne.s32.totalorder %s87, %s103
    %p105 = scmp.eq.s32.totalorder %s16, 0
    %p106 = por %p104, %p105
    %s107 = ssub.s32 %s17, %s29
    %p108 = scmp.eq.s32.totalorder %s107, 0
    %s110 = sadd.s32 %s109, 1
    %s111 = scalar_select %p108, %s109, %s110
    %p114 = pneg %p108
    %p115 = scmp.eq.s32.totalorder %s10, 1
    %p116 = por %p114, %p115
    %p117 = scmp.ne.s32.totalorder %s109, %s112
    %p118 = scmp.eq.s32.totalorder %s10, 0
    %p119 = por %p117, %p118
    %p120 = scmp.ne.s32.totalorder %s109, %s112
    %p121 = scmp.eq.s32.totalorder %s15, 1
    %p122 = por %p120, %p121
    %p123 = scmp.ne.s32.totalorder %s112, %s113
    %p124 = scmp.eq.s32.totalorder %s15, 0
    %p125 = por %p123, %p124
    %p126 = scmp.ne.s32.totalorder %s112, %s113
    %p127 = scmp.eq.s32.totalorder %s16, 1
    %p128 = por %p126, %p127
    %p130 = scmp.ne.s32.totalorder %s113, %s129
    %p131 = scmp.eq.s32.totalorder %s16, 0
    %p132 = por %p130, %p131
    %p133 = scmp.le.s32.totalorder 1, %s10
    %p134 = scmp.lt.s32.totalorder %s10, 3
    %p135 = pnand %p133, %p134
    %p136 = pneg %p135
    // Predicated region
    $region9: #{conv_stem_forward.4} parent=5 // pred_check
      _
    $region10: #{conv_stem_forward.4} parent=5 // pred_check_branch
      %138 = sbr.rel (%p135) target = $region12
    $region11: #{conv_stem_forward.4} parent=5 // pred_region
      %s139 = ssub.s32 %s10, 1
      // Predicated region
      $region13: #{conv_stem_forward.4} parent=11 // pred_check
        %p140 = pneg %p71
      $region14: #{conv_stem_forward.4} parent=11 // pred_check_branch
        %142 = sbr.rel (%p140) target = $region16
      $region15: #{conv_stem_forward.4} parent=11 // pred_region
        _
      $region16: #{conv_stem_forward.4} parent=11 // pred_fallthru
        _
    $region12: #{conv_stem_forward.4} parent=5 // pred_fallthru
      _
    %p143 = scmp.lt.s32.totalorder %s10, 2
    // Predicated region
    $region17: #{conv_stem_forward.4} parent=5 // pred_check
      %p144 = pneg %p143
    $region18: #{conv_stem_forward.4} parent=5 // pred_check_branch
      %146 = sbr.rel (%p144) target = $region20
    $region19: #{conv_stem_forward.4} parent=5 // pred_region
      // Predicated region
      $region21: #{conv_stem_forward.4} parent=19 // pred_check
        %p147 = pneg %p44
      $region22: #{conv_stem_forward.4} parent=19 // pred_check_branch
        %149 = sbr.rel (%p147) target = $region24
      $region23: #{conv_stem_forward.4} parent=19 // pred_region
        %s150 = sadd.s32 %s17, %s18
        %s151 = smul.u32 32, %s150
        %p152 = scmp.lt.s32.totalorder %s151, 63
        %s153 = scalar_select %p152, %s151, 63
        %s154 = smul.addr %s153, 2
        %s155 = smul.addr %s154, 4
        %s156 = scalar_lea.vmem %s0, %s155
        %s157 = sadd.s32 %s17, %s18
        %s158 = smul.u32 32, %s157
      $region24: #{conv_stem_forward.4} parent=19 // pred_fallthru
        _
    $region20: #{conv_stem_forward.4} parent=5 // pred_fallthru
      _
    %p159 = scmp.le.s32.totalorder 1, %s10
    %p160 = scmp.lt.s32.totalorder %s10, 3
    %p161 = pnand %p159, %p160
    %p162 = pneg %p161
    // Predicated region
    $region25: #{conv_stem_forward.4} parent=5 // pred_check
      _
    $region26: #{conv_stem_forward.4} parent=5 // pred_check_branch
      %164 = sbr.rel (%p161) target = $region28
    $region27: #{conv_stem_forward.4} parent=5 // pred_region
      %s165 = ssub.s32 %s10, 1
      %s166 = sadd.s32 %s19, %s20
      %s167 = smul.u32 32, %s166
      %p168 = scmp.lt.s32.totalorder %s167, 63
      %s169 = scalar_select %p168, %s167, 63
      %s170 = smul.addr %s169, 2
      %s171 = smul.addr %s170, 4
      %s172 = scalar_lea.vmem %s0, %s171
      %p173 = pneg %p50
      %p174 = pneg %p47
      %p175 = pneg %p71
      %p176 = pneg %p68
      %p177 = pneg %p99
      %p178 = pneg %p96
      %s179 = sadd.s32 %s19, %s20
      %s180 = smul.u32 32, %s179
      %p181 = scmp.lt.s32.totalorder %s180, 63
      %s182 = scalar_select %p181, %s180, 63
      %s183 = smul.addr %s182, 4
      %s184 = scalar_lea.vmem %s2, %s183
      %p185 = pneg %p125
      %p186 = pneg %p122
      %p187 = scmp.lt.s32.totalorder %s19, 1
      %s188 = scalar_select %p187, %s19, 1
      %s189 = smul.addr %s188, 4
      %s190 = scalar_lea.vmem %s3, %s189
      %s191 = sadd.s32 %s19, %s20
      %s192 = smul.u32 32, %s191
      %p193 = scmp.lt.s32.totalorder %s192, 63
      %s194 = scalar_select %p193, %s192, 63
      %s195 = smul.addr %s194, 2
      %s196 = smul.addr %s195, 4
      %s197 = scalar_lea.vmem %s0, %s196
      %s198 = sadd.s32 %s19, %s20
      %s199 = smul.u32 32, %s198
      %s200 = sadd.s32 %s19, %s20
      %s201 = smul.u32 32, %s200
      %p202 = scmp.lt.s32.totalorder %s201, 63
      %s203 = scalar_select %p202, %s201, 63
      %s204 = smul.addr %s203, 4
      %s205 = scalar_lea.vmem %s2, %s204
      %s206 = sadd.s32 %s19, %s20
      %s207 = smul.u32 32, %s206
      %p208 = scmp.lt.s32.totalorder %s19, 1
      %s209 = scalar_select %p208, %s19, 1
      %s210 = smul.addr %s209, 4
      %s211 = scalar_lea.vmem %s3, %s210
      %p213 = scmp.eq.s32.totalorder %s20, 0
      // Predicated region
      $region29: #{conv_stem_forward.4} parent=27 // pred_check
        %p214 = pneg %p213
      $region30: #{conv_stem_forward.4} parent=27 // pred_check_branch
        %216 = sbr.rel (%p214) target = $region32
      $region31: #{conv_stem_forward.4} parent=27 // pred_region
        %217 = vst [vmem:[%s211] sm:$0x7] 0.0
      $region32: #{conv_stem_forward.4} parent=27 // pred_fallthru
        _
      %v218 = vld [vmem:[%s197] sm:$0xff]
      %v219 = vld [vmem:[%s197 + $0x8] sm:$0xff]
      %v220 = vld [vmem:[%s197 + $0x10] sm:$0xff]
      %v221 = vld [vmem:[%s197 + $0x18] sm:$0xff]
      %v222 = vld [vmem:[%s197 + $0x20] sm:$0xff]
      %v223 = vld [vmem:[%s197 + $0x28] sm:$0xff]
      %v224 = vld [vmem:[%s197 + $0x30] sm:$0xff]
      %v225 = vld [vmem:[%s197 + $0x38] sm:$0xff]
      %v226 = vld [vmem:[%s197 + $0x40] sm:$0xff]
      %v227 = vld [vmem:[%s197 + $0x48] sm:$0xff]
      %v228 = vld [vmem:[%s197 + $0x50] sm:$0xff]
      %v229 = vld [vmem:[%s197 + $0x58] sm:$0xff]
      %v230 = vld [vmem:[%s197 + $0x60] sm:$0xff]
      %v231 = vld [vmem:[%s197 + $0x68] sm:$0xff]
      %v232 = vld [vmem:[%s197 + $0x70] sm:$0xff]
      %v233 = vld [vmem:[%s197 + $0x78] sm:$0xff]
      %v234 = vld [vmem:[%s197 + $0x80] sm:$0xff]
      %v235 = vld [vmem:[%s197 + $0x88] sm:$0xff]
      %v236 = vld [vmem:[%s197 + $0x90] sm:$0xff]
      %v237 = vld [vmem:[%s197 + $0x98] sm:$0xff]
      %v238 = vld [vmem:[%s197 + $0xa0] sm:$0xff]
      %v239 = vld [vmem:[%s197 + $0xa8] sm:$0xff]
      %v240 = vld [vmem:[%s197 + $0xb0] sm:$0xff]
      %v241 = vld [vmem:[%s197 + $0xb8] sm:$0xff]
      %v242 = vld [vmem:[%s197 + $0xc0] sm:$0xff]
      %v243 = vld [vmem:[%s197 + $0xc8] sm:$0xff]
      %v244 = vld [vmem:[%s197 + $0xd0] sm:$0xff]
      %v245 = vld [vmem:[%s197 + $0xd8] sm:$0xff]
      %v246 = vld [vmem:[%s197 + $0xe0] sm:$0xff]
      %v247 = vld [vmem:[%s197 + $0xe8] sm:$0xff]
      %v248 = vld [vmem:[%s197 + $0xf0] sm:$0xff]
      %v249 = vld [vmem:[%s197 + $0xf8] sm:$0xff]
      %v250 = vld [vmem:[%s1] sm:$0xf]
      %v251 = vld [vmem:[%s1 + $0x4] sm:$0xf]
      %v252 = vld [vmem:[%s1 + $0x8] sm:$0xf]
      %v253 = vld [vmem:[%s1 + $0xc] sm:$0xf]
      %v254 = vld [vmem:[%s1 + $0x10] sm:$0xf]
      %v255 = vld [vmem:[%s1 + $0x14] sm:$0xf]
      %v256 = vld [vmem:[%s1 + $0x18] sm:$0xf]
      %v257 = vld [vmem:[%s1 + $0x1c] sm:$0xf]
      %v258 = vld [vmem:[%s1 + $0x20] sm:$0xf]
      %v259 = vld [vmem:[%s1 + $0x24] sm:$0xf]
      %v260 = vld [vmem:[%s1 + $0x28] sm:$0xf]
      %v261 = vld [vmem:[%s1 + $0x2c] sm:$0xf]
      %v262 = vld [vmem:[%s1 + $0x30] sm:$0xf]
      %v263 = vld [vmem:[%s1 + $0x34] sm:$0xf]
      %v264 = vld [vmem:[%s1 + $0x38] sm:$0xf]
      %v265 = vld [vmem:[%s1 + $0x3c] sm:$0xf]
      %v266 = vld [vmem:[%s1 + $0x40] sm:$0xf]
      %v267 = vld [vmem:[%s1 + $0x44] sm:$0xf]
      %v268 = vld [vmem:[%s1 + $0x48] sm:$0xf]
      %v269 = vld [vmem:[%s1 + $0x4c] sm:$0xf]
      %v270 = vld [vmem:[%s1 + $0x50] sm:$0xf]
      %v271 = vld [vmem:[%s1 + $0x54] sm:$0xf]
      %v272 = vld [vmem:[%s1 + $0x58] sm:$0xf]
      %v273 = vld [vmem:[%s1 + $0x5c] sm:$0xf]
      %v274 = vld [vmem:[%s1 + $0x60] sm:$0x3]
      %v307 = vunpack.c.l.b16 %v218
      %v308 = vunpack.c.h.b16 %v218
      %v309 = vunpack.c.l.b16 %v219
      %v310 = vunpack.c.h.b16 %v219
      %v311 = vunpack.c.l.b16 %v220
      %v312 = vunpack.c.h.b16 %v220
      %v313 = vunpack.c.l.b16 %v221
      %v314 = vunpack.c.h.b16 %v221
      %v315 = vunpack.c.l.b16 %v222
      %v316 = vunpack.c.h.b16 %v222
      %v317 = vunpack.c.l.b16 %v223
      %v318 = vunpack.c.h.b16 %v223
      %v319 = vunpack.c.l.b16 %v224
      %v320 = vunpack.c.h.b16 %v224
      %v321 = vunpack.c.l.b16 %v225
      %v322 = vunpack.c.h.b16 %v225
      %v323 = vunpack.c.l.b16 %v226
      %v324 = vunpack.c.h.b16 %v226
      %v325 = vunpack.c.l.b16 %v227
      %v326 = vunpack.c.h.b16 %v227
      %v327 = vunpack.c.l.b16 %v228
      %v328 = vunpack.c.h.b16 %v228
      %v329 = vunpack.c.l.b16 %v229
      %v330 = vunpack.c.h.b16 %v229
      %v331 = vunpack.c.l.b16 %v230
      %v332 = vunpack.c.h.b16 %v230
      %v333 = vunpack.c.l.b16 %v231
      %v334 = vunpack.c.h.b16 %v231
      %v335 = vunpack.c.l.b16 %v232
      %v336 = vunpack.c.h.b16 %v232
      %v337 = vunpack.c.l.b16 %v233
      %v338 = vunpack.c.h.b16 %v233
      %v339 = vunpack.c.l.b16 %v234
      %v340 = vunpack.c.h.b16 %v234
      %v341 = vunpack.c.l.b16 %v235
      %v342 = vunpack.c.h.b16 %v235
      %v343 = vunpack.c.l.b16 %v236
      %v344 = vunpack.c.h.b16 %v236
      %v345 = vunpack.c.l.b16 %v237
      %v346 = vunpack.c.h.b16 %v237
      %v347 = vunpack.c.l.b16 %v238
      %v348 = vunpack.c.h.b16 %v238
      %v349 = vunpack.c.l.b16 %v239
      %v350 = vunpack.c.h.b16 %v239
      %v351 = vunpack.c.l.b16 %v240
      %v352 = vunpack.c.h.b16 %v240
      %v353 = vunpack.c.l.b16 %v241
      %v354 = vunpack.c.h.b16 %v241
      %v355 = vunpack.c.l.b16 %v242
      %v356 = vunpack.c.h.b16 %v242
      %v357 = vunpack.c.l.b16 %v243
      %v358 = vunpack.c.h.b16 %v243
      %v359 = vunpack.c.l.b16 %v244
      %v360 = vunpack.c.h.b16 %v244
      %v361 = vunpack.c.l.b16 %v245
      %v362 = vunpack.c.h.b16 %v245
      %v363 = vunpack.c.l.b16 %v246
      %v364 = vunpack.c.h.b16 %v246
      %v365 = vunpack.c.l.b16 %v247
      %v366 = vunpack.c.h.b16 %v247
      %v367 = vunpack.c.l.b16 %v248
      %v368 = vunpack.c.h.b16 %v248
      %v369 = vunpack.c.l.b16 %v249
      %v370 = vunpack.c.h.b16 %v249
      %v371 = vpack.c.b16 %v309, %v307
      %v372 = vpack.c.b16 %v310, %v308
      %v373 = vpack.c.b16 %v313, %v311
      %v374 = vpack.c.b16 %v314, %v312
      %v375 = vpack.c.b16 %v317, %v315
      %v376 = vpack.c.b16 %v318, %v316
      %v377 = vpack.c.b16 %v321, %v319
      %v378 = vpack.c.b16 %v322, %v320
      %v379 = vpack.c.b16 %v325, %v323
      %v380 = vpack.c.b16 %v326, %v324
      %v381 = vpack.c.b16 %v329, %v327
      %v382 = vpack.c.b16 %v330, %v328
      %v383 = vpack.c.b16 %v333, %v331
      %v384 = vpack.c.b16 %v334, %v332
      %v385 = vpack.c.b16 %v337, %v335
      %v386 = vpack.c.b16 %v338, %v336
      %v387 = vpack.c.b16 %v341, %v339
      %v388 = vpack.c.b16 %v342, %v340
      %v389 = vpack.c.b16 %v345, %v343
      %v390 = vpack.c.b16 %v346, %v344
      %v391 = vpack.c.b16 %v349, %v347
      %v392 = vpack.c.b16 %v350, %v348
      %v393 = vpack.c.b16 %v353, %v351
      %v394 = vpack.c.b16 %v354, %v352
      %v395 = vpack.c.b16 %v357, %v355
      %v396 = vpack.c.b16 %v358, %v356
      %v397 = vpack.c.b16 %v361, %v359
      %v398 = vpack.c.b16 %v362, %v360
      %v399 = vpack.c.b16 %v365, %v363
      %v400 = vpack.c.b16 %v366, %v364
      %v401 = vpack.c.b16 %v369, %v367
      %v402 = vpack.c.b16 %v370, %v368
      %v444 = vunpack.c.l.b16 %v250
      %v445 = vunpack.c.l.b16 %v251
      %v446 = vunpack.c.l.b16 %v252
      %v447 = vunpack.c.l.b16 %v253
      %v448 = vunpack.c.l.b16 %v254
      %v449 = vunpack.c.l.b16 %v255
      %v450 = vunpack.c.l.b16 %v256
      %v451 = vunpack.c.l.b16 %v257
      %v452 = vunpack.c.l.b16 %v258
      %v453 = vunpack.c.l.b16 %v259
      %v454 = vunpack.c.l.b16 %v260
      %v455 = vunpack.c.l.b16 %v261
      %v456 = vunpack.c.l.b16 %v262
      %v457 = vunpack.c.l.b16 %v263
      %v458 = vunpack.c.l.b16 %v264
      %v459 = vunpack.c.l.b16 %v265
      %v460 = vunpack.c.l.b16 %v266
      %v461 = vunpack.c.l.b16 %v267
      %v462 = vunpack.c.l.b16 %v268
      %v463 = vunpack.c.l.b16 %v269
      %v464 = vunpack.c.l.b16 %v270
      %v465 = vunpack.c.l.b16 %v271
      %v466 = vunpack.c.l.b16 %v272
      %v467 = vunpack.c.l.b16 %v273
      %v468 = vunpack.c.l.b16 %v274
      %v469 = vpack.c.b16 %v445, %v444
      %v470 = vpack.c.b16 %v447, %v446
      %v471 = vpack.c.b16 %v449, %v448
      %v472 = vpack.c.b16 %v451, %v450
      %v473 = vpack.c.b16 %v453, %v452
      %v474 = vpack.c.b16 %v455, %v454
      %v475 = vpack.c.b16 %v457, %v456
      %v476 = vpack.c.b16 %v459, %v458
      %v477 = vpack.c.b16 %v461, %v460
      %v478 = vpack.c.b16 %v463, %v462
      %v479 = vpack.c.b16 %v465, %v464
      %v480 = vpack.c.b16 %v467, %v466
      %v481 = vpack.c.b16 %v468, %v468
      %vm494 = vcmask 556032
      %v496 = vsel %vm494, %v372, 0
      %v499 = vsel %vm494, %v374, 0
      %v502 = vsel %vm494, %v376, 0
      %v505 = vsel %vm494, %v378, 0
      %v508 = vsel %vm494, %v380, 0
      %v511 = vsel %vm494, %v382, 0
      %v514 = vsel %vm494, %v384, 0
      %v517 = vsel %vm494, %v386, 0
      %v520 = vsel %vm494, %v388, 0
      %v523 = vsel %vm494, %v390, 0
      %v526 = vsel %vm494, %v392, 0
      %v529 = vsel %vm494, %v394, 0
      %v532 = vsel %vm494, %v396, 0
      %v535 = vsel %vm494, %v398, 0
      %v538 = vsel %vm494, %v400, 0
      %v541 = vsel %vm494, %v402, 0
      %vm543 = vcmask 1041408
      %v545 = vsel %vm543, %v481, 0
      %547 = vmatpush.bf16.msra.mxu0 %v476
      %548 = vmatpush.bf16.msra.mxu0 %v475
      %549 = vmatpush.bf16.msra.mxu0 %v474
      %550 = vmatpush.bf16.msra.mxu0 %v473
      %551 = vmatpush.bf16.msra.mxu0 %v472
      %552 = vmatpush.bf16.msra.mxu0 %v471
      %553 = vmatpush.bf16.msra.mxu0 %v470
      %554 = vmatpush.bf16.msra.mxu0 %v469
      %555 = vmatmul.bf16.gmra.mxu0 %v371
      %v556 = vpop.f32.mrf.mxu0
      %v557 = vadd.f32 0.0, %v556
      %v558 = vpop.f32.mrf.mxu0
      %v559 = vadd.f32 0.0, %v558
      %560 = vmatmul.bf16.gmra.mxu0 %v373
      %v561 = vpop.f32.mrf.mxu0
      %v562 = vadd.f32 0.0, %v561
      %v563 = vpop.f32.mrf.mxu0
      %v564 = vadd.f32 0.0, %v563
      %565 = vmatmul.bf16.gmra.mxu0 %v375
      %v566 = vpop.f32.mrf.mxu0
      %v567 = vadd.f32 0.0, %v566
      %v568 = vpop.f32.mrf.mxu0
      %v569 = vadd.f32 0.0, %v568
      %570 = vmatmul.bf16.gmra.mxu0 %v377
      %v571 = vpop.f32.mrf.mxu0
      %v572 = vadd.f32 0.0, %v571
      %v573 = vpop.f32.mrf.mxu0
      %v574 = vadd.f32 0.0, %v573
      %575 = vmatmul.bf16.gmra.mxu0 %v379
      %v576 = vpop.f32.mrf.mxu0
      %v577 = vadd.f32 0.0, %v576
      %v578 = vpop.f32.mrf.mxu0
      %v579 = vadd.f32 0.0, %v578
      %580 = vmatmul.bf16.gmra.mxu0 %v381
      %v581 = vpop.f32.mrf.mxu0
      %v582 = vadd.f32 0.0, %v581
      %v583 = vpop.f32.mrf.mxu0
      %v584 = vadd.f32 0.0, %v583
      %585 = vmatmul.bf16.gmra.mxu0 %v383
      %v586 = vpop.f32.mrf.mxu0
      %v587 = vadd.f32 0.0, %v586
      %v588 = vpop.f32.mrf.mxu0
      %v589 = vadd.f32 0.0, %v588
      %590 = vmatmul.bf16.gmra.mxu0 %v385
      %v591 = vpop.f32.mrf.mxu0
      %v592 = vadd.f32 0.0, %v591
      %v593 = vpop.f32.mrf.mxu0
      %v594 = vadd.f32 0.0, %v593
      %595 = vmatmul.bf16.gmra.mxu0 %v387
      %v596 = vpop.f32.mrf.mxu0
      %v597 = vadd.f32 0.0, %v596
      %v598 = vpop.f32.mrf.mxu0
      %v599 = vadd.f32 0.0, %v598
      %600 = vmatmul.bf16.gmra.mxu0 %v389
      %v601 = vpop.f32.mrf.mxu0
      %v602 = vadd.f32 0.0, %v601
      %v603 = vpop.f32.mrf.mxu0
      %v604 = vadd.f32 0.0, %v603
      %605 = vmatmul.bf16.gmra.mxu0 %v391
      %v606 = vpop.f32.mrf.mxu0
      %v607 = vadd.f32 0.0, %v606
      %v608 = vpop.f32.mrf.mxu0
      %v609 = vadd.f32 0.0, %v608
      %610 = vmatmul.bf16.gmra.mxu0 %v393
      %v611 = vpop.f32.mrf.mxu0
      %v612 = vadd.f32 0.0, %v611
      %v613 = vpop.f32.mrf.mxu0
      %v614 = vadd.f32 0.0, %v613
      %615 = vmatmul.bf16.gmra.mxu0 %v395
      %v616 = vpop.f32.mrf.mxu0
      %v617 = vadd.f32 0.0, %v616
      %v618 = vpop.f32.mrf.mxu0
      %v619 = vadd.f32 0.0, %v618
      %620 = vmatmul.bf16.gmra.mxu0 %v397
      %v621 = vpop.f32.mrf.mxu0
      %v622 = vadd.f32 0.0, %v621
      %v623 = vpop.f32.mrf.mxu0
      %v624 = vadd.f32 0.0, %v623
      %625 = vmatmul.bf16.gmra.mxu0 %v399
      %v626 = vpop.f32.mrf.mxu0
      %v627 = vadd.f32 0.0, %v626
      %v628 = vpop.f32.mrf.mxu0
      %v629 = vadd.f32 0.0, %v628
      %630 = vmatmul.bf16.gmra.mxu0 %v401
      %v631 = vpop.f32.mrf.mxu0
      %v632 = vadd.f32 0.0, %v631
      %v633 = vpop.f32.mrf.mxu0
      %v634 = vadd.f32 0.0, %v633
      %635 = vdwg.mxu0
      %636 = vmatpush.bf16.msra.mxu0 0
      %637 = vmatpush.bf16.msra.mxu0 0
      %638 = vmatpush.bf16.msra.mxu0 0
      %639 = vmatpush.bf16.msra.mxu0 %v545
      %640 = vmatpush.bf16.msra.mxu0 %v480
      %641 = vmatpush.bf16.msra.mxu0 %v479
      %642 = vmatpush.bf16.msra.mxu0 %v478
      %643 = vmatpush.bf16.msra.mxu0 %v477
      %644 = vmatmul.bf16.gmra.mxu0 %v496
      %v645 = vpop.f32.mrf.mxu0
      %v646 = vadd.f32 %v557, %v645
      %v647 = vpop.f32.mrf.mxu0
      %v648 = vadd.f32 %v559, %v647
      %649 = vmatmul.bf16.gmra.mxu0 %v499
      %v650 = vpop.f32.mrf.mxu0
      %v651 = vadd.f32 %v562, %v650
      %v652 = vpop.f32.mrf.mxu0
      %v653 = vadd.f32 %v564, %v652
      %654 = vmatmul.bf16.gmra.mxu0 %v502
      %v655 = vpop.f32.mrf.mxu0
      %v656 = vadd.f32 %v567, %v655
      %v657 = vpop.f32.mrf.mxu0
      %v658 = vadd.f32 %v569, %v657
      %659 = vmatmul.bf16.gmra.mxu0 %v505
      %v660 = vpop.f32.mrf.mxu0
      %v661 = vadd.f32 %v572, %v660
      %v662 = vpop.f32.mrf.mxu0
      %v663 = vadd.f32 %v574, %v662
      %664 = vmatmul.bf16.gmra.mxu0 %v508
      %v665 = vpop.f32.mrf.mxu0
      %v666 = vadd.f32 %v577, %v665
      %v667 = vpop.f32.mrf.mxu0
      %v668 = vadd.f32 %v579, %v667
      %669 = vmatmul.bf16.gmra.mxu0 %v511
      %v670 = vpop.f32.mrf.mxu0
      %v671 = vadd.f32 %v582, %v670
      %v672 = vpop.f32.mrf.mxu0
      %v673 = vadd.f32 %v584, %v672
      %674 = vmatmul.bf16.gmra.mxu0 %v514
      %v675 = vpop.f32.mrf.mxu0
      %v676 = vadd.f32 %v587, %v675
      %v677 = vpop.f32.mrf.mxu0
      %v678 = vadd.f32 %v589, %v677
      %679 = vmatmul.bf16.gmra.mxu0 %v517
      %v680 = vpop.f32.mrf.mxu0
      %v681 = vadd.f32 %v592, %v680
      %v682 = vpop.f32.mrf.mxu0
      %v683 = vadd.f32 %v594, %v682
      %684 = vmatmul.bf16.gmra.mxu0 %v520
      %v685 = vpop.f32.mrf.mxu0
      %v686 = vadd.f32 %v597, %v685
      %v687 = vpop.f32.mrf.mxu0
      %v688 = vadd.f32 %v599, %v687
      %689 = vmatmul.bf16.gmra.mxu0 %v523
      %v690 = vpop.f32.mrf.mxu0
      %v691 = vadd.f32 %v602, %v690
      %v692 = vpop.f32.mrf.mxu0
      %v693 = vadd.f32 %v604, %v692
      %694 = vmatmul.bf16.gmra.mxu0 %v526
      %v695 = vpop.f32.mrf.mxu0
      %v696 = vadd.f32 %v607, %v695
      %v697 = vpop.f32.mrf.mxu0
      %v698 = vadd.f32 %v609, %v697
      %699 = vmatmul.bf16.gmra.mxu0 %v529
      %v700 = vpop.f32.mrf.mxu0
      %v701 = vadd.f32 %v612, %v700
      %v702 = vpop.f32.mrf.mxu0
      %v703 = vadd.f32 %v614, %v702
      %704 = vmatmul.bf16.gmra.mxu0 %v532
      %v705 = vpop.f32.mrf.mxu0
      %v706 = vadd.f32 %v617, %v705
      %v707 = vpop.f32.mrf.mxu0
      %v708 = vadd.f32 %v619, %v707
      %709 = vmatmul.bf16.gmra.mxu0 %v535
      %v710 = vpop.f32.mrf.mxu0
      %v711 = vadd.f32 %v622, %v710
      %v712 = vpop.f32.mrf.mxu0
      %v713 = vadd.f32 %v624, %v712
      %714 = vmatmul.bf16.gmra.mxu0 %v538
      %v715 = vpop.f32.mrf.mxu0
      %v716 = vadd.f32 %v627, %v715
      %v717 = vpop.f32.mrf.mxu0
      %v718 = vadd.f32 %v629, %v717
      %719 = vmatmul.bf16.gmra.mxu0 %v541
      %v720 = vpop.f32.mrf.mxu0
      %v721 = vadd.f32 %v632, %v720
      %v722 = vpop.f32.mrf.mxu0
      %v723 = vadd.f32 %v634, %v722
      %724 = vdwg.mxu0
      %v725 = vpack.c.bf16 %v646, %v646
      %v726 = vpack.c.bf16 %v648, %v648
      %v727 = vpack.c.bf16 %v651, %v651
      %v728 = vpack.c.bf16 %v653, %v653
      %v729 = vpack.c.bf16 %v656, %v656
      %v730 = vpack.c.bf16 %v658, %v658
      %v731 = vpack.c.bf16 %v661, %v661
      %v732 = vpack.c.bf16 %v663, %v663
      %v733 = vpack.c.bf16 %v666, %v666
      %v734 = vpack.c.bf16 %v668, %v668
      %v735 = vpack.c.bf16 %v671, %v671
      %v736 = vpack.c.bf16 %v673, %v673
      %v737 = vpack.c.bf16 %v676, %v676
      %v738 = vpack.c.bf16 %v678, %v678
      %v739 = vpack.c.bf16 %v681, %v681
      %v740 = vpack.c.bf16 %v683, %v683
      %v741 = vpack.c.bf16 %v686, %v686
      %v742 = vpack.c.bf16 %v688, %v688
      %v743 = vpack.c.bf16 %v691, %v691
      %v744 = vpack.c.bf16 %v693, %v693
      %v745 = vpack.c.bf16 %v696, %v696
      %v746 = vpack.c.bf16 %v698, %v698
      %v747 = vpack.c.bf16 %v701, %v701
      %v748 = vpack.c.bf16 %v703, %v703
      %v749 = vpack.c.bf16 %v706, %v706
      %v750 = vpack.c.bf16 %v708, %v708
      %v751 = vpack.c.bf16 %v711, %v711
      %v752 = vpack.c.bf16 %v713, %v713
      %v753 = vpack.c.bf16 %v716, %v716
      %v754 = vpack.c.bf16 %v718, %v718
      %v755 = vpack.c.bf16 %v721, %v721
      %v756 = vpack.c.bf16 %v723, %v723
      %757 = vst [vmem:[%s205] sm:$0xf] %v725
      %758 = vst [vmem:[%s205 + $0x4] sm:$0xf] %v726
      %759 = vst [vmem:[%s205 + $0x8] sm:$0xf] %v727
      %760 = vst [vmem:[%s205 + $0xc] sm:$0xf] %v728
      %761 = vst [vmem:[%s205 + $0x10] sm:$0xf] %v729
      %762 = vst [vmem:[%s205 + $0x14] sm:$0xf] %v730
      %763 = vst [vmem:[%s205 + $0x18] sm:$0xf] %v731
      %764 = vst [vmem:[%s205 + $0x1c] sm:$0xf] %v732
      %765 = vst [vmem:[%s205 + $0x20] sm:$0xf] %v733
      %766 = vst [vmem:[%s205 + $0x24] sm:$0xf] %v734
      %767 = vst [vmem:[%s205 + $0x28] sm:$0xf] %v735
      %768 = vst [vmem:[%s205 + $0x2c] sm:$0xf] %v736
      %769 = vst [vmem:[%s205 + $0x30] sm:$0xf] %v737
      %770 = vst [vmem:[%s205 + $0x34] sm:$0xf] %v738
      %771 = vst [vmem:[%s205 + $0x38] sm:$0xf] %v739
      %772 = vst [vmem:[%s205 + $0x3c] sm:$0xf] %v740
      %773 = vst [vmem:[%s205 + $0x40] sm:$0xf] %v741
      %774 = vst [vmem:[%s205 + $0x44] sm:$0xf] %v742
      %775 = vst [vmem:[%s205 + $0x48] sm:$0xf] %v743
      %776 = vst [vmem:[%s205 + $0x4c] sm:$0xf] %v744
      %777 = vst [vmem:[%s205 + $0x50] sm:$0xf] %v745
      %778 = vst [vmem:[%s205 + $0x54] sm:$0xf] %v746
      %779 = vst [vmem:[%s205 + $0x58] sm:$0xf] %v747
      %780 = vst [vmem:[%s205 + $0x5c] sm:$0xf] %v748
      %781 = vst [vmem:[%s205 + $0x60] sm:$0xf] %v749
      %782 = vst [vmem:[%s205 + $0x64] sm:$0xf] %v750
      %783 = vst [vmem:[%s205 + $0x68] sm:$0xf] %v751
      %784 = vst [vmem:[%s205 + $0x6c] sm:$0xf] %v752
      %785 = vst [vmem:[%s205 + $0x70] sm:$0xf] %v753
      %786 = vst [vmem:[%s205 + $0x74] sm:$0xf] %v754
      %787 = vst [vmem:[%s205 + $0x78] sm:$0xf] %v755
      %788 = vst [vmem:[%s205 + $0x7c] sm:$0xf] %v756
      %v789 = vadd.f32 %v646, %v648
      %v790 = vadd.f32 %v789, %v651
      %v791 = vadd.f32 %v790, %v653
      %v792 = vadd.f32 %v791, %v656
      %v793 = vadd.f32 %v792, %v658
      %v794 = vadd.f32 %v793, %v661
      %v795 = vadd.f32 %v794, %v663
      %v796 = vadd.f32 %v795, %v666
      %v797 = vadd.f32 %v796, %v668
      %v798 = vadd.f32 %v797, %v671
      %v799 = vadd.f32 %v798, %v673
      %v800 = vadd.f32 %v799, %v676
      %v801 = vadd.f32 %v800, %v678
      %v802 = vadd.f32 %v801, %v681
      %v803 = vadd.f32 %v802, %v683
      %v804 = vadd.f32 %v803, %v686
      %v805 = vadd.f32 %v804, %v688
      %v806 = vadd.f32 %v805, %v691
      %v807 = vadd.f32 %v806, %v693
      %v808 = vadd.f32 %v807, %v696
      %v809 = vadd.f32 %v808, %v698
      %v810 = vadd.f32 %v809, %v701
      %v811 = vadd.f32 %v810, %v703
      %v812 = vadd.f32 %v811, %v706
      %v813 = vadd.f32 %v812, %v708
      %v814 = vadd.f32 %v813, %v711
      %v815 = vadd.f32 %v814, %v713
      %v816 = vadd.f32 %v815, %v716
      %v817 = vadd.f32 %v816, %v718
      %v818 = vadd.f32 %v817, %v721
      %v819 = vadd.f32 %v818, %v723
      %v820 = vrot.slane %v819, 4
      %v821 = vadd.f32 %v819, %v820
      %v822 = vrot.slane %v821, 2
      %v823 = vadd.f32 %v821, %v822
      %v824 = vrot.slane %v823, 1
      %v825 = vadd.f32 %v823, %v824
      %v826 = vmul.f32 %v646, %v646
      %v827 = vmul.f32 %v648, %v648
      %v828 = vmul.f32 %v651, %v651
      %v829 = vmul.f32 %v653, %v653
      %v830 = vmul.f32 %v656, %v656
      %v831 = vmul.f32 %v658, %v658
      %v832 = vmul.f32 %v661, %v661
      %v833 = vmul.f32 %v663, %v663
      %v834 = vmul.f32 %v666, %v666
      %v835 = vmul.f32 %v668, %v668
      %v836 = vmul.f32 %v671, %v671
      %v837 = vmul.f32 %v673, %v673
      %v838 = vmul.f32 %v676, %v676
      %v839 = vmul.f32 %v678, %v678
      %v840 = vmul.f32 %v681, %v681
      %v841 = vmul.f32 %v683, %v683
      %v842 = vmul.f32 %v686, %v686
      %v843 = vmul.f32 %v688, %v688
      %v844 = vmul.f32 %v691, %v691
      %v845 = vmul.f32 %v693, %v693
      %v846 = vmul.f32 %v696, %v696
      %v847 = vmul.f32 %v698, %v698
      %v848 = vmul.f32 %v701, %v701
      %v849 = vmul.f32 %v703, %v703
      %v850 = vmul.f32 %v706, %v706
      %v851 = vmul.f32 %v708, %v708
      %v852 = vmul.f32 %v711, %v711
      %v853 = vmul.f32 %v713, %v713
      %v854 = vmul.f32 %v716, %v716
      %v855 = vmul.f32 %v718, %v718
      %v856 = vmul.f32 %v721, %v721
      %v857 = vmul.f32 %v723, %v723
      %v858 = vadd.f32 %v826, %v827
      %v859 = vadd.f32 %v858, %v828
      %v860 = vadd.f32 %v859, %v829
      %v861 = vadd.f32 %v860, %v830
      %v862 = vadd.f32 %v861, %v831
      %v863 = vadd.f32 %v862, %v832
      %v864 = vadd.f32 %v863, %v833
      %v865 = vadd.f32 %v864, %v834
      %v866 = vadd.f32 %v865, %v835
      %v867 = vadd.f32 %v866, %v836
      %v868 = vadd.f32 %v867, %v837
      %v869 = vadd.f32 %v868, %v838
      %v870 = vadd.f32 %v869, %v839
      %v871 = vadd.f32 %v870, %v840
      %v872 = vadd.f32 %v871, %v841
      %v873 = vadd.f32 %v872, %v842
      %v874 = vadd.f32 %v873, %v843
      %v875 = vadd.f32 %v874, %v844
      %v876 = vadd.f32 %v875, %v845
      %v877 = vadd.f32 %v876, %v846
      %v878 = vadd.f32 %v877, %v847
      %v879 = vadd.f32 %v878, %v848
      %v880 = vadd.f32 %v879, %v849
      %v881 = vadd.f32 %v880, %v850
      %v882 = vadd.f32 %v881, %v851
      %v883 = vadd.f32 %v882, %v852
      %v884 = vadd.f32 %v883, %v853
      %v885 = vadd.f32 %v884, %v854
      %v886 = vadd.f32 %v885, %v855
      %v887 = vadd.f32 %v886, %v856
      %v888 = vadd.f32 %v887, %v857
      %v889 = vrot.slane %v888, 4
      %v890 = vadd.f32 %v888, %v889
      %v891 = vrot.slane %v890, 2
      %v892 = vadd.f32 %v890, %v891
      %v893 = vrot.slane %v892, 1
      %v894 = vadd.f32 %v892, %v893
      %927 = vrot.lane.b32.xlu0 %v646, 64
      %v928 = vpop.permute.xlu0 %927
      %929 = vrot.lane.b32.xlu0 %v648, 64
      %v930 = vpop.permute.xlu0 %929
      %931 = vrot.lane.b32.xlu0 %v651, 64
      %v932 = vpop.permute.xlu0 %931
      %933 = vrot.lane.b32.xlu0 %v653, 64
      %v934 = vpop.permute.xlu0 %933
      %935 = vrot.lane.b32.xlu0 %v656, 64
      %v936 = vpop.permute.xlu0 %935
      %937 = vrot.lane.b32.xlu0 %v658, 64
      %v938 = vpop.permute.xlu0 %937
      %939 = vrot.lane.b32.xlu0 %v661, 64
      %v940 = vpop.permute.xlu0 %939
      %941 = vrot.lane.b32.xlu0 %v663, 64
      %v942 = vpop.permute.xlu0 %941
      %943 = vrot.lane.b32.xlu0 %v666, 64
      %v944 = vpop.permute.xlu0 %943
      %945 = vrot.lane.b32.xlu0 %v668, 64
      %v946 = vpop.permute.xlu0 %945
      %947 = vrot.lane.b32.xlu0 %v671, 64
      %v948 = vpop.permute.xlu0 %947
      %949 = vrot.lane.b32.xlu0 %v673, 64
      %v950 = vpop.permute.xlu0 %949
      %951 = vrot.lane.b32.xlu0 %v676, 64
      %v952 = vpop.permute.xlu0 %951
      %953 = vrot.lane.b32.xlu0 %v678, 64
      %v954 = vpop.permute.xlu0 %953
      %955 = vrot.lane.b32.xlu0 %v681, 64
      %v956 = vpop.permute.xlu0 %955
      %957 = vrot.lane.b32.xlu0 %v683, 64
      %v958 = vpop.permute.xlu0 %957
      %959 = vrot.lane.b32.xlu0 %v686, 64
      %v960 = vpop.permute.xlu0 %959
      %961 = vrot.lane.b32.xlu0 %v688, 64
      %v962 = vpop.permute.xlu0 %961
      %963 = vrot.lane.b32.xlu0 %v691, 64
      %v964 = vpop.permute.xlu0 %963
      %965 = vrot.lane.b32.xlu0 %v693, 64
      %v966 = vpop.permute.xlu0 %965
      %967 = vrot.lane.b32.xlu0 %v696, 64
      %v968 = vpop.permute.xlu0 %967
      %969 = vrot.lane.b32.xlu0 %v698, 64
      %v970 = vpop.permute.xlu0 %969
      %971 = vrot.lane.b32.xlu0 %v701, 64
      %v972 = vpop.permute.xlu0 %971
      %973 = vrot.lane.b32.xlu0 %v703, 64
      %v974 = vpop.permute.xlu0 %973
      %975 = vrot.lane.b32.xlu0 %v706, 64
      %v976 = vpop.permute.xlu0 %975
      %977 = vrot.lane.b32.xlu0 %v708, 64
      %v978 = vpop.permute.xlu0 %977
      %979 = vrot.lane.b32.xlu0 %v711, 64
      %v980 = vpop.permute.xlu0 %979
      %981 = vrot.lane.b32.xlu0 %v713, 64
      %v982 = vpop.permute.xlu0 %981
      %983 = vrot.lane.b32.xlu0 %v716, 64
      %v984 = vpop.permute.xlu0 %983
      %985 = vrot.lane.b32.xlu0 %v718, 64
      %v986 = vpop.permute.xlu0 %985
      %987 = vrot.lane.b32.xlu0 %v721, 64
      %v988 = vpop.permute.xlu0 %987
      %989 = vrot.lane.b32.xlu0 %v723, 64
      %v990 = vpop.permute.xlu0 %989
      %v1023 = vmul.f32 %v646, %v928
      %v1024 = vmul.f32 %v648, %v930
      %v1025 = vmul.f32 %v651, %v932
      %v1026 = vmul.f32 %v653, %v934
      %v1027 = vmul.f32 %v656, %v936
      %v1028 = vmul.f32 %v658, %v938
      %v1029 = vmul.f32 %v661, %v940
      %v1030 = vmul.f32 %v663, %v942
      %v1031 = vmul.f32 %v666, %v944
      %v1032 = vmul.f32 %v668, %v946
      %v1033 = vmul.f32 %v671, %v948
      %v1034 = vmul.f32 %v673, %v950
      %v1035 = vmul.f32 %v676, %v952
      %v1036 = vmul.f32 %v678, %v954
      %v1037 = vmul.f32 %v681, %v956
      %v1038 = vmul.f32 %v683, %v958
      %v1039 = vmul.f32 %v686, %v960
      %v1040 = vmul.f32 %v688, %v962
      %v1041 = vmul.f32 %v691, %v964
      %v1042 = vmul.f32 %v693, %v966
      %v1043 = vmul.f32 %v696, %v968
      %v1044 = vmul.f32 %v698, %v970
      %v1045 = vmul.f32 %v701, %v972
      %v1046 = vmul.f32 %v703, %v974
      %v1047 = vmul.f32 %v706, %v976
      %v1048 = vmul.f32 %v708, %v978
      %v1049 = vmul.f32 %v711, %v980
      %v1050 = vmul.f32 %v713, %v982
      %v1051 = vmul.f32 %v716, %v984
      %v1052 = vmul.f32 %v718, %v986
      %v1053 = vmul.f32 %v721, %v988
      %v1054 = vmul.f32 %v723, %v990
      %vm1055 = vcmask 523264
      %v1056 = vsel %vm1055, %v1023, 0.0
      %v1057 = vsel %vm1055, %v1024, 0.0
      %v1058 = vadd.f32 %v1056, %v1057
      %v1059 = vsel %vm1055, %v1025, 0.0
      %v1060 = vadd.f32 %v1058, %v1059
      %v1061 = vsel %vm1055, %v1026, 0.0
      %v1062 = vadd.f32 %v1060, %v1061
      %v1063 = vsel %vm1055, %v1027, 0.0
      %v1064 = vadd.f32 %v1062, %v1063
      %v1065 = vsel %vm1055, %v1028, 0.0
      %v1066 = vadd.f32 %v1064, %v1065
      %v1067 = vsel %vm1055, %v1029, 0.0
      %v1068 = vadd.f32 %v1066, %v1067
      %v1069 = vsel %vm1055, %v1030, 0.0
      %v1070 = vadd.f32 %v1068, %v1069
      %v1071 = vsel %vm1055, %v1031, 0.0
      %v1072 = vadd.f32 %v1070, %v1071
      %v1073 = vsel %vm1055, %v1032, 0.0
      %v1074 = vadd.f32 %v1072, %v1073
      %v1075 = vsel %vm1055, %v1033, 0.0
      %v1076 = vadd.f32 %v1074, %v1075
      %v1077 = vsel %vm1055, %v1034, 0.0
      %v1078 = vadd.f32 %v1076, %v1077
      %v1079 = vsel %vm1055, %v1035, 0.0
      %v1080 = vadd.f32 %v1078, %v1079
      %v1081 = vsel %vm1055, %v1036, 0.0
      %v1082 = vadd.f32 %v1080, %v1081
      %v1083 = vsel %vm1055, %v1037, 0.0
      %v1084 = vadd.f32 %v1082, %v1083
      %v1085 = vsel %vm1055, %v1038, 0.0
      %v1086 = vadd.f32 %v1084, %v1085
      %v1087 = vsel %vm1055, %v1039, 0.0
      %v1088 = vadd.f32 %v1086, %v1087
      %v1089 = vsel %vm1055, %v1040, 0.0
      %v1090 = vadd.f32 %v1088, %v1089
      %v1091 = vsel %vm1055, %v1041, 0.0
      %v1092 = vadd.f32 %v1090, %v1091
      %v1093 = vsel %vm1055, %v1042, 0.0
      %v1094 = vadd.f32 %v1092, %v1093
      %v1095 = vsel %vm1055, %v1043, 0.0
      %v1096 = vadd.f32 %v1094, %v1095
      %v1097 = vsel %vm1055, %v1044, 0.0
      %v1098 = vadd.f32 %v1096, %v1097
      %v1099 = vsel %vm1055, %v1045, 0.0
      %v1100 = vadd.f32 %v1098, %v1099
      %v1101 = vsel %vm1055, %v1046, 0.0
      %v1102 = vadd.f32 %v1100, %v1101
      %v1103 = vsel %vm1055, %v1047, 0.0
      %v1104 = vadd.f32 %v1102, %v1103
      %v1105 = vsel %vm1055, %v1048, 0.0
      %v1106 = vadd.f32 %v1104, %v1105
      %v1107 = vsel %vm1055, %v1049, 0.0
      %v1108 = vadd.f32 %v1106, %v1107
      %v1109 = vsel %vm1055, %v1050, 0.0
      %v1110 = vadd.f32 %v1108, %v1109
      %v1111 = vsel %vm1055, %v1051, 0.0
      %v1112 = vadd.f32 %v1110, %v1111
      %v1113 = vsel %vm1055, %v1052, 0.0
      %v1114 = vadd.f32 %v1112, %v1113
      %v1115 = vsel %vm1055, %v1053, 0.0
      %v1116 = vadd.f32 %v1114, %v1115
      %v1117 = vsel %vm1055, %v1054, 0.0
      %v1118 = vadd.f32 %v1116, %v1117
      %v1119 = vrot.slane %v1118, 4
      %v1120 = vadd.f32 %v1118, %v1119
      %v1121 = vrot.slane %v1120, 2
      %v1122 = vadd.f32 %v1120, %v1121
      %v1123 = vrot.slane %v1122, 1
      %v1124 = vadd.f32 %v1122, %v1123
      %1126 = vrot.lane.b32.xlu0 %v1124, 64
      %v1127 = vpop.permute.xlu0 %1126
      %v1129 = vsel %vm1055, %v1124, %v1127
      %v1131 = vrot.slane %v1129, 6
      %vm1133 = vcmask 1040384
      %v1134 = vsel %vm1133, %v825, %v894
      %v1135 = vsel %vm543, %v1134, %v1131
      %v1136 = vld [vmem:[%s211] sm:$0x7]
      %v1137 = vadd.f32 %v1136, %v1135
      %1138 = vst [vmem:[%s211] sm:$0x7] %v1137
      %s1139 = sadd.s32 %s19, %s20
      %s1140 = smul.u32 32, %s1139
      %p1141 = scmp.lt.s32.totalorder %s1140, 63
      %s1142 = scalar_select %p1141, %s1140, 63
      %s1143 = smul.addr %s1142, 4
      %s1144 = scalar_lea.vmem %s2, %s1143
      %p1145 = scmp.lt.s32.totalorder %s19, 1
      %s1146 = scalar_select %p1145, %s19, 1
      %s1147 = smul.addr %s1146, 4
      %s1148 = scalar_lea.vmem %s3, %s1147
      // Predicated region
      $region33: #{conv_stem_forward.4} parent=27 // pred_check
        %p1149 = pneg %p96
      $region34: #{conv_stem_forward.4} parent=27 // pred_check_branch
        %1151 = sbr.rel (%p1149) target = $region36
      $region35: #{conv_stem_forward.4} parent=27 // pred_region
        %s1152 = sadd.s32 %s19, %s20
        %s1153 = smul.u32 32, %s1152
      $region36: #{conv_stem_forward.4} parent=27 // pred_fallthru
        _
      // Predicated region
      $region37: #{conv_stem_forward.4} parent=27 // pred_check
        %p1154 = pneg %p122
      $region38: #{conv_stem_forward.4} parent=27 // pred_check_branch
        %1156 = sbr.rel (%p1154) target = $region40
      $region39: #{conv_stem_forward.4} parent=27 // pred_region
        _
      $region40: #{conv_stem_forward.4} parent=27 // pred_fallthru
        _
    $region28: #{conv_stem_forward.4} parent=5 // pred_fallthru
      _
    %p1157 = scmp.le.s32.totalorder 2, %s10
    // Predicated region
    $region41: #{conv_stem_forward.4} parent=5 // pred_check
      %p1158 = pneg %p1157
    $region42: #{conv_stem_forward.4} parent=5 // pred_check_branch
      %1160 = sbr.rel (%p1158) target = $region44
    $region43: #{conv_stem_forward.4} parent=5 // pred_region
      %s1161 = ssub.s32 %s10, 2
      // Predicated region
      $region45: #{conv_stem_forward.4} parent=43 // pred_check
        %p1162 = pneg %p102
      $region46: #{conv_stem_forward.4} parent=43 // pred_check_branch
        %1164 = sbr.rel (%p1162) target = $region48
      $region47: #{conv_stem_forward.4} parent=43 // pred_region
        %s1165 = sadd.s32 %s21, %s22
        %s1166 = smul.u32 32, %s1165
        %p1167 = scmp.lt.s32.totalorder %s1166, 63
        %s1168 = scalar_select %p1167, %s1166, 63
        %s1169 = smul.addr %s1168, 4
        %s1170 = scalar_lea.vmem %s2, %s1169
      $region48: #{conv_stem_forward.4} parent=43 // pred_fallthru
        _
      // Predicated region
      $region49: #{conv_stem_forward.4} parent=43 // pred_check
        %p1171 = pneg %p128
      $region50: #{conv_stem_forward.4} parent=43 // pred_check_branch
        %1173 = sbr.rel (%p1171) target = $region52
      $region51: #{conv_stem_forward.4} parent=43 // pred_region
        %p1174 = scmp.lt.s32.totalorder %s21, 1
        %s1175 = scalar_select %p1174, %s21, 1
        %s1176 = smul.addr %s1175, 4
        %s1177 = scalar_lea.vmem %s3, %s1176
      $region52: #{conv_stem_forward.4} parent=43 // pred_fallthru
        _
    $region44: #{conv_stem_forward.4} parent=5 // pred_fallthru
      _
  $region6: #{conv_stem_forward.4} parent=0 // loop_footer
    %s14 = sadd.s32 1, %s10
  $region7: #{conv_stem_forward.4} parent=0 // loop_footer_branch
    %9 = sbr.rel target = $region3
  $region8: #{conv_stem_forward.4} parent=0 // loop_exit
    _

// kernel: conv_stem_forward.5
$region0: #{conv_stem_forward.5}
  #allocation0 [shape = 'u32[]', space=smem, size = 0x4, offset = 0x4, fixed_abs, tag = 'smem constant byte address 0x4 - core index']
  #allocation1 [shape = 'u32[72,128]{1,0:T(1,128)}', space=vmem, size = 0x9000, scoped, tag = 'internal scratch']
  %s0 = inlined_call_operand.vmem [shape: bf16[512,128], index: 0, kind: input, shape index: {}]
  %s1 = inlined_call_operand.vmem [shape: f32[9,64], index: 1, kind: input, shape index: {}]
  %s2 = inlined_call_operand.vmem [shape: bf16[512,128], index: 2, kind: output, shape index: {}]
  %s3 = sld [smem:[#allocation0]]
  $region18: #{conv_stem_forward.5} parent=0
    _
  %s5 = ssub.s32 1, %s3
  %s6 = scalar_select 0, %s5, %s3
  // Predicated region
  $region2: #{conv_stem_forward.5} parent=0 // pred_check
    _
  $region3: #{conv_stem_forward.5} parent=0 // pred_check_branch
    %8 = sbr.rel (0) target = $region5
  $region4: #{conv_stem_forward.5} parent=0 // pred_region
    _
  $region5: #{conv_stem_forward.5} parent=0 // pred_fallthru
    _
  // Predicated region
  $region6: #{conv_stem_forward.5} parent=0 // pred_check
    _
  $region7: #{conv_stem_forward.5} parent=0 // pred_check_branch
    %10 = sbr.rel (0) target = $region9
  $region8: #{conv_stem_forward.5} parent=0 // pred_region
    _
  $region9: #{conv_stem_forward.5} parent=0 // pred_fallthru
    _
  %v11 = vld [vmem:[%s1] sm:$0xff]
  %v12 = vld [vmem:[%s1 + $0x8] sm:$0x1]
  %v13 = vld [vmem:[%s0] sm:$0xf]
  %v14 = vld [vmem:[%s0 + $0x4] sm:$0xf]
  %v15 = vld [vmem:[%s0 + $0x8] sm:$0xf]
  %v16 = vld [vmem:[%s0 + $0xc] sm:$0xf]
  %v17 = vld [vmem:[%s0 + $0x10] sm:$0xf]
  %v18 = vld [vmem:[%s0 + $0x14] sm:$0xf]
  %v19 = vld [vmem:[%s0 + $0x18] sm:$0xf]
  %v20 = vld [vmem:[%s0 + $0x1c] sm:$0xf]
  %v21 = vld [vmem:[%s0 + $0x20] sm:$0xf]
  %v22 = vld [vmem:[%s0 + $0x24] sm:$0xf]
  %v23 = vld [vmem:[%s0 + $0x28] sm:$0xf]
  %v24 = vld [vmem:[%s0 + $0x2c] sm:$0xf]
  %v25 = vld [vmem:[%s0 + $0x30] sm:$0xf]
  %v26 = vld [vmem:[%s0 + $0x34] sm:$0xf]
  %v27 = vld [vmem:[%s0 + $0x38] sm:$0xf]
  %v28 = vld [vmem:[%s0 + $0x3c] sm:$0xf]
  %v29 = vld [vmem:[%s0 + $0x40] sm:$0xf]
  %v30 = vld [vmem:[%s0 + $0x44] sm:$0xf]
  %v31 = vld [vmem:[%s0 + $0x48] sm:$0xf]
  %v32 = vld [vmem:[%s0 + $0x4c] sm:$0xf]
  %v33 = vld [vmem:[%s0 + $0x50] sm:$0xf]
  %v34 = vld [vmem:[%s0 + $0x54] sm:$0xf]
  %v35 = vld [vmem:[%s0 + $0x58] sm:$0xf]
  %v36 = vld [vmem:[%s0 + $0x5c] sm:$0xf]
  %v37 = vld [vmem:[%s0 + $0x60] sm:$0xf]
  %v38 = vld [vmem:[%s0 + $0x64] sm:$0xf]
  %v39 = vld [vmem:[%s0 + $0x68] sm:$0xf]
  %v40 = vld [vmem:[%s0 + $0x6c] sm:$0xf]
  %v41 = vld [vmem:[%s0 + $0x70] sm:$0xf]
  %v42 = vld [vmem:[%s0 + $0x74] sm:$0xf]
  %v43 = vld [vmem:[%s0 + $0x78] sm:$0xf]
  %v44 = vld [vmem:[%s0 + $0x7c] sm:$0xf]
  %v45 = vld [vmem:[%s0 + $0x80] sm:$0xf]
  %v46 = vld [vmem:[%s0 + $0x84] sm:$0xf]
  %v47 = vld [vmem:[%s0 + $0x88] sm:$0xf]
  %v48 = vld [vmem:[%s0 + $0x8c] sm:$0xf]
  %v49 = vld [vmem:[%s0 + $0x90] sm:$0xf]
  %v50 = vld [vmem:[%s0 + $0x94] sm:$0xf]
  %v51 = vld [vmem:[%s0 + $0x98] sm:$0xf]
  %v52 = vld [vmem:[%s0 + $0x9c] sm:$0xf]
  %v53 = vld [vmem:[%s0 + $0xa0] sm:$0xf]
  %v54 = vld [vmem:[%s0 + $0xa4] sm:$0xf]
  %v55 = vld [vmem:[%s0 + $0xa8] sm:$0xf]
  %v56 = vld [vmem:[%s0 + $0xac] sm:$0xf]
  %v57 = vld [vmem:[%s0 + $0xb0] sm:$0xf]
  %v58 = vld [vmem:[%s0 + $0xb4] sm:$0xf]
  %v59 = vld [vmem:[%s0 + $0xb8] sm:$0xf]
  %v60 = vld [vmem:[%s0 + $0xbc] sm:$0xf]
  %v61 = vld [vmem:[%s0 + $0xc0] sm:$0xf]
  %v62 = vld [vmem:[%s0 + $0xc4] sm:$0xf]
  %v63 = vld [vmem:[%s0 + $0xc8] sm:$0xf]
  %v64 = vld [vmem:[%s0 + $0xcc] sm:$0xf]
  %v65 = vld [vmem:[%s0 + $0xd0] sm:$0xf]
  %v66 = vld [vmem:[%s0 + $0xd4] sm:$0xf]
  %v67 = vld [vmem:[%s0 + $0xd8] sm:$0xf]
  %v68 = vld [vmem:[%s0 + $0xdc] sm:$0xf]
  %v69 = vld [vmem:[%s0 + $0xe0] sm:$0xf]
  %v70 = vld [vmem:[%s0 + $0xe4] sm:$0xf]
  %v71 = vld [vmem:[%s0 + $0xe8] sm:$0xf]
  %v72 = vld [vmem:[%s0 + $0xec] sm:$0xf]
  %v73 = vld [vmem:[%s0 + $0xf0] sm:$0xf]
  %v74 = vld [vmem:[%s0 + $0xf4] sm:$0xf]
  %v75 = vld [vmem:[%s0 + $0xf8] sm:$0xf]
  %v76 = vld [vmem:[%s0 + $0xfc] sm:$0xf]
  %v77 = vunpack.c.l.bf16 %v13
  %v78 = vunpack.c.l.bf16 %v14
  %v79 = vunpack.c.l.bf16 %v15
  %v80 = vunpack.c.l.bf16 %v16
  %v81 = vunpack.c.l.bf16 %v17
  %v82 = vunpack.c.l.bf16 %v18
  %v83 = vunpack.c.l.bf16 %v19
  %v84 = vunpack.c.l.bf16 %v20
  %v85 = vunpack.c.l.bf16 %v21
  %v86 = vunpack.c.l.bf16 %v22
  %v87 = vunpack.c.l.bf16 %v23
  %v88 = vunpack.c.l.bf16 %v24
  %v89 = vunpack.c.l.bf16 %v25
  %v90 = vunpack.c.l.bf16 %v26
  %v91 = vunpack.c.l.bf16 %v27
  %v92 = vunpack.c.l.bf16 %v28
  %v93 = vunpack.c.l.bf16 %v29
  %v94 = vunpack.c.l.bf16 %v30
  %v95 = vunpack.c.l.bf16 %v31
  %v96 = vunpack.c.l.bf16 %v32
  %v97 = vunpack.c.l.bf16 %v33
  %v98 = vunpack.c.l.bf16 %v34
  %v99 = vunpack.c.l.bf16 %v35
  %v100 = vunpack.c.l.bf16 %v36
  %v101 = vunpack.c.l.bf16 %v37
  %v102 = vunpack.c.l.bf16 %v38
  %v103 = vunpack.c.l.bf16 %v39
  %v104 = vunpack.c.l.bf16 %v40
  %v105 = vunpack.c.l.bf16 %v41
  %v106 = vunpack.c.l.bf16 %v42
  %v107 = vunpack.c.l.bf16 %v43
  %v108 = vunpack.c.l.bf16 %v44
  %v109 = vunpack.c.l.bf16 %v45
  %v110 = vunpack.c.l.bf16 %v46
  %v111 = vunpack.c.l.bf16 %v47
  %v112 = vunpack.c.l.bf16 %v48
  %v113 = vunpack.c.l.bf16 %v49
  %v114 = vunpack.c.l.bf16 %v50
  %v115 = vunpack.c.l.bf16 %v51
  %v116 = vunpack.c.l.bf16 %v52
  %v117 = vunpack.c.l.bf16 %v53
  %v118 = vunpack.c.l.bf16 %v54
  %v119 = vunpack.c.l.bf16 %v55
  %v120 = vunpack.c.l.bf16 %v56
  %v121 = vunpack.c.l.bf16 %v57
  %v122 = vunpack.c.l.bf16 %v58
  %v123 = vunpack.c.l.bf16 %v59
  %v124 = vunpack.c.l.bf16 %v60
  %v125 = vunpack.c.l.bf16 %v61
  %v126 = vunpack.c.l.bf16 %v62
  %v127 = vunpack.c.l.bf16 %v63
  %v128 = vunpack.c.l.bf16 %v64
  %v129 = vunpack.c.l.bf16 %v65
  %v130 = vunpack.c.l.bf16 %v66
  %v131 = vunpack.c.l.bf16 %v67
  %v132 = vunpack.c.l.bf16 %v68
  %v133 = vunpack.c.l.bf16 %v69
  %v134 = vunpack.c.l.bf16 %v70
  %v135 = vunpack.c.l.bf16 %v71
  %v136 = vunpack.c.l.bf16 %v72
  %v137 = vunpack.c.l.bf16 %v73
  %v138 = vunpack.c.l.bf16 %v74
  %v139 = vunpack.c.l.bf16 %v75
  %v140 = vunpack.c.l.bf16 %v76
  %v141 = vperm.slane %v11, 0
  %v142 = vsub.f32 %v77, %v141
  %v143 = vsub.f32 %v78, %v141
  %v144 = vsub.f32 %v79, %v141
  %v145 = vsub.f32 %v80, %v141
  %v146 = vsub.f32 %v81, %v141
  %v147 = vsub.f32 %v82, %v141
  %v148 = vsub.f32 %v83, %v141
  %v149 = vsub.f32 %v84, %v141
  %v150 = vsub.f32 %v85, %v141
  %v151 = vsub.f32 %v86, %v141
  %v152 = vsub.f32 %v87, %v141
  %v153 = vsub.f32 %v88, %v141
  %v154 = vsub.f32 %v89, %v141
  %v155 = vsub.f32 %v90, %v141
  %v156 = vsub.f32 %v91, %v141
  %v157 = vsub.f32 %v92, %v141
  %v158 = vsub.f32 %v93, %v141
  %v159 = vsub.f32 %v94, %v141
  %v160 = vsub.f32 %v95, %v141
  %v161 = vsub.f32 %v96, %v141
  %v162 = vsub.f32 %v97, %v141
  %v163 = vsub.f32 %v98, %v141
  %v164 = vsub.f32 %v99, %v141
  %v165 = vsub.f32 %v100, %v141
  %v166 = vsub.f32 %v101, %v141
  %v167 = vsub.f32 %v102, %v141
  %v168 = vsub.f32 %v103, %v141
  %v169 = vsub.f32 %v104, %v141
  %v170 = vsub.f32 %v105, %v141
  %v171 = vsub.f32 %v106, %v141
  %v172 = vsub.f32 %v107, %v141
  %v173 = vsub.f32 %v108, %v141
  %v174 = vsub.f32 %v109, %v141
  %v175 = vsub.f32 %v110, %v141
  %v176 = vsub.f32 %v111, %v141
  %v177 = vsub.f32 %v112, %v141
  %v178 = vsub.f32 %v113, %v141
  %v179 = vsub.f32 %v114, %v141
  %v180 = vsub.f32 %v115, %v141
  %v181 = vsub.f32 %v116, %v141
  %v182 = vsub.f32 %v117, %v141
  %v183 = vsub.f32 %v118, %v141
  %v184 = vsub.f32 %v119, %v141
  %v185 = vsub.f32 %v120, %v141
  %v186 = vsub.f32 %v121, %v141
  %v187 = vsub.f32 %v122, %v141
  %v188 = vsub.f32 %v123, %v141
  %v189 = vsub.f32 %v124, %v141
  %v190 = vsub.f32 %v125, %v141
  %v191 = vsub.f32 %v126, %v141
  %v192 = vsub.f32 %v127, %v141
  %v193 = vsub.f32 %v128, %v141
  %v194 = vsub.f32 %v129, %v141
  %v195 = vsub.f32 %v130, %v141
  %v196 = vsub.f32 %v131, %v141
  %v197 = vsub.f32 %v132, %v141
  %v198 = vsub.f32 %v133, %v141
  %v199 = vsub.f32 %v134, %v141
  %v200 = vsub.f32 %v135, %v141
  %v201 = vsub.f32 %v136, %v141
  %v202 = vsub.f32 %v137, %v141
  %v203 = vsub.f32 %v138, %v141
  %v204 = vsub.f32 %v139, %v141
  %v205 = vsub.f32 %v140, %v141
  %v206 = vperm.slane %v11, 1
  %208 = vrot.lane.b32.xlu0 %v206, 64
  %v209 = vpop.permute.xlu0 %208
  %v211 = vsub.f32 %v77, %v209
  %v212 = vsub.f32 %v78, %v209
  %v213 = vsub.f32 %v79, %v209
  %v214 = vsub.f32 %v80, %v209
  %v215 = vsub.f32 %v81, %v209
  %v216 = vsub.f32 %v82, %v209
  %v217 = vsub.f32 %v83, %v209
  %v218 = vsub.f32 %v84, %v209
  %v219 = vsub.f32 %v85, %v209
  %v220 = vsub.f32 %v86, %v209
  %v221 = vsub.f32 %v87, %v209
  %v222 = vsub.f32 %v88, %v209
  %v223 = vsub.f32 %v89, %v209
  %v224 = vsub.f32 %v90, %v209
  %v225 = vsub.f32 %v91, %v209
  %v226 = vsub.f32 %v92, %v209
  %v227 = vsub.f32 %v93, %v209
  %v228 = vsub.f32 %v94, %v209
  %v229 = vsub.f32 %v95, %v209
  %v230 = vsub.f32 %v96, %v209
  %v231 = vsub.f32 %v97, %v209
  %v232 = vsub.f32 %v98, %v209
  %v233 = vsub.f32 %v99, %v209
  %v234 = vsub.f32 %v100, %v209
  %v235 = vsub.f32 %v101, %v209
  %v236 = vsub.f32 %v102, %v209
  %v237 = vsub.f32 %v103, %v209
  %v238 = vsub.f32 %v104, %v209
  %v239 = vsub.f32 %v105, %v209
  %v240 = vsub.f32 %v106, %v209
  %v241 = vsub.f32 %v107, %v209
  %v242 = vsub.f32 %v108, %v209
  %v243 = vsub.f32 %v109, %v209
  %v244 = vsub.f32 %v110, %v209
  %v245 = vsub.f32 %v111, %v209
  %v246 = vsub.f32 %v112, %v209
  %v247 = vsub.f32 %v113, %v209
  %v248 = vsub.f32 %v114, %v209
  %v249 = vsub.f32 %v115, %v209
  %v250 = vsub.f32 %v116, %v209
  %v251 = vsub.f32 %v117, %v209
  %v252 = vsub.f32 %v118, %v209
  %v253 = vsub.f32 %v119, %v209
  %v254 = vsub.f32 %v120, %v209
  %v255 = vsub.f32 %v121, %v209
  %v256 = vsub.f32 %v122, %v209
  %v257 = vsub.f32 %v123, %v209
  %v258 = vsub.f32 %v124, %v209
  %v259 = vsub.f32 %v125, %v209
  %v260 = vsub.f32 %v126, %v209
  %v261 = vsub.f32 %v127, %v209
  %v262 = vsub.f32 %v128, %v209
  %v263 = vsub.f32 %v129, %v209
  %v264 = vsub.f32 %v130, %v209
  %v265 = vsub.f32 %v131, %v209
  %v266 = vsub.f32 %v132, %v209
  %v267 = vsub.f32 %v133, %v209
  %v268 = vsub.f32 %v134, %v209
  %v269 = vsub.f32 %v135, %v209
  %v270 = vsub.f32 %v136, %v209
  %v271 = vsub.f32 %v137, %v209
  %v272 = vsub.f32 %v138, %v209
  %v273 = vsub.f32 %v139, %v209
  %v274 = vsub.f32 %v140, %v209
  %v275 = vperm.slane %v11, 2
  %v276 = vmul.f32 %v275, %v142
  %v277 = vmul.f32 %v275, %v143
  %v278 = vmul.f32 %v275, %v144
  %v279 = vmul.f32 %v275, %v145
  %v280 = vmul.f32 %v275, %v146
  %v281 = vmul.f32 %v275, %v147
  %v282 = vmul.f32 %v275, %v148
  %v283 = vmul.f32 %v275, %v149
  %v284 = vmul.f32 %v275, %v150
  %v285 = vmul.f32 %v275, %v151
  %v286 = vmul.f32 %v275, %v152
  %v287 = vmul.f32 %v275, %v153
  %v288 = vmul.f32 %v275, %v154
  %v289 = vmul.f32 %v275, %v155
  %v290 = vmul.f32 %v275, %v156
  %v291 = vmul.f32 %v275, %v157
  %v292 = vmul.f32 %v275, %v158
  %v293 = vmul.f32 %v275, %v159
  %v294 = vmul.f32 %v275, %v160
  %v295 = vmul.f32 %v275, %v161
  %v296 = vmul.f32 %v275, %v162
  %v297 = vmul.f32 %v275, %v163
  %v298 = vmul.f32 %v275, %v164
  %v299 = vmul.f32 %v275, %v165
  %v300 = vmul.f32 %v275, %v166
  %v301 = vmul.f32 %v275, %v167
  %v302 = vmul.f32 %v275, %v168
  %v303 = vmul.f32 %v275, %v169
  %v304 = vmul.f32 %v275, %v170
  %v305 = vmul.f32 %v275, %v171
  %v306 = vmul.f32 %v275, %v172
  %v307 = vmul.f32 %v275, %v173
  %v308 = vmul.f32 %v275, %v174
  %v309 = vmul.f32 %v275, %v175
  %v310 = vmul.f32 %v275, %v176
  %v311 = vmul.f32 %v275, %v177
  %v312 = vmul.f32 %v275, %v178
  %v313 = vmul.f32 %v275, %v179
  %v314 = vmul.f32 %v275, %v180
  %v315 = vmul.f32 %v275, %v181
  %v316 = vmul.f32 %v275, %v182
  %v317 = vmul.f32 %v275, %v183
  %v318 = vmul.f32 %v275, %v184
  %v319 = vmul.f32 %v275, %v185
  %v320 = vmul.f32 %v275, %v186
  %v321 = vmul.f32 %v275, %v187
  %v322 = vmul.f32 %v275, %v188
  %v323 = vmul.f32 %v275, %v189
  %v324 = vmul.f32 %v275, %v190
  %v325 = vmul.f32 %v275, %v191
  %v326 = vmul.f32 %v275, %v192
  %v327 = vmul.f32 %v275, %v193
  %v328 = vmul.f32 %v275, %v194
  %v329 = vmul.f32 %v275, %v195
  %v330 = vmul.f32 %v275, %v196
  %v331 = vmul.f32 %v275, %v197
  %v332 = vmul.f32 %v275, %v198
  %v333 = vmul.f32 %v275, %v199
  %v334 = vmul.f32 %v275, %v200
  %v335 = vmul.f32 %v275, %v201
  %v336 = vmul.f32 %v275, %v202
  %v337 = vmul.f32 %v275, %v203
  %v338 = vmul.f32 %v275, %v204
  %v339 = vmul.f32 %v275, %v205
  %v340 = vperm.slane %v11, 3
  %405 = vrot.lane.b32.xlu0 %v211, 64
  %v406 = vpop.permute.xlu0 %405
  %407 = vrot.lane.b32.xlu0 %v212, 64
  %v408 = vpop.permute.xlu0 %407
  %409 = vrot.lane.b32.xlu0 %v213, 64
  %v410 = vpop.permute.xlu0 %409
  %411 = vrot.lane.b32.xlu0 %v214, 64
  %v412 = vpop.permute.xlu0 %411
  %413 = vrot.lane.b32.xlu0 %v215, 64
  %v414 = vpop.permute.xlu0 %413
  %415 = vrot.lane.b32.xlu0 %v216, 64
  %v416 = vpop.permute.xlu0 %415
  %417 = vrot.lane.b32.xlu0 %v217, 64
  %v418 = vpop.permute.xlu0 %417
  %419 = vrot.lane.b32.xlu0 %v218, 64
  %v420 = vpop.permute.xlu0 %419
  %421 = vrot.lane.b32.xlu0 %v219, 64
  %v422 = vpop.permute.xlu0 %421
  %423 = vrot.lane.b32.xlu0 %v220, 64
  %v424 = vpop.permute.xlu0 %423
  %425 = vrot.lane.b32.xlu0 %v221, 64
  %v426 = vpop.permute.xlu0 %425
  %427 = vrot.lane.b32.xlu0 %v222, 64
  %v428 = vpop.permute.xlu0 %427
  %429 = vrot.lane.b32.xlu0 %v223, 64
  %v430 = vpop.permute.xlu0 %429
  %431 = vrot.lane.b32.xlu0 %v224, 64
  %v432 = vpop.permute.xlu0 %431
  %433 = vrot.lane.b32.xlu0 %v225, 64
  %v434 = vpop.permute.xlu0 %433
  %435 = vrot.lane.b32.xlu0 %v226, 64
  %v436 = vpop.permute.xlu0 %435
  %437 = vrot.lane.b32.xlu0 %v227, 64
  %v438 = vpop.permute.xlu0 %437
  %439 = vrot.lane.b32.xlu0 %v228, 64
  %v440 = vpop.permute.xlu0 %439
  %441 = vrot.lane.b32.xlu0 %v229, 64
  %v442 = vpop.permute.xlu0 %441
  %443 = vrot.lane.b32.xlu0 %v230, 64
  %v444 = vpop.permute.xlu0 %443
  %445 = vrot.lane.b32.xlu0 %v231, 64
  %v446 = vpop.permute.xlu0 %445
  %447 = vrot.lane.b32.xlu0 %v232, 64
  %v448 = vpop.permute.xlu0 %447
  %449 = vrot.lane.b32.xlu0 %v233, 64
  %v450 = vpop.permute.xlu0 %449
  %451 = vrot.lane.b32.xlu0 %v234, 64
  %v452 = vpop.permute.xlu0 %451
  %453 = vrot.lane.b32.xlu0 %v235, 64
  %v454 = vpop.permute.xlu0 %453
  %455 = vrot.lane.b32.xlu0 %v236, 64
  %v456 = vpop.permute.xlu0 %455
  %457 = vrot.lane.b32.xlu0 %v237, 64
  %v458 = vpop.permute.xlu0 %457
  %459 = vrot.lane.b32.xlu0 %v238, 64
  %v460 = vpop.permute.xlu0 %459
  %461 = vrot.lane.b32.xlu0 %v239, 64
  %v462 = vpop.permute.xlu0 %461
  %463 = vrot.lane.b32.xlu0 %v240, 64
  %v464 = vpop.permute.xlu0 %463
  %465 = vrot.lane.b32.xlu0 %v241, 64
  %v466 = vpop.permute.xlu0 %465
  %467 = vrot.lane.b32.xlu0 %v242, 64
  %v468 = vpop.permute.xlu0 %467
  %469 = vrot.lane.b32.xlu0 %v243, 64
  %v470 = vpop.permute.xlu0 %469
  %471 = vrot.lane.b32.xlu0 %v244, 64
  %v472 = vpop.permute.xlu0 %471
  %473 = vrot.lane.b32.xlu0 %v245, 64
  %v474 = vpop.permute.xlu0 %473
  %475 = vrot.lane.b32.xlu0 %v246, 64
  %v476 = vpop.permute.xlu0 %475
  %477 = vrot.lane.b32.xlu0 %v247, 64
  %v478 = vpop.permute.xlu0 %477
  %479 = vrot.lane.b32.xlu0 %v248, 64
  %v480 = vpop.permute.xlu0 %479
  %481 = vrot.lane.b32.xlu0 %v249, 64
  %v482 = vpop.permute.xlu0 %481
  %483 = vrot.lane.b32.xlu0 %v250, 64
  %v484 = vpop.permute.xlu0 %483
  %485 = vrot.lane.b32.xlu0 %v251, 64
  %v486 = vpop.permute.xlu0 %485
  %487 = vrot.lane.b32.xlu0 %v252, 64
  %v488 = vpop.permute.xlu0 %487
  %489 = vrot.lane.b32.xlu0 %v253, 64
  %v490 = vpop.permute.xlu0 %489
  %491 = vrot.lane.b32.xlu0 %v254, 64
  %v492 = vpop.permute.xlu0 %491
  %493 = vrot.lane.b32.xlu0 %v255, 64
  %v494 = vpop.permute.xlu0 %493
  %495 = vrot.lane.b32.xlu0 %v256, 64
  %v496 = vpop.permute.xlu0 %495
  %497 = vrot.lane.b32.xlu0 %v257, 64
  %v498 = vpop.permute.xlu0 %497
  %499 = vrot.lane.b32.xlu0 %v258, 64
  %v500 = vpop.permute.xlu0 %499
  %501 = vrot.lane.b32.xlu0 %v259, 64
  %v502 = vpop.permute.xlu0 %501
  %503 = vrot.lane.b32.xlu0 %v260, 64
  %v504 = vpop.permute.xlu0 %503
  %505 = vrot.lane.b32.xlu0 %v261, 64
  %v506 = vpop.permute.xlu0 %505
  %507 = vrot.lane.b32.xlu0 %v262, 64
  %v508 = vpop.permute.xlu0 %507
  %509 = vrot.lane.b32.xlu0 %v263, 64
  %v510 = vpop.permute.xlu0 %509
  %511 = vrot.lane.b32.xlu0 %v264, 64
  %v512 = vpop.permute.xlu0 %511
  %513 = vrot.lane.b32.xlu0 %v265, 64
  %v514 = vpop.permute.xlu0 %513
  %515 = vrot.lane.b32.xlu0 %v266, 64
  %v516 = vpop.permute.xlu0 %515
  %517 = vrot.lane.b32.xlu0 %v267, 64
  %v518 = vpop.permute.xlu0 %517
  %519 = vrot.lane.b32.xlu0 %v268, 64
  %v520 = vpop.permute.xlu0 %519
  %521 = vrot.lane.b32.xlu0 %v269, 64
  %v522 = vpop.permute.xlu0 %521
  %523 = vrot.lane.b32.xlu0 %v270, 64
  %v524 = vpop.permute.xlu0 %523
  %525 = vrot.lane.b32.xlu0 %v271, 64
  %v526 = vpop.permute.xlu0 %525
  %527 = vrot.lane.b32.xlu0 %v272, 64
  %v528 = vpop.permute.xlu0 %527
  %529 = vrot.lane.b32.xlu0 %v273, 64
  %v530 = vpop.permute.xlu0 %529
  %531 = vrot.lane.b32.xlu0 %v274, 64
  %v532 = vpop.permute.xlu0 %531
  %v597 = vmul.f32 %v340, %v406
  %v598 = vmul.f32 %v340, %v408
  %v599 = vmul.f32 %v340, %v410
  %v600 = vmul.f32 %v340, %v412
  %v601 = vmul.f32 %v340, %v414
  %v602 = vmul.f32 %v340, %v416
  %v603 = vmul.f32 %v340, %v418
  %v604 = vmul.f32 %v340, %v420
  %v605 = vmul.f32 %v340, %v422
  %v606 = vmul.f32 %v340, %v424
  %v607 = vmul.f32 %v340, %v426
  %v608 = vmul.f32 %v340, %v428
  %v609 = vmul.f32 %v340, %v430
  %v610 = vmul.f32 %v340, %v432
  %v611 = vmul.f32 %v340, %v434
  %v612 = vmul.f32 %v340, %v436
  %v613 = vmul.f32 %v340, %v438
  %v614 = vmul.f32 %v340, %v440
  %v615 = vmul.f32 %v340, %v442
  %v616 = vmul.f32 %v340, %v444
  %v617 = vmul.f32 %v340, %v446
  %v618 = vmul.f32 %v340, %v448
  %v619 = vmul.f32 %v340, %v450
  %v620 = vmul.f32 %v340, %v452
  %v621 = vmul.f32 %v340, %v454
  %v622 = vmul.f32 %v340, %v456
  %v623 = vmul.f32 %v340, %v458
  %v624 = vmul.f32 %v340, %v460
  %v625 = vmul.f32 %v340, %v462
  %v626 = vmul.f32 %v340, %v464
  %v627 = vmul.f32 %v340, %v466
  %v628 = vmul.f32 %v340, %v468
  %v629 = vmul.f32 %v340, %v470
  %v630 = vmul.f32 %v340, %v472
  %v631 = vmul.f32 %v340, %v474
  %v632 = vmul.f32 %v340, %v476
  %v633 = vmul.f32 %v340, %v478
  %v634 = vmul.f32 %v340, %v480
  %v635 = vmul.f32 %v340, %v482
  %v636 = vmul.f32 %v340, %v484
  %v637 = vmul.f32 %v340, %v486
  %v638 = vmul.f32 %v340, %v488
  %v639 = vmul.f32 %v340, %v490
  %v640 = vmul.f32 %v340, %v492
  %v641 = vmul.f32 %v340, %v494
  %v642 = vmul.f32 %v340, %v496
  %v643 = vmul.f32 %v340, %v498
  %v644 = vmul.f32 %v340, %v500
  %v645 = vmul.f32 %v340, %v502
  %v646 = vmul.f32 %v340, %v504
  %v647 = vmul.f32 %v340, %v506
  %v648 = vmul.f32 %v340, %v508
  %v649 = vmul.f32 %v340, %v510
  %v650 = vmul.f32 %v340, %v512
  %v651 = vmul.f32 %v340, %v514
  %v652 = vmul.f32 %v340, %v516
  %v653 = vmul.f32 %v340, %v518
  %v654 = vmul.f32 %v340, %v520
  %v655 = vmul.f32 %v340, %v522
  %v656 = vmul.f32 %v340, %v524
  %v657 = vmul.f32 %v340, %v526
  %v658 = vmul.f32 %v340, %v528
  %v659 = vmul.f32 %v340, %v530
  %v660 = vmul.f32 %v340, %v532
  %v661 = vadd.f32 %v276, %v597
  %v662 = vadd.f32 %v277, %v598
  %v663 = vadd.f32 %v278, %v599
  %v664 = vadd.f32 %v279, %v600
  %v665 = vadd.f32 %v280, %v601
  %v666 = vadd.f32 %v281, %v602
  %v667 = vadd.f32 %v282, %v603
  %v668 = vadd.f32 %v283, %v604
  %v669 = vadd.f32 %v284, %v605
  %v670 = vadd.f32 %v285, %v606
  %v671 = vadd.f32 %v286, %v607
  %v672 = vadd.f32 %v287, %v608
  %v673 = vadd.f32 %v288, %v609
  %v674 = vadd.f32 %v289, %v610
  %v675 = vadd.f32 %v290, %v611
  %v676 = vadd.f32 %v291, %v612
  %v677 = vadd.f32 %v292, %v613
  %v678 = vadd.f32 %v293, %v614
  %v679 = vadd.f32 %v294, %v615
  %v680 = vadd.f32 %v295, %v616
  %v681 = vadd.f32 %v296, %v617
  %v682 = vadd.f32 %v297, %v618
  %v683 = vadd.f32 %v298, %v619
  %v684 = vadd.f32 %v299, %v620
  %v685 = vadd.f32 %v300, %v621
  %v686 = vadd.f32 %v301, %v622
  %v687 = vadd.f32 %v302, %v623
  %v688 = vadd.f32 %v303, %v624
  %v689 = vadd.f32 %v304, %v625
  %v690 = vadd.f32 %v305, %v626
  %v691 = vadd.f32 %v306, %v627
  %v692 = vadd.f32 %v307, %v628
  %v693 = vadd.f32 %v308, %v629
  %v694 = vadd.f32 %v309, %v630
  %v695 = vadd.f32 %v310, %v631
  %v696 = vadd.f32 %v311, %v632
  %v697 = vadd.f32 %v312, %v633
  %v698 = vadd.f32 %v313, %v634
  %v699 = vadd.f32 %v314, %v635
  %v700 = vadd.f32 %v315, %v636
  %v701 = vadd.f32 %v316, %v637
  %v702 = vadd.f32 %v317, %v638
  %v703 = vadd.f32 %v318, %v639
  %v704 = vadd.f32 %v319, %v640
  %v705 = vadd.f32 %v320, %v641
  %v706 = vadd.f32 %v321, %v642
  %v707 = vadd.f32 %v322, %v643
  %v708 = vadd.f32 %v323, %v644
  %v709 = vadd.f32 %v324, %v645
  %v710 = vadd.f32 %v325, %v646
  %v711 = vadd.f32 %v326, %v647
  %v712 = vadd.f32 %v327, %v648
  %v713 = vadd.f32 %v328, %v649
  %v714 = vadd.f32 %v329, %v650
  %v715 = vadd.f32 %v330, %v651
  %v716 = vadd.f32 %v331, %v652
  %v717 = vadd.f32 %v332, %v653
  %v718 = vadd.f32 %v333, %v654
  %v719 = vadd.f32 %v334, %v655
  %v720 = vadd.f32 %v335, %v656
  %v721 = vadd.f32 %v336, %v657
  %v722 = vadd.f32 %v337, %v658
  %v723 = vadd.f32 %v338, %v659
  %v724 = vadd.f32 %v339, %v660
  %v725 = vperm.slane %v11, 6
  %v726 = vadd.f32 %v661, %v725
  %v727 = vadd.f32 %v662, %v725
  %v728 = vadd.f32 %v663, %v725
  %v729 = vadd.f32 %v664, %v725
  %v730 = vadd.f32 %v665, %v725
  %v731 = vadd.f32 %v666, %v725
  %v732 = vadd.f32 %v667, %v725
  %v733 = vadd.f32 %v668, %v725
  %v734 = vadd.f32 %v669, %v725
  %v735 = vadd.f32 %v670, %v725
  %v736 = vadd.f32 %v671, %v725
  %v737 = vadd.f32 %v672, %v725
  %v738 = vadd.f32 %v673, %v725
  %v739 = vadd.f32 %v674, %v725
  %v740 = vadd.f32 %v675, %v725
  %v741 = vadd.f32 %v676, %v725
  %v742 = vadd.f32 %v677, %v725
  %v743 = vadd.f32 %v678, %v725
  %v744 = vadd.f32 %v679, %v725
  %v745 = vadd.f32 %v680, %v725
  %v746 = vadd.f32 %v681, %v725
  %v747 = vadd.f32 %v682, %v725
  %v748 = vadd.f32 %v683, %v725
  %v749 = vadd.f32 %v684, %v725
  %v750 = vadd.f32 %v685, %v725
  %v751 = vadd.f32 %v686, %v725
  %v752 = vadd.f32 %v687, %v725
  %v753 = vadd.f32 %v688, %v725
  %v754 = vadd.f32 %v689, %v725
  %v755 = vadd.f32 %v690, %v725
  %v756 = vadd.f32 %v691, %v725
  %v757 = vadd.f32 %v692, %v725
  %v758 = vadd.f32 %v693, %v725
  %v759 = vadd.f32 %v694, %v725
  %v760 = vadd.f32 %v695, %v725
  %v761 = vadd.f32 %v696, %v725
  %v762 = vadd.f32 %v697, %v725
  %v763 = vadd.f32 %v698, %v725
  %v764 = vadd.f32 %v699, %v725
  %v765 = vadd.f32 %v700, %v725
  %v766 = vadd.f32 %v701, %v725
  %v767 = vadd.f32 %v702, %v725
  %v768 = vadd.f32 %v703, %v725
  %v769 = vadd.f32 %v704, %v725
  %v770 = vadd.f32 %v705, %v725
  %v771 = vadd.f32 %v706, %v725
  %v772 = vadd.f32 %v707, %v725
  %v773 = vadd.f32 %v708, %v725
  %v774 = vadd.f32 %v709, %v725
  %v775 = vadd.f32 %v710, %v725
  %v776 = vadd.f32 %v711, %v725
  %v777 = vadd.f32 %v712, %v725
  %v778 = vadd.f32 %v713, %v725
  %v779 = vadd.f32 %v714, %v725
  %v780 = vadd.f32 %v715, %v725
  %v781 = vadd.f32 %v716, %v725
  %v782 = vadd.f32 %v717, %v725
  %v783 = vadd.f32 %v718, %v725
  %v784 = vadd.f32 %v719, %v725
  %v785 = vadd.f32 %v720, %v725
  %v786 = vadd.f32 %v721, %v725
  %v787 = vadd.f32 %v722, %v725
  %v788 = vadd.f32 %v723, %v725
  %v789 = vadd.f32 %v724, %v725
  %v790 = vperm.slane %v11, 4
  %v791 = vmul.f32 %v790, %v142
  %v792 = vmul.f32 %v790, %v143
  %v793 = vmul.f32 %v790, %v144
  %v794 = vmul.f32 %v790, %v145
  %v795 = vmul.f32 %v790, %v146
  %v796 = vmul.f32 %v790, %v147
  %v797 = vmul.f32 %v790, %v148
  %v798 = vmul.f32 %v790, %v149
  %v799 = vmul.f32 %v790, %v150
  %v800 = vmul.f32 %v790, %v151
  %v801 = vmul.f32 %v790, %v152
  %v802 = vmul.f32 %v790, %v153
  %v803 = vmul.f32 %v790, %v154
  %v804 = vmul.f32 %v790, %v155
  %v805 = vmul.f32 %v790, %v156
  %v806 = vmul.f32 %v790, %v157
  %v807 = vmul.f32 %v790, %v158
  %v808 = vmul.f32 %v790, %v159
  %v809 = vmul.f32 %v790, %v160
  %v810 = vmul.f32 %v790, %v161
  %v811 = vmul.f32 %v790, %v162
  %v812 = vmul.f32 %v790, %v163
  %v813 = vmul.f32 %v790, %v164
  %v814 = vmul.f32 %v790, %v165
  %v815 = vmul.f32 %v790, %v166
  %v816 = vmul.f32 %v790, %v167
  %v817 = vmul.f32 %v790, %v168
  %v818 = vmul.f32 %v790, %v169
  %v819 = vmul.f32 %v790, %v170
  %v820 = vmul.f32 %v790, %v171
  %v821 = vmul.f32 %v790, %v172
  %v822 = vmul.f32 %v790, %v173
  %v823 = vmul.f32 %v790, %v174
  %v824 = vmul.f32 %v790, %v175
  %v825 = vmul.f32 %v790, %v176
  %v826 = vmul.f32 %v790, %v177
  %v827 = vmul.f32 %v790, %v178
  %v828 = vmul.f32 %v790, %v179
  %v829 = vmul.f32 %v790, %v180
  %v830 = vmul.f32 %v790, %v181
  %v831 = vmul.f32 %v790, %v182
  %v832 = vmul.f32 %v790, %v183
  %v833 = vmul.f32 %v790, %v184
  %v834 = vmul.f32 %v790, %v185
  %v835 = vmul.f32 %v790, %v186
  %v836 = vmul.f32 %v790, %v187
  %v837 = vmul.f32 %v790, %v188
  %v838 = vmul.f32 %v790, %v189
  %v839 = vmul.f32 %v790, %v190
  %v840 = vmul.f32 %v790, %v191
  %v841 = vmul.f32 %v790, %v192
  %v842 = vmul.f32 %v790, %v193
  %v843 = vmul.f32 %v790, %v194
  %v844 = vmul.f32 %v790, %v195
  %v845 = vmul.f32 %v790, %v196
  %v846 = vmul.f32 %v790, %v197
  %v847 = vmul.f32 %v790, %v198
  %v848 = vmul.f32 %v790, %v199
  %v849 = vmul.f32 %v790, %v200
  %v850 = vmul.f32 %v790, %v201
  %v851 = vmul.f32 %v790, %v202
  %v852 = vmul.f32 %v790, %v203
  %v853 = vmul.f32 %v790, %v204
  %v854 = vmul.f32 %v790, %v205
  %v855 = vperm.slane %v11, 5
  %v856 = vmul.f32 %v855, %v406
  %v857 = vmul.f32 %v855, %v408
  %v858 = vmul.f32 %v855, %v410
  %v859 = vmul.f32 %v855, %v412
  %v860 = vmul.f32 %v855, %v414
  %v861 = vmul.f32 %v855, %v416
  %v862 = vmul.f32 %v855, %v418
  %v863 = vmul.f32 %v855, %v420
  %v864 = vmul.f32 %v855, %v422
  %v865 = vmul.f32 %v855, %v424
  %v866 = vmul.f32 %v855, %v426
  %v867 = vmul.f32 %v855, %v428
  %v868 = vmul.f32 %v855, %v430
  %v869 = vmul.f32 %v855, %v432
  %v870 = vmul.f32 %v855, %v434
  %v871 = vmul.f32 %v855, %v436
  %v872 = vmul.f32 %v855, %v438
  %v873 = vmul.f32 %v855, %v440
  %v874 = vmul.f32 %v855, %v442
  %v875 = vmul.f32 %v855, %v444
  %v876 = vmul.f32 %v855, %v446
  %v877 = vmul.f32 %v855, %v448
  %v878 = vmul.f32 %v855, %v450
  %v879 = vmul.f32 %v855, %v452
  %v880 = vmul.f32 %v855, %v454
  %v881 = vmul.f32 %v855, %v456
  %v882 = vmul.f32 %v855, %v458
  %v883 = vmul.f32 %v855, %v460
  %v884 = vmul.f32 %v855, %v462
  %v885 = vmul.f32 %v855, %v464
  %v886 = vmul.f32 %v855, %v466
  %v887 = vmul.f32 %v855, %v468
  %v888 = vmul.f32 %v855, %v470
  %v889 = vmul.f32 %v855, %v472
  %v890 = vmul.f32 %v855, %v474
  %v891 = vmul.f32 %v855, %v476
  %v892 = vmul.f32 %v855, %v478
  %v893 = vmul.f32 %v855, %v480
  %v894 = vmul.f32 %v855, %v482
  %v895 = vmul.f32 %v855, %v484
  %v896 = vmul.f32 %v855, %v486
  %v897 = vmul.f32 %v855, %v488
  %v898 = vmul.f32 %v855, %v490
  %v899 = vmul.f32 %v855, %v492
  %v900 = vmul.f32 %v855, %v494
  %v901 = vmul.f32 %v855, %v496
  %v902 = vmul.f32 %v855, %v498
  %v903 = vmul.f32 %v855, %v500
  %v904 = vmul.f32 %v855, %v502
  %v905 = vmul.f32 %v855, %v504
  %v906 = vmul.f32 %v855, %v506
  %v907 = vmul.f32 %v855, %v508
  %v908 = vmul.f32 %v855, %v510
  %v909 = vmul.f32 %v855, %v512
  %v910 = vmul.f32 %v855, %v514
  %v911 = vmul.f32 %v855, %v516
  %v912 = vmul.f32 %v855, %v518
  %v913 = vmul.f32 %v855, %v520
  %v914 = vmul.f32 %v855, %v522
  %v915 = vmul.f32 %v855, %v524
  %v916 = vmul.f32 %v855, %v526
  %v917 = vmul.f32 %v855, %v528
  %v918 = vmul.f32 %v855, %v530
  %v919 = vmul.f32 %v855, %v532
  %v920 = vadd.f32 %v791, %v856
  %v921 = vadd.f32 %v792, %v857
  %v922 = vadd.f32 %v793, %v858
  %v923 = vadd.f32 %v794, %v859
  %v924 = vadd.f32 %v795, %v860
  %v925 = vadd.f32 %v796, %v861
  %v926 = vadd.f32 %v797, %v862
  %v927 = vadd.f32 %v798, %v863
  %v928 = vadd.f32 %v799, %v864
  %v929 = vadd.f32 %v800, %v865
  %v930 = vadd.f32 %v801, %v866
  %v931 = vadd.f32 %v802, %v867
  %v932 = vadd.f32 %v803, %v868
  %v933 = vadd.f32 %v804, %v869
  %v934 = vadd.f32 %v805, %v870
  %v935 = vadd.f32 %v806, %v871
  %v936 = vadd.f32 %v807, %v872
  %v937 = vadd.f32 %v808, %v873
  %v938 = vadd.f32 %v809, %v874
  %v939 = vadd.f32 %v810, %v875
  %v940 = vadd.f32 %v811, %v876
  %v941 = vadd.f32 %v812, %v877
  %v942 = vadd.f32 %v813, %v878
  %v943 = vadd.f32 %v814, %v879
  %v944 = vadd.f32 %v815, %v880
  %v945 = vadd.f32 %v816, %v881
  %v946 = vadd.f32 %v817, %v882
  %v947 = vadd.f32 %v818, %v883
  %v948 = vadd.f32 %v819, %v884
  %v949 = vadd.f32 %v820, %v885
  %v950 = vadd.f32 %v821, %v886
  %v951 = vadd.f32 %v822, %v887
  %v952 = vadd.f32 %v823, %v888
  %v953 = vadd.f32 %v824, %v889
  %v954 = vadd.f32 %v825, %v890
  %v955 = vadd.f32 %v826, %v891
  %v956 = vadd.f32 %v827, %v892
  %v957 = vadd.f32 %v828, %v893
  %v958 = vadd.f32 %v829, %v894
  %v959 = vadd.f32 %v830, %v895
  %v960 = vadd.f32 %v831, %v896
  %v961 = vadd.f32 %v832, %v897
  %v962 = vadd.f32 %v833, %v898
  %v963 = vadd.f32 %v834, %v899
  %v964 = vadd.f32 %v835, %v900
  %v965 = vadd.f32 %v836, %v901
  %v966 = vadd.f32 %v837, %v902
  %v967 = vadd.f32 %v838, %v903
  %v968 = vadd.f32 %v839, %v904
  %v969 = vadd.f32 %v840, %v905
  %v970 = vadd.f32 %v841, %v906
  %v971 = vadd.f32 %v842, %v907
  %v972 = vadd.f32 %v843, %v908
  %v973 = vadd.f32 %v844, %v909
  %v974 = vadd.f32 %v845, %v910
  %v975 = vadd.f32 %v846, %v911
  %v976 = vadd.f32 %v847, %v912
  %v977 = vadd.f32 %v848, %v913
  %v978 = vadd.f32 %v849, %v914
  %v979 = vadd.f32 %v850, %v915
  %v980 = vadd.f32 %v851, %v916
  %v981 = vadd.f32 %v852, %v917
  %v982 = vadd.f32 %v853, %v918
  %v983 = vadd.f32 %v854, %v919
  %v984 = vperm.slane %v11, 7
  %v985 = vadd.f32 %v920, %v984
  %v986 = vadd.f32 %v921, %v984
  %v987 = vadd.f32 %v922, %v984
  %v988 = vadd.f32 %v923, %v984
  %v989 = vadd.f32 %v924, %v984
  %v990 = vadd.f32 %v925, %v984
  %v991 = vadd.f32 %v926, %v984
  %v992 = vadd.f32 %v927, %v984
  %v993 = vadd.f32 %v928, %v984
  %v994 = vadd.f32 %v929, %v984
  %v995 = vadd.f32 %v930, %v984
  %v996 = vadd.f32 %v931, %v984
  %v997 = vadd.f32 %v932, %v984
  %v998 = vadd.f32 %v933, %v984
  %v999 = vadd.f32 %v934, %v984
  %v1000 = vadd.f32 %v935, %v984
  %v1001 = vadd.f32 %v936, %v984
  %v1002 = vadd.f32 %v937, %v984
  %v1003 = vadd.f32 %v938, %v984
  %v1004 = vadd.f32 %v939, %v984
  %v1005 = vadd.f32 %v940, %v984
  %v1006 = vadd.f32 %v941, %v984
  %v1007 = vadd.f32 %v942, %v984
  %v1008 = vadd.f32 %v943, %v984
  %v1009 = vadd.f32 %v944, %v984
  %v1010 = vadd.f32 %v945, %v984
  %v1011 = vadd.f32 %v946, %v984
  %v1012 = vadd.f32 %v947, %v984
  %v1013 = vadd.f32 %v948, %v984
  %v1014 = vadd.f32 %v949, %v984
  %v1015 = vadd.f32 %v950, %v984
  %v1016 = vadd.f32 %v951, %v984
  %v1017 = vadd.f32 %v952, %v984
  %v1018 = vadd.f32 %v953, %v984
  %v1019 = vadd.f32 %v954, %v984
  %v1020 = vadd.f32 %v955, %v984
  %v1021 = vadd.f32 %v956, %v984
  %v1022 = vadd.f32 %v957, %v984
  %v1023 = vadd.f32 %v958, %v984
  %v1024 = vadd.f32 %v959, %v984
  %v1025 = vadd.f32 %v960, %v984
  %v1026 = vadd.f32 %v961, %v984
  %v1027 = vadd.f32 %v962, %v984
  %v1028 = vadd.f32 %v963, %v984
  %v1029 = vadd.f32 %v964, %v984
  %v1030 = vadd.f32 %v965, %v984
  %v1031 = vadd.f32 %v966, %v984
  %v1032 = vadd.f32 %v967, %v984
  %v1033 = vadd.f32 %v968, %v984
  %v1034 = vadd.f32 %v969, %v984
  %v1035 = vadd.f32 %v970, %v984
  %v1036 = vadd.f32 %v971, %v984
  %v1037 = vadd.f32 %v972, %v984
  %v1038 = vadd.f32 %v973, %v984
  %v1039 = vadd.f32 %v974, %v984
  %v1040 = vadd.f32 %v975, %v984
  %v1041 = vadd.f32 %v976, %v984
  %v1042 = vadd.f32 %v977, %v984
  %v1043 = vadd.f32 %v978, %v984
  %v1044 = vadd.f32 %v979, %v984
  %v1045 = vadd.f32 %v980, %v984
  %v1046 = vadd.f32 %v981, %v984
  %v1047 = vadd.f32 %v982, %v984
  %v1048 = vadd.f32 %v983, %v984
  %v1049 = vmul.f32 %v726, %v726
  %v1050 = vmul.f32 %v727, %v727
  %v1051 = vmul.f32 %v728, %v728
  %v1052 = vmul.f32 %v729, %v729
  %v1053 = vmul.f32 %v730, %v730
  %v1054 = vmul.f32 %v731, %v731
  %v1055 = vmul.f32 %v732, %v732
  %v1056 = vmul.f32 %v733, %v733
  %v1057 = vmul.f32 %v734, %v734
  %v1058 = vmul.f32 %v735, %v735
  %v1059 = vmul.f32 %v736, %v736
  %v1060 = vmul.f32 %v737, %v737
  %v1061 = vmul.f32 %v738, %v738
  %v1062 = vmul.f32 %v739, %v739
  %v1063 = vmul.f32 %v740, %v740
  %v1064 = vmul.f32 %v741, %v741
  %v1065 = vmul.f32 %v742, %v742
  %v1066 = vmul.f32 %v743, %v743
  %v1067 = vmul.f32 %v744, %v744
  %v1068 = vmul.f32 %v745, %v745
  %v1069 = vmul.f32 %v746, %v746
  %v1070 = vmul.f32 %v747, %v747
  %v1071 = vmul.f32 %v748, %v748
  %v1072 = vmul.f32 %v749, %v749
  %v1073 = vmul.f32 %v750, %v750
  %v1074 = vmul.f32 %v751, %v751
  %v1075 = vmul.f32 %v752, %v752
  %v1076 = vmul.f32 %v753, %v753
  %v1077 = vmul.f32 %v754, %v754
  %v1078 = vmul.f32 %v755, %v755
  %v1079 = vmul.f32 %v756, %v756
  %v1080 = vmul.f32 %v757, %v757
  %v1081 = vmul.f32 %v758, %v758
  %v1082 = vmul.f32 %v759, %v759
  %v1083 = vmul.f32 %v760, %v760
  %v1084 = vmul.f32 %v761, %v761
  %v1085 = vmul.f32 %v762, %v762
  %v1086 = vmul.f32 %v763, %v763
  %v1087 = vmul.f32 %v764, %v764
  %v1088 = vmul.f32 %v765, %v765
  %v1089 = vmul.f32 %v766, %v766
  %v1090 = vmul.f32 %v767, %v767
  %v1091 = vmul.f32 %v768, %v768
  %v1092 = vmul.f32 %v769, %v769
  %v1093 = vmul.f32 %v770, %v770
  %v1094 = vmul.f32 %v771, %v771
  %v1095 = vmul.f32 %v772, %v772
  %v1096 = vmul.f32 %v773, %v773
  %v1097 = vmul.f32 %v774, %v774
  %v1098 = vmul.f32 %v775, %v775
  %v1099 = vmul.f32 %v776, %v776
  %v1100 = vmul.f32 %v777, %v777
  %v1101 = vmul.f32 %v778, %v778
  %v1102 = vmul.f32 %v779, %v779
  %v1103 = vmul.f32 %v780, %v780
  %v1104 = vmul.f32 %v781, %v781
  %v1105 = vmul.f32 %v782, %v782
  %v1106 = vmul.f32 %v783, %v783
  %v1107 = vmul.f32 %v784, %v784
  %v1108 = vmul.f32 %v785, %v785
  %v1109 = vmul.f32 %v786, %v786
  %v1110 = vmul.f32 %v787, %v787
  %v1111 = vmul.f32 %v788, %v788
  %v1112 = vmul.f32 %v789, %v789
  %v1113 = vmul.f32 %v985, %v985
  %v1114 = vmul.f32 %v986, %v986
  %v1115 = vmul.f32 %v987, %v987
  %v1116 = vmul.f32 %v988, %v988
  %v1117 = vmul.f32 %v989, %v989
  %v1118 = vmul.f32 %v990, %v990
  %v1119 = vmul.f32 %v991, %v991
  %v1120 = vmul.f32 %v992, %v992
  %v1121 = vmul.f32 %v993, %v993
  %v1122 = vmul.f32 %v994, %v994
  %v1123 = vmul.f32 %v995, %v995
  %v1124 = vmul.f32 %v996, %v996
  %v1125 = vmul.f32 %v997, %v997
  %v1126 = vmul.f32 %v998, %v998
  %v1127 = vmul.f32 %v999, %v999
  %v1128 = vmul.f32 %v1000, %v1000
  %v1129 = vmul.f32 %v1001, %v1001
  %v1130 = vmul.f32 %v1002, %v1002
  %v1131 = vmul.f32 %v1003, %v1003
  %v1132 = vmul.f32 %v1004, %v1004
  %v1133 = vmul.f32 %v1005, %v1005
  %v1134 = vmul.f32 %v1006, %v1006
  %v1135 = vmul.f32 %v1007, %v1007
  %v1136 = vmul.f32 %v1008, %v1008
  %v1137 = vmul.f32 %v1009, %v1009
  %v1138 = vmul.f32 %v1010, %v1010
  %v1139 = vmul.f32 %v1011, %v1011
  %v1140 = vmul.f32 %v1012, %v1012
  %v1141 = vmul.f32 %v1013, %v1013
  %v1142 = vmul.f32 %v1014, %v1014
  %v1143 = vmul.f32 %v1015, %v1015
  %v1144 = vmul.f32 %v1016, %v1016
  %v1145 = vmul.f32 %v1017, %v1017
  %v1146 = vmul.f32 %v1018, %v1018
  %v1147 = vmul.f32 %v1019, %v1019
  %v1148 = vmul.f32 %v1020, %v1020
  %v1149 = vmul.f32 %v1021, %v1021
  %v1150 = vmul.f32 %v1022, %v1022
  %v1151 = vmul.f32 %v1023, %v1023
  %v1152 = vmul.f32 %v1024, %v1024
  %v1153 = vmul.f32 %v1025, %v1025
  %v1154 = vmul.f32 %v1026, %v1026
  %v1155 = vmul.f32 %v1027, %v1027
  %v1156 = vmul.f32 %v1028, %v1028
  %v1157 = vmul.f32 %v1029, %v1029
  %v1158 = vmul.f32 %v1030, %v1030
  %v1159 = vmul.f32 %v1031, %v1031
  %v1160 = vmul.f32 %v1032, %v1032
  %v1161 = vmul.f32 %v1033, %v1033
  %v1162 = vmul.f32 %v1034, %v1034
  %v1163 = vmul.f32 %v1035, %v1035
  %v1164 = vmul.f32 %v1036, %v1036
  %v1165 = vmul.f32 %v1037, %v1037
  %v1166 = vmul.f32 %v1038, %v1038
  %v1167 = vmul.f32 %v1039, %v1039
  %v1168 = vmul.f32 %v1040, %v1040
  %v1169 = vmul.f32 %v1041, %v1041
  %v1170 = vmul.f32 %v1042, %v1042
  %v1171 = vmul.f32 %v1043, %v1043
  %v1172 = vmul.f32 %v1044, %v1044
  %v1173 = vmul.f32 %v1045, %v1045
  %v1174 = vmul.f32 %v1046, %v1046
  %v1175 = vmul.f32 %v1047, %v1047
  %v1176 = vmul.f32 %v1048, %v1048
  %v1177 = vadd.f32 %v1049, %v1113
  %v1178 = vadd.f32 %v1050, %v1114
  %v1179 = vadd.f32 %v1051, %v1115
  %v1180 = vadd.f32 %v1052, %v1116
  %v1181 = vadd.f32 %v1053, %v1117
  %v1182 = vadd.f32 %v1054, %v1118
  %v1183 = vadd.f32 %v1055, %v1119
  %v1184 = vadd.f32 %v1056, %v1120
  %v1185 = vadd.f32 %v1057, %v1121
  %v1186 = vadd.f32 %v1058, %v1122
  %v1187 = vadd.f32 %v1059, %v1123
  %v1188 = vadd.f32 %v1060, %v1124
  %v1189 = vadd.f32 %v1061, %v1125
  %v1190 = vadd.f32 %v1062, %v1126
  %v1191 = vadd.f32 %v1063, %v1127
  %v1192 = vadd.f32 %v1064, %v1128
  %v1193 = vadd.f32 %v1065, %v1129
  %v1194 = vadd.f32 %v1066, %v1130
  %v1195 = vadd.f32 %v1067, %v1131
  %v1196 = vadd.f32 %v1068, %v1132
  %v1197 = vadd.f32 %v1069, %v1133
  %v1198 = vadd.f32 %v1070, %v1134
  %v1199 = vadd.f32 %v1071, %v1135
  %v1200 = vadd.f32 %v1072, %v1136
  %v1201 = vadd.f32 %v1073, %v1137
  %v1202 = vadd.f32 %v1074, %v1138
  %v1203 = vadd.f32 %v1075, %v1139
  %v1204 = vadd.f32 %v1076, %v1140
  %v1205 = vadd.f32 %v1077, %v1141
  %v1206 = vadd.f32 %v1078, %v1142
  %v1207 = vadd.f32 %v1079, %v1143
  %v1208 = vadd.f32 %v1080, %v1144
  %v1209 = vadd.f32 %v1081, %v1145
  %v1210 = vadd.f32 %v1082, %v1146
  %v1211 = vadd.f32 %v1083, %v1147
  %v1212 = vadd.f32 %v1084, %v1148
  %v1213 = vadd.f32 %v1085, %v1149
  %v1214 = vadd.f32 %v1086, %v1150
  %v1215 = vadd.f32 %v1087, %v1151
  %v1216 = vadd.f32 %v1088, %v1152
  %v1217 = vadd.f32 %v1089, %v1153
  %v1218 = vadd.f32 %v1090, %v1154
  %v1219 = vadd.f32 %v1091, %v1155
  %v1220 = vadd.f32 %v1092, %v1156
  %v1221 = vadd.f32 %v1093, %v1157
  %v1222 = vadd.f32 %v1094, %v1158
  %v1223 = vadd.f32 %v1095, %v1159
  %v1224 = vadd.f32 %v1096, %v1160
  %v1225 = vadd.f32 %v1097, %v1161
  %v1226 = vadd.f32 %v1098, %v1162
  %v1227 = vadd.f32 %v1099, %v1163
  %v1228 = vadd.f32 %v1100, %v1164
  %v1229 = vadd.f32 %v1101, %v1165
  %v1230 = vadd.f32 %v1102, %v1166
  %v1231 = vadd.f32 %v1103, %v1167
  %v1232 = vadd.f32 %v1104, %v1168
  %v1233 = vadd.f32 %v1105, %v1169
  %v1234 = vadd.f32 %v1106, %v1170
  %v1235 = vadd.f32 %v1107, %v1171
  %v1236 = vadd.f32 %v1108, %v1172
  %v1237 = vadd.f32 %v1109, %v1173
  %v1238 = vadd.f32 %v1110, %v1174
  %v1239 = vadd.f32 %v1111, %v1175
  %v1240 = vadd.f32 %v1112, %v1176
  %v1241 = vadd.f32 %v1177, 1e-12
  %v1242 = vadd.f32 %v1178, 1e-12
  %v1243 = vadd.f32 %v1179, 1e-12
  %v1244 = vadd.f32 %v1180, 1e-12
  %v1245 = vadd.f32 %v1181, 1e-12
  %v1246 = vadd.f32 %v1182, 1e-12
  %v1247 = vadd.f32 %v1183, 1e-12
  %v1248 = vadd.f32 %v1184, 1e-12
  %v1249 = vadd.f32 %v1185, 1e-12
  %v1250 = vadd.f32 %v1186, 1e-12
  %v1251 = vadd.f32 %v1187, 1e-12
  %v1252 = vadd.f32 %v1188, 1e-12
  %v1253 = vadd.f32 %v1189, 1e-12
  %v1254 = vadd.f32 %v1190, 1e-12
  %v1255 = vadd.f32 %v1191, 1e-12
  %v1256 = vadd.f32 %v1192, 1e-12
  %v1257 = vadd.f32 %v1193, 1e-12
  %v1258 = vadd.f32 %v1194, 1e-12
  %v1259 = vadd.f32 %v1195, 1e-12
  %v1260 = vadd.f32 %v1196, 1e-12
  %v1261 = vadd.f32 %v1197, 1e-12
  %v1262 = vadd.f32 %v1198, 1e-12
  %v1263 = vadd.f32 %v1199, 1e-12
  %v1264 = vadd.f32 %v1200, 1e-12
  %v1265 = vadd.f32 %v1201, 1e-12
  %v1266 = vadd.f32 %v1202, 1e-12
  %v1267 = vadd.f32 %v1203, 1e-12
  %v1268 = vadd.f32 %v1204, 1e-12
  %v1269 = vadd.f32 %v1205, 1e-12
  %v1270 = vadd.f32 %v1206, 1e-12
  %v1271 = vadd.f32 %v1207, 1e-12
  %v1272 = vadd.f32 %v1208, 1e-12
  %v1273 = vadd.f32 %v1209, 1e-12
  %v1274 = vadd.f32 %v1210, 1e-12
  %v1275 = vadd.f32 %v1211, 1e-12
  %v1276 = vadd.f32 %v1212, 1e-12
  %v1277 = vadd.f32 %v1213, 1e-12
  %v1278 = vadd.f32 %v1214, 1e-12
  %v1279 = vadd.f32 %v1215, 1e-12
  %v1280 = vadd.f32 %v1216, 1e-12
  %v1281 = vadd.f32 %v1217, 1e-12
  %v1282 = vadd.f32 %v1218, 1e-12
  %v1283 = vadd.f32 %v1219, 1e-12
  %v1284 = vadd.f32 %v1220, 1e-12
  %v1285 = vadd.f32 %v1221, 1e-12
  %v1286 = vadd.f32 %v1222, 1e-12
  %v1287 = vadd.f32 %v1223, 1e-12
  %v1288 = vadd.f32 %v1224, 1e-12
  %v1289 = vadd.f32 %v1225, 1e-12
  %v1290 = vadd.f32 %v1226, 1e-12
  %v1291 = vadd.f32 %v1227, 1e-12
  %v1292 = vadd.f32 %v1228, 1e-12
  %v1293 = vadd.f32 %v1229, 1e-12
  %v1294 = vadd.f32 %v1230, 1e-12
  %v1295 = vadd.f32 %v1231, 1e-12
  %v1296 = vadd.f32 %v1232, 1e-12
  %v1297 = vadd.f32 %v1233, 1e-12
  %v1298 = vadd.f32 %v1234, 1e-12
  %v1299 = vadd.f32 %v1235, 1e-12
  %v1300 = vadd.f32 %v1236, 1e-12
  %v1301 = vadd.f32 %v1237, 1e-12
  %v1302 = vadd.f32 %v1238, 1e-12
  %v1303 = vadd.f32 %v1239, 1e-12
  %v1304 = vadd.f32 %v1240, 1e-12
  %v1305 = vrsqrt.pop %v1241
  %v1306 = vmul.f32 %v1305, %v1241
  %v1307 = vmul.f32 %v1306, %v1305
  %v1308 = vmul.f32 0.5, %v1307
  %v1309 = vsub.f32 1.5, %v1308
  %v1310 = vmul.f32 %v1305, %v1309
  %vm1311 = vweird.f32 %v1241
  %vm1312 = vweird.f32 %v1305
  %vm1313 = vmor %vm1311, %vm1312
  %v1314 = vsel %vm1313, %v1305, %v1310
  %v1315 = vrsqrt.pop %v1242
  %v1316 = vmul.f32 %v1315, %v1242
  %v1317 = vmul.f32 %v1316, %v1315
  %v1318 = vmul.f32 0.5, %v1317
  %v1319 = vsub.f32 1.5, %v1318
  %v1320 = vmul.f32 %v1315, %v1319
  %vm1321 = vweird.f32 %v1242
  %vm1322 = vweird.f32 %v1315
  %vm1323 = vmor %vm1321, %vm1322
  %v1324 = vsel %vm1323, %v1315, %v1320
  %v1325 = vrsqrt.pop %v1243
  %v1326 = vmul.f32 %v1325, %v1243
  %v1327 = vmul.f32 %v1326, %v1325
  %v1328 = vmul.f32 0.5, %v1327
  %v1329 = vsub.f32 1.5, %v1328
  %v1330 = vmul.f32 %v1325, %v1329
  %vm1331 = vweird.f32 %v1243
  %vm1332 = vweird.f32 %v1325
  %vm1333 = vmor %vm1331, %vm1332
  %v1334 = vsel %vm1333, %v1325, %v1330
  %v1335 = vrsqrt.pop %v1244
  %v1336 = vmul.f32 %v1335, %v1244
  %v1337 = vmul.f32 %v1336, %v1335
  %v1338 = vmul.f32 0.5, %v1337
  %v1339 = vsub.f32 1.5, %v1338
  %v1340 = vmul.f32 %v1335, %v1339
  %vm1341 = vweird.f32 %v1244
  %vm1342 = vweird.f32 %v1335
  %vm1343 = vmor %vm1341, %vm1342
  %v1344 = vsel %vm1343, %v1335, %v1340
  %v1345 = vrsqrt.pop %v1245
  %v1346 = vmul.f32 %v1345, %v1245
  %v1347 = vmul.f32 %v1346, %v1345
  %v1348 = vmul.f32 0.5, %v1347
  %v1349 = vsub.f32 1.5, %v1348
  %v1350 = vmul.f32 %v1345, %v1349
  %vm1351 = vweird.f32 %v1245
  %vm1352 = vweird.f32 %v1345
  %vm1353 = vmor %vm1351, %vm1352
  %v1354 = vsel %vm1353, %v1345, %v1350
  %v1355 = vrsqrt.pop %v1246
  %v1356 = vmul.f32 %v1355, %v1246
  %v1357 = vmul.f32 %v1356, %v1355
  %v1358 = vmul.f32 0.5, %v1357
  %v1359 = vsub.f32 1.5, %v1358
  %v1360 = vmul.f32 %v1355, %v1359
  %vm1361 = vweird.f32 %v1246
  %vm1362 = vweird.f32 %v1355
  %vm1363 = vmor %vm1361, %vm1362
  %v1364 = vsel %vm1363, %v1355, %v1360
  %v1365 = vrsqrt.pop %v1247
  %v1366 = vmul.f32 %v1365, %v1247
  %v1367 = vmul.f32 %v1366, %v1365
  %v1368 = vmul.f32 0.5, %v1367
  %v1369 = vsub.f32 1.5, %v1368
  %v1370 = vmul.f32 %v1365, %v1369
  %vm1371 = vweird.f32 %v1247
  %vm1372 = vweird.f32 %v1365
  %vm1373 = vmor %vm1371, %vm1372
  %v1374 = vsel %vm1373, %v1365, %v1370
  %v1375 = vrsqrt.pop %v1248
  %v1376 = vmul.f32 %v1375, %v1248
  %v1377 = vmul.f32 %v1376, %v1375
  %v1378 = vmul.f32 0.5, %v1377
  %v1379 = vsub.f32 1.5, %v1378
  %v1380 = vmul.f32 %v1375, %v1379
  %vm1381 = vweird.f32 %v1248
  %vm1382 = vweird.f32 %v1375
  %vm1383 = vmor %vm1381, %vm1382
  %v1384 = vsel %vm1383, %v1375, %v1380
  %v1385 = vrsqrt.pop %v1249
  %v1386 = vmul.f32 %v1385, %v1249
  %v1387 = vmul.f32 %v1386, %v1385
  %v1388 = vmul.f32 0.5, %v1387
  %v1389 = vsub.f32 1.5, %v1388
  %v1390 = vmul.f32 %v1385, %v1389
  %vm1391 = vweird.f32 %v1249
  %vm1392 = vweird.f32 %v1385
  %vm1393 = vmor %vm1391, %vm1392
  %v1394 = vsel %vm1393, %v1385, %v1390
  %v1395 = vrsqrt.pop %v1250
  %v1396 = vmul.f32 %v1395, %v1250
  %v1397 = vmul.f32 %v1396, %v1395
  %v1398 = vmul.f32 0.5, %v1397
  %v1399 = vsub.f32 1.5, %v1398
  %v1400 = vmul.f32 %v1395, %v1399
  %vm1401 = vweird.f32 %v1250
  %vm1402 = vweird.f32 %v1395
  %vm1403 = vmor %vm1401, %vm1402
  %v1404 = vsel %vm1403, %v1395, %v1400
  %v1405 = vrsqrt.pop %v1251
  %v1406 = vmul.f32 %v1405, %v1251
  %v1407 = vmul.f32 %v1406, %v1405
  %v1408 = vmul.f32 0.5, %v1407
  %v1409 = vsub.f32 1.5, %v1408
  %v1410 = vmul.f32 %v1405, %v1409
  %vm1411 = vweird.f32 %v1251
  %vm1412 = vweird.f32 %v1405
  %vm1413 = vmor %vm1411, %vm1412
  %v1414 = vsel %vm1413, %v1405, %v1410
  %v1415 = vrsqrt.pop %v1252
  %v1416 = vmul.f32 %v1415, %v1252
  %v1417 = vmul.f32 %v1416, %v1415
  %v1418 = vmul.f32 0.5, %v1417
  %v1419 = vsub.f32 1.5, %v1418
  %v1420 = vmul.f32 %v1415, %v1419
  %vm1421 = vweird.f32 %v1252
  %vm1422 = vweird.f32 %v1415
  %vm1423 = vmor %vm1421, %vm1422
  %v1424 = vsel %vm1423, %v1415, %v1420
  %v1425 = vrsqrt.pop %v1253
  %v1426 = vmul.f32 %v1425, %v1253
  %v1427 = vmul.f32 %v1426, %v1425
  %v1428 = vmul.f32 0.5, %v1427
  %v1429 = vsub.f32 1.5, %v1428
  %v1430 = vmul.f32 %v1425, %v1429
  %vm1431 = vweird.f32 %v1253
  %vm1432 = vweird.f32 %v1425
  %vm1433 = vmor %vm1431, %vm1432
  %v1434 = vsel %vm1433, %v1425, %v1430
  %v1435 = vrsqrt.pop %v1254
  %v1436 = vmul.f32 %v1435, %v1254
  %v1437 = vmul.f32 %v1436, %v1435
  %v1438 = vmul.f32 0.5, %v1437
  %v1439 = vsub.f32 1.5, %v1438
  %v1440 = vmul.f32 %v1435, %v1439
  %vm1441 = vweird.f32 %v1254
  %vm1442 = vweird.f32 %v1435
  %vm1443 = vmor %vm1441, %vm1442
  %v1444 = vsel %vm1443, %v1435, %v1440
  %v1445 = vrsqrt.pop %v1255
  %v1446 = vmul.f32 %v1445, %v1255
  %v1447 = vmul.f32 %v1446, %v1445
  %v1448 = vmul.f32 0.5, %v1447
  %v1449 = vsub.f32 1.5, %v1448
  %v1450 = vmul.f32 %v1445, %v1449
  %vm1451 = vweird.f32 %v1255
  %vm1452 = vweird.f32 %v1445
  %vm1453 = vmor %vm1451, %vm1452
  %v1454 = vsel %vm1453, %v1445, %v1450
  %v1455 = vrsqrt.pop %v1256
  %v1456 = vmul.f32 %v1455, %v1256
  %v1457 = vmul.f32 %v1456, %v1455
  %v1458 = vmul.f32 0.5, %v1457
  %v1459 = vsub.f32 1.5, %v1458
  %v1460 = vmul.f32 %v1455, %v1459
  %vm1461 = vweird.f32 %v1256
  %vm1462 = vweird.f32 %v1455
  %vm1463 = vmor %vm1461, %vm1462
  %v1464 = vsel %vm1463, %v1455, %v1460
  %v1465 = vrsqrt.pop %v1257
  %v1466 = vmul.f32 %v1465, %v1257
  %v1467 = vmul.f32 %v1466, %v1465
  %v1468 = vmul.f32 0.5, %v1467
  %v1469 = vsub.f32 1.5, %v1468
  %v1470 = vmul.f32 %v1465, %v1469
  %vm1471 = vweird.f32 %v1257
  %vm1472 = vweird.f32 %v1465
  %vm1473 = vmor %vm1471, %vm1472
  %v1474 = vsel %vm1473, %v1465, %v1470
  %v1475 = vrsqrt.pop %v1258
  %v1476 = vmul.f32 %v1475, %v1258
  %v1477 = vmul.f32 %v1476, %v1475
  %v1478 = vmul.f32 0.5, %v1477
  %v1479 = vsub.f32 1.5, %v1478
  %v1480 = vmul.f32 %v1475, %v1479
  %vm1481 = vweird.f32 %v1258
  %vm1482 = vweird.f32 %v1475
  %vm1483 = vmor %vm1481, %vm1482
  %v1484 = vsel %vm1483, %v1475, %v1480
  %v1485 = vrsqrt.pop %v1259
  %v1486 = vmul.f32 %v1485, %v1259
  %v1487 = vmul.f32 %v1486, %v1485
  %v1488 = vmul.f32 0.5, %v1487
  %v1489 = vsub.f32 1.5, %v1488
  %v1490 = vmul.f32 %v1485, %v1489
  %vm1491 = vweird.f32 %v1259
  %vm1492 = vweird.f32 %v1485
  %vm1493 = vmor %vm1491, %vm1492
  %v1494 = vsel %vm1493, %v1485, %v1490
  %v1495 = vrsqrt.pop %v1260
  %v1496 = vmul.f32 %v1495, %v1260
  %v1497 = vmul.f32 %v1496, %v1495
  %v1498 = vmul.f32 0.5, %v1497
  %v1499 = vsub.f32 1.5, %v1498
  %v1500 = vmul.f32 %v1495, %v1499
  %vm1501 = vweird.f32 %v1260
  %vm1502 = vweird.f32 %v1495
  %vm1503 = vmor %vm1501, %vm1502
  %v1504 = vsel %vm1503, %v1495, %v1500
  %v1505 = vrsqrt.pop %v1261
  %v1506 = vmul.f32 %v1505, %v1261
  %v1507 = vmul.f32 %v1506, %v1505
  %v1508 = vmul.f32 0.5, %v1507
  %v1509 = vsub.f32 1.5, %v1508
  %v1510 = vmul.f32 %v1505, %v1509
  %vm1511 = vweird.f32 %v1261
  %vm1512 = vweird.f32 %v1505
  %vm1513 = vmor %vm1511, %vm1512
  %v1514 = vsel %vm1513, %v1505, %v1510
  %v1515 = vrsqrt.pop %v1262
  %v1516 = vmul.f32 %v1515, %v1262
  %v1517 = vmul.f32 %v1516, %v1515
  %v1518 = vmul.f32 0.5, %v1517
  %v1519 = vsub.f32 1.5, %v1518
  %v1520 = vmul.f32 %v1515, %v1519
  %vm1521 = vweird.f32 %v1262
  %vm1522 = vweird.f32 %v1515
  %vm1523 = vmor %vm1521, %vm1522
  %v1524 = vsel %vm1523, %v1515, %v1520
  %v1525 = vrsqrt.pop %v1263
  %v1526 = vmul.f32 %v1525, %v1263
  %v1527 = vmul.f32 %v1526, %v1525
  %v1528 = vmul.f32 0.5, %v1527
  %v1529 = vsub.f32 1.5, %v1528
  %v1530 = vmul.f32 %v1525, %v1529
  %vm1531 = vweird.f32 %v1263
  %vm1532 = vweird.f32 %v1525
  %vm1533 = vmor %vm1531, %vm1532
  %v1534 = vsel %vm1533, %v1525, %v1530
  %v1535 = vrsqrt.pop %v1264
  %v1536 = vmul.f32 %v1535, %v1264
  %v1537 = vmul.f32 %v1536, %v1535
  %v1538 = vmul.f32 0.5, %v1537
  %v1539 = vsub.f32 1.5, %v1538
  %v1540 = vmul.f32 %v1535, %v1539
  %vm1541 = vweird.f32 %v1264
  %vm1542 = vweird.f32 %v1535
  %vm1543 = vmor %vm1541, %vm1542
  %v1544 = vsel %vm1543, %v1535, %v1540
  %v1545 = vrsqrt.pop %v1265
  %v1546 = vmul.f32 %v1545, %v1265
  %v1547 = vmul.f32 %v1546, %v1545
  %v1548 = vmul.f32 0.5, %v1547
  %v1549 = vsub.f32 1.5, %v1548
  %v1550 = vmul.f32 %v1545, %v1549
  %vm1551 = vweird.f32 %v1265
  %vm1552 = vweird.f32 %v1545
  %vm1553 = vmor %vm1551, %vm1552
  %v1554 = vsel %vm1553, %v1545, %v1550
  %v1555 = vrsqrt.pop %v1266
  %v1556 = vmul.f32 %v1555, %v1266
  %v1557 = vmul.f32 %v1556, %v1555
  %v1558 = vmul.f32 0.5, %v1557
  %v1559 = vsub.f32 1.5, %v1558
  %v1560 = vmul.f32 %v1555, %v1559
  %vm1561 = vweird.f32 %v1266
  %vm1562 = vweird.f32 %v1555
  %vm1563 = vmor %vm1561, %vm1562
  %v1564 = vsel %vm1563, %v1555, %v1560
  %v1565 = vrsqrt.pop %v1267
  %v1566 = vmul.f32 %v1565, %v1267
  %v1567 = vmul.f32 %v1566, %v1565
  %v1568 = vmul.f32 0.5, %v1567
  %v1569 = vsub.f32 1.5, %v1568
  %v1570 = vmul.f32 %v1565, %v1569
  %vm1571 = vweird.f32 %v1267
  %vm1572 = vweird.f32 %v1565
  %vm1573 = vmor %vm1571, %vm1572
  %v1574 = vsel %vm1573, %v1565, %v1570
  %v1575 = vrsqrt.pop %v1268
  %v1576 = vmul.f32 %v1575, %v1268
  %v1577 = vmul.f32 %v1576, %v1575
  %v1578 = vmul.f32 0.5, %v1577
  %v1579 = vsub.f32 1.5, %v1578
  %v1580 = vmul.f32 %v1575, %v1579
  %vm1581 = vweird.f32 %v1268
  %vm1582 = vweird.f32 %v1575
  %vm1583 = vmor %vm1581, %vm1582
  %v1584 = vsel %vm1583, %v1575, %v1580
  %v1585 = vrsqrt.pop %v1269
  %v1586 = vmul.f32 %v1585, %v1269
  %v1587 = vmul.f32 %v1586, %v1585
  %v1588 = vmul.f32 0.5, %v1587
  %v1589 = vsub.f32 1.5, %v1588
  %v1590 = vmul.f32 %v1585, %v1589
  %vm1591 = vweird.f32 %v1269
  %vm1592 = vweird.f32 %v1585
  %vm1593 = vmor %vm1591, %vm1592
  %v1594 = vsel %vm1593, %v1585, %v1590
  %v1595 = vrsqrt.pop %v1270
  %v1596 = vmul.f32 %v1595, %v1270
  %v1597 = vmul.f32 %v1596, %v1595
  %v1598 = vmul.f32 0.5, %v1597
  %v1599 = vsub.f32 1.5, %v1598
  %v1600 = vmul.f32 %v1595, %v1599
  %vm1601 = vweird.f32 %v1270
  %vm1602 = vweird.f32 %v1595
  %vm1603 = vmor %vm1601, %vm1602
  %v1604 = vsel %vm1603, %v1595, %v1600
  %v1605 = vrsqrt.pop %v1271
  %v1606 = vmul.f32 %v1605, %v1271
  %v1607 = vmul.f32 %v1606, %v1605
  %v1608 = vmul.f32 0.5, %v1607
  %v1609 = vsub.f32 1.5, %v1608
  %v1610 = vmul.f32 %v1605, %v1609
  %vm1611 = vweird.f32 %v1271
  %vm1612 = vweird.f32 %v1605
  %vm1613 = vmor %vm1611, %vm1612
  %v1614 = vsel %vm1613, %v1605, %v1610
  %v1615 = vrsqrt.pop %v1272
  %v1616 = vmul.f32 %v1615, %v1272
  %v1617 = vmul.f32 %v1616, %v1615
  %v1618 = vmul.f32 0.5, %v1617
  %v1619 = vsub.f32 1.5, %v1618
  %v1620 = vmul.f32 %v1615, %v1619
  %vm1621 = vweird.f32 %v1272
  %vm1622 = vweird.f32 %v1615
  %vm1623 = vmor %vm1621, %vm1622
  %v1624 = vsel %vm1623, %v1615, %v1620
  %v1625 = vrsqrt.pop %v1273
  %v1626 = vmul.f32 %v1625, %v1273
  %v1627 = vmul.f32 %v1626, %v1625
  %v1628 = vmul.f32 0.5, %v1627
  %v1629 = vsub.f32 1.5, %v1628
  %v1630 = vmul.f32 %v1625, %v1629
  %vm1631 = vweird.f32 %v1273
  %vm1632 = vweird.f32 %v1625
  %vm1633 = vmor %vm1631, %vm1632
  %v1634 = vsel %vm1633, %v1625, %v1630
  %v1635 = vrsqrt.pop %v1274
  %v1636 = vmul.f32 %v1635, %v1274
  %v1637 = vmul.f32 %v1636, %v1635
  %v1638 = vmul.f32 0.5, %v1637
  %v1639 = vsub.f32 1.5, %v1638
  %v1640 = vmul.f32 %v1635, %v1639
  %vm1641 = vweird.f32 %v1274
  %vm1642 = vweird.f32 %v1635
  %vm1643 = vmor %vm1641, %vm1642
  %v1644 = vsel %vm1643, %v1635, %v1640
  %v1645 = vrsqrt.pop %v1275
  %v1646 = vmul.f32 %v1645, %v1275
  %v1647 = vmul.f32 %v1646, %v1645
  %v1648 = vmul.f32 0.5, %v1647
  %v1649 = vsub.f32 1.5, %v1648
  %v1650 = vmul.f32 %v1645, %v1649
  %vm1651 = vweird.f32 %v1275
  %vm1652 = vweird.f32 %v1645
  %vm1653 = vmor %vm1651, %vm1652
  %v1654 = vsel %vm1653, %v1645, %v1650
  %v1655 = vrsqrt.pop %v1276
  %v1656 = vmul.f32 %v1655, %v1276
  %v1657 = vmul.f32 %v1656, %v1655
  %v1658 = vmul.f32 0.5, %v1657
  %v1659 = vsub.f32 1.5, %v1658
  %v1660 = vmul.f32 %v1655, %v1659
  %vm1661 = vweird.f32 %v1276
  %vm1662 = vweird.f32 %v1655
  %vm1663 = vmor %vm1661, %vm1662
  %v1664 = vsel %vm1663, %v1655, %v1660
  %v1665 = vrsqrt.pop %v1277
  %v1666 = vmul.f32 %v1665, %v1277
  %v1667 = vmul.f32 %v1666, %v1665
  %v1668 = vmul.f32 0.5, %v1667
  %v1669 = vsub.f32 1.5, %v1668
  %v1670 = vmul.f32 %v1665, %v1669
  %vm1671 = vweird.f32 %v1277
  %vm1672 = vweird.f32 %v1665
  %vm1673 = vmor %vm1671, %vm1672
  %v1674 = vsel %vm1673, %v1665, %v1670
  %v1675 = vrsqrt.pop %v1278
  %v1676 = vmul.f32 %v1675, %v1278
  %v1677 = vmul.f32 %v1676, %v1675
  %v1678 = vmul.f32 0.5, %v1677
  %v1679 = vsub.f32 1.5, %v1678
  %v1680 = vmul.f32 %v1675, %v1679
  %vm1681 = vweird.f32 %v1278
  %vm1682 = vweird.f32 %v1675
  %vm1683 = vmor %vm1681, %vm1682
  %v1684 = vsel %vm1683, %v1675, %v1680
  %v1685 = vrsqrt.pop %v1279
  %v1686 = vmul.f32 %v1685, %v1279
  %v1687 = vmul.f32 %v1686, %v1685
  %v1688 = vmul.f32 0.5, %v1687
  %v1689 = vsub.f32 1.5, %v1688
  %v1690 = vmul.f32 %v1685, %v1689
  %vm1691 = vweird.f32 %v1279
  %vm1692 = vweird.f32 %v1685
  %vm1693 = vmor %vm1691, %vm1692
  %v1694 = vsel %vm1693, %v1685, %v1690
  %v1695 = vrsqrt.pop %v1280
  %v1696 = vmul.f32 %v1695, %v1280
  %v1697 = vmul.f32 %v1696, %v1695
  %v1698 = vmul.f32 0.5, %v1697
  %v1699 = vsub.f32 1.5, %v1698
  %v1700 = vmul.f32 %v1695, %v1699
  %vm1701 = vweird.f32 %v1280
  %vm1702 = vweird.f32 %v1695
  %vm1703 = vmor %vm1701, %vm1702
  %v1704 = vsel %vm1703, %v1695, %v1700
  %v1705 = vrsqrt.pop %v1281
  %v1706 = vmul.f32 %v1705, %v1281
  %v1707 = vmul.f32 %v1706, %v1705
  %v1708 = vmul.f32 0.5, %v1707
  %v1709 = vsub.f32 1.5, %v1708
  %v1710 = vmul.f32 %v1705, %v1709
  %vm1711 = vweird.f32 %v1281
  %vm1712 = vweird.f32 %v1705
  %vm1713 = vmor %vm1711, %vm1712
  %v1714 = vsel %vm1713, %v1705, %v1710
  %v1715 = vrsqrt.pop %v1282
  %v1716 = vmul.f32 %v1715, %v1282
  %v1717 = vmul.f32 %v1716, %v1715
  %v1718 = vmul.f32 0.5, %v1717
  %v1719 = vsub.f32 1.5, %v1718
  %v1720 = vmul.f32 %v1715, %v1719
  %vm1721 = vweird.f32 %v1282
  %vm1722 = vweird.f32 %v1715
  %vm1723 = vmor %vm1721, %vm1722
  %v1724 = vsel %vm1723, %v1715, %v1720
  %v1725 = vrsqrt.pop %v1283
  %v1726 = vmul.f32 %v1725, %v1283
  %v1727 = vmul.f32 %v1726, %v1725
  %v1728 = vmul.f32 0.5, %v1727
  %v1729 = vsub.f32 1.5, %v1728
  %v1730 = vmul.f32 %v1725, %v1729
  %vm1731 = vweird.f32 %v1283
  %vm1732 = vweird.f32 %v1725
  %vm1733 = vmor %vm1731, %vm1732
  %v1734 = vsel %vm1733, %v1725, %v1730
  %v1735 = vrsqrt.pop %v1284
  %v1736 = vmul.f32 %v1735, %v1284
  %v1737 = vmul.f32 %v1736, %v1735
  %v1738 = vmul.f32 0.5, %v1737
  %v1739 = vsub.f32 1.5, %v1738
  %v1740 = vmul.f32 %v1735, %v1739
  %vm1741 = vweird.f32 %v1284
  %vm1742 = vweird.f32 %v1735
  %vm1743 = vmor %vm1741, %vm1742
  %v1744 = vsel %vm1743, %v1735, %v1740
  %v1745 = vrsqrt.pop %v1285
  %v1746 = vmul.f32 %v1745, %v1285
  %v1747 = vmul.f32 %v1746, %v1745
  %v1748 = vmul.f32 0.5, %v1747
  %v1749 = vsub.f32 1.5, %v1748
  %v1750 = vmul.f32 %v1745, %v1749
  %vm1751 = vweird.f32 %v1285
  %vm1752 = vweird.f32 %v1745
  %vm1753 = vmor %vm1751, %vm1752
  %v1754 = vsel %vm1753, %v1745, %v1750
  %v1755 = vrsqrt.pop %v1286
  %v1756 = vmul.f32 %v1755, %v1286
  %v1757 = vmul.f32 %v1756, %v1755
  %v1758 = vmul.f32 0.5, %v1757
  %v1759 = vsub.f32 1.5, %v1758
  %v1760 = vmul.f32 %v1755, %v1759
  %vm1761 = vweird.f32 %v1286
  %vm1762 = vweird.f32 %v1755
  %vm1763 = vmor %vm1761, %vm1762
  %v1764 = vsel %vm1763, %v1755, %v1760
  %v1765 = vrsqrt.pop %v1287
  %v1766 = vmul.f32 %v1765, %v1287
  %v1767 = vmul.f32 %v1766, %v1765
  %v1768 = vmul.f32 0.5, %v1767
  %v1769 = vsub.f32 1.5, %v1768
  %v1770 = vmul.f32 %v1765, %v1769
  %vm1771 = vweird.f32 %v1287
  %vm1772 = vweird.f32 %v1765
  %vm1773 = vmor %vm1771, %vm1772
  %v1774 = vsel %vm1773, %v1765, %v1770
  %v1775 = vrsqrt.pop %v1288
  %v1776 = vmul.f32 %v1775, %v1288
  %v1777 = vmul.f32 %v1776, %v1775
  %v1778 = vmul.f32 0.5, %v1777
  %v1779 = vsub.f32 1.5, %v1778
  %v1780 = vmul.f32 %v1775, %v1779
  %vm1781 = vweird.f32 %v1288
  %vm1782 = vweird.f32 %v1775
  %vm1783 = vmor %vm1781, %vm1782
  %v1784 = vsel %vm1783, %v1775, %v1780
  %v1785 = vrsqrt.pop %v1289
  %v1786 = vmul.f32 %v1785, %v1289
  %v1787 = vmul.f32 %v1786, %v1785
  %v1788 = vmul.f32 0.5, %v1787
  %v1789 = vsub.f32 1.5, %v1788
  %v1790 = vmul.f32 %v1785, %v1789
  %vm1791 = vweird.f32 %v1289
  %vm1792 = vweird.f32 %v1785
  %vm1793 = vmor %vm1791, %vm1792
  %v1794 = vsel %vm1793, %v1785, %v1790
  %v1795 = vrsqrt.pop %v1290
  %v1796 = vmul.f32 %v1795, %v1290
  %v1797 = vmul.f32 %v1796, %v1795
  %v1798 = vmul.f32 0.5, %v1797
  %v1799 = vsub.f32 1.5, %v1798
  %v1800 = vmul.f32 %v1795, %v1799
  %vm1801 = vweird.f32 %v1290
  %vm1802 = vweird.f32 %v1795
  %vm1803 = vmor %vm1801, %vm1802
  %v1804 = vsel %vm1803, %v1795, %v1800
  %v1805 = vrsqrt.pop %v1291
  %v1806 = vmul.f32 %v1805, %v1291
  %v1807 = vmul.f32 %v1806, %v1805
  %v1808 = vmul.f32 0.5, %v1807
  %v1809 = vsub.f32 1.5, %v1808
  %v1810 = vmul.f32 %v1805, %v1809
  %vm1811 = vweird.f32 %v1291
  %vm1812 = vweird.f32 %v1805
  %vm1813 = vmor %vm1811, %vm1812
  %v1814 = vsel %vm1813, %v1805, %v1810
  %v1815 = vrsqrt.pop %v1292
  %v1816 = vmul.f32 %v1815, %v1292
  %v1817 = vmul.f32 %v1816, %v1815
  %v1818 = vmul.f32 0.5, %v1817
  %v1819 = vsub.f32 1.5, %v1818
  %v1820 = vmul.f32 %v1815, %v1819
  %vm1821 = vweird.f32 %v1292
  %vm1822 = vweird.f32 %v1815
  %vm1823 = vmor %vm1821, %vm1822
  %v1824 = vsel %vm1823, %v1815, %v1820
  %v1825 = vrsqrt.pop %v1293
  %v1826 = vmul.f32 %v1825, %v1293
  %v1827 = vmul.f32 %v1826, %v1825
  %v1828 = vmul.f32 0.5, %v1827
  %v1829 = vsub.f32 1.5, %v1828
  %v1830 = vmul.f32 %v1825, %v1829
  %vm1831 = vweird.f32 %v1293
  %vm1832 = vweird.f32 %v1825
  %vm1833 = vmor %vm1831, %vm1832
  %v1834 = vsel %vm1833, %v1825, %v1830
  %v1835 = vrsqrt.pop %v1294
  %v1836 = vmul.f32 %v1835, %v1294
  %v1837 = vmul.f32 %v1836, %v1835
  %v1838 = vmul.f32 0.5, %v1837
  %v1839 = vsub.f32 1.5, %v1838
  %v1840 = vmul.f32 %v1835, %v1839
  %vm1841 = vweird.f32 %v1294
  %vm1842 = vweird.f32 %v1835
  %vm1843 = vmor %vm1841, %vm1842
  %v1844 = vsel %vm1843, %v1835, %v1840
  %v1845 = vrsqrt.pop %v1295
  %v1846 = vmul.f32 %v1845, %v1295
  %v1847 = vmul.f32 %v1846, %v1845
  %v1848 = vmul.f32 0.5, %v1847
  %v1849 = vsub.f32 1.5, %v1848
  %v1850 = vmul.f32 %v1845, %v1849
  %vm1851 = vweird.f32 %v1295
  %vm1852 = vweird.f32 %v1845
  %vm1853 = vmor %vm1851, %vm1852
  %v1854 = vsel %vm1853, %v1845, %v1850
  %v1855 = vrsqrt.pop %v1296
  %v1856 = vmul.f32 %v1855, %v1296
  %v1857 = vmul.f32 %v1856, %v1855
  %v1858 = vmul.f32 0.5, %v1857
  %v1859 = vsub.f32 1.5, %v1858
  %v1860 = vmul.f32 %v1855, %v1859
  %vm1861 = vweird.f32 %v1296
  %vm1862 = vweird.f32 %v1855
  %vm1863 = vmor %vm1861, %vm1862
  %v1864 = vsel %vm1863, %v1855, %v1860
  %v1865 = vrsqrt.pop %v1297
  %v1866 = vmul.f32 %v1865, %v1297
  %v1867 = vmul.f32 %v1866, %v1865
  %v1868 = vmul.f32 0.5, %v1867
  %v1869 = vsub.f32 1.5, %v1868
  %v1870 = vmul.f32 %v1865, %v1869
  %vm1871 = vweird.f32 %v1297
  %vm1872 = vweird.f32 %v1865
  %vm1873 = vmor %vm1871, %vm1872
  %v1874 = vsel %vm1873, %v1865, %v1870
  %v1875 = vrsqrt.pop %v1298
  %v1876 = vmul.f32 %v1875, %v1298
  %v1877 = vmul.f32 %v1876, %v1875
  %v1878 = vmul.f32 0.5, %v1877
  %v1879 = vsub.f32 1.5, %v1878
  %v1880 = vmul.f32 %v1875, %v1879
  %vm1881 = vweird.f32 %v1298
  %vm1882 = vweird.f32 %v1875
  %vm1883 = vmor %vm1881, %vm1882
  %v1884 = vsel %vm1883, %v1875, %v1880
  %v1885 = vrsqrt.pop %v1299
  %v1886 = vmul.f32 %v1885, %v1299
  %v1887 = vmul.f32 %v1886, %v1885
  %v1888 = vmul.f32 0.5, %v1887
  %v1889 = vsub.f32 1.5, %v1888
  %v1890 = vmul.f32 %v1885, %v1889
  %vm1891 = vweird.f32 %v1299
  %vm1892 = vweird.f32 %v1885
  %vm1893 = vmor %vm1891, %vm1892
  %v1894 = vsel %vm1893, %v1885, %v1890
  %v1895 = vrsqrt.pop %v1300
  %v1896 = vmul.f32 %v1895, %v1300
  %v1897 = vmul.f32 %v1896, %v1895
  %v1898 = vmul.f32 0.5, %v1897
  %v1899 = vsub.f32 1.5, %v1898
  %v1900 = vmul.f32 %v1895, %v1899
  %vm1901 = vweird.f32 %v1300
  %vm1902 = vweird.f32 %v1895
  %vm1903 = vmor %vm1901, %vm1902
  %v1904 = vsel %vm1903, %v1895, %v1900
  %v1905 = vrsqrt.pop %v1301
  %v1906 = vmul.f32 %v1905, %v1301
  %v1907 = vmul.f32 %v1906, %v1905
  %v1908 = vmul.f32 0.5, %v1907
  %v1909 = vsub.f32 1.5, %v1908
  %v1910 = vmul.f32 %v1905, %v1909
  %vm1911 = vweird.f32 %v1301
  %vm1912 = vweird.f32 %v1905
  %vm1913 = vmor %vm1911, %vm1912
  %v1914 = vsel %vm1913, %v1905, %v1910
  %v1915 = vrsqrt.pop %v1302
  %v1916 = vmul.f32 %v1915, %v1302
  %v1917 = vmul.f32 %v1916, %v1915
  %v1918 = vmul.f32 0.5, %v1917
  %v1919 = vsub.f32 1.5, %v1918
  %v1920 = vmul.f32 %v1915, %v1919
  %vm1921 = vweird.f32 %v1302
  %vm1922 = vweird.f32 %v1915
  %vm1923 = vmor %vm1921, %vm1922
  %v1924 = vsel %vm1923, %v1915, %v1920
  %v1925 = vrsqrt.pop %v1303
  %v1926 = vmul.f32 %v1925, %v1303
  %v1927 = vmul.f32 %v1926, %v1925
  %v1928 = vmul.f32 0.5, %v1927
  %v1929 = vsub.f32 1.5, %v1928
  %v1930 = vmul.f32 %v1925, %v1929
  %vm1931 = vweird.f32 %v1303
  %vm1932 = vweird.f32 %v1925
  %vm1933 = vmor %vm1931, %vm1932
  %v1934 = vsel %vm1933, %v1925, %v1930
  %v1935 = vrsqrt.pop %v1304
  %v1936 = vmul.f32 %v1935, %v1304
  %v1937 = vmul.f32 %v1936, %v1935
  %v1938 = vmul.f32 0.5, %v1937
  %v1939 = vsub.f32 1.5, %v1938
  %v1940 = vmul.f32 %v1935, %v1939
  %vm1941 = vweird.f32 %v1304
  %vm1942 = vweird.f32 %v1935
  %vm1943 = vmor %vm1941, %vm1942
  %v1944 = vsel %vm1943, %v1935, %v1940
  %v1945 = vmul.f32 %v1177, %v1314
  %v1946 = vmul.f32 %v1178, %v1324
  %v1947 = vmul.f32 %v1179, %v1334
  %v1948 = vmul.f32 %v1180, %v1344
  %v1949 = vmul.f32 %v1181, %v1354
  %v1950 = vmul.f32 %v1182, %v1364
  %v1951 = vmul.f32 %v1183, %v1374
  %v1952 = vmul.f32 %v1184, %v1384
  %v1953 = vmul.f32 %v1185, %v1394
  %v1954 = vmul.f32 %v1186, %v1404
  %v1955 = vmul.f32 %v1187, %v1414
  %v1956 = vmul.f32 %v1188, %v1424
  %v1957 = vmul.f32 %v1189, %v1434
  %v1958 = vmul.f32 %v1190, %v1444
  %v1959 = vmul.f32 %v1191, %v1454
  %v1960 = vmul.f32 %v1192, %v1464
  %v1961 = vmul.f32 %v1193, %v1474
  %v1962 = vmul.f32 %v1194, %v1484
  %v1963 = vmul.f32 %v1195, %v1494
  %v1964 = vmul.f32 %v1196, %v1504
  %v1965 = vmul.f32 %v1197, %v1514
  %v1966 = vmul.f32 %v1198, %v1524
  %v1967 = vmul.f32 %v1199, %v1534
  %v1968 = vmul.f32 %v1200, %v1544
  %v1969 = vmul.f32 %v1201, %v1554
  %v1970 = vmul.f32 %v1202, %v1564
  %v1971 = vmul.f32 %v1203, %v1574
  %v1972 = vmul.f32 %v1204, %v1584
  %v1973 = vmul.f32 %v1205, %v1594
  %v1974 = vmul.f32 %v1206, %v1604
  %v1975 = vmul.f32 %v1207, %v1614
  %v1976 = vmul.f32 %v1208, %v1624
  %v1977 = vmul.f32 %v1209, %v1634
  %v1978 = vmul.f32 %v1210, %v1644
  %v1979 = vmul.f32 %v1211, %v1654
  %v1980 = vmul.f32 %v1212, %v1664
  %v1981 = vmul.f32 %v1213, %v1674
  %v1982 = vmul.f32 %v1214, %v1684
  %v1983 = vmul.f32 %v1215, %v1694
  %v1984 = vmul.f32 %v1216, %v1704
  %v1985 = vmul.f32 %v1217, %v1714
  %v1986 = vmul.f32 %v1218, %v1724
  %v1987 = vmul.f32 %v1219, %v1734
  %v1988 = vmul.f32 %v1220, %v1744
  %v1989 = vmul.f32 %v1221, %v1754
  %v1990 = vmul.f32 %v1222, %v1764
  %v1991 = vmul.f32 %v1223, %v1774
  %v1992 = vmul.f32 %v1224, %v1784
  %v1993 = vmul.f32 %v1225, %v1794
  %v1994 = vmul.f32 %v1226, %v1804
  %v1995 = vmul.f32 %v1227, %v1814
  %v1996 = vmul.f32 %v1228, %v1824
  %v1997 = vmul.f32 %v1229, %v1834
  %v1998 = vmul.f32 %v1230, %v1844
  %v1999 = vmul.f32 %v1231, %v1854
  %v2000 = vmul.f32 %v1232, %v1864
  %v2001 = vmul.f32 %v1233, %v1874
  %v2002 = vmul.f32 %v1234, %v1884
  %v2003 = vmul.f32 %v1235, %v1894
  %v2004 = vmul.f32 %v1236, %v1904
  %v2005 = vmul.f32 %v1237, %v1914
  %v2006 = vmul.f32 %v1238, %v1924
  %v2007 = vmul.f32 %v1239, %v1934
  %v2008 = vmul.f32 %v1240, %v1944
  %v2009 = vperm.slane %v12, 0
  %v2010 = vadd.f32 %v1945, %v2009
  %v2011 = vadd.f32 %v1946, %v2009
  %v2012 = vadd.f32 %v1947, %v2009
  %v2013 = vadd.f32 %v1948, %v2009
  %v2014 = vadd.f32 %v1949, %v2009
  %v2015 = vadd.f32 %v1950, %v2009
  %v2016 = vadd.f32 %v1951, %v2009
  %v2017 = vadd.f32 %v1952, %v2009
  %v2018 = vadd.f32 %v1953, %v2009
  %v2019 = vadd.f32 %v1954, %v2009
  %v2020 = vadd.f32 %v1955, %v2009
  %v2021 = vadd.f32 %v1956, %v2009
  %v2022 = vadd.f32 %v1957, %v2009
  %v2023 = vadd.f32 %v1958, %v2009
  %v2024 = vadd.f32 %v1959, %v2009
  %v2025 = vadd.f32 %v1960, %v2009
  %v2026 = vadd.f32 %v1961, %v2009
  %v2027 = vadd.f32 %v1962, %v2009
  %v2028 = vadd.f32 %v1963, %v2009
  %v2029 = vadd.f32 %v1964, %v2009
  %v2030 = vadd.f32 %v1965, %v2009
  %v2031 = vadd.f32 %v1966, %v2009
  %v2032 = vadd.f32 %v1967, %v2009
  %v2033 = vadd.f32 %v1968, %v2009
  %v2034 = vadd.f32 %v1969, %v2009
  %v2035 = vadd.f32 %v1970, %v2009
  %v2036 = vadd.f32 %v1971, %v2009
  %v2037 = vadd.f32 %v1972, %v2009
  %v2038 = vadd.f32 %v1973, %v2009
  %v2039 = vadd.f32 %v1974, %v2009
  %v2040 = vadd.f32 %v1975, %v2009
  %v2041 = vadd.f32 %v1976, %v2009
  %v2042 = vadd.f32 %v1977, %v2009
  %v2043 = vadd.f32 %v1978, %v2009
  %v2044 = vadd.f32 %v1979, %v2009
  %v2045 = vadd.f32 %v1980, %v2009
  %v2046 = vadd.f32 %v1981, %v2009
  %v2047 = vadd.f32 %v1982, %v2009
  %v2048 = vadd.f32 %v1983, %v2009
  %v2049 = vadd.f32 %v1984, %v2009
  %v2050 = vadd.f32 %v1985, %v2009
  %v2051 = vadd.f32 %v1986, %v2009
  %v2052 = vadd.f32 %v1987, %v2009
  %v2053 = vadd.f32 %v1988, %v2009
  %v2054 = vadd.f32 %v1989, %v2009
  %v2055 = vadd.f32 %v1990, %v2009
  %v2056 = vadd.f32 %v1991, %v2009
  %v2057 = vadd.f32 %v1992, %v2009
  %v2058 = vadd.f32 %v1993, %v2009
  %v2059 = vadd.f32 %v1994, %v2009
  %v2060 = vadd.f32 %v1995, %v2009
  %v2061 = vadd.f32 %v1996, %v2009
  %v2062 = vadd.f32 %v1997, %v2009
  %v2063 = vadd.f32 %v1998, %v2009
  %v2064 = vadd.f32 %v1999, %v2009
  %v2065 = vadd.f32 %v2000, %v2009
  %v2066 = vadd.f32 %v2001, %v2009
  %v2067 = vadd.f32 %v2002, %v2009
  %v2068 = vadd.f32 %v2003, %v2009
  %v2069 = vadd.f32 %v2004, %v2009
  %v2070 = vadd.f32 %v2005, %v2009
  %v2071 = vadd.f32 %v2006, %v2009
  %v2072 = vadd.f32 %v2007, %v2009
  %v2073 = vadd.f32 %v2008, %v2009
  %v2074 = vmax.f32 %v2010, 0.0
  %v2075 = vmax.f32 %v2011, 0.0
  %v2076 = vmax.f32 %v2012, 0.0
  %v2077 = vmax.f32 %v2013, 0.0
  %v2078 = vmax.f32 %v2014, 0.0
  %v2079 = vmax.f32 %v2015, 0.0
  %v2080 = vmax.f32 %v2016, 0.0
  %v2081 = vmax.f32 %v2017, 0.0
  %v2082 = vmax.f32 %v2018, 0.0
  %v2083 = vmax.f32 %v2019, 0.0
  %v2084 = vmax.f32 %v2020, 0.0
  %v2085 = vmax.f32 %v2021, 0.0
  %v2086 = vmax.f32 %v2022, 0.0
  %v2087 = vmax.f32 %v2023, 0.0
  %v2088 = vmax.f32 %v2024, 0.0
  %v2089 = vmax.f32 %v2025, 0.0
  %v2090 = vmax.f32 %v2026, 0.0
  %v2091 = vmax.f32 %v2027, 0.0
  %v2092 = vmax.f32 %v2028, 0.0
  %v2093 = vmax.f32 %v2029, 0.0
  %v2094 = vmax.f32 %v2030, 0.0
  %v2095 = vmax.f32 %v2031, 0.0
  %v2096 = vmax.f32 %v2032, 0.0
  %v2097 = vmax.f32 %v2033, 0.0
  %v2098 = vmax.f32 %v2034, 0.0
  %v2099 = vmax.f32 %v2035, 0.0
  %v2100 = vmax.f32 %v2036, 0.0
  %v2101 = vmax.f32 %v2037, 0.0
  %v2102 = vmax.f32 %v2038, 0.0
  %v2103 = vmax.f32 %v2039, 0.0
  %v2104 = vmax.f32 %v2040, 0.0
  %v2105 = vmax.f32 %v2041, 0.0
  %v2106 = vmax.f32 %v2042, 0.0
  %v2107 = vmax.f32 %v2043, 0.0
  %v2108 = vmax.f32 %v2044, 0.0
  %v2109 = vmax.f32 %v2045, 0.0
  %v2110 = vmax.f32 %v2046, 0.0
  %v2111 = vmax.f32 %v2047, 0.0
  %v2112 = vmax.f32 %v2048, 0.0
  %v2113 = vmax.f32 %v2049, 0.0
  %v2114 = vmax.f32 %v2050, 0.0
  %v2115 = vmax.f32 %v2051, 0.0
  %v2116 = vmax.f32 %v2052, 0.0
  %v2117 = vmax.f32 %v2053, 0.0
  %v2118 = vmax.f32 %v2054, 0.0
  %v2119 = vmax.f32 %v2055, 0.0
  %v2120 = vmax.f32 %v2056, 0.0
  %v2121 = vmax.f32 %v2057, 0.0
  %v2122 = vmax.f32 %v2058, 0.0
  %v2123 = vmax.f32 %v2059, 0.0
  %v2124 = vmax.f32 %v2060, 0.0
  %v2125 = vmax.f32 %v2061, 0.0
  %v2126 = vmax.f32 %v2062, 0.0
  %v2127 = vmax.f32 %v2063, 0.0
  %v2128 = vmax.f32 %v2064, 0.0
  %v2129 = vmax.f32 %v2065, 0.0
  %v2130 = vmax.f32 %v2066, 0.0
  %v2131 = vmax.f32 %v2067, 0.0
  %v2132 = vmax.f32 %v2068, 0.0
  %v2133 = vmax.f32 %v2069, 0.0
  %v2134 = vmax.f32 %v2070, 0.0
  %v2135 = vmax.f32 %v2071, 0.0
  %v2136 = vmax.f32 %v2072, 0.0
  %v2137 = vmax.f32 %v2073, 0.0
  %v2138 = vmul.f32 %v2074, %v1314
  %v2139 = vmul.f32 %v2075, %v1324
  %v2140 = vmul.f32 %v2076, %v1334
  %v2141 = vmul.f32 %v2077, %v1344
  %v2142 = vmul.f32 %v2078, %v1354
  %v2143 = vmul.f32 %v2079, %v1364
  %v2144 = vmul.f32 %v2080, %v1374
  %v2145 = vmul.f32 %v2081, %v1384
  %v2146 = vmul.f32 %v2082, %v1394
  %v2147 = vmul.f32 %v2083, %v1404
  %v2148 = vmul.f32 %v2084, %v1414
  %v2149 = vmul.f32 %v2085, %v1424
  %v2150 = vmul.f32 %v2086, %v1434
  %v2151 = vmul.f32 %v2087, %v1444
  %v2152 = vmul.f32 %v2088, %v1454
  %v2153 = vmul.f32 %v2089, %v1464
  %v2154 = vmul.f32 %v2090, %v1474
  %v2155 = vmul.f32 %v2091, %v1484
  %v2156 = vmul.f32 %v2092, %v1494
  %v2157 = vmul.f32 %v2093, %v1504
  %v2158 = vmul.f32 %v2094, %v1514
  %v2159 = vmul.f32 %v2095, %v1524
  %v2160 = vmul.f32 %v2096, %v1534
  %v2161 = vmul.f32 %v2097, %v1544
  %v2162 = vmul.f32 %v2098, %v1554
  %v2163 = vmul.f32 %v2099, %v1564
  %v2164 = vmul.f32 %v2100, %v1574
  %v2165 = vmul.f32 %v2101, %v1584
  %v2166 = vmul.f32 %v2102, %v1594
  %v2167 = vmul.f32 %v2103, %v1604
  %v2168 = vmul.f32 %v2104, %v1614
  %v2169 = vmul.f32 %v2105, %v1624
  %v2170 = vmul.f32 %v2106, %v1634
  %v2171 = vmul.f32 %v2107, %v1644
  %v2172 = vmul.f32 %v2108, %v1654
  %v2173 = vmul.f32 %v2109, %v1664
  %v2174 = vmul.f32 %v2110, %v1674
  %v2175 = vmul.f32 %v2111, %v1684
  %v2176 = vmul.f32 %v2112, %v1694
  %v2177 = vmul.f32 %v2113, %v1704
  %v2178 = vmul.f32 %v2114, %v1714
  %v2179 = vmul.f32 %v2115, %v1724
  %v2180 = vmul.f32 %v2116, %v1734
  %v2181 = vmul.f32 %v2117, %v1744
  %v2182 = vmul.f32 %v2118, %v1754
  %v2183 = vmul.f32 %v2119, %v1764
  %v2184 = vmul.f32 %v2120, %v1774
  %v2185 = vmul.f32 %v2121, %v1784
  %v2186 = vmul.f32 %v2122, %v1794
  %v2187 = vmul.f32 %v2123, %v1804
  %v2188 = vmul.f32 %v2124, %v1814
  %v2189 = vmul.f32 %v2125, %v1824
  %v2190 = vmul.f32 %v2126, %v1834
  %v2191 = vmul.f32 %v2127, %v1844
  %v2192 = vmul.f32 %v2128, %v1854
  %v2193 = vmul.f32 %v2129, %v1864
  %v2194 = vmul.f32 %v2130, %v1874
  %v2195 = vmul.f32 %v2131, %v1884
  %v2196 = vmul.f32 %v2132, %v1894
  %v2197 = vmul.f32 %v2133, %v1904
  %v2198 = vmul.f32 %v2134, %v1914
  %v2199 = vmul.f32 %v2135, %v1924
  %v2200 = vmul.f32 %v2136, %v1934
  %v2201 = vmul.f32 %v2137, %v1944
  %v2202 = vmul.f32 %v726, %v2138
  %v2203 = vmul.f32 %v727, %v2139
  %v2204 = vmul.f32 %v728, %v2140
  %v2205 = vmul.f32 %v729, %v2141
  %v2206 = vmul.f32 %v730, %v2142
  %v2207 = vmul.f32 %v731, %v2143
  %v2208 = vmul.f32 %v732, %v2144
  %v2209 = vmul.f32 %v733, %v2145
  %v2210 = vmul.f32 %v734, %v2146
  %v2211 = vmul.f32 %v735, %v2147
  %v2212 = vmul.f32 %v736, %v2148
  %v2213 = vmul.f32 %v737, %v2149
  %v2214 = vmul.f32 %v738, %v2150
  %v2215 = vmul.f32 %v739, %v2151
  %v2216 = vmul.f32 %v740, %v2152
  %v2217 = vmul.f32 %v741, %v2153
  %v2218 = vmul.f32 %v742, %v2154
  %v2219 = vmul.f32 %v743, %v2155
  %v2220 = vmul.f32 %v744, %v2156
  %v2221 = vmul.f32 %v745, %v2157
  %v2222 = vmul.f32 %v746, %v2158
  %v2223 = vmul.f32 %v747, %v2159
  %v2224 = vmul.f32 %v748, %v2160
  %v2225 = vmul.f32 %v749, %v2161
  %v2226 = vmul.f32 %v750, %v2162
  %v2227 = vmul.f32 %v751, %v2163
  %v2228 = vmul.f32 %v752, %v2164
  %v2229 = vmul.f32 %v753, %v2165
  %v2230 = vmul.f32 %v754, %v2166
  %v2231 = vmul.f32 %v755, %v2167
  %v2232 = vmul.f32 %v756, %v2168
  %v2233 = vmul.f32 %v757, %v2169
  %v2234 = vmul.f32 %v758, %v2170
  %v2235 = vmul.f32 %v759, %v2171
  %v2236 = vmul.f32 %v760, %v2172
  %v2237 = vmul.f32 %v761, %v2173
  %v2238 = vmul.f32 %v762, %v2174
  %v2239 = vmul.f32 %v763, %v2175
  %v2240 = vmul.f32 %v764, %v2176
  %v2241 = vmul.f32 %v765, %v2177
  %v2242 = vmul.f32 %v766, %v2178
  %v2243 = vmul.f32 %v767, %v2179
  %v2244 = vmul.f32 %v768, %v2180
  %v2245 = vmul.f32 %v769, %v2181
  %v2246 = vmul.f32 %v770, %v2182
  %v2247 = vmul.f32 %v771, %v2183
  %v2248 = vmul.f32 %v772, %v2184
  %v2249 = vmul.f32 %v773, %v2185
  %v2250 = vmul.f32 %v774, %v2186
  %v2251 = vmul.f32 %v775, %v2187
  %v2252 = vmul.f32 %v776, %v2188
  %v2253 = vmul.f32 %v777, %v2189
  %v2254 = vmul.f32 %v778, %v2190
  %v2255 = vmul.f32 %v779, %v2191
  %v2256 = vmul.f32 %v780, %v2192
  %v2257 = vmul.f32 %v781, %v2193
  %v2258 = vmul.f32 %v782, %v2194
  %v2259 = vmul.f32 %v783, %v2195
  %v2260 = vmul.f32 %v784, %v2196
  %v2261 = vmul.f32 %v785, %v2197
  %v2262 = vmul.f32 %v786, %v2198
  %v2263 = vmul.f32 %v787, %v2199
  %v2264 = vmul.f32 %v788, %v2200
  %v2265 = vmul.f32 %v789, %v2201
  %v2266 = vpack.c.bf16 %v2202, %v2202
  %v2267 = vpack.c.bf16 %v2203, %v2203
  %v2268 = vpack.c.bf16 %v2204, %v2204
  %v2269 = vpack.c.bf16 %v2205, %v2205
  %v2270 = vpack.c.bf16 %v2206, %v2206
  %v2271 = vpack.c.bf16 %v2207, %v2207
  %v2272 = vpack.c.bf16 %v2208, %v2208
  %v2273 = vpack.c.bf16 %v2209, %v2209
  %v2274 = vpack.c.bf16 %v2210, %v2210
  %v2275 = vpack.c.bf16 %v2211, %v2211
  %v2276 = vpack.c.bf16 %v2212, %v2212
  %v2277 = vpack.c.bf16 %v2213, %v2213
  %v2278 = vpack.c.bf16 %v2214, %v2214
  %v2279 = vpack.c.bf16 %v2215, %v2215
  %v2280 = vpack.c.bf16 %v2216, %v2216
  %v2281 = vpack.c.bf16 %v2217, %v2217
  %v2282 = vpack.c.bf16 %v2218, %v2218
  %v2283 = vpack.c.bf16 %v2219, %v2219
  %v2284 = vpack.c.bf16 %v2220, %v2220
  %v2285 = vpack.c.bf16 %v2221, %v2221
  %v2286 = vpack.c.bf16 %v2222, %v2222
  %v2287 = vpack.c.bf16 %v2223, %v2223
  %v2288 = vpack.c.bf16 %v2224, %v2224
  %v2289 = vpack.c.bf16 %v2225, %v2225
  %v2290 = vpack.c.bf16 %v2226, %v2226
  %v2291 = vpack.c.bf16 %v2227, %v2227
  %v2292 = vpack.c.bf16 %v2228, %v2228
  %v2293 = vpack.c.bf16 %v2229, %v2229
  %v2294 = vpack.c.bf16 %v2230, %v2230
  %v2295 = vpack.c.bf16 %v2231, %v2231
  %v2296 = vpack.c.bf16 %v2232, %v2232
  %v2297 = vpack.c.bf16 %v2233, %v2233
  %v2298 = vpack.c.bf16 %v2234, %v2234
  %v2299 = vpack.c.bf16 %v2235, %v2235
  %v2300 = vpack.c.bf16 %v2236, %v2236
  %v2301 = vpack.c.bf16 %v2237, %v2237
  %v2302 = vpack.c.bf16 %v2238, %v2238
  %v2303 = vpack.c.bf16 %v2239, %v2239
  %v2304 = vpack.c.bf16 %v2240, %v2240
  %v2305 = vpack.c.bf16 %v2241, %v2241
  %v2306 = vpack.c.bf16 %v2242, %v2242
  %v2307 = vpack.c.bf16 %v2243, %v2243
  %v2308 = vpack.c.bf16 %v2244, %v2244
  %v2309 = vpack.c.bf16 %v2245, %v2245
  %v2310 = vpack.c.bf16 %v2246, %v2246
  %v2311 = vpack.c.bf16 %v2247, %v2247
  %v2312 = vpack.c.bf16 %v2248, %v2248
  %v2313 = vpack.c.bf16 %v2249, %v2249
  %v2314 = vpack.c.bf16 %v2250, %v2250
  %v2315 = vpack.c.bf16 %v2251, %v2251
  %v2316 = vpack.c.bf16 %v2252, %v2252
  %v2317 = vpack.c.bf16 %v2253, %v2253
  %v2318 = vpack.c.bf16 %v2254, %v2254
  %v2319 = vpack.c.bf16 %v2255, %v2255
  %v2320 = vpack.c.bf16 %v2256, %v2256
  %v2321 = vpack.c.bf16 %v2257, %v2257
  %v2322 = vpack.c.bf16 %v2258, %v2258
  %v2323 = vpack.c.bf16 %v2259, %v2259
  %v2324 = vpack.c.bf16 %v2260, %v2260
  %v2325 = vpack.c.bf16 %v2261, %v2261
  %v2326 = vpack.c.bf16 %v2262, %v2262
  %v2327 = vpack.c.bf16 %v2263, %v2263
  %v2328 = vpack.c.bf16 %v2264, %v2264
  %v2329 = vpack.c.bf16 %v2265, %v2265
  %vm2330 = vcmask 519168
  %2331 = vst.msk [vmem:[%s2] sm:$0xf] %vm2330, %v2266
  %2332 = vst.msk [vmem:[%s2 + $0x4] sm:$0xf] %vm2330, %v2267
  %2333 = vst.msk [vmem:[%s2 + $0x8] sm:$0xf] %vm2330, %v2268
  %2334 = vst.msk [vmem:[%s2 + $0xc] sm:$0xf] %vm2330, %v2269
  %2335 = vst.msk [vmem:[%s2 + $0x10] sm:$0xf] %vm2330, %v2270
  %2336 = vst.msk [vmem:[%s2 + $0x14] sm:$0xf] %vm2330, %v2271
  %2337 = vst.msk [vmem:[%s2 + $0x18] sm:$0xf] %vm2330, %v2272
  %2338 = vst.msk [vmem:[%s2 + $0x1c] sm:$0xf] %vm2330, %v2273
  %2339 = vst.msk [vmem:[%s2 + $0x20] sm:$0xf] %vm2330, %v2274
  %2340 = vst.msk [vmem:[%s2 + $0x24] sm:$0xf] %vm2330, %v2275
  %2341 = vst.msk [vmem:[%s2 + $0x28] sm:$0xf] %vm2330, %v2276
  %2342 = vst.msk [vmem:[%s2 + $0x2c] sm:$0xf] %vm2330, %v2277
  %2343 = vst.msk [vmem:[%s2 + $0x30] sm:$0xf] %vm2330, %v2278
  %2344 = vst.msk [vmem:[%s2 + $0x34] sm:$0xf] %vm2330, %v2279
  %2345 = vst.msk [vmem:[%s2 + $0x38] sm:$0xf] %vm2330, %v2280
  %2346 = vst.msk [vmem:[%s2 + $0x3c] sm:$0xf] %vm2330, %v2281
  %2347 = vst.msk [vmem:[%s2 + $0x40] sm:$0xf] %vm2330, %v2282
  %2348 = vst.msk [vmem:[%s2 + $0x44] sm:$0xf] %vm2330, %v2283
  %2349 = vst.msk [vmem:[%s2 + $0x48] sm:$0xf] %vm2330, %v2284
  %2350 = vst.msk [vmem:[%s2 + $0x4c] sm:$0xf] %vm2330, %v2285
  %2351 = vst.msk [vmem:[%s2 + $0x50] sm:$0xf] %vm2330, %v2286
  %2352 = vst.msk [vmem:[%s2 + $0x54] sm:$0xf] %vm2330, %v2287
  %2353 = vst.msk [vmem:[%s2 + $0x58] sm:$0xf] %vm2330, %v2288
  %2354 = vst.msk [vmem:[%s2 + $0x5c] sm:$0xf] %vm2330, %v2289
  %2355 = vst.msk [vmem:[%s2 + $0x60] sm:$0xf] %vm2330, %v2290
  %2356 = vst.msk [vmem:[%s2 + $0x64] sm:$0xf] %vm2330, %v2291
  %2357 = vst.msk [vmem:[%s2 + $0x68] sm:$0xf] %vm2330, %v2292
  %2358 = vst.msk [vmem:[%s2 + $0x6c] sm:$0xf] %vm2330, %v2293
  %2359 = vst.msk [vmem:[%s2 + $0x70] sm:$0xf] %vm2330, %v2294
  %2360 = vst.msk [vmem:[%s2 + $0x74] sm:$0xf] %vm2330, %v2295
  %2361 = vst.msk [vmem:[%s2 + $0x78] sm:$0xf] %vm2330, %v2296
  %2362 = vst.msk [vmem:[%s2 + $0x7c] sm:$0xf] %vm2330, %v2297
  %2363 = vst.msk [vmem:[%s2 + $0x80] sm:$0xf] %vm2330, %v2298
  %2364 = vst.msk [vmem:[%s2 + $0x84] sm:$0xf] %vm2330, %v2299
  %2365 = vst.msk [vmem:[%s2 + $0x88] sm:$0xf] %vm2330, %v2300
  %2366 = vst.msk [vmem:[%s2 + $0x8c] sm:$0xf] %vm2330, %v2301
  %2367 = vst.msk [vmem:[%s2 + $0x90] sm:$0xf] %vm2330, %v2302
  %2368 = vst.msk [vmem:[%s2 + $0x94] sm:$0xf] %vm2330, %v2303
  %2369 = vst.msk [vmem:[%s2 + $0x98] sm:$0xf] %vm2330, %v2304
  %2370 = vst.msk [vmem:[%s2 + $0x9c] sm:$0xf] %vm2330, %v2305
  %2371 = vst.msk [vmem:[%s2 + $0xa0] sm:$0xf] %vm2330, %v2306
  %2372 = vst.msk [vmem:[%s2 + $0xa4] sm:$0xf] %vm2330, %v2307
  %2373 = vst.msk [vmem:[%s2 + $0xa8] sm:$0xf] %vm2330, %v2308
  %2374 = vst.msk [vmem:[%s2 + $0xac] sm:$0xf] %vm2330, %v2309
  %2375 = vst.msk [vmem:[%s2 + $0xb0] sm:$0xf] %vm2330, %v2310
  %2376 = vst.msk [vmem:[%s2 + $0xb4] sm:$0xf] %vm2330, %v2311
  %2377 = vst.msk [vmem:[%s2 + $0xb8] sm:$0xf] %vm2330, %v2312
  %2378 = vst.msk [vmem:[%s2 + $0xbc] sm:$0xf] %vm2330, %v2313
  %2379 = vst.msk [vmem:[%s2 + $0xc0] sm:$0xf] %vm2330, %v2314
  %2380 = vst.msk [vmem:[%s2 + $0xc4] sm:$0xf] %vm2330, %v2315
  %2381 = vst.msk [vmem:[%s2 + $0xc8] sm:$0xf] %vm2330, %v2316
  %2382 = vst.msk [vmem:[%s2 + $0xcc] sm:$0xf] %vm2330, %v2317
  %2383 = vst.msk [vmem:[%s2 + $0xd0] sm:$0xf] %vm2330, %v2318
  %2384 = vst.msk [vmem:[%s2 + $0xd4] sm:$0xf] %vm2330, %v2319
  %2385 = vst.msk [vmem:[%s2 + $0xd8] sm:$0xf] %vm2330, %v2320
  %2386 = vst.msk [vmem:[%s2 + $0xdc] sm:$0xf] %vm2330, %v2321
  %2387 = vst.msk [vmem:[%s2 + $0xe0] sm:$0xf] %vm2330, %v2322
  %2388 = vst.msk [vmem:[%s2 + $0xe4] sm:$0xf] %vm2330, %v2323
  %2389 = vst.msk [vmem:[%s2 + $0xe8] sm:$0xf] %vm2330, %v2324
  %2390 = vst.msk [vmem:[%s2 + $0xec] sm:$0xf] %vm2330, %v2325
  %2391 = vst.msk [vmem:[%s2 + $0xf0] sm:$0xf] %vm2330, %v2326
  %2392 = vst.msk [vmem:[%s2 + $0xf4] sm:$0xf] %vm2330, %v2327
  %2393 = vst.msk [vmem:[%s2 + $0xf8] sm:$0xf] %vm2330, %v2328
  %2394 = vst.msk [vmem:[%s2 + $0xfc] sm:$0xf] %vm2330, %v2329
  %v2395 = vmul.f32 %v985, %v2138
  %v2396 = vmul.f32 %v986, %v2139
  %v2397 = vmul.f32 %v987, %v2140
  %v2398 = vmul.f32 %v988, %v2141
  %v2399 = vmul.f32 %v989, %v2142
  %v2400 = vmul.f32 %v990, %v2143
  %v2401 = vmul.f32 %v991, %v2144
  %v2402 = vmul.f32 %v992, %v2145
  %v2403 = vmul.f32 %v993, %v2146
  %v2404 = vmul.f32 %v994, %v2147
  %v2405 = vmul.f32 %v995, %v2148
  %v2406 = vmul.f32 %v996, %v2149
  %v2407 = vmul.f32 %v997, %v2150
  %v2408 = vmul.f32 %v998, %v2151
  %v2409 = vmul.f32 %v999, %v2152
  %v2410 = vmul.f32 %v1000, %v2153
  %v2411 = vmul.f32 %v1001, %v2154
  %v2412 = vmul.f32 %v1002, %v2155
  %v2413 = vmul.f32 %v1003, %v2156
  %v2414 = vmul.f32 %v1004, %v2157
  %v2415 = vmul.f32 %v1005, %v2158
  %v2416 = vmul.f32 %v1006, %v2159
  %v2417 = vmul.f32 %v1007, %v2160
  %v2418 = vmul.f32 %v1008, %v2161
  %v2419 = vmul.f32 %v1009, %v2162
  %v2420 = vmul.f32 %v1010, %v2163
  %v2421 = vmul.f32 %v1011, %v2164
  %v2422 = vmul.f32 %v1012, %v2165
  %v2423 = vmul.f32 %v1013, %v2166
  %v2424 = vmul.f32 %v1014, %v2167
  %v2425 = vmul.f32 %v1015, %v2168
  %v2426 = vmul.f32 %v1016, %v2169
  %v2427 = vmul.f32 %v1017, %v2170
  %v2428 = vmul.f32 %v1018, %v2171
  %v2429 = vmul.f32 %v1019, %v2172
  %v2430 = vmul.f32 %v1020, %v2173
  %v2431 = vmul.f32 %v1021, %v2174
  %v2432 = vmul.f32 %v1022, %v2175
  %v2433 = vmul.f32 %v1023, %v2176
  %v2434 = vmul.f32 %v1024, %v2177
  %v2435 = vmul.f32 %v1025, %v2178
  %v2436 = vmul.f32 %v1026, %v2179
  %v2437 = vmul.f32 %v1027, %v2180
  %v2438 = vmul.f32 %v1028, %v2181
  %v2439 = vmul.f32 %v1029, %v2182
  %v2440 = vmul.f32 %v1030, %v2183
  %v2441 = vmul.f32 %v1031, %v2184
  %v2442 = vmul.f32 %v1032, %v2185
  %v2443 = vmul.f32 %v1033, %v2186
  %v2444 = vmul.f32 %v1034, %v2187
  %v2445 = vmul.f32 %v1035, %v2188
  %v2446 = vmul.f32 %v1036, %v2189
  %v2447 = vmul.f32 %v1037, %v2190
  %v2448 = vmul.f32 %v1038, %v2191
  %v2449 = vmul.f32 %v1039, %v2192
  %v2450 = vmul.f32 %v1040, %v2193
  %v2451 = vmul.f32 %v1041, %v2194
  %v2452 = vmul.f32 %v1042, %v2195
  %v2453 = vmul.f32 %v1043, %v2196
  %v2454 = vmul.f32 %v1044, %v2197
  %v2455 = vmul.f32 %v1045, %v2198
  %v2456 = vmul.f32 %v1046, %v2199
  %v2457 = vmul.f32 %v1047, %v2200
  %v2458 = vmul.f32 %v1048, %v2201
  %v2459 = vpack.c.bf16 %v2395, %v2395
  %v2460 = vpack.c.bf16 %v2396, %v2396
  %v2461 = vpack.c.bf16 %v2397, %v2397
  %v2462 = vpack.c.bf16 %v2398, %v2398
  %v2463 = vpack.c.bf16 %v2399, %v2399
  %v2464 = vpack.c.bf16 %v2400, %v2400
  %v2465 = vpack.c.bf16 %v2401, %v2401
  %v2466 = vpack.c.bf16 %v2402, %v2402
  %v2467 = vpack.c.bf16 %v2403, %v2403
  %v2468 = vpack.c.bf16 %v2404, %v2404
  %v2469 = vpack.c.bf16 %v2405, %v2405
  %v2470 = vpack.c.bf16 %v2406, %v2406
  %v2471 = vpack.c.bf16 %v2407, %v2407
  %v2472 = vpack.c.bf16 %v2408, %v2408
  %v2473 = vpack.c.bf16 %v2409, %v2409
  %v2474 = vpack.c.bf16 %v2410, %v2410
  %v2475 = vpack.c.bf16 %v2411, %v2411
  %v2476 = vpack.c.bf16 %v2412, %v2412
  %v2477 = vpack.c.bf16 %v2413, %v2413
  %v2478 = vpack.c.bf16 %v2414, %v2414
  %v2479 = vpack.c.bf16 %v2415, %v2415
  %v2480 = vpack.c.bf16 %v2416, %v2416
  %v2481 = vpack.c.bf16 %v2417, %v2417
  %v2482 = vpack.c.bf16 %v2418, %v2418
  %v2483 = vpack.c.bf16 %v2419, %v2419
  %v2484 = vpack.c.bf16 %v2420, %v2420
  %v2485 = vpack.c.bf16 %v2421, %v2421
  %v2486 = vpack.c.bf16 %v2422, %v2422
  %v2487 = vpack.c.bf16 %v2423, %v2423
  %v2488 = vpack.c.bf16 %v2424, %v2424
  %v2489 = vpack.c.bf16 %v2425, %v2425
  %v2490 = vpack.c.bf16 %v2426, %v2426
  %v2491 = vpack.c.bf16 %v2427, %v2427
  %v2492 = vpack.c.bf16 %v2428, %v2428
  %v2493 = vpack.c.bf16 %v2429, %v2429
  %v2494 = vpack.c.bf16 %v2430, %v2430
  %v2495 = vpack.c.bf16 %v2431, %v2431
  %v2496 = vpack.c.bf16 %v2432, %v2432
  %v2497 = vpack.c.bf16 %v2433, %v2433
  %v2498 = vpack.c.bf16 %v2434, %v2434
  %v2499 = vpack.c.bf16 %v2435, %v2435
  %v2500 = vpack.c.bf16 %v2436, %v2436
  %v2501 = vpack.c.bf16 %v2437, %v2437
  %v2502 = vpack.c.bf16 %v2438, %v2438
  %v2503 = vpack.c.bf16 %v2439, %v2439
  %v2504 = vpack.c.bf16 %v2440, %v2440
  %v2505 = vpack.c.bf16 %v2441, %v2441
  %v2506 = vpack.c.bf16 %v2442, %v2442
  %v2507 = vpack.c.bf16 %v2443, %v2443
  %v2508 = vpack.c.bf16 %v2444, %v2444
  %v2509 = vpack.c.bf16 %v2445, %v2445
  %v2510 = vpack.c.bf16 %v2446, %v2446
  %v2511 = vpack.c.bf16 %v2447, %v2447
  %v2512 = vpack.c.bf16 %v2448, %v2448
  %v2513 = vpack.c.bf16 %v2449, %v2449
  %v2514 = vpack.c.bf16 %v2450, %v2450
  %v2515 = vpack.c.bf16 %v2451, %v2451
  %v2516 = vpack.c.bf16 %v2452, %v2452
  %v2517 = vpack.c.bf16 %v2453, %v2453
  %v2518 = vpack.c.bf16 %v2454, %v2454
  %v2519 = vpack.c.bf16 %v2455, %v2455
  %v2520 = vpack.c.bf16 %v2456, %v2456
  %v2521 = vpack.c.bf16 %v2457, %v2457
  %v2522 = vpack.c.bf16 %v2458, %v2458
  %2587 = vrot.lane.b32.xlu0 %v2459, 64
  %v2588 = vpop.permute.xlu0 %2587
  %2589 = vrot.lane.b32.xlu0 %v2460, 64
  %v2590 = vpop.permute.xlu0 %2589
  %2591 = vrot.lane.b32.xlu0 %v2461, 64
  %v2592 = vpop.permute.xlu0 %2591
  %2593 = vrot.lane.b32.xlu0 %v2462, 64
  %v2594 = vpop.permute.xlu0 %2593
  %2595 = vrot.lane.b32.xlu0 %v2463, 64
  %v2596 = vpop.permute.xlu0 %2595
  %2597 = vrot.lane.b32.xlu0 %v2464, 64
  %v2598 = vpop.permute.xlu0 %2597
  %2599 = vrot.lane.b32.xlu0 %v2465, 64
  %v2600 = vpop.permute.xlu0 %2599
  %2601 = vrot.lane.b32.xlu0 %v2466, 64
  %v2602 = vpop.permute.xlu0 %2601
  %2603 = vrot.lane.b32.xlu0 %v2467, 64
  %v2604 = vpop.permute.xlu0 %2603
  %2605 = vrot.lane.b32.xlu0 %v2468, 64
  %v2606 = vpop.permute.xlu0 %2605
  %2607 = vrot.lane.b32.xlu0 %v2469, 64
  %v2608 = vpop.permute.xlu0 %2607
  %2609 = vrot.lane.b32.xlu0 %v2470, 64
  %v2610 = vpop.permute.xlu0 %2609
  %2611 = vrot.lane.b32.xlu0 %v2471, 64
  %v2612 = vpop.permute.xlu0 %2611
  %2613 = vrot.lane.b32.xlu0 %v2472, 64
  %v2614 = vpop.permute.xlu0 %2613
  %2615 = vrot.lane.b32.xlu0 %v2473, 64
  %v2616 = vpop.permute.xlu0 %2615
  %2617 = vrot.lane.b32.xlu0 %v2474, 64
  %v2618 = vpop.permute.xlu0 %2617
  %2619 = vrot.lane.b32.xlu0 %v2475, 64
  %v2620 = vpop.permute.xlu0 %2619
  %2621 = vrot.lane.b32.xlu0 %v2476, 64
  %v2622 = vpop.permute.xlu0 %2621
  %2623 = vrot.lane.b32.xlu0 %v2477, 64
  %v2624 = vpop.permute.xlu0 %2623
  %2625 = vrot.lane.b32.xlu0 %v2478, 64
  %v2626 = vpop.permute.xlu0 %2625
  %2627 = vrot.lane.b32.xlu0 %v2479, 64
  %v2628 = vpop.permute.xlu0 %2627
  %2629 = vrot.lane.b32.xlu0 %v2480, 64
  %v2630 = vpop.permute.xlu0 %2629
  %2631 = vrot.lane.b32.xlu0 %v2481, 64
  %v2632 = vpop.permute.xlu0 %2631
  %2633 = vrot.lane.b32.xlu0 %v2482, 64
  %v2634 = vpop.permute.xlu0 %2633
  %2635 = vrot.lane.b32.xlu0 %v2483, 64
  %v2636 = vpop.permute.xlu0 %2635
  %2637 = vrot.lane.b32.xlu0 %v2484, 64
  %v2638 = vpop.permute.xlu0 %2637
  %2639 = vrot.lane.b32.xlu0 %v2485, 64
  %v2640 = vpop.permute.xlu0 %2639
  %2641 = vrot.lane.b32.xlu0 %v2486, 64
  %v2642 = vpop.permute.xlu0 %2641
  %2643 = vrot.lane.b32.xlu0 %v2487, 64
  %v2644 = vpop.permute.xlu0 %2643
  %2645 = vrot.lane.b32.xlu0 %v2488, 64
  %v2646 = vpop.permute.xlu0 %2645
  %2647 = vrot.lane.b32.xlu0 %v2489, 64
  %v2648 = vpop.permute.xlu0 %2647
  %2649 = vrot.lane.b32.xlu0 %v2490, 64
  %v2650 = vpop.permute.xlu0 %2649
  %2651 = vrot.lane.b32.xlu0 %v2491, 64
  %v2652 = vpop.permute.xlu0 %2651
  %2653 = vrot.lane.b32.xlu0 %v2492, 64
  %v2654 = vpop.permute.xlu0 %2653
  %2655 = vrot.lane.b32.xlu0 %v2493, 64
  %v2656 = vpop.permute.xlu0 %2655
  %2657 = vrot.lane.b32.xlu0 %v2494, 64
  %v2658 = vpop.permute.xlu0 %2657
  %2659 = vrot.lane.b32.xlu0 %v2495, 64
  %v2660 = vpop.permute.xlu0 %2659
  %2661 = vrot.lane.b32.xlu0 %v2496, 64
  %v2662 = vpop.permute.xlu0 %2661
  %2663 = vrot.lane.b32.xlu0 %v2497, 64
  %v2664 = vpop.permute.xlu0 %2663
  %2665 = vrot.lane.b32.xlu0 %v2498, 64
  %v2666 = vpop.permute.xlu0 %2665
  %2667 = vrot.lane.b32.xlu0 %v2499, 64
  %v2668 = vpop.permute.xlu0 %2667
  %2669 = vrot.lane.b32.xlu0 %v2500, 64
  %v2670 = vpop.permute.xlu0 %2669
  %2671 = vrot.lane.b32.xlu0 %v2501, 64
  %v2672 = vpop.permute.xlu0 %2671
  %2673 = vrot.lane.b32.xlu0 %v2502, 64
  %v2674 = vpop.permute.xlu0 %2673
  %2675 = vrot.lane.b32.xlu0 %v2503, 64
  %v2676 = vpop.permute.xlu0 %2675
  %2677 = vrot.lane.b32.xlu0 %v2504, 64
  %v2678 = vpop.permute.xlu0 %2677
  %2679 = vrot.lane.b32.xlu0 %v2505, 64
  %v2680 = vpop.permute.xlu0 %2679
  %2681 = vrot.lane.b32.xlu0 %v2506, 64
  %v2682 = vpop.permute.xlu0 %2681
  %2683 = vrot.lane.b32.xlu0 %v2507, 64
  %v2684 = vpop.permute.xlu0 %2683
  %2685 = vrot.lane.b32.xlu0 %v2508, 64
  %v2686 = vpop.permute.xlu0 %2685
  %2687 = vrot.lane.b32.xlu0 %v2509, 64
  %v2688 = vpop.permute.xlu0 %2687
  %2689 = vrot.lane.b32.xlu0 %v2510, 64
  %v2690 = vpop.permute.xlu0 %2689
  %2691 = vrot.lane.b32.xlu0 %v2511, 64
  %v2692 = vpop.permute.xlu0 %2691
  %2693 = vrot.lane.b32.xlu0 %v2512, 64
  %v2694 = vpop.permute.xlu0 %2693
  %2695 = vrot.lane.b32.xlu0 %v2513, 64
  %v2696 = vpop.permute.xlu0 %2695
  %2697 = vrot.lane.b32.xlu0 %v2514, 64
  %v2698 = vpop.permute.xlu0 %2697
  %2699 = vrot.lane.b32.xlu0 %v2515, 64
  %v2700 = vpop.permute.xlu0 %2699
  %2701 = vrot.lane.b32.xlu0 %v2516, 64
  %v2702 = vpop.permute.xlu0 %2701
  %2703 = vrot.lane.b32.xlu0 %v2517, 64
  %v2704 = vpop.permute.xlu0 %2703
  %2705 = vrot.lane.b32.xlu0 %v2518, 64
  %v2706 = vpop.permute.xlu0 %2705
  %2707 = vrot.lane.b32.xlu0 %v2519, 64
  %v2708 = vpop.permute.xlu0 %2707
  %2709 = vrot.lane.b32.xlu0 %v2520, 64
  %v2710 = vpop.permute.xlu0 %2709
  %2711 = vrot.lane.b32.xlu0 %v2521, 64
  %v2712 = vpop.permute.xlu0 %2711
  %2713 = vrot.lane.b32.xlu0 %v2522, 64
  %v2714 = vpop.permute.xlu0 %2713
  %vm2779 = vcmask 1043968
  %2780 = vst.msk [vmem:[%s2] sm:$0xf] %vm2779, %v2588
  %2781 = vst.msk [vmem:[%s2 + $0x4] sm:$0xf] %vm2779, %v2590
  %2782 = vst.msk [vmem:[%s2 + $0x8] sm:$0xf] %vm2779, %v2592
  %2783 = vst.msk [vmem:[%s2 + $0xc] sm:$0xf] %vm2779, %v2594
  %2784 = vst.msk [vmem:[%s2 + $0x10] sm:$0xf] %vm2779, %v2596
  %2785 = vst.msk [vmem:[%s2 + $0x14] sm:$0xf] %vm2779, %v2598
  %2786 = vst.msk [vmem:[%s2 + $0x18] sm:$0xf] %vm2779, %v2600
  %2787 = vst.msk [vmem:[%s2 + $0x1c] sm:$0xf] %vm2779, %v2602
  %2788 = vst.msk [vmem:[%s2 + $0x20] sm:$0xf] %vm2779, %v2604
  %2789 = vst.msk [vmem:[%s2 + $0x24] sm:$0xf] %vm2779, %v2606
  %2790 = vst.msk [vmem:[%s2 + $0x28] sm:$0xf] %vm2779, %v2608
  %2791 = vst.msk [vmem:[%s2 + $0x2c] sm:$0xf] %vm2779, %v2610
  %2792 = vst.msk [vmem:[%s2 + $0x30] sm:$0xf] %vm2779, %v2612
  %2793 = vst.msk [vmem:[%s2 + $0x34] sm:$0xf] %vm2779, %v2614
  %2794 = vst.msk [vmem:[%s2 + $0x38] sm:$0xf] %vm2779, %v2616
  %2795 = vst.msk [vmem:[%s2 + $0x3c] sm:$0xf] %vm2779, %v2618
  %2796 = vst.msk [vmem:[%s2 + $0x40] sm:$0xf] %vm2779, %v2620
  %2797 = vst.msk [vmem:[%s2 + $0x44] sm:$0xf] %vm2779, %v2622
  %2798 = vst.msk [vmem:[%s2 + $0x48] sm:$0xf] %vm2779, %v2624
  %2799 = vst.msk [vmem:[%s2 + $0x4c] sm:$0xf] %vm2779, %v2626
  %2800 = vst.msk [vmem:[%s2 + $0x50] sm:$0xf] %vm2779, %v2628
  %2801 = vst.msk [vmem:[%s2 + $0x54] sm:$0xf] %vm2779, %v2630
  %2802 = vst.msk [vmem:[%s2 + $0x58] sm:$0xf] %vm2779, %v2632
  %2803 = vst.msk [vmem:[%s2 + $0x5c] sm:$0xf] %vm2779, %v2634
  %2804 = vst.msk [vmem:[%s2 + $0x60] sm:$0xf] %vm2779, %v2636
  %2805 = vst.msk [vmem:[%s2 + $0x64] sm:$0xf] %vm2779, %v2638
  %2806 = vst.msk [vmem:[%s2 + $0x68] sm:$0xf] %vm2779, %v2640
  %2807 = vst.msk [vmem:[%s2 + $0x6c] sm:$0xf] %vm2779, %v2642
  %2808 = vst.msk [vmem:[%s2 + $0x70] sm:$0xf] %vm2779, %v2644
  %2809 = vst.msk [vmem:[%s2 + $0x74] sm:$0xf] %vm2779, %v2646
  %2810 = vst.msk [vmem:[%s2 + $0x78] sm:$0xf] %vm2779, %v2648
  %2811 = vst.msk [vmem:[%s2 + $0x7c] sm:$0xf] %vm2779, %v2650
  %2812 = vst.msk [vmem:[%s2 + $0x80] sm:$0xf] %vm2779, %v2652
  %2813 = vst.msk [vmem:[%s2 + $0x84] sm:$0xf] %vm2779, %v2654
  %2814 = vst.msk [vmem:[%s2 + $0x88] sm:$0xf] %vm2779, %v2656
  %2815 = vst.msk [vmem:[%s2 + $0x8c] sm:$0xf] %vm2779, %v2658
  %2816 = vst.msk [vmem:[%s2 + $0x90] sm:$0xf] %vm2779, %v2660
  %2817 = vst.msk [vmem:[%s2 + $0x94] sm:$0xf] %vm2779, %v2662
  %2818 = vst.msk [vmem:[%s2 + $0x98] sm:$0xf] %vm2779, %v2664
  %2819 = vst.msk [vmem:[%s2 + $0x9c] sm:$0xf] %vm2779, %v2666
  %2820 = vst.msk [vmem:[%s2 + $0xa0] sm:$0xf] %vm2779, %v2668
  %2821 = vst.msk [vmem:[%s2 + $0xa4] sm:$0xf] %vm2779, %v2670
  %2822 = vst.msk [vmem:[%s2 + $0xa8] sm:$0xf] %vm2779, %v2672
  %2823 = vst.msk [vmem:[%s2 + $0xac] sm:$0xf] %vm2779, %v2674
  %2824 = vst.msk [vmem:[%s2 + $0xb0] sm:$0xf] %vm2779, %v2676
  %2825 = vst.msk [vmem:[%s2 + $0xb4] sm:$0xf] %vm2779, %v2678
  %2826 = vst.msk [vmem:[%s2 + $0xb8] sm:$0xf] %vm2779, %v2680
  %2827 = vst.msk [vmem:[%s2 + $0xbc] sm:$0xf] %vm2779, %v2682
  %2828 = vst.msk [vmem:[%s2 + $0xc0] sm:$0xf] %vm2779, %v2684
  %2829 = vst.msk [vmem:[%s2 + $0xc4] sm:$0xf] %vm2779, %v2686
  %2830 = vst.msk [vmem:[%s2 + $0xc8] sm:$0xf] %vm2779, %v2688
  %2831 = vst.msk [vmem:[%s2 + $0xcc] sm:$0xf] %vm2779, %v2690
  %2832 = vst.msk [vmem:[%s2 + $0xd0] sm:$0xf] %vm2779, %v2692
  %2833 = vst.msk [vmem:[%s2 + $0xd4] sm:$0xf] %vm2779, %v2694
  %2834 = vst.msk [vmem:[%s2 + $0xd8] sm:$0xf] %vm2779, %v2696
  %2835 = vst.msk [vmem:[%s2 + $0xdc] sm:$0xf] %vm2779, %v2698
  %2836 = vst.msk [vmem:[%s2 + $0xe0] sm:$0xf] %vm2779, %v2700
  %2837 = vst.msk [vmem:[%s2 + $0xe4] sm:$0xf] %vm2779, %v2702
  %2838 = vst.msk [vmem:[%s2 + $0xe8] sm:$0xf] %vm2779, %v2704
  %2839 = vst.msk [vmem:[%s2 + $0xec] sm:$0xf] %vm2779, %v2706
  %2840 = vst.msk [vmem:[%s2 + $0xf0] sm:$0xf] %vm2779, %v2708
  %2841 = vst.msk [vmem:[%s2 + $0xf4] sm:$0xf] %vm2779, %v2710
  %2842 = vst.msk [vmem:[%s2 + $0xf8] sm:$0xf] %vm2779, %v2712
  %2843 = vst.msk [vmem:[%s2 + $0xfc] sm:$0xf] %vm2779, %v2714
  // Predicated region
  $region10: #{conv_stem_forward.5} parent=0 // pred_check
    _
  $region11: #{conv_stem_forward.5} parent=0 // pred_check_branch
    %2845 = sbr.rel (0) target = $region13
  $region12: #{conv_stem_forward.5} parent=0 // pred_region
    _
  $region13: #{conv_stem_forward.5} parent=0 // pred_fallthru
    _
  // Predicated region
  $region14: #{conv_stem_forward.5} parent=0 // pred_check
    _
  $region15: #{conv_stem_forward.5} parent=0 // pred_check_branch
    %2847 = sbr.rel (0) target = $region17
  $region16: #{conv_stem_forward.5} parent=0 // pred_region
    _
  $region17: #{conv_stem_forward.5} parent=0 // pred_fallthru
    _

// kernel: custom-call.2
$region0: #{custom-call.2}
  %s0 = inlined_call_operand.vmem [shape: f32[2,16,32], index: 0, kind: input, shape index: {}]
  %s1 = inlined_call_operand.vmem [shape: f32[2,16,32], index: 1, kind: input, shape index: {}]
  %s2 = inlined_call_operand.hbm [shape: c64[2,16,32], index: 2, kind: output, shape index: {}]
  %s3 = scalar_lea.hbm %s2, 32
  $region1: #{custom-call.2} parent=0
    #allocation0 [shape = 's32[1]{0}', space=sflag, size = 0x4, scoped, tag = 'scoped memory for custom-call.2']
    %4 = vsyncpa [#allocation0], 0
    %s6 = sshll.u32 %s0, 4
    %s7 = int_to_ptr.vmem [resolvable:$true] %s6
    %s8 = sshll.u32 %s2, 4
    %s9 = int_to_ptr.hbm [resolvable:$true] %s8
    %11 = dma.vmem_to_hbm [thread:$0]  %s7, 512, %s9, [#allocation0]
    %13 = dma.done [#allocation0], 512
    %14 = vsyncpa [#allocation0], 1
  $region2: #{custom-call.2} parent=0
    #allocation1 [shape = 's32[1]{0}', space=sflag, size = 0x4, scoped, tag = 'scoped memory for custom-call.2']
    %15 = vsyncpa [#allocation1], 0
    %s17 = sshll.u32 %s1, 4
    %s18 = int_to_ptr.vmem [resolvable:$true] %s17
    %s19 = sshll.u32 %s3, 4
    %s20 = int_to_ptr.hbm [resolvable:$true] %s19
    %22 = dma.vmem_to_hbm [thread:$0]  %s18, 512, %s20, [#allocation1]
    %24 = dma.done [#allocation1], 512
    %25 = vsyncpa [#allocation1], 1

// kernel: conv_stem_forward.6
$region0: #{conv_stem_forward.6}
  #allocation0 [shape = 'u32[]', space=smem, size = 0x4, offset = 0x4, fixed_abs, tag = 'smem constant byte address 0x4 - core index']
  #allocation1 [shape = 'u32[72,128]{1,0:T(1,128)}', space=vmem, size = 0x9000, scoped, tag = 'internal scratch']
  %s0 = inlined_call_operand.vmem [shape: bf16[512,288], index: 0, kind: input, shape index: {}]
  %s1 = inlined_call_operand.vmem [shape: bf16[288,128], index: 1, kind: input, shape index: {}]
  %s2 = inlined_call_operand.vmem [shape: bf16[512,128], index: 2, kind: output, shape index: {0}]
  %s3 = inlined_call_operand.vmem [shape: f32[2,3,128], index: 3, kind: output, shape index: {1}]
  %4 = xla_tuple %s2, %s3
  %s5 = sld [smem:[#allocation0]]
  $region53: #{conv_stem_forward.6} parent=0
    _
  %s7 = ssub.s32 1, %s5
  %s8 = scalar_select 0, %s7, %s5
  loop: start=0, step=1, limit=4
  $region2: #{conv_stem_forward.6} parent=0 // loop_pre_header
    _
  $region3: #{conv_stem_forward.6} parent=0 // loop_header
    %s10 = sphi 0, %s14
    %p11 = scmp.ge.s32.totalorder %s10, 4
    %s17 = sphi 0, %s29
    %s18 = sphi 0, %s25
    %s19 = sphi 0, %s17
    %s20 = sphi 0, %s18
    %s21 = sphi 0, %s19
    %s22 = sphi 0, %s20
    %s34 = sphi 0, %s36
    %s37 = sphi 0, %s34
    %s38 = sphi 0, %s37
    %s54 = sphi 0, %s38
    %s58 = sphi 0, %s58
    %s60 = sphi 0, %s58
    %s61 = sphi 0, %s60
    %s75 = sphi 0, %s61
    %s83 = sphi 0, %s85
    %s86 = sphi 0, %s83
    %s87 = sphi 0, %s86
    %s103 = sphi 0, %s87
    %s109 = sphi 0, %s111
    %s112 = sphi 0, %s109
    %s113 = sphi 0, %s112
    %s129 = sphi 0, %s113
  $region4: #{conv_stem_forward.6} parent=0 // loop_header_branch
    %13 = sbr.rel (%p11) target = $region8
  $region5: #{conv_stem_forward.6} parent=0 // loop_body
    %s15 = ssub.s32 %s10, 1
    %s16 = ssub.s32 %s10, 2
    %s23 = sadd.s32 1, %s18
    %p24 = scmp.ge.s32.totalorder %s23, 1
    %s25 = scalar_select %p24, 0, %s23
    %s26 = sadd.s32 1, %s17
    %s27 = scalar_select %p24, %s26, %s17
    %p28 = scmp.ge.s32.totalorder %s27, 2
    %s29 = scalar_select %p28, 0, %s27
    %s30 = sadd.s32 %s17, %s18
    %s31 = sadd.s32 %s29, %s25
    %s32 = ssub.s32 %s30, %s31
    %p33 = scmp.eq.s32.totalorder %s32, 0
    %s35 = sadd.s32 %s34, 1
    %s36 = scalar_select %p33, %s34, %s35
    %p39 = pneg %p33
    %p40 = scmp.eq.s32.totalorder %s10, 1
    %p41 = por %p39, %p40
    %p42 = scmp.ne.s32.totalorder %s34, %s37
    %p43 = scmp.eq.s32.totalorder %s10, 0
    %p44 = por %p42, %p43
    %p45 = scmp.ne.s32.totalorder %s34, %s37
    %p46 = scmp.eq.s32.totalorder %s15, 1
    %p47 = por %p45, %p46
    %p48 = scmp.ne.s32.totalorder %s37, %s38
    %p49 = scmp.eq.s32.totalorder %s15, 0
    %p50 = por %p48, %p49
    %p51 = scmp.ne.s32.totalorder %s37, %s38
    %p52 = scmp.eq.s32.totalorder %s16, 1
    %p53 = por %p51, %p52
    %p55 = scmp.ne.s32.totalorder %s38, %s54
    %p56 = scmp.eq.s32.totalorder %s16, 0
    %p57 = por %p55, %p56
    %s59 = sadd.s32 %s58, 1
    %p62 = scmp.eq.s32.totalorder %s10, 1
    %p63 = scmp.ne.s32.totalorder %s58, %s60
    %p64 = scmp.eq.s32.totalorder %s10, 0
    %p65 = por %p63, %p64
    %p66 = scmp.ne.s32.totalorder %s58, %s60
    %p67 = scmp.eq.s32.totalorder %s15, 1
    %p68 = por %p66, %p67
    %p69 = scmp.ne.s32.totalorder %s60, %s61
    %p70 = scmp.eq.s32.totalorder %s15, 0
    %p71 = por %p69, %p70
    %p72 = scmp.ne.s32.totalorder %s60, %s61
    %p73 = scmp.eq.s32.totalorder %s16, 1
    %p74 = por %p72, %p73
    %p76 = scmp.ne.s32.totalorder %s61, %s75
    %p77 = scmp.eq.s32.totalorder %s16, 0
    %p78 = por %p76, %p77
    %s79 = sadd.s32 %s17, %s18
    %s80 = sadd.s32 %s29, %s25
    %s81 = ssub.s32 %s79, %s80
    %p82 = scmp.eq.s32.totalorder %s81, 0
    %s84 = sadd.s32 %s83, 1
    %s85 = scalar_select %p82, %s83, %s84
    %p88 = pneg %p82
    %p89 = scmp.eq.s32.totalorder %s10, 1
    %p90 = por %p88, %p89
    %p91 = scmp.ne.s32.totalorder %s83, %s86
    %p92 = scmp.eq.s32.totalorder %s10, 0
    %p93 = por %p91, %p92
    %p94 = scmp.ne.s32.totalorder %s83, %s86
    %p95 = scmp.eq.s32.totalorder %s15, 1
    %p96 = por %p94, %p95
    %p97 = scmp.ne.s32.totalorder %s86, %s87
    %p98 = scmp.eq.s32.totalorder %s15, 0
    %p99 = por %p97, %p98
    %p100 = scmp.ne.s32.totalorder %s86, %s87
    %p101 = scmp.eq.s32.totalorder %s16, 1
    %p102 = por %p100, %p101
    %p104 = scmp.ne.s32.totalorder %s87, %s103
    %p105 = scmp.eq.s32.totalorder %s16, 0
    %p106 = por %p104, %p105
    %s107 = ssub.s32 %s17, %s29
    %p108 = scmp.eq.s32.totalorder %s107, 0
    %s110 = sadd.s32 %s109, 1
    %s111 = scalar_select %p108, %s109, %s110
    %p114 = pneg %p108
    %p115 = scmp.eq.s32.totalorder %s10, 1
    %p116 = por %p114, %p115
    %p117 = scmp.ne.s32.totalorder %s109, %s112
    %p118 = scmp.eq.s32.totalorder %s10, 0
    %p119 = por %p117, %p118
    %p120 = scmp.ne.s32.totalorder %s109, %s112
    %p121 = scmp.eq.s32.totalorder %s15, 1
    %p122 = por %p120, %p121
    %p123 = scmp.ne.s32.totalorder %s112, %s113
    %p124 = scmp.eq.s32.totalorder %s15, 0
    %p125 = por %p123, %p124
    %p126 = scmp.ne.s32.totalorder %s112, %s113
    %p127 = scmp.eq.s32.totalorder %s16, 1
    %p128 = por %p126, %p127
    %p130 = scmp.ne.s32.totalorder %s113, %s129
    %p131 = scmp.eq.s32.totalorder %s16, 0
    %p132 = por %p130, %p131
    %p133 = scmp.le.s32.totalorder 1, %s10
    %p134 = scmp.lt.s32.totalorder %s10, 3
    %p135 = pnand %p133, %p134
    %p136 = pneg %p135
    // Predicated region
    $region9: #{conv_stem_forward.6} parent=5 // pred_check
      _
    $region10: #{conv_stem_forward.6} parent=5 // pred_check_branch
      %138 = sbr.rel (%p135) target = $region12
    $region11: #{conv_stem_forward.6} parent=5 // pred_region
      %s139 = ssub.s32 %s10, 1
      // Predicated region
      $region13: #{conv_stem_forward.6} parent=11 // pred_check
        %p140 = pneg %p71
      $region14: #{conv_stem_forward.6} parent=11 // pred_check_branch
        %142 = sbr.rel (%p140) target = $region16
      $region15: #{conv_stem_forward.6} parent=11 // pred_region
        _
      $region16: #{conv_stem_forward.6} parent=11 // pred_fallthru
        _
    $region12: #{conv_stem_forward.6} parent=5 // pred_fallthru
      _
    %p143 = scmp.lt.s32.totalorder %s10, 2
    // Predicated region
    $region17: #{conv_stem_forward.6} parent=5 // pred_check
      %p144 = pneg %p143
    $region18: #{conv_stem_forward.6} parent=5 // pred_check_branch
      %146 = sbr.rel (%p144) target = $region20
    $region19: #{conv_stem_forward.6} parent=5 // pred_region
      // Predicated region
      $region21: #{conv_stem_forward.6} parent=19 // pred_check
        %p147 = pneg %p44
      $region22: #{conv_stem_forward.6} parent=19 // pred_check_branch
        %149 = sbr.rel (%p147) target = $region24
      $region23: #{conv_stem_forward.6} parent=19 // pred_region
        %s150 = sadd.s32 %s17, %s18
        %s151 = smul.u32 32, %s150
        %p152 = scmp.lt.s32.totalorder %s151, 63
        %s153 = scalar_select %p152, %s151, 63
        %s154 = smul.addr %s153, 3
        %s155 = smul.addr %s154, 4
        %s156 = scalar_lea.vmem %s0, %s155
        %s157 = sadd.s32 %s17, %s18
        %s158 = smul.u32 32, %s157
      $region24: #{conv_stem_forward.6} parent=19 // pred_fallthru
        _
    $region20: #{conv_stem_forward.6} parent=5 // pred_fallthru
      _
    %p159 = scmp.le.s32.totalorder 1, %s10
    %p160 = scmp.lt.s32.totalorder %s10, 3
    %p161 = pnand %p159, %p160
    %p162 = pneg %p161
    // Predicated region
    $region25: #{conv_stem_forward.6} parent=5 // pred_check
      _
    $region26: #{conv_stem_forward.6} parent=5 // pred_check_branch
      %164 = sbr.rel (%p161) target = $region28
    $region27: #{conv_stem_forward.6} parent=5 // pred_region
      %s165 = ssub.s32 %s10, 1
      %s166 = sadd.s32 %s19, %s20
      %s167 = smul.u32 32, %s166
      %p168 = scmp.lt.s32.totalorder %s167, 63
      %s169 = scalar_select %p168, %s167, 63
      %s170 = smul.addr %s169, 3
      %s171 = smul.addr %s170, 4
      %s172 = scalar_lea.vmem %s0, %s171
      %p173 = pneg %p50
      %p174 = pneg %p47
      %p175 = pneg %p71
      %p176 = pneg %p68
      %p177 = pneg %p99
      %p178 = pneg %p96
      %s179 = sadd.s32 %s19, %s20
      %s180 = smul.u32 32, %s179
      %p181 = scmp.lt.s32.totalorder %s180, 63
      %s182 = scalar_select %p181, %s180, 63
      %s183 = smul.addr %s182, 4
      %s184 = scalar_lea.vmem %s2, %s183
      %p185 = pneg %p125
      %p186 = pneg %p122
      %p187 = scmp.lt.s32.totalorder %s19, 1
      %s188 = scalar_select %p187, %s19, 1
      %s189 = smul.addr %s188, 4
      %s190 = scalar_lea.vmem %s3, %s189
      %s191 = sadd.s32 %s19, %s20
      %s192 = smul.u32 32, %s191
      %p193 = scmp.lt.s32.totalorder %s192, 63
      %s194 = scalar_select %p193, %s192, 63
      %s195 = smul.addr %s194, 3
      %s196 = smul.addr %s195, 4
      %s197 = scalar_lea.vmem %s0, %s196
      %s198 = sadd.s32 %s19, %s20
      %s199 = smul.u32 32, %s198
      %s200 = sadd.s32 %s19, %s20
      %s201 = smul.u32 32, %s200
      %p202 = scmp.lt.s32.totalorder %s201, 63
      %s203 = scalar_select %p202, %s201, 63
      %s204 = smul.addr %s203, 4
      %s205 = scalar_lea.vmem %s2, %s204
      %s206 = sadd.s32 %s19, %s20
      %s207 = smul.u32 32, %s206
      %p208 = scmp.lt.s32.totalorder %s19, 1
      %s209 = scalar_select %p208, %s19, 1
      %s210 = smul.addr %s209, 4
      %s211 = scalar_lea.vmem %s3, %s210
      %p213 = scmp.eq.s32.totalorder %s20, 0
      // Predicated region
      $region29: #{conv_stem_forward.6} parent=27 // pred_check
        %p214 = pneg %p213
      $region30: #{conv_stem_forward.6} parent=27 // pred_check_branch
        %216 = sbr.rel (%p214) target = $region32
      $region31: #{conv_stem_forward.6} parent=27 // pred_region
        %217 = vst [vmem:[%s211] sm:$0x7] 0.0
      $region32: #{conv_stem_forward.6} parent=27 // pred_fallthru
        _
      %v218 = vld [vmem:[%s197] sm:$0xff]
      %v219 = vld [vmem:[%s197 + $0x8] sm:$0xf]
      %v220 = vld [vmem:[%s197 + $0xc] sm:$0xff]
      %v221 = vld [vmem:[%s197 + $0x14] sm:$0xf]
      %v222 = vld [vmem:[%s197 + $0x18] sm:$0xff]
      %v223 = vld [vmem:[%s197 + $0x20] sm:$0xf]
      %v224 = vld [vmem:[%s197 + $0x24] sm:$0xff]
      %v225 = vld [vmem:[%s197 + $0x2c] sm:$0xf]
      %v226 = vld [vmem:[%s197 + $0x30] sm:$0xff]
      %v227 = vld [vmem:[%s197 + $0x38] sm:$0xf]
      %v228 = vld [vmem:[%s197 + $0x3c] sm:$0xff]
      %v229 = vld [vmem:[%s197 + $0x44] sm:$0xf]
      %v230 = vld [vmem:[%s197 + $0x48] sm:$0xff]
      %v231 = vld [vmem:[%s197 + $0x50] sm:$0xf]
      %v232 = vld [vmem:[%s197 + $0x54] sm:$0xff]
      %v233 = vld [vmem:[%s197 + $0x5c] sm:$0xf]
      %v234 = vld [vmem:[%s197 + $0x60] sm:$0xff]
      %v235 = vld [vmem:[%s197 + $0x68] sm:$0xf]
      %v236 = vld [vmem:[%s197 + $0x6c] sm:$0xff]
      %v237 = vld [vmem:[%s197 + $0x74] sm:$0xf]
      %v238 = vld [vmem:[%s197 + $0x78] sm:$0xff]
      %v239 = vld [vmem:[%s197 + $0x80] sm:$0xf]
      %v240 = vld [vmem:[%s197 + $0x84] sm:$0xff]
      %v241 = vld [vmem:[%s197 + $0x8c] sm:$0xf]
      %v242 = vld [vmem:[%s197 + $0x90] sm:$0xff]
      %v243 = vld [vmem:[%s197 + $0x98] sm:$0xf]
      %v244 = vld [vmem:[%s197 + $0x9c] sm:$0xff]
      %v245 = vld [vmem:[%s197 + $0xa4] sm:$0xf]
      %v246 = vld [vmem:[%s197 + $0xa8] sm:$0xff]
      %v247 = vld [vmem:[%s197 + $0xb0] sm:$0xf]
      %v248 = vld [vmem:[%s197 + $0xb4] sm:$0xff]
      %v249 = vld [vmem:[%s197 + $0xbc] sm:$0xf]
      %v250 = vld [vmem:[%s197 + $0xc0] sm:$0xff]
      %v251 = vld [vmem:[%s197 + $0xc8] sm:$0xf]
      %v252 = vld [vmem:[%s197 + $0xcc] sm:$0xff]
      %v253 = vld [vmem:[%s197 + $0xd4] sm:$0xf]
      %v254 = vld [vmem:[%s197 + $0xd8] sm:$0xff]
      %v255 = vld [vmem:[%s197 + $0xe0] sm:$0xf]
      %v256 = vld [vmem:[%s197 + $0xe4] sm:$0xff]
      %v257 = vld [vmem:[%s197 + $0xec] sm:$0xf]
      %v258 = vld [vmem:[%s197 + $0xf0] sm:$0xff]
      %v259 = vld [vmem:[%s197 + $0xf8] sm:$0xf]
      %v260 = vld [vmem:[%s197 + $0xfc] sm:$0xff]
      %v261 = vld [vmem:[%s197 + $0x104] sm:$0xf]
      %v262 = vld [vmem:[%s197 + $0x108] sm:$0xff]
      %v263 = vld [vmem:[%s197 + $0x110] sm:$0xf]
      %v264 = vld [vmem:[%s197 + $0x114] sm:$0xff]
      %v265 = vld [vmem:[%s197 + $0x11c] sm:$0xf]
      %v266 = vld [vmem:[%s197 + $0x120] sm:$0xff]
      %v267 = vld [vmem:[%s197 + $0x128] sm:$0xf]
      %v268 = vld [vmem:[%s197 + $0x12c] sm:$0xff]
      %v269 = vld [vmem:[%s197 + $0x134] sm:$0xf]
      %v270 = vld [vmem:[%s197 + $0x138] sm:$0xff]
      %v271 = vld [vmem:[%s197 + $0x140] sm:$0xf]
      %v272 = vld [vmem:[%s197 + $0x144] sm:$0xff]
      %v273 = vld [vmem:[%s197 + $0x14c] sm:$0xf]
      %v274 = vld [vmem:[%s197 + $0x150] sm:$0xff]
      %v275 = vld [vmem:[%s197 + $0x158] sm:$0xf]
      %v276 = vld [vmem:[%s197 + $0x15c] sm:$0xff]
      %v277 = vld [vmem:[%s197 + $0x164] sm:$0xf]
      %v278 = vld [vmem:[%s197 + $0x168] sm:$0xff]
      %v279 = vld [vmem:[%s197 + $0x170] sm:$0xf]
      %v280 = vld [vmem:[%s197 + $0x174] sm:$0xff]
      %v281 = vld [vmem:[%s197 + $0x17c] sm:$0xf]
      %v282 = vld [vmem:[%s1] sm:$0xf]
      %v283 = vld [vmem:[%s1 + $0x4] sm:$0xf]
      %v284 = vld [vmem:[%s1 + $0x8] sm:$0xf]
      %v285 = vld [vmem:[%s1 + $0xc] sm:$0xf]
      %v286 = vld [vmem:[%s1 + $0x10] sm:$0xf]
      %v287 = vld [vmem:[%s1 + $0x14] sm:$0xf]
      %v288 = vld [vmem:[%s1 + $0x18] sm:$0xf]
      %v289 = vld [vmem:[%s1 + $0x1c] sm:$0xf]
      %v290 = vld [vmem:[%s1 + $0x20] sm:$0xf]
      %v291 = vld [vmem:[%s1 + $0x24] sm:$0xf]
      %v292 = vld [vmem:[%s1 + $0x28] sm:$0xf]
      %v293 = vld [vmem:[%s1 + $0x2c] sm:$0xf]
      %v294 = vld [vmem:[%s1 + $0x30] sm:$0xf]
      %v295 = vld [vmem:[%s1 + $0x34] sm:$0xf]
      %v296 = vld [vmem:[%s1 + $0x38] sm:$0xf]
      %v297 = vld [vmem:[%s1 + $0x3c] sm:$0xf]
      %v298 = vld [vmem:[%s1 + $0x40] sm:$0xf]
      %v299 = vld [vmem:[%s1 + $0x44] sm:$0xf]
      %v300 = vld [vmem:[%s1 + $0x48] sm:$0xf]
      %v301 = vld [vmem:[%s1 + $0x4c] sm:$0xf]
      %v302 = vld [vmem:[%s1 + $0x50] sm:$0xf]
      %v303 = vld [vmem:[%s1 + $0x54] sm:$0xf]
      %v304 = vld [vmem:[%s1 + $0x58] sm:$0xf]
      %v305 = vld [vmem:[%s1 + $0x5c] sm:$0xf]
      %v306 = vld [vmem:[%s1 + $0x60] sm:$0xf]
      %v307 = vld [vmem:[%s1 + $0x64] sm:$0xf]
      %v308 = vld [vmem:[%s1 + $0x68] sm:$0xf]
      %v309 = vld [vmem:[%s1 + $0x6c] sm:$0xf]
      %v310 = vld [vmem:[%s1 + $0x70] sm:$0xf]
      %v311 = vld [vmem:[%s1 + $0x74] sm:$0xf]
      %v312 = vld [vmem:[%s1 + $0x78] sm:$0xf]
      %v313 = vld [vmem:[%s1 + $0x7c] sm:$0xf]
      %v314 = vld [vmem:[%s1 + $0x80] sm:$0xf]
      %v315 = vld [vmem:[%s1 + $0x84] sm:$0xf]
      %v316 = vld [vmem:[%s1 + $0x88] sm:$0xf]
      %v317 = vld [vmem:[%s1 + $0x8c] sm:$0xf]
      %v382 = vunpack.c.l.b16 %v218
      %v383 = vunpack.c.h.b16 %v218
      %v384 = vunpack.c.l.b16 %v219
      %v385 = vunpack.c.l.b16 %v220
      %v386 = vunpack.c.h.b16 %v220
      %v387 = vunpack.c.l.b16 %v221
      %v388 = vunpack.c.l.b16 %v222
      %v389 = vunpack.c.h.b16 %v222
      %v390 = vunpack.c.l.b16 %v223
      %v391 = vunpack.c.l.b16 %v224
      %v392 = vunpack.c.h.b16 %v224
      %v393 = vunpack.c.l.b16 %v225
      %v394 = vunpack.c.l.b16 %v226
      %v395 = vunpack.c.h.b16 %v226
      %v396 = vunpack.c.l.b16 %v227
      %v397 = vunpack.c.l.b16 %v228
      %v398 = vunpack.c.h.b16 %v228
      %v399 = vunpack.c.l.b16 %v229
      %v400 = vunpack.c.l.b16 %v230
      %v401 = vunpack.c.h.b16 %v230
      %v402 = vunpack.c.l.b16 %v231
      %v403 = vunpack.c.l.b16 %v232
      %v404 = vunpack.c.h.b16 %v232
      %v405 = vunpack.c.l.b16 %v233
      %v406 = vunpack.c.l.b16 %v234
      %v407 = vunpack.c.h.b16 %v234
      %v408 = vunpack.c.l.b16 %v235
      %v409 = vunpack.c.l.b16 %v236
      %v410 = vunpack.c.h.b16 %v236
      %v411 = vunpack.c.l.b16 %v237
      %v412 = vunpack.c.l.b16 %v238
      %v413 = vunpack.c.h.b16 %v238
      %v414 = vunpack.c.l.b16 %v239
      %v415 = vunpack.c.l.b16 %v240
      %v416 = vunpack.c.h.b16 %v240
      %v417 = vunpack.c.l.b16 %v241
      %v418 = vunpack.c.l.b16 %v242
      %v419 = vunpack.c.h.b16 %v242
      %v420 = vunpack.c.l.b16 %v243
      %v421 = vunpack.c.l.b16 %v244
      %v422 = vunpack.c.h.b16 %v244
      %v423 = vunpack.c.l.b16 %v245
      %v424 = vunpack.c.l.b16 %v246
      %v425 = vunpack.c.h.b16 %v246
      %v426 = vunpack.c.l.b16 %v247
      %v427 = vunpack.c.l.b16 %v248
      %v428 = vunpack.c.h.b16 %v248
      %v429 = vunpack.c.l.b16 %v249
      %v430 = vunpack.c.l.b16 %v250
      %v431 = vunpack.c.h.b16 %v250
      %v432 = vunpack.c.l.b16 %v251
      %v433 = vunpack.c.l.b16 %v252
      %v434 = vunpack.c.h.b16 %v252
      %v435 = vunpack.c.l.b16 %v253
      %v436 = vunpack.c.l.b16 %v254
      %v437 = vunpack.c.h.b16 %v254
      %v438 = vunpack.c.l.b16 %v255
      %v439 = vunpack.c.l.b16 %v256
      %v440 = vunpack.c.h.b16 %v256
      %v441 = vunpack.c.l.b16 %v257
      %v442 = vunpack.c.l.b16 %v258
      %v443 = vunpack.c.h.b16 %v258
      %v444 = vunpack.c.l.b16 %v259
      %v445 = vunpack.c.l.b16 %v260
      %v446 = vunpack.c.h.b16 %v260
      %v447 = vunpack.c.l.b16 %v261
      %v448 = vunpack.c.l.b16 %v262
      %v449 = vunpack.c.h.b16 %v262
      %v450 = vunpack.c.l.b16 %v263
      %v451 = vunpack.c.l.b16 %v264
      %v452 = vunpack.c.h.b16 %v264
      %v453 = vunpack.c.l.b16 %v265
      %v454 = vunpack.c.l.b16 %v266
      %v455 = vunpack.c.h.b16 %v266
      %v456 = vunpack.c.l.b16 %v267
      %v457 = vunpack.c.l.b16 %v268
      %v458 = vunpack.c.h.b16 %v268
      %v459 = vunpack.c.l.b16 %v269
      %v460 = vunpack.c.l.b16 %v270
      %v461 = vunpack.c.h.b16 %v270
      %v462 = vunpack.c.l.b16 %v271
      %v463 = vunpack.c.l.b16 %v272
      %v464 = vunpack.c.h.b16 %v272
      %v465 = vunpack.c.l.b16 %v273
      %v466 = vunpack.c.l.b16 %v274
      %v467 = vunpack.c.h.b16 %v274
      %v468 = vunpack.c.l.b16 %v275
      %v469 = vunpack.c.l.b16 %v276
      %v470 = vunpack.c.h.b16 %v276
      %v471 = vunpack.c.l.b16 %v277
      %v472 = vunpack.c.l.b16 %v278
      %v473 = vunpack.c.h.b16 %v278
      %v474 = vunpack.c.l.b16 %v279
      %v475 = vunpack.c.l.b16 %v280
      %v476 = vunpack.c.h.b16 %v280
      %v477 = vunpack.c.l.b16 %v281
      %v478 = vpack.c.b16 %v385, %v382
      %v479 = vpack.c.b16 %v386, %v383
      %v480 = vpack.c.b16 %v387, %v384
      %v481 = vpack.c.b16 %v391, %v388
      %v482 = vpack.c.b16 %v392, %v389
      %v483 = vpack.c.b16 %v393, %v390
      %v484 = vpack.c.b16 %v397, %v394
      %v485 = vpack.c.b16 %v398, %v395
      %v486 = vpack.c.b16 %v399, %v396
      %v487 = vpack.c.b16 %v403, %v400
      %v488 = vpack.c.b16 %v404, %v401
      %v489 = vpack.c.b16 %v405, %v402
      %v490 = vpack.c.b16 %v409, %v406
      %v491 = vpack.c.b16 %v410, %v407
      %v492 = vpack.c.b16 %v411, %v408
      %v493 = vpack.c.b16 %v415, %v412
      %v494 = vpack.c.b16 %v416, %v413
      %v495 = vpack.c.b16 %v417, %v414
      %v496 = vpack.c.b16 %v421, %v418
      %v497 = vpack.c.b16 %v422, %v419
      %v498 = vpack.c.b16 %v423, %v420
      %v499 = vpack.c.b16 %v427, %v424
      %v500 = vpack.c.b16 %v428, %v425
      %v501 = vpack.c.b16 %v429, %v426
      %v502 = vpack.c.b16 %v433, %v430
      %v503 = vpack.c.b16 %v434, %v431
      %v504 = vpack.c.b16 %v435, %v432
      %v505 = vpack.c.b16 %v439, %v436
      %v506 = vpack.c.b16 %v440, %v437
      %v507 = vpack.c.b16 %v441, %v438
      %v508 = vpack.c.b16 %v445, %v442
      %v509 = vpack.c.b16 %v446, %v443
      %v510 = vpack.c.b16 %v447, %v444
      %v511 = vpack.c.b16 %v451, %v448
      %v512 = vpack.c.b16 %v452, %v449
      %v513 = vpack.c.b16 %v453, %v450
      %v514 = vpack.c.b16 %v457, %v454
      %v515 = vpack.c.b16 %v458, %v455
      %v516 = vpack.c.b16 %v459, %v456
      %v517 = vpack.c.b16 %v463, %v460
      %v518 = vpack.c.b16 %v464, %v461
      %v519 = vpack.c.b16 %v465, %v462
      %v520 = vpack.c.b16 %v469, %v466
      %v521 = vpack.c.b16 %v470, %v467
      %v522 = vpack.c.b16 %v471, %v468
      %v523 = vpack.c.b16 %v475, %v472
      %v524 = vpack.c.b16 %v476, %v473
      %v525 = vpack.c.b16 %v477, %v474
      %v594 = vunpack.c.l.b16 %v282
      %v595 = vunpack.c.l.b16 %v283
      %v596 = vunpack.c.l.b16 %v284
      %v597 = vunpack.c.l.b16 %v285
      %v598 = vunpack.c.l.b16 %v286
      %v599 = vunpack.c.l.b16 %v287
      %v600 = vunpack.c.l.b16 %v288
      %v601 = vunpack.c.l.b16 %v289
      %v602 = vunpack.c.l.b16 %v290
      %v603 = vunpack.c.l.b16 %v291
      %v604 = vunpack.c.l.b16 %v292
      %v605 = vunpack.c.l.b16 %v293
      %v606 = vunpack.c.l.b16 %v294
      %v607 = vunpack.c.l.b16 %v295
      %v608 = vunpack.c.l.b16 %v296
      %v609 = vunpack.c.l.b16 %v297
      %v610 = vunpack.c.l.b16 %v298
      %v611 = vunpack.c.l.b16 %v299
      %v612 = vunpack.c.l.b16 %v300
      %v613 = vunpack.c.l.b16 %v301
      %v614 = vunpack.c.l.b16 %v302
      %v615 = vunpack.c.l.b16 %v303
      %v616 = vunpack.c.l.b16 %v304
      %v617 = vunpack.c.l.b16 %v305
      %v618 = vunpack.c.l.b16 %v306
      %v619 = vunpack.c.l.b16 %v307
      %v620 = vunpack.c.l.b16 %v308
      %v621 = vunpack.c.l.b16 %v309
      %v622 = vunpack.c.l.b16 %v310
      %v623 = vunpack.c.l.b16 %v311
      %v624 = vunpack.c.l.b16 %v312
      %v625 = vunpack.c.l.b16 %v313
      %v626 = vunpack.c.l.b16 %v314
      %v627 = vunpack.c.l.b16 %v315
      %v628 = vunpack.c.l.b16 %v316
      %v629 = vunpack.c.l.b16 %v317
      %v630 = vpack.c.b16 %v595, %v594
      %v631 = vpack.c.b16 %v597, %v596
      %v632 = vpack.c.b16 %v599, %v598
      %v633 = vpack.c.b16 %v601, %v600
      %v634 = vpack.c.b16 %v603, %v602
      %v635 = vpack.c.b16 %v605, %v604
      %v636 = vpack.c.b16 %v607, %v606
      %v637 = vpack.c.b16 %v609, %v608
      %v638 = vpack.c.b16 %v611, %v610
      %v639 = vpack.c.b16 %v613, %v612
      %v640 = vpack.c.b16 %v615, %v614
      %v641 = vpack.c.b16 %v617, %v616
      %v642 = vpack.c.b16 %v619, %v618
      %v643 = vpack.c.b16 %v621, %v620
      %v644 = vpack.c.b16 %v623, %v622
      %v645 = vpack.c.b16 %v625, %v624
      %v646 = vpack.c.b16 %v627, %v626
      %v647 = vpack.c.b16 %v629, %v628
      %vm666 = vcmask 261120
      %v668 = vsel %vm666, %v480, 0
      %v671 = vsel %vm666, %v483, 0
      %v674 = vsel %vm666, %v486, 0
      %v677 = vsel %vm666, %v489, 0
      %v680 = vsel %vm666, %v492, 0
      %v683 = vsel %vm666, %v495, 0
      %v686 = vsel %vm666, %v498, 0
      %v689 = vsel %vm666, %v501, 0
      %v692 = vsel %vm666, %v504, 0
      %v695 = vsel %vm666, %v507, 0
      %v698 = vsel %vm666, %v510, 0
      %v701 = vsel %vm666, %v513, 0
      %v704 = vsel %vm666, %v516, 0
      %v707 = vsel %vm666, %v519, 0
      %v710 = vsel %vm666, %v522, 0
      %v713 = vsel %vm666, %v525, 0
      %715 = vmatpush.bf16.msra.mxu0 %v637
      %716 = vmatpush.bf16.msra.mxu0 %v636
      %717 = vmatpush.bf16.msra.mxu0 %v635
      %718 = vmatpush.bf16.msra.mxu0 %v634
      %719 = vmatpush.bf16.msra.mxu0 %v633
      %720 = vmatpush.bf16.msra.mxu0 %v632
      %721 = vmatpush.bf16.msra.mxu0 %v631
      %722 = vmatpush.bf16.msra.mxu0 %v630
      %723 = vmatmul.bf16.gmra.mxu0 %v478
      %v724 = vpop.f32.mrf.mxu0
      %v725 = vadd.f32 0.0, %v724
      %v726 = vpop.f32.mrf.mxu0
      %v727 = vadd.f32 0.0, %v726
      %728 = vmatmul.bf16.gmra.mxu0 %v481
      %v729 = vpop.f32.mrf.mxu0
      %v730 = vadd.f32 0.0, %v729
      %v731 = vpop.f32.mrf.mxu0
      %v732 = vadd.f32 0.0, %v731
      %733 = vmatmul.bf16.gmra.mxu0 %v484
      %v734 = vpop.f32.mrf.mxu0
      %v735 = vadd.f32 0.0, %v734
      %v736 = vpop.f32.mrf.mxu0
      %v737 = vadd.f32 0.0, %v736
      %738 = vmatmul.bf16.gmra.mxu0 %v487
      %v739 = vpop.f32.mrf.mxu0
      %v740 = vadd.f32 0.0, %v739
      %v741 = vpop.f32.mrf.mxu0
      %v742 = vadd.f32 0.0, %v741
      %743 = vmatmul.bf16.gmra.mxu0 %v490
      %v744 = vpop.f32.mrf.mxu0
      %v745 = vadd.f32 0.0, %v744
      %v746 = vpop.f32.mrf.mxu0
      %v747 = vadd.f32 0.0, %v746
      %748 = vmatmul.bf16.gmra.mxu0 %v493
      %v749 = vpop.f32.mrf.mxu0
      %v750 = vadd.f32 0.0, %v749
      %v751 = vpop.f32.mrf.mxu0
      %v752 = vadd.f32 0.0, %v751
      %753 = vmatmul.bf16.gmra.mxu0 %v496
      %v754 = vpop.f32.mrf.mxu0
      %v755 = vadd.f32 0.0, %v754
      %v756 = vpop.f32.mrf.mxu0
      %v757 = vadd.f32 0.0, %v756
      %758 = vmatmul.bf16.gmra.mxu0 %v499
      %v759 = vpop.f32.mrf.mxu0
      %v760 = vadd.f32 0.0, %v759
      %v761 = vpop.f32.mrf.mxu0
      %v762 = vadd.f32 0.0, %v761
      %763 = vmatmul.bf16.gmra.mxu0 %v502
      %v764 = vpop.f32.mrf.mxu0
      %v765 = vadd.f32 0.0, %v764
      %v766 = vpop.f32.mrf.mxu0
      %v767 = vadd.f32 0.0, %v766
      %768 = vmatmul.bf16.gmra.mxu0 %v505
      %v769 = vpop.f32.mrf.mxu0
      %v770 = vadd.f32 0.0, %v769
      %v771 = vpop.f32.mrf.mxu0
      %v772 = vadd.f32 0.0, %v771
      %773 = vmatmul.bf16.gmra.mxu0 %v508
      %v774 = vpop.f32.mrf.mxu0
      %v775 = vadd.f32 0.0, %v774
      %v776 = vpop.f32.mrf.mxu0
      %v777 = vadd.f32 0.0, %v776
      %778 = vmatmul.bf16.gmra.mxu0 %v511
      %v779 = vpop.f32.mrf.mxu0
      %v780 = vadd.f32 0.0, %v779
      %v781 = vpop.f32.mrf.mxu0
      %v782 = vadd.f32 0.0, %v781
      %783 = vmatmul.bf16.gmra.mxu0 %v514
      %v784 = vpop.f32.mrf.mxu0
      %v785 = vadd.f32 0.0, %v784
      %v786 = vpop.f32.mrf.mxu0
      %v787 = vadd.f32 0.0, %v786
      %788 = vmatmul.bf16.gmra.mxu0 %v517
      %v789 = vpop.f32.mrf.mxu0
      %v790 = vadd.f32 0.0, %v789
      %v791 = vpop.f32.mrf.mxu0
      %v792 = vadd.f32 0.0, %v791
      %793 = vmatmul.bf16.gmra.mxu0 %v520
      %v794 = vpop.f32.mrf.mxu0
      %v795 = vadd.f32 0.0, %v794
      %v796 = vpop.f32.mrf.mxu0
      %v797 = vadd.f32 0.0, %v796
      %798 = vmatmul.bf16.gmra.mxu0 %v523
      %v799 = vpop.f32.mrf.mxu0
      %v800 = vadd.f32 0.0, %v799
      %v801 = vpop.f32.mrf.mxu0
      %v802 = vadd.f32 0.0, %v801
      %803 = vdwg.mxu0
      %804 = vmatpush.bf16.msra.mxu0 %v645
      %805 = vmatpush.bf16.msra.mxu0 %v644
      %806 = vmatpush.bf16.msra.mxu0 %v643
      %807 = vmatpush.bf16.msra.mxu0 %v642
      %808 = vmatpush.bf16.msra.mxu0 %v641
      %809 = vmatpush.bf16.msra.mxu0 %v640
      %810 = vmatpush.bf16.msra.mxu0 %v639
      %811 = vmatpush.bf16.msra.mxu0 %v638
      %812 = vmatmul.bf16.gmra.mxu0 %v479
      %v813 = vpop.f32.mrf.mxu0
      %v814 = vadd.f32 %v725, %v813
      %v815 = vpop.f32.mrf.mxu0
      %v816 = vadd.f32 %v727, %v815
      %817 = vmatmul.bf16.gmra.mxu0 %v482
      %v818 = vpop.f32.mrf.mxu0
      %v819 = vadd.f32 %v730, %v818
      %v820 = vpop.f32.mrf.mxu0
      %v821 = vadd.f32 %v732, %v820
      %822 = vmatmul.bf16.gmra.mxu0 %v485
      %v823 = vpop.f32.mrf.mxu0
      %v824 = vadd.f32 %v735, %v823
      %v825 = vpop.f32.mrf.mxu0
      %v826 = vadd.f32 %v737, %v825
      %827 = vmatmul.bf16.gmra.mxu0 %v488
      %v828 = vpop.f32.mrf.mxu0
      %v829 = vadd.f32 %v740, %v828
      %v830 = vpop.f32.mrf.mxu0
      %v831 = vadd.f32 %v742, %v830
      %832 = vmatmul.bf16.gmra.mxu0 %v491
      %v833 = vpop.f32.mrf.mxu0
      %v834 = vadd.f32 %v745, %v833
      %v835 = vpop.f32.mrf.mxu0
      %v836 = vadd.f32 %v747, %v835
      %837 = vmatmul.bf16.gmra.mxu0 %v494
      %v838 = vpop.f32.mrf.mxu0
      %v839 = vadd.f32 %v750, %v838
      %v840 = vpop.f32.mrf.mxu0
      %v841 = vadd.f32 %v752, %v840
      %842 = vmatmul.bf16.gmra.mxu0 %v497
      %v843 = vpop.f32.mrf.mxu0
      %v844 = vadd.f32 %v755, %v843
      %v845 = vpop.f32.mrf.mxu0
      %v846 = vadd.f32 %v757, %v845
      %847 = vmatmul.bf16.gmra.mxu0 %v500
      %v848 = vpop.f32.mrf.mxu0
      %v849 = vadd.f32 %v760, %v848
      %v850 = vpop.f32.mrf.mxu0
      %v851 = vadd.f32 %v762, %v850
      %852 = vmatmul.bf16.gmra.mxu0 %v503
      %v853 = vpop.f32.mrf.mxu0
      %v854 = vadd.f32 %v765, %v853
      %v855 = vpop.f32.mrf.mxu0
      %v856 = vadd.f32 %v767, %v855
      %857 = vmatmul.bf16.gmra.mxu0 %v506
      %v858 = vpop.f32.mrf.mxu0
      %v859 = vadd.f32 %v770, %v858
      %v860 = vpop.f32.mrf.mxu0
      %v861 = vadd.f32 %v772, %v860
      %862 = vmatmul.bf16.gmra.mxu0 %v509
      %v863 = vpop.f32.mrf.mxu0
      %v864 = vadd.f32 %v775, %v863
      %v865 = vpop.f32.mrf.mxu0
      %v866 = vadd.f32 %v777, %v865
      %867 = vmatmul.bf16.gmra.mxu0 %v512
      %v868 = vpop.f32.mrf.mxu0
      %v869 = vadd.f32 %v780, %v868
      %v870 = vpop.f32.mrf.mxu0
      %v871 = vadd.f32 %v782, %v870
      %872 = vmatmul.bf16.gmra.mxu0 %v515
      %v873 = vpop.f32.mrf.mxu0
      %v874 = vadd.f32 %v785, %v873
      %v875 = vpop.f32.mrf.mxu0
      %v876 = vadd.f32 %v787, %v875
      %877 = vmatmul.bf16.gmra.mxu0 %v518
      %v878 = vpop.f32.mrf.mxu0
      %v879 = vadd.f32 %v790, %v878
      %v880 = vpop.f32.mrf.mxu0
      %v881 = vadd.f32 %v792, %v880
      %882 = vmatmul.bf16.gmra.mxu0 %v521
      %v883 = vpop.f32.mrf.mxu0
      %v884 = vadd.f32 %v795, %v883
      %v885 = vpop.f32.mrf.mxu0
      %v886 = vadd.f32 %v797, %v885
      %887 = vmatmul.bf16.gmra.mxu0 %v524
      %v888 = vpop.f32.mrf.mxu0
      %v889 = vadd.f32 %v800, %v888
      %v890 = vpop.f32.mrf.mxu0
      %v891 = vadd.f32 %v802, %v890
      %892 = vdwg.mxu0
      %893 = vmatpush.bf16.msra.mxu0 0
      %894 = vmatpush.bf16.msra.mxu0 0
      %895 = vmatpush.bf16.msra.mxu0 0
      %896 = vmatpush.bf16.msra.mxu0 0
      %897 = vmatpush.bf16.msra.mxu0 0
      %898 = vmatpush.bf16.msra.mxu0 0
      %899 = vmatpush.bf16.msra.mxu0 %v647
      %900 = vmatpush.bf16.msra.mxu0 %v646
      %901 = vmatmul.bf16.gmra.mxu0 %v668
      %v902 = vpop.f32.mrf.mxu0
      %v903 = vadd.f32 %v814, %v902
      %v904 = vpop.f32.mrf.mxu0
      %v905 = vadd.f32 %v816, %v904
      %906 = vmatmul.bf16.gmra.mxu0 %v671
      %v907 = vpop.f32.mrf.mxu0
      %v908 = vadd.f32 %v819, %v907
      %v909 = vpop.f32.mrf.mxu0
      %v910 = vadd.f32 %v821, %v909
      %911 = vmatmul.bf16.gmra.mxu0 %v674
      %v912 = vpop.f32.mrf.mxu0
      %v913 = vadd.f32 %v824, %v912
      %v914 = vpop.f32.mrf.mxu0
      %v915 = vadd.f32 %v826, %v914
      %916 = vmatmul.bf16.gmra.mxu0 %v677
      %v917 = vpop.f32.mrf.mxu0
      %v918 = vadd.f32 %v829, %v917
      %v919 = vpop.f32.mrf.mxu0
      %v920 = vadd.f32 %v831, %v919
      %921 = vmatmul.bf16.gmra.mxu0 %v680
      %v922 = vpop.f32.mrf.mxu0
      %v923 = vadd.f32 %v834, %v922
      %v924 = vpop.f32.mrf.mxu0
      %v925 = vadd.f32 %v836, %v924
      %926 = vmatmul.bf16.gmra.mxu0 %v683
      %v927 = vpop.f32.mrf.mxu0
      %v928 = vadd.f32 %v839, %v927
      %v929 = vpop.f32.mrf.mxu0
      %v930 = vadd.f32 %v841, %v929
      %931 = vmatmul.bf16.gmra.mxu0 %v686
      %v932 = vpop.f32.mrf.mxu0
      %v933 = vadd.f32 %v844, %v932
      %v934 = vpop.f32.mrf.mxu0
      %v935 = vadd.f32 %v846, %v934
      %936 = vmatmul.bf16.gmra.mxu0 %v689
      %v937 = vpop.f32.mrf.mxu0
      %v938 = vadd.f32 %v849, %v937
      %v939 = vpop.f32.mrf.mxu0
      %v940 = vadd.f32 %v851, %v939
      %941 = vmatmul.bf16.gmra.mxu0 %v692
      %v942 = vpop.f32.mrf.mxu0
      %v943 = vadd.f32 %v854, %v942
      %v944 = vpop.f32.mrf.mxu0
      %v945 = vadd.f32 %v856, %v944
      %946 = vmatmul.bf16.gmra.mxu0 %v695
      %v947 = vpop.f32.mrf.mxu0
      %v948 = vadd.f32 %v859, %v947
      %v949 = vpop.f32.mrf.mxu0
      %v950 = vadd.f32 %v861, %v949
      %951 = vmatmul.bf16.gmra.mxu0 %v698
      %v952 = vpop.f32.mrf.mxu0
      %v953 = vadd.f32 %v864, %v952
      %v954 = vpop.f32.mrf.mxu0
      %v955 = vadd.f32 %v866, %v954
      %956 = vmatmul.bf16.gmra.mxu0 %v701
      %v957 = vpop.f32.mrf.mxu0
      %v958 = vadd.f32 %v869, %v957
      %v959 = vpop.f32.mrf.mxu0
      %v960 = vadd.f32 %v871, %v959
      %961 = vmatmul.bf16.gmra.mxu0 %v704
      %v962 = vpop.f32.mrf.mxu0
      %v963 = vadd.f32 %v874, %v962
      %v964 = vpop.f32.mrf.mxu0
      %v965 = vadd.f32 %v876, %v964
      %966 = vmatmul.bf16.gmra.mxu0 %v707
      %v967 = vpop.f32.mrf.mxu0
      %v968 = vadd.f32 %v879, %v967
      %v969 = vpop.f32.mrf.mxu0
      %v970 = vadd.f32 %v881, %v969
      %971 = vmatmul.bf16.gmra.mxu0 %v710
      %v972 = vpop.f32.mrf.mxu0
      %v973 = vadd.f32 %v884, %v972
      %v974 = vpop.f32.mrf.mxu0
      %v975 = vadd.f32 %v886, %v974
      %976 = vmatmul.bf16.gmra.mxu0 %v713
      %v977 = vpop.f32.mrf.mxu0
      %v978 = vadd.f32 %v889, %v977
      %v979 = vpop.f32.mrf.mxu0
      %v980 = vadd.f32 %v891, %v979
      %981 = vdwg.mxu0
      %v982 = vpack.c.bf16 %v903, %v903
      %v983 = vpack.c.bf16 %v905, %v905
      %v984 = vpack.c.bf16 %v908, %v908
      %v985 = vpack.c.bf16 %v910, %v910
      %v986 = vpack.c.bf16 %v913, %v913
      %v987 = vpack.c.bf16 %v915, %v915
      %v988 = vpack.c.bf16 %v918, %v918
      %v989 = vpack.c.bf16 %v920, %v920
      %v990 = vpack.c.bf16 %v923, %v923
      %v991 = vpack.c.bf16 %v925, %v925
      %v992 = vpack.c.bf16 %v928, %v928
      %v993 = vpack.c.bf16 %v930, %v930
      %v994 = vpack.c.bf16 %v933, %v933
      %v995 = vpack.c.bf16 %v935, %v935
      %v996 = vpack.c.bf16 %v938, %v938
      %v997 = vpack.c.bf16 %v940, %v940
      %v998 = vpack.c.bf16 %v943, %v943
      %v999 = vpack.c.bf16 %v945, %v945
      %v1000 = vpack.c.bf16 %v948, %v948
      %v1001 = vpack.c.bf16 %v950, %v950
      %v1002 = vpack.c.bf16 %v953, %v953
      %v1003 = vpack.c.bf16 %v955, %v955
      %v1004 = vpack.c.bf16 %v958, %v958
      %v1005 = vpack.c.bf16 %v960, %v960
      %v1006 = vpack.c.bf16 %v963, %v963
      %v1007 = vpack.c.bf16 %v965, %v965
      %v1008 = vpack.c.bf16 %v968, %v968
      %v1009 = vpack.c.bf16 %v970, %v970
      %v1010 = vpack.c.bf16 %v973, %v973
      %v1011 = vpack.c.bf16 %v975, %v975
      %v1012 = vpack.c.bf16 %v978, %v978
      %v1013 = vpack.c.bf16 %v980, %v980
      %1014 = vst [vmem:[%s205] sm:$0xf] %v982
      %1015 = vst [vmem:[%s205 + $0x4] sm:$0xf] %v983
      %1016 = vst [vmem:[%s205 + $0x8] sm:$0xf] %v984
      %1017 = vst [vmem:[%s205 + $0xc] sm:$0xf] %v985
      %1018 = vst [vmem:[%s205 + $0x10] sm:$0xf] %v986
      %1019 = vst [vmem:[%s205 + $0x14] sm:$0xf] %v987
      %1020 = vst [vmem:[%s205 + $0x18] sm:$0xf] %v988
      %1021 = vst [vmem:[%s205 + $0x1c] sm:$0xf] %v989
      %1022 = vst [vmem:[%s205 + $0x20] sm:$0xf] %v990
      %1023 = vst [vmem:[%s205 + $0x24] sm:$0xf] %v991
      %1024 = vst [vmem:[%s205 + $0x28] sm:$0xf] %v992
      %1025 = vst [vmem:[%s205 + $0x2c] sm:$0xf] %v993
      %1026 = vst [vmem:[%s205 + $0x30] sm:$0xf] %v994
      %1027 = vst [vmem:[%s205 + $0x34] sm:$0xf] %v995
      %1028 = vst [vmem:[%s205 + $0x38] sm:$0xf] %v996
      %1029 = vst [vmem:[%s205 + $0x3c] sm:$0xf] %v997
      %1030 = vst [vmem:[%s205 + $0x40] sm:$0xf] %v998
      %1031 = vst [vmem:[%s205 + $0x44] sm:$0xf] %v999
      %1032 = vst [vmem:[%s205 + $0x48] sm:$0xf] %v1000
      %1033 = vst [vmem:[%s205 + $0x4c] sm:$0xf] %v1001
      %1034 = vst [vmem:[%s205 + $0x50] sm:$0xf] %v1002
      %1035 = vst [vmem:[%s205 + $0x54] sm:$0xf] %v1003
      %1036 = vst [vmem:[%s205 + $0x58] sm:$0xf] %v1004
      %1037 = vst [vmem:[%s205 + $0x5c] sm:$0xf] %v1005
      %1038 = vst [vmem:[%s205 + $0x60] sm:$0xf] %v1006
      %1039 = vst [vmem:[%s205 + $0x64] sm:$0xf] %v1007
      %1040 = vst [vmem:[%s205 + $0x68] sm:$0xf] %v1008
      %1041 = vst [vmem:[%s205 + $0x6c] sm:$0xf] %v1009
      %1042 = vst [vmem:[%s205 + $0x70] sm:$0xf] %v1010
      %1043 = vst [vmem:[%s205 + $0x74] sm:$0xf] %v1011
      %1044 = vst [vmem:[%s205 + $0x78] sm:$0xf] %v1012
      %1045 = vst [vmem:[%s205 + $0x7c] sm:$0xf] %v1013
      %v1046 = vadd.f32 %v903, %v905
      %v1047 = vadd.f32 %v1046, %v908
      %v1048 = vadd.f32 %v1047, %v910
      %v1049 = vadd.f32 %v1048, %v913
      %v1050 = vadd.f32 %v1049, %v915
      %v1051 = vadd.f32 %v1050, %v918
      %v1052 = vadd.f32 %v1051, %v920
      %v1053 = vadd.f32 %v1052, %v923
      %v1054 = vadd.f32 %v1053, %v925
      %v1055 = vadd.f32 %v1054, %v928
      %v1056 = vadd.f32 %v1055, %v930
      %v1057 = vadd.f32 %v1056, %v933
      %v1058 = vadd.f32 %v1057, %v935
      %v1059 = vadd.f32 %v1058, %v938
      %v1060 = vadd.f32 %v1059, %v940
      %v1061 = vadd.f32 %v1060, %v943
      %v1062 = vadd.f32 %v1061, %v945
      %v1063 = vadd.f32 %v1062, %v948
      %v1064 = vadd.f32 %v1063, %v950
      %v1065 = vadd.f32 %v1064, %v953
      %v1066 = vadd.f32 %v1065, %v955
      %v1067 = vadd.f32 %v1066, %v958
      %v1068 = vadd.f32 %v1067, %v960
      %v1069 = vadd.f32 %v1068, %v963
      %v1070 = vadd.f32 %v1069, %v965
      %v1071 = vadd.f32 %v1070, %v968
      %v1072 = vadd.f32 %v1071, %v970
      %v1073 = vadd.f32 %v1072, %v973
      %v1074 = vadd.f32 %v1073, %v975
      %v1075 = vadd.f32 %v1074, %v978
      %v1076 = vadd.f32 %v1075, %v980
      %v1077 = vrot.slane %v1076, 4
      %v1078 = vadd.f32 %v1076, %v1077
      %v1079 = vrot.slane %v1078, 2
      %v1080 = vadd.f32 %v1078, %v1079
      %v1081 = vrot.slane %v1080, 1
      %v1082 = vadd.f32 %v1080, %v1081
      %v1083 = vmul.f32 %v903, %v903
      %v1084 = vmul.f32 %v905, %v905
      %v1085 = vmul.f32 %v908, %v908
      %v1086 = vmul.f32 %v910, %v910
      %v1087 = vmul.f32 %v913, %v913
      %v1088 = vmul.f32 %v915, %v915
      %v1089 = vmul.f32 %v918, %v918
      %v1090 = vmul.f32 %v920, %v920
      %v1091 = vmul.f32 %v923, %v923
      %v1092 = vmul.f32 %v925, %v925
      %v1093 = vmul.f32 %v928, %v928
      %v1094 = vmul.f32 %v930, %v930
      %v1095 = vmul.f32 %v933, %v933
      %v1096 = vmul.f32 %v935, %v935
      %v1097 = vmul.f32 %v938, %v938
      %v1098 = vmul.f32 %v940, %v940
      %v1099 = vmul.f32 %v943, %v943
      %v1100 = vmul.f32 %v945, %v945
      %v1101 = vmul.f32 %v948, %v948
      %v1102 = vmul.f32 %v950, %v950
      %v1103 = vmul.f32 %v953, %v953
      %v1104 = vmul.f32 %v955, %v955
      %v1105 = vmul.f32 %v958, %v958
      %v1106 = vmul.f32 %v960, %v960
      %v1107 = vmul.f32 %v963, %v963
      %v1108 = vmul.f32 %v965, %v965
      %v1109 = vmul.f32 %v968, %v968
      %v1110 = vmul.f32 %v970, %v970
      %v1111 = vmul.f32 %v973, %v973
      %v1112 = vmul.f32 %v975, %v975
      %v1113 = vmul.f32 %v978, %v978
      %v1114 = vmul.f32 %v980, %v980
      %v1115 = vadd.f32 %v1083, %v1084
      %v1116 = vadd.f32 %v1115, %v1085
      %v1117 = vadd.f32 %v1116, %v1086
      %v1118 = vadd.f32 %v1117, %v1087
      %v1119 = vadd.f32 %v1118, %v1088
      %v1120 = vadd.f32 %v1119, %v1089
      %v1121 = vadd.f32 %v1120, %v1090
      %v1122 = vadd.f32 %v1121, %v1091
      %v1123 = vadd.f32 %v1122, %v1092
      %v1124 = vadd.f32 %v1123, %v1093
      %v1125 = vadd.f32 %v1124, %v1094
      %v1126 = vadd.f32 %v1125, %v1095
      %v1127 = vadd.f32 %v1126, %v1096
      %v1128 = vadd.f32 %v1127, %v1097
      %v1129 = vadd.f32 %v1128, %v1098
      %v1130 = vadd.f32 %v1129, %v1099
      %v1131 = vadd.f32 %v1130, %v1100
      %v1132 = vadd.f32 %v1131, %v1101
      %v1133 = vadd.f32 %v1132, %v1102
      %v1134 = vadd.f32 %v1133, %v1103
      %v1135 = vadd.f32 %v1134, %v1104
      %v1136 = vadd.f32 %v1135, %v1105
      %v1137 = vadd.f32 %v1136, %v1106
      %v1138 = vadd.f32 %v1137, %v1107
      %v1139 = vadd.f32 %v1138, %v1108
      %v1140 = vadd.f32 %v1139, %v1109
      %v1141 = vadd.f32 %v1140, %v1110
      %v1142 = vadd.f32 %v1141, %v1111
      %v1143 = vadd.f32 %v1142, %v1112
      %v1144 = vadd.f32 %v1143, %v1113
      %v1145 = vadd.f32 %v1144, %v1114
      %v1146 = vrot.slane %v1145, 4
      %v1147 = vadd.f32 %v1145, %v1146
      %v1148 = vrot.slane %v1147, 2
      %v1149 = vadd.f32 %v1147, %v1148
      %v1150 = vrot.slane %v1149, 1
      %v1151 = vadd.f32 %v1149, %v1150
      %1184 = vrot.lane.b32.xlu0 %v903, 64
      %v1185 = vpop.permute.xlu0 %1184
      %1186 = vrot.lane.b32.xlu0 %v905, 64
      %v1187 = vpop.permute.xlu0 %1186
      %1188 = vrot.lane.b32.xlu0 %v908, 64
      %v1189 = vpop.permute.xlu0 %1188
      %1190 = vrot.lane.b32.xlu0 %v910, 64
      %v1191 = vpop.permute.xlu0 %1190
      %1192 = vrot.lane.b32.xlu0 %v913, 64
      %v1193 = vpop.permute.xlu0 %1192
      %1194 = vrot.lane.b32.xlu0 %v915, 64
      %v1195 = vpop.permute.xlu0 %1194
      %1196 = vrot.lane.b32.xlu0 %v918, 64
      %v1197 = vpop.permute.xlu0 %1196
      %1198 = vrot.lane.b32.xlu0 %v920, 64
      %v1199 = vpop.permute.xlu0 %1198
      %1200 = vrot.lane.b32.xlu0 %v923, 64
      %v1201 = vpop.permute.xlu0 %1200
      %1202 = vrot.lane.b32.xlu0 %v925, 64
      %v1203 = vpop.permute.xlu0 %1202
      %1204 = vrot.lane.b32.xlu0 %v928, 64
      %v1205 = vpop.permute.xlu0 %1204
      %1206 = vrot.lane.b32.xlu0 %v930, 64
      %v1207 = vpop.permute.xlu0 %1206
      %1208 = vrot.lane.b32.xlu0 %v933, 64
      %v1209 = vpop.permute.xlu0 %1208
      %1210 = vrot.lane.b32.xlu0 %v935, 64
      %v1211 = vpop.permute.xlu0 %1210
      %1212 = vrot.lane.b32.xlu0 %v938, 64
      %v1213 = vpop.permute.xlu0 %1212
      %1214 = vrot.lane.b32.xlu0 %v940, 64
      %v1215 = vpop.permute.xlu0 %1214
      %1216 = vrot.lane.b32.xlu0 %v943, 64
      %v1217 = vpop.permute.xlu0 %1216
      %1218 = vrot.lane.b32.xlu0 %v945, 64
      %v1219 = vpop.permute.xlu0 %1218
      %1220 = vrot.lane.b32.xlu0 %v948, 64
      %v1221 = vpop.permute.xlu0 %1220
      %1222 = vrot.lane.b32.xlu0 %v950, 64
      %v1223 = vpop.permute.xlu0 %1222
      %1224 = vrot.lane.b32.xlu0 %v953, 64
      %v1225 = vpop.permute.xlu0 %1224
      %1226 = vrot.lane.b32.xlu0 %v955, 64
      %v1227 = vpop.permute.xlu0 %1226
      %1228 = vrot.lane.b32.xlu0 %v958, 64
      %v1229 = vpop.permute.xlu0 %1228
      %1230 = vrot.lane.b32.xlu0 %v960, 64
      %v1231 = vpop.permute.xlu0 %1230
      %1232 = vrot.lane.b32.xlu0 %v963, 64
      %v1233 = vpop.permute.xlu0 %1232
      %1234 = vrot.lane.b32.xlu0 %v965, 64
      %v1235 = vpop.permute.xlu0 %1234
      %1236 = vrot.lane.b32.xlu0 %v968, 64
      %v1237 = vpop.permute.xlu0 %1236
      %1238 = vrot.lane.b32.xlu0 %v970, 64
      %v1239 = vpop.permute.xlu0 %1238
      %1240 = vrot.lane.b32.xlu0 %v973, 64
      %v1241 = vpop.permute.xlu0 %1240
      %1242 = vrot.lane.b32.xlu0 %v975, 64
      %v1243 = vpop.permute.xlu0 %1242
      %1244 = vrot.lane.b32.xlu0 %v978, 64
      %v1245 = vpop.permute.xlu0 %1244
      %1246 = vrot.lane.b32.xlu0 %v980, 64
      %v1247 = vpop.permute.xlu0 %1246
      %v1280 = vmul.f32 %v903, %v1185
      %v1281 = vmul.f32 %v905, %v1187
      %v1282 = vmul.f32 %v908, %v1189
      %v1283 = vmul.f32 %v910, %v1191
      %v1284 = vmul.f32 %v913, %v1193
      %v1285 = vmul.f32 %v915, %v1195
      %v1286 = vmul.f32 %v918, %v1197
      %v1287 = vmul.f32 %v920, %v1199
      %v1288 = vmul.f32 %v923, %v1201
      %v1289 = vmul.f32 %v925, %v1203
      %v1290 = vmul.f32 %v928, %v1205
      %v1291 = vmul.f32 %v930, %v1207
      %v1292 = vmul.f32 %v933, %v1209
      %v1293 = vmul.f32 %v935, %v1211
      %v1294 = vmul.f32 %v938, %v1213
      %v1295 = vmul.f32 %v940, %v1215
      %v1296 = vmul.f32 %v943, %v1217
      %v1297 = vmul.f32 %v945, %v1219
      %v1298 = vmul.f32 %v948, %v1221
      %v1299 = vmul.f32 %v950, %v1223
      %v1300 = vmul.f32 %v953, %v1225
      %v1301 = vmul.f32 %v955, %v1227
      %v1302 = vmul.f32 %v958, %v1229
      %v1303 = vmul.f32 %v960, %v1231
      %v1304 = vmul.f32 %v963, %v1233
      %v1305 = vmul.f32 %v965, %v1235
      %v1306 = vmul.f32 %v968, %v1237
      %v1307 = vmul.f32 %v970, %v1239
      %v1308 = vmul.f32 %v973, %v1241
      %v1309 = vmul.f32 %v975, %v1243
      %v1310 = vmul.f32 %v978, %v1245
      %v1311 = vmul.f32 %v980, %v1247
      %vm1312 = vcmask 523264
      %v1313 = vsel %vm1312, %v1280, 0.0
      %v1314 = vsel %vm1312, %v1281, 0.0
      %v1315 = vadd.f32 %v1313, %v1314
      %v1316 = vsel %vm1312, %v1282, 0.0
      %v1317 = vadd.f32 %v1315, %v1316
      %v1318 = vsel %vm1312, %v1283, 0.0
      %v1319 = vadd.f32 %v1317, %v1318
      %v1320 = vsel %vm1312, %v1284, 0.0
      %v1321 = vadd.f32 %v1319, %v1320
      %v1322 = vsel %vm1312, %v1285, 0.0
      %v1323 = vadd.f32 %v1321, %v1322
      %v1324 = vsel %vm1312, %v1286, 0.0
      %v1325 = vadd.f32 %v1323, %v1324
      %v1326 = vsel %vm1312, %v1287, 0.0
      %v1327 = vadd.f32 %v1325, %v1326
      %v1328 = vsel %vm1312, %v1288, 0.0
      %v1329 = vadd.f32 %v1327, %v1328
      %v1330 = vsel %vm1312, %v1289, 0.0
      %v1331 = vadd.f32 %v1329, %v1330
      %v1332 = vsel %vm1312, %v1290, 0.0
      %v1333 = vadd.f32 %v1331, %v1332
      %v1334 = vsel %vm1312, %v1291, 0.0
      %v1335 = vadd.f32 %v1333, %v1334
      %v1336 = vsel %vm1312, %v1292, 0.0
      %v1337 = vadd.f32 %v1335, %v1336
      %v1338 = vsel %vm1312, %v1293, 0.0
      %v1339 = vadd.f32 %v1337, %v1338
      %v1340 = vsel %vm1312, %v1294, 0.0
      %v1341 = vadd.f32 %v1339, %v1340
      %v1342 = vsel %vm1312, %v1295, 0.0
      %v1343 = vadd.f32 %v1341, %v1342
      %v1344 = vsel %vm1312, %v1296, 0.0
      %v1345 = vadd.f32 %v1343, %v1344
      %v1346 = vsel %vm1312, %v1297, 0.0
      %v1347 = vadd.f32 %v1345, %v1346
      %v1348 = vsel %vm1312, %v1298, 0.0
      %v1349 = vadd.f32 %v1347, %v1348
      %v1350 = vsel %vm1312, %v1299, 0.0
      %v1351 = vadd.f32 %v1349, %v1350
      %v1352 = vsel %vm1312, %v1300, 0.0
      %v1353 = vadd.f32 %v1351, %v1352
      %v1354 = vsel %vm1312, %v1301, 0.0
      %v1355 = vadd.f32 %v1353, %v1354
      %v1356 = vsel %vm1312, %v1302, 0.0
      %v1357 = vadd.f32 %v1355, %v1356
      %v1358 = vsel %vm1312, %v1303, 0.0
      %v1359 = vadd.f32 %v1357, %v1358
      %v1360 = vsel %vm1312, %v1304, 0.0
      %v1361 = vadd.f32 %v1359, %v1360
      %v1362 = vsel %vm1312, %v1305, 0.0
      %v1363 = vadd.f32 %v1361, %v1362
      %v1364 = vsel %vm1312, %v1306, 0.0
      %v1365 = vadd.f32 %v1363, %v1364
      %v1366 = vsel %vm1312, %v1307, 0.0
      %v1367 = vadd.f32 %v1365, %v1366
      %v1368 = vsel %vm1312, %v1308, 0.0
      %v1369 = vadd.f32 %v1367, %v1368
      %v1370 = vsel %vm1312, %v1309, 0.0
      %v1371 = vadd.f32 %v1369, %v1370
      %v1372 = vsel %vm1312, %v1310, 0.0
      %v1373 = vadd.f32 %v1371, %v1372
      %v1374 = vsel %vm1312, %v1311, 0.0
      %v1375 = vadd.f32 %v1373, %v1374
      %v1376 = vrot.slane %v1375, 4
      %v1377 = vadd.f32 %v1375, %v1376
      %v1378 = vrot.slane %v1377, 2
      %v1379 = vadd.f32 %v1377, %v1378
      %v1380 = vrot.slane %v1379, 1
      %v1381 = vadd.f32 %v1379, %v1380
      %1383 = vrot.lane.b32.xlu0 %v1381, 64
      %v1384 = vpop.permute.xlu0 %1383
      %v1386 = vsel %vm1312, %v1381, %v1384
      %v1388 = vrot.slane %v1386, 6
      %vm1390 = vcmask 1040384
      %v1391 = vsel %vm1390, %v1082, %v1151
      %vm1392 = vcmask 1041408
      %v1393 = vsel %vm1392, %v1391, %v1388
      %v1394 = vld [vmem:[%s211] sm:$0x7]
      %v1395 = vadd.f32 %v1394, %v1393
      %1396 = vst [vmem:[%s211] sm:$0x7] %v1395
      %s1397 = sadd.s32 %s19, %s20
      %s1398 = smul.u32 32, %s1397
      %p1399 = scmp.lt.s32.totalorder %s1398, 63
      %s1400 = scalar_select %p1399, %s1398, 63
      %s1401 = smul.addr %s1400, 4
      %s1402 = scalar_lea.vmem %s2, %s1401
      %p1403 = scmp.lt.s32.totalorder %s19, 1
      %s1404 = scalar_select %p1403, %s19, 1
      %s1405 = smul.addr %s1404, 4
      %s1406 = scalar_lea.vmem %s3, %s1405
      // Predicated region
      $region33: #{conv_stem_forward.6} parent=27 // pred_check
        %p1407 = pneg %p96
      $region34: #{conv_stem_forward.6} parent=27 // pred_check_branch
        %1409 = sbr.rel (%p1407) target = $region36
      $region35: #{conv_stem_forward.6} parent=27 // pred_region
        %s1410 = sadd.s32 %s19, %s20
        %s1411 = smul.u32 32, %s1410
      $region36: #{conv_stem_forward.6} parent=27 // pred_fallthru
        _
      // Predicated region
      $region37: #{conv_stem_forward.6} parent=27 // pred_check
        %p1412 = pneg %p122
      $region38: #{conv_stem_forward.6} parent=27 // pred_check_branch
        %1414 = sbr.rel (%p1412) target = $region40
      $region39: #{conv_stem_forward.6} parent=27 // pred_region
        _
      $region40: #{conv_stem_forward.6} parent=27 // pred_fallthru
        _
    $region28: #{conv_stem_forward.6} parent=5 // pred_fallthru
      _
    %p1415 = scmp.le.s32.totalorder 2, %s10
    // Predicated region
    $region41: #{conv_stem_forward.6} parent=5 // pred_check
      %p1416 = pneg %p1415
    $region42: #{conv_stem_forward.6} parent=5 // pred_check_branch
      %1418 = sbr.rel (%p1416) target = $region44
    $region43: #{conv_stem_forward.6} parent=5 // pred_region
      %s1419 = ssub.s32 %s10, 2
      // Predicated region
      $region45: #{conv_stem_forward.6} parent=43 // pred_check
        %p1420 = pneg %p102
      $region46: #{conv_stem_forward.6} parent=43 // pred_check_branch
        %1422 = sbr.rel (%p1420) target = $region48
      $region47: #{conv_stem_forward.6} parent=43 // pred_region
        %s1423 = sadd.s32 %s21, %s22
        %s1424 = smul.u32 32, %s1423
        %p1425 = scmp.lt.s32.totalorder %s1424, 63
        %s1426 = scalar_select %p1425, %s1424, 63
        %s1427 = smul.addr %s1426, 4
        %s1428 = scalar_lea.vmem %s2, %s1427
      $region48: #{conv_stem_forward.6} parent=43 // pred_fallthru
        _
      // Predicated region
      $region49: #{conv_stem_forward.6} parent=43 // pred_check
        %p1429 = pneg %p128
      $region50: #{conv_stem_forward.6} parent=43 // pred_check_branch
        %1431 = sbr.rel (%p1429) target = $region52
      $region51: #{conv_stem_forward.6} parent=43 // pred_region
        %p1432 = scmp.lt.s32.totalorder %s21, 1
        %s1433 = scalar_select %p1432, %s21, 1
        %s1434 = smul.addr %s1433, 4
        %s1435 = scalar_lea.vmem %s3, %s1434
      $region52: #{conv_stem_forward.6} parent=43 // pred_fallthru
        _
    $region44: #{conv_stem_forward.6} parent=5 // pred_fallthru
      _
  $region6: #{conv_stem_forward.6} parent=0 // loop_footer
    %s14 = sadd.s32 1, %s10
  $region7: #{conv_stem_forward.6} parent=0 // loop_footer_branch
    %9 = sbr.rel target = $region3
  $region8: #{conv_stem_forward.6} parent=0 // loop_exit
    _

// kernel: conv_stem_forward.7
$region0: #{conv_stem_forward.7}
  #allocation0 [shape = 'u32[]', space=smem, size = 0x4, offset = 0x4, fixed_abs, tag = 'smem constant byte address 0x4 - core index']
  #allocation1 [shape = 'u32[72,128]{1,0:T(1,128)}', space=vmem, size = 0x9000, scoped, tag = 'internal scratch']
  %s0 = inlined_call_operand.vmem [shape: bf16[512,128], index: 0, kind: input, shape index: {}]
  %s1 = inlined_call_operand.vmem [shape: f32[9,64], index: 1, kind: input, shape index: {}]
  %s2 = inlined_call_operand.vmem [shape: f32[512,128], index: 2, kind: output, shape index: {}]
  %s3 = sld [smem:[#allocation0]]
  $region18: #{conv_stem_forward.7} parent=0
    _
  %s5 = ssub.s32 1, %s3
  %s6 = scalar_select 0, %s5, %s3
  // Predicated region
  $region2: #{conv_stem_forward.7} parent=0 // pred_check
    _
  $region3: #{conv_stem_forward.7} parent=0 // pred_check_branch
    %8 = sbr.rel (0) target = $region5
  $region4: #{conv_stem_forward.7} parent=0 // pred_region
    _
  $region5: #{conv_stem_forward.7} parent=0 // pred_fallthru
    _
  // Predicated region
  $region6: #{conv_stem_forward.7} parent=0 // pred_check
    _
  $region7: #{conv_stem_forward.7} parent=0 // pred_check_branch
    %10 = sbr.rel (0) target = $region9
  $region8: #{conv_stem_forward.7} parent=0 // pred_region
    _
  $region9: #{conv_stem_forward.7} parent=0 // pred_fallthru
    _
  %v11 = vld [vmem:[%s1] sm:$0xff]
  %v12 = vld [vmem:[%s1 + $0x8] sm:$0x1]
  %v13 = vld [vmem:[%s0] sm:$0xf]
  %v14 = vld [vmem:[%s0 + $0x4] sm:$0xf]
  %v15 = vld [vmem:[%s0 + $0x8] sm:$0xf]
  %v16 = vld [vmem:[%s0 + $0xc] sm:$0xf]
  %v17 = vld [vmem:[%s0 + $0x10] sm:$0xf]
  %v18 = vld [vmem:[%s0 + $0x14] sm:$0xf]
  %v19 = vld [vmem:[%s0 + $0x18] sm:$0xf]
  %v20 = vld [vmem:[%s0 + $0x1c] sm:$0xf]
  %v21 = vld [vmem:[%s0 + $0x20] sm:$0xf]
  %v22 = vld [vmem:[%s0 + $0x24] sm:$0xf]
  %v23 = vld [vmem:[%s0 + $0x28] sm:$0xf]
  %v24 = vld [vmem:[%s0 + $0x2c] sm:$0xf]
  %v25 = vld [vmem:[%s0 + $0x30] sm:$0xf]
  %v26 = vld [vmem:[%s0 + $0x34] sm:$0xf]
  %v27 = vld [vmem:[%s0 + $0x38] sm:$0xf]
  %v28 = vld [vmem:[%s0 + $0x3c] sm:$0xf]
  %v29 = vld [vmem:[%s0 + $0x40] sm:$0xf]
  %v30 = vld [vmem:[%s0 + $0x44] sm:$0xf]
  %v31 = vld [vmem:[%s0 + $0x48] sm:$0xf]
  %v32 = vld [vmem:[%s0 + $0x4c] sm:$0xf]
  %v33 = vld [vmem:[%s0 + $0x50] sm:$0xf]
  %v34 = vld [vmem:[%s0 + $0x54] sm:$0xf]
  %v35 = vld [vmem:[%s0 + $0x58] sm:$0xf]
  %v36 = vld [vmem:[%s0 + $0x5c] sm:$0xf]
  %v37 = vld [vmem:[%s0 + $0x60] sm:$0xf]
  %v38 = vld [vmem:[%s0 + $0x64] sm:$0xf]
  %v39 = vld [vmem:[%s0 + $0x68] sm:$0xf]
  %v40 = vld [vmem:[%s0 + $0x6c] sm:$0xf]
  %v41 = vld [vmem:[%s0 + $0x70] sm:$0xf]
  %v42 = vld [vmem:[%s0 + $0x74] sm:$0xf]
  %v43 = vld [vmem:[%s0 + $0x78] sm:$0xf]
  %v44 = vld [vmem:[%s0 + $0x7c] sm:$0xf]
  %v45 = vld [vmem:[%s0 + $0x80] sm:$0xf]
  %v46 = vld [vmem:[%s0 + $0x84] sm:$0xf]
  %v47 = vld [vmem:[%s0 + $0x88] sm:$0xf]
  %v48 = vld [vmem:[%s0 + $0x8c] sm:$0xf]
  %v49 = vld [vmem:[%s0 + $0x90] sm:$0xf]
  %v50 = vld [vmem:[%s0 + $0x94] sm:$0xf]
  %v51 = vld [vmem:[%s0 + $0x98] sm:$0xf]
  %v52 = vld [vmem:[%s0 + $0x9c] sm:$0xf]
  %v53 = vld [vmem:[%s0 + $0xa0] sm:$0xf]
  %v54 = vld [vmem:[%s0 + $0xa4] sm:$0xf]
  %v55 = vld [vmem:[%s0 + $0xa8] sm:$0xf]
  %v56 = vld [vmem:[%s0 + $0xac] sm:$0xf]
  %v57 = vld [vmem:[%s0 + $0xb0] sm:$0xf]
  %v58 = vld [vmem:[%s0 + $0xb4] sm:$0xf]
  %v59 = vld [vmem:[%s0 + $0xb8] sm:$0xf]
  %v60 = vld [vmem:[%s0 + $0xbc] sm:$0xf]
  %v61 = vld [vmem:[%s0 + $0xc0] sm:$0xf]
  %v62 = vld [vmem:[%s0 + $0xc4] sm:$0xf]
  %v63 = vld [vmem:[%s0 + $0xc8] sm:$0xf]
  %v64 = vld [vmem:[%s0 + $0xcc] sm:$0xf]
  %v65 = vld [vmem:[%s0 + $0xd0] sm:$0xf]
  %v66 = vld [vmem:[%s0 + $0xd4] sm:$0xf]
  %v67 = vld [vmem:[%s0 + $0xd8] sm:$0xf]
  %v68 = vld [vmem:[%s0 + $0xdc] sm:$0xf]
  %v69 = vld [vmem:[%s0 + $0xe0] sm:$0xf]
  %v70 = vld [vmem:[%s0 + $0xe4] sm:$0xf]
  %v71 = vld [vmem:[%s0 + $0xe8] sm:$0xf]
  %v72 = vld [vmem:[%s0 + $0xec] sm:$0xf]
  %v73 = vld [vmem:[%s0 + $0xf0] sm:$0xf]
  %v74 = vld [vmem:[%s0 + $0xf4] sm:$0xf]
  %v75 = vld [vmem:[%s0 + $0xf8] sm:$0xf]
  %v76 = vld [vmem:[%s0 + $0xfc] sm:$0xf]
  %v77 = vunpack.c.l.bf16 %v13
  %v78 = vunpack.c.l.bf16 %v14
  %v79 = vunpack.c.l.bf16 %v15
  %v80 = vunpack.c.l.bf16 %v16
  %v81 = vunpack.c.l.bf16 %v17
  %v82 = vunpack.c.l.bf16 %v18
  %v83 = vunpack.c.l.bf16 %v19
  %v84 = vunpack.c.l.bf16 %v20
  %v85 = vunpack.c.l.bf16 %v21
  %v86 = vunpack.c.l.bf16 %v22
  %v87 = vunpack.c.l.bf16 %v23
  %v88 = vunpack.c.l.bf16 %v24
  %v89 = vunpack.c.l.bf16 %v25
  %v90 = vunpack.c.l.bf16 %v26
  %v91 = vunpack.c.l.bf16 %v27
  %v92 = vunpack.c.l.bf16 %v28
  %v93 = vunpack.c.l.bf16 %v29
  %v94 = vunpack.c.l.bf16 %v30
  %v95 = vunpack.c.l.bf16 %v31
  %v96 = vunpack.c.l.bf16 %v32
  %v97 = vunpack.c.l.bf16 %v33
  %v98 = vunpack.c.l.bf16 %v34
  %v99 = vunpack.c.l.bf16 %v35
  %v100 = vunpack.c.l.bf16 %v36
  %v101 = vunpack.c.l.bf16 %v37
  %v102 = vunpack.c.l.bf16 %v38
  %v103 = vunpack.c.l.bf16 %v39
  %v104 = vunpack.c.l.bf16 %v40
  %v105 = vunpack.c.l.bf16 %v41
  %v106 = vunpack.c.l.bf16 %v42
  %v107 = vunpack.c.l.bf16 %v43
  %v108 = vunpack.c.l.bf16 %v44
  %v109 = vunpack.c.l.bf16 %v45
  %v110 = vunpack.c.l.bf16 %v46
  %v111 = vunpack.c.l.bf16 %v47
  %v112 = vunpack.c.l.bf16 %v48
  %v113 = vunpack.c.l.bf16 %v49
  %v114 = vunpack.c.l.bf16 %v50
  %v115 = vunpack.c.l.bf16 %v51
  %v116 = vunpack.c.l.bf16 %v52
  %v117 = vunpack.c.l.bf16 %v53
  %v118 = vunpack.c.l.bf16 %v54
  %v119 = vunpack.c.l.bf16 %v55
  %v120 = vunpack.c.l.bf16 %v56
  %v121 = vunpack.c.l.bf16 %v57
  %v122 = vunpack.c.l.bf16 %v58
  %v123 = vunpack.c.l.bf16 %v59
  %v124 = vunpack.c.l.bf16 %v60
  %v125 = vunpack.c.l.bf16 %v61
  %v126 = vunpack.c.l.bf16 %v62
  %v127 = vunpack.c.l.bf16 %v63
  %v128 = vunpack.c.l.bf16 %v64
  %v129 = vunpack.c.l.bf16 %v65
  %v130 = vunpack.c.l.bf16 %v66
  %v131 = vunpack.c.l.bf16 %v67
  %v132 = vunpack.c.l.bf16 %v68
  %v133 = vunpack.c.l.bf16 %v69
  %v134 = vunpack.c.l.bf16 %v70
  %v135 = vunpack.c.l.bf16 %v71
  %v136 = vunpack.c.l.bf16 %v72
  %v137 = vunpack.c.l.bf16 %v73
  %v138 = vunpack.c.l.bf16 %v74
  %v139 = vunpack.c.l.bf16 %v75
  %v140 = vunpack.c.l.bf16 %v76
  %v141 = vperm.slane %v11, 0
  %v142 = vsub.f32 %v77, %v141
  %v143 = vsub.f32 %v78, %v141
  %v144 = vsub.f32 %v79, %v141
  %v145 = vsub.f32 %v80, %v141
  %v146 = vsub.f32 %v81, %v141
  %v147 = vsub.f32 %v82, %v141
  %v148 = vsub.f32 %v83, %v141
  %v149 = vsub.f32 %v84, %v141
  %v150 = vsub.f32 %v85, %v141
  %v151 = vsub.f32 %v86, %v141
  %v152 = vsub.f32 %v87, %v141
  %v153 = vsub.f32 %v88, %v141
  %v154 = vsub.f32 %v89, %v141
  %v155 = vsub.f32 %v90, %v141
  %v156 = vsub.f32 %v91, %v141
  %v157 = vsub.f32 %v92, %v141
  %v158 = vsub.f32 %v93, %v141
  %v159 = vsub.f32 %v94, %v141
  %v160 = vsub.f32 %v95, %v141
  %v161 = vsub.f32 %v96, %v141
  %v162 = vsub.f32 %v97, %v141
  %v163 = vsub.f32 %v98, %v141
  %v164 = vsub.f32 %v99, %v141
  %v165 = vsub.f32 %v100, %v141
  %v166 = vsub.f32 %v101, %v141
  %v167 = vsub.f32 %v102, %v141
  %v168 = vsub.f32 %v103, %v141
  %v169 = vsub.f32 %v104, %v141
  %v170 = vsub.f32 %v105, %v141
  %v171 = vsub.f32 %v106, %v141
  %v172 = vsub.f32 %v107, %v141
  %v173 = vsub.f32 %v108, %v141
  %v174 = vsub.f32 %v109, %v141
  %v175 = vsub.f32 %v110, %v141
  %v176 = vsub.f32 %v111, %v141
  %v177 = vsub.f32 %v112, %v141
  %v178 = vsub.f32 %v113, %v141
  %v179 = vsub.f32 %v114, %v141
  %v180 = vsub.f32 %v115, %v141
  %v181 = vsub.f32 %v116, %v141
  %v182 = vsub.f32 %v117, %v141
  %v183 = vsub.f32 %v118, %v141
  %v184 = vsub.f32 %v119, %v141
  %v185 = vsub.f32 %v120, %v141
  %v186 = vsub.f32 %v121, %v141
  %v187 = vsub.f32 %v122, %v141
  %v188 = vsub.f32 %v123, %v141
  %v189 = vsub.f32 %v124, %v141
  %v190 = vsub.f32 %v125, %v141
  %v191 = vsub.f32 %v126, %v141
  %v192 = vsub.f32 %v127, %v141
  %v193 = vsub.f32 %v128, %v141
  %v194 = vsub.f32 %v129, %v141
  %v195 = vsub.f32 %v130, %v141
  %v196 = vsub.f32 %v131, %v141
  %v197 = vsub.f32 %v132, %v141
  %v198 = vsub.f32 %v133, %v141
  %v199 = vsub.f32 %v134, %v141
  %v200 = vsub.f32 %v135, %v141
  %v201 = vsub.f32 %v136, %v141
  %v202 = vsub.f32 %v137, %v141
  %v203 = vsub.f32 %v138, %v141
  %v204 = vsub.f32 %v139, %v141
  %v205 = vsub.f32 %v140, %v141
  %v206 = vperm.slane %v11, 1
  %208 = vrot.lane.b32.xlu0 %v206, 64
  %v209 = vpop.permute.xlu0 %208
  %v211 = vsub.f32 %v77, %v209
  %v212 = vsub.f32 %v78, %v209
  %v213 = vsub.f32 %v79, %v209
  %v214 = vsub.f32 %v80, %v209
  %v215 = vsub.f32 %v81, %v209
  %v216 = vsub.f32 %v82, %v209
  %v217 = vsub.f32 %v83, %v209
  %v218 = vsub.f32 %v84, %v209
  %v219 = vsub.f32 %v85, %v209
  %v220 = vsub.f32 %v86, %v209
  %v221 = vsub.f32 %v87, %v209
  %v222 = vsub.f32 %v88, %v209
  %v223 = vsub.f32 %v89, %v209
  %v224 = vsub.f32 %v90, %v209
  %v225 = vsub.f32 %v91, %v209
  %v226 = vsub.f32 %v92, %v209
  %v227 = vsub.f32 %v93, %v209
  %v228 = vsub.f32 %v94, %v209
  %v229 = vsub.f32 %v95, %v209
  %v230 = vsub.f32 %v96, %v209
  %v231 = vsub.f32 %v97, %v209
  %v232 = vsub.f32 %v98, %v209
  %v233 = vsub.f32 %v99, %v209
  %v234 = vsub.f32 %v100, %v209
  %v235 = vsub.f32 %v101, %v209
  %v236 = vsub.f32 %v102, %v209
  %v237 = vsub.f32 %v103, %v209
  %v238 = vsub.f32 %v104, %v209
  %v239 = vsub.f32 %v105, %v209
  %v240 = vsub.f32 %v106, %v209
  %v241 = vsub.f32 %v107, %v209
  %v242 = vsub.f32 %v108, %v209
  %v243 = vsub.f32 %v109, %v209
  %v244 = vsub.f32 %v110, %v209
  %v245 = vsub.f32 %v111, %v209
  %v246 = vsub.f32 %v112, %v209
  %v247 = vsub.f32 %v113, %v209
  %v248 = vsub.f32 %v114, %v209
  %v249 = vsub.f32 %v115, %v209
  %v250 = vsub.f32 %v116, %v209
  %v251 = vsub.f32 %v117, %v209
  %v252 = vsub.f32 %v118, %v209
  %v253 = vsub.f32 %v119, %v209
  %v254 = vsub.f32 %v120, %v209
  %v255 = vsub.f32 %v121, %v209
  %v256 = vsub.f32 %v122, %v209
  %v257 = vsub.f32 %v123, %v209
  %v258 = vsub.f32 %v124, %v209
  %v259 = vsub.f32 %v125, %v209
  %v260 = vsub.f32 %v126, %v209
  %v261 = vsub.f32 %v127, %v209
  %v262 = vsub.f32 %v128, %v209
  %v263 = vsub.f32 %v129, %v209
  %v264 = vsub.f32 %v130, %v209
  %v265 = vsub.f32 %v131, %v209
  %v266 = vsub.f32 %v132, %v209
  %v267 = vsub.f32 %v133, %v209
  %v268 = vsub.f32 %v134, %v209
  %v269 = vsub.f32 %v135, %v209
  %v270 = vsub.f32 %v136, %v209
  %v271 = vsub.f32 %v137, %v209
  %v272 = vsub.f32 %v138, %v209
  %v273 = vsub.f32 %v139, %v209
  %v274 = vsub.f32 %v140, %v209
  %v275 = vperm.slane %v11, 2
  %v276 = vmul.f32 %v275, %v142
  %v277 = vmul.f32 %v275, %v143
  %v278 = vmul.f32 %v275, %v144
  %v279 = vmul.f32 %v275, %v145
  %v280 = vmul.f32 %v275, %v146
  %v281 = vmul.f32 %v275, %v147
  %v282 = vmul.f32 %v275, %v148
  %v283 = vmul.f32 %v275, %v149
  %v284 = vmul.f32 %v275, %v150
  %v285 = vmul.f32 %v275, %v151
  %v286 = vmul.f32 %v275, %v152
  %v287 = vmul.f32 %v275, %v153
  %v288 = vmul.f32 %v275, %v154
  %v289 = vmul.f32 %v275, %v155
  %v290 = vmul.f32 %v275, %v156
  %v291 = vmul.f32 %v275, %v157
  %v292 = vmul.f32 %v275, %v158
  %v293 = vmul.f32 %v275, %v159
  %v294 = vmul.f32 %v275, %v160
  %v295 = vmul.f32 %v275, %v161
  %v296 = vmul.f32 %v275, %v162
  %v297 = vmul.f32 %v275, %v163
  %v298 = vmul.f32 %v275, %v164
  %v299 = vmul.f32 %v275, %v165
  %v300 = vmul.f32 %v275, %v166
  %v301 = vmul.f32 %v275, %v167
  %v302 = vmul.f32 %v275, %v168
  %v303 = vmul.f32 %v275, %v169
  %v304 = vmul.f32 %v275, %v170
  %v305 = vmul.f32 %v275, %v171
  %v306 = vmul.f32 %v275, %v172
  %v307 = vmul.f32 %v275, %v173
  %v308 = vmul.f32 %v275, %v174
  %v309 = vmul.f32 %v275, %v175
  %v310 = vmul.f32 %v275, %v176
  %v311 = vmul.f32 %v275, %v177
  %v312 = vmul.f32 %v275, %v178
  %v313 = vmul.f32 %v275, %v179
  %v314 = vmul.f32 %v275, %v180
  %v315 = vmul.f32 %v275, %v181
  %v316 = vmul.f32 %v275, %v182
  %v317 = vmul.f32 %v275, %v183
  %v318 = vmul.f32 %v275, %v184
  %v319 = vmul.f32 %v275, %v185
  %v320 = vmul.f32 %v275, %v186
  %v321 = vmul.f32 %v275, %v187
  %v322 = vmul.f32 %v275, %v188
  %v323 = vmul.f32 %v275, %v189
  %v324 = vmul.f32 %v275, %v190
  %v325 = vmul.f32 %v275, %v191
  %v326 = vmul.f32 %v275, %v192
  %v327 = vmul.f32 %v275, %v193
  %v328 = vmul.f32 %v275, %v194
  %v329 = vmul.f32 %v275, %v195
  %v330 = vmul.f32 %v275, %v196
  %v331 = vmul.f32 %v275, %v197
  %v332 = vmul.f32 %v275, %v198
  %v333 = vmul.f32 %v275, %v199
  %v334 = vmul.f32 %v275, %v200
  %v335 = vmul.f32 %v275, %v201
  %v336 = vmul.f32 %v275, %v202
  %v337 = vmul.f32 %v275, %v203
  %v338 = vmul.f32 %v275, %v204
  %v339 = vmul.f32 %v275, %v205
  %v340 = vperm.slane %v11, 3
  %405 = vrot.lane.b32.xlu0 %v211, 64
  %v406 = vpop.permute.xlu0 %405
  %407 = vrot.lane.b32.xlu0 %v212, 64
  %v408 = vpop.permute.xlu0 %407
  %409 = vrot.lane.b32.xlu0 %v213, 64
  %v410 = vpop.permute.xlu0 %409
  %411 = vrot.lane.b32.xlu0 %v214, 64
  %v412 = vpop.permute.xlu0 %411
  %413 = vrot.lane.b32.xlu0 %v215, 64
  %v414 = vpop.permute.xlu0 %413
  %415 = vrot.lane.b32.xlu0 %v216, 64
  %v416 = vpop.permute.xlu0 %415
  %417 = vrot.lane.b32.xlu0 %v217, 64
  %v418 = vpop.permute.xlu0 %417
  %419 = vrot.lane.b32.xlu0 %v218, 64
  %v420 = vpop.permute.xlu0 %419
  %421 = vrot.lane.b32.xlu0 %v219, 64
  %v422 = vpop.permute.xlu0 %421
  %423 = vrot.lane.b32.xlu0 %v220, 64
  %v424 = vpop.permute.xlu0 %423
  %425 = vrot.lane.b32.xlu0 %v221, 64
  %v426 = vpop.permute.xlu0 %425
  %427 = vrot.lane.b32.xlu0 %v222, 64
  %v428 = vpop.permute.xlu0 %427
  %429 = vrot.lane.b32.xlu0 %v223, 64
  %v430 = vpop.permute.xlu0 %429
  %431 = vrot.lane.b32.xlu0 %v224, 64
  %v432 = vpop.permute.xlu0 %431
  %433 = vrot.lane.b32.xlu0 %v225, 64
  %v434 = vpop.permute.xlu0 %433
  %435 = vrot.lane.b32.xlu0 %v226, 64
  %v436 = vpop.permute.xlu0 %435
  %437 = vrot.lane.b32.xlu0 %v227, 64
  %v438 = vpop.permute.xlu0 %437
  %439 = vrot.lane.b32.xlu0 %v228, 64
  %v440 = vpop.permute.xlu0 %439
  %441 = vrot.lane.b32.xlu0 %v229, 64
  %v442 = vpop.permute.xlu0 %441
  %443 = vrot.lane.b32.xlu0 %v230, 64
  %v444 = vpop.permute.xlu0 %443
  %445 = vrot.lane.b32.xlu0 %v231, 64
  %v446 = vpop.permute.xlu0 %445
  %447 = vrot.lane.b32.xlu0 %v232, 64
  %v448 = vpop.permute.xlu0 %447
  %449 = vrot.lane.b32.xlu0 %v233, 64
  %v450 = vpop.permute.xlu0 %449
  %451 = vrot.lane.b32.xlu0 %v234, 64
  %v452 = vpop.permute.xlu0 %451
  %453 = vrot.lane.b32.xlu0 %v235, 64
  %v454 = vpop.permute.xlu0 %453
  %455 = vrot.lane.b32.xlu0 %v236, 64
  %v456 = vpop.permute.xlu0 %455
  %457 = vrot.lane.b32.xlu0 %v237, 64
  %v458 = vpop.permute.xlu0 %457
  %459 = vrot.lane.b32.xlu0 %v238, 64
  %v460 = vpop.permute.xlu0 %459
  %461 = vrot.lane.b32.xlu0 %v239, 64
  %v462 = vpop.permute.xlu0 %461
  %463 = vrot.lane.b32.xlu0 %v240, 64
  %v464 = vpop.permute.xlu0 %463
  %465 = vrot.lane.b32.xlu0 %v241, 64
  %v466 = vpop.permute.xlu0 %465
  %467 = vrot.lane.b32.xlu0 %v242, 64
  %v468 = vpop.permute.xlu0 %467
  %469 = vrot.lane.b32.xlu0 %v243, 64
  %v470 = vpop.permute.xlu0 %469
  %471 = vrot.lane.b32.xlu0 %v244, 64
  %v472 = vpop.permute.xlu0 %471
  %473 = vrot.lane.b32.xlu0 %v245, 64
  %v474 = vpop.permute.xlu0 %473
  %475 = vrot.lane.b32.xlu0 %v246, 64
  %v476 = vpop.permute.xlu0 %475
  %477 = vrot.lane.b32.xlu0 %v247, 64
  %v478 = vpop.permute.xlu0 %477
  %479 = vrot.lane.b32.xlu0 %v248, 64
  %v480 = vpop.permute.xlu0 %479
  %481 = vrot.lane.b32.xlu0 %v249, 64
  %v482 = vpop.permute.xlu0 %481
  %483 = vrot.lane.b32.xlu0 %v250, 64
  %v484 = vpop.permute.xlu0 %483
  %485 = vrot.lane.b32.xlu0 %v251, 64
  %v486 = vpop.permute.xlu0 %485
  %487 = vrot.lane.b32.xlu0 %v252, 64
  %v488 = vpop.permute.xlu0 %487
  %489 = vrot.lane.b32.xlu0 %v253, 64
  %v490 = vpop.permute.xlu0 %489
  %491 = vrot.lane.b32.xlu0 %v254, 64
  %v492 = vpop.permute.xlu0 %491
  %493 = vrot.lane.b32.xlu0 %v255, 64
  %v494 = vpop.permute.xlu0 %493
  %495 = vrot.lane.b32.xlu0 %v256, 64
  %v496 = vpop.permute.xlu0 %495
  %497 = vrot.lane.b32.xlu0 %v257, 64
  %v498 = vpop.permute.xlu0 %497
  %499 = vrot.lane.b32.xlu0 %v258, 64
  %v500 = vpop.permute.xlu0 %499
  %501 = vrot.lane.b32.xlu0 %v259, 64
  %v502 = vpop.permute.xlu0 %501
  %503 = vrot.lane.b32.xlu0 %v260, 64
  %v504 = vpop.permute.xlu0 %503
  %505 = vrot.lane.b32.xlu0 %v261, 64
  %v506 = vpop.permute.xlu0 %505
  %507 = vrot.lane.b32.xlu0 %v262, 64
  %v508 = vpop.permute.xlu0 %507
  %509 = vrot.lane.b32.xlu0 %v263, 64
  %v510 = vpop.permute.xlu0 %509
  %511 = vrot.lane.b32.xlu0 %v264, 64
  %v512 = vpop.permute.xlu0 %511
  %513 = vrot.lane.b32.xlu0 %v265, 64
  %v514 = vpop.permute.xlu0 %513
  %515 = vrot.lane.b32.xlu0 %v266, 64
  %v516 = vpop.permute.xlu0 %515
  %517 = vrot.lane.b32.xlu0 %v267, 64
  %v518 = vpop.permute.xlu0 %517
  %519 = vrot.lane.b32.xlu0 %v268, 64
  %v520 = vpop.permute.xlu0 %519
  %521 = vrot.lane.b32.xlu0 %v269, 64
  %v522 = vpop.permute.xlu0 %521
  %523 = vrot.lane.b32.xlu0 %v270, 64
  %v524 = vpop.permute.xlu0 %523
  %525 = vrot.lane.b32.xlu0 %v271, 64
  %v526 = vpop.permute.xlu0 %525
  %527 = vrot.lane.b32.xlu0 %v272, 64
  %v528 = vpop.permute.xlu0 %527
  %529 = vrot.lane.b32.xlu0 %v273, 64
  %v530 = vpop.permute.xlu0 %529
  %531 = vrot.lane.b32.xlu0 %v274, 64
  %v532 = vpop.permute.xlu0 %531
  %v597 = vmul.f32 %v340, %v406
  %v598 = vmul.f32 %v340, %v408
  %v599 = vmul.f32 %v340, %v410
  %v600 = vmul.f32 %v340, %v412
  %v601 = vmul.f32 %v340, %v414
  %v602 = vmul.f32 %v340, %v416
  %v603 = vmul.f32 %v340, %v418
  %v604 = vmul.f32 %v340, %v420
  %v605 = vmul.f32 %v340, %v422
  %v606 = vmul.f32 %v340, %v424
  %v607 = vmul.f32 %v340, %v426
  %v608 = vmul.f32 %v340, %v428
  %v609 = vmul.f32 %v340, %v430
  %v610 = vmul.f32 %v340, %v432
  %v611 = vmul.f32 %v340, %v434
  %v612 = vmul.f32 %v340, %v436
  %v613 = vmul.f32 %v340, %v438
  %v614 = vmul.f32 %v340, %v440
  %v615 = vmul.f32 %v340, %v442
  %v616 = vmul.f32 %v340, %v444
  %v617 = vmul.f32 %v340, %v446
  %v618 = vmul.f32 %v340, %v448
  %v619 = vmul.f32 %v340, %v450
  %v620 = vmul.f32 %v340, %v452
  %v621 = vmul.f32 %v340, %v454
  %v622 = vmul.f32 %v340, %v456
  %v623 = vmul.f32 %v340, %v458
  %v624 = vmul.f32 %v340, %v460
  %v625 = vmul.f32 %v340, %v462
  %v626 = vmul.f32 %v340, %v464
  %v627 = vmul.f32 %v340, %v466
  %v628 = vmul.f32 %v340, %v468
  %v629 = vmul.f32 %v340, %v470
  %v630 = vmul.f32 %v340, %v472
  %v631 = vmul.f32 %v340, %v474
  %v632 = vmul.f32 %v340, %v476
  %v633 = vmul.f32 %v340, %v478
  %v634 = vmul.f32 %v340, %v480
  %v635 = vmul.f32 %v340, %v482
  %v636 = vmul.f32 %v340, %v484
  %v637 = vmul.f32 %v340, %v486
  %v638 = vmul.f32 %v340, %v488
  %v639 = vmul.f32 %v340, %v490
  %v640 = vmul.f32 %v340, %v492
  %v641 = vmul.f32 %v340, %v494
  %v642 = vmul.f32 %v340, %v496
  %v643 = vmul.f32 %v340, %v498
  %v644 = vmul.f32 %v340, %v500
  %v645 = vmul.f32 %v340, %v502
  %v646 = vmul.f32 %v340, %v504
  %v647 = vmul.f32 %v340, %v506
  %v648 = vmul.f32 %v340, %v508
  %v649 = vmul.f32 %v340, %v510
  %v650 = vmul.f32 %v340, %v512
  %v651 = vmul.f32 %v340, %v514
  %v652 = vmul.f32 %v340, %v516
  %v653 = vmul.f32 %v340, %v518
  %v654 = vmul.f32 %v340, %v520
  %v655 = vmul.f32 %v340, %v522
  %v656 = vmul.f32 %v340, %v524
  %v657 = vmul.f32 %v340, %v526
  %v658 = vmul.f32 %v340, %v528
  %v659 = vmul.f32 %v340, %v530
  %v660 = vmul.f32 %v340, %v532
  %v661 = vadd.f32 %v276, %v597
  %v662 = vadd.f32 %v277, %v598
  %v663 = vadd.f32 %v278, %v599
  %v664 = vadd.f32 %v279, %v600
  %v665 = vadd.f32 %v280, %v601
  %v666 = vadd.f32 %v281, %v602
  %v667 = vadd.f32 %v282, %v603
  %v668 = vadd.f32 %v283, %v604
  %v669 = vadd.f32 %v284, %v605
  %v670 = vadd.f32 %v285, %v606
  %v671 = vadd.f32 %v286, %v607
  %v672 = vadd.f32 %v287, %v608
  %v673 = vadd.f32 %v288, %v609
  %v674 = vadd.f32 %v289, %v610
  %v675 = vadd.f32 %v290, %v611
  %v676 = vadd.f32 %v291, %v612
  %v677 = vadd.f32 %v292, %v613
  %v678 = vadd.f32 %v293, %v614
  %v679 = vadd.f32 %v294, %v615
  %v680 = vadd.f32 %v295, %v616
  %v681 = vadd.f32 %v296, %v617
  %v682 = vadd.f32 %v297, %v618
  %v683 = vadd.f32 %v298, %v619
  %v684 = vadd.f32 %v299, %v620
  %v685 = vadd.f32 %v300, %v621
  %v686 = vadd.f32 %v301, %v622
  %v687 = vadd.f32 %v302, %v623
  %v688 = vadd.f32 %v303, %v624
  %v689 = vadd.f32 %v304, %v625
  %v690 = vadd.f32 %v305, %v626
  %v691 = vadd.f32 %v306, %v627
  %v692 = vadd.f32 %v307, %v628
  %v693 = vadd.f32 %v308, %v629
  %v694 = vadd.f32 %v309, %v630
  %v695 = vadd.f32 %v310, %v631
  %v696 = vadd.f32 %v311, %v632
  %v697 = vadd.f32 %v312, %v633
  %v698 = vadd.f32 %v313, %v634
  %v699 = vadd.f32 %v314, %v635
  %v700 = vadd.f32 %v315, %v636
  %v701 = vadd.f32 %v316, %v637
  %v702 = vadd.f32 %v317, %v638
  %v703 = vadd.f32 %v318, %v639
  %v704 = vadd.f32 %v319, %v640
  %v705 = vadd.f32 %v320, %v641
  %v706 = vadd.f32 %v321, %v642
  %v707 = vadd.f32 %v322, %v643
  %v708 = vadd.f32 %v323, %v644
  %v709 = vadd.f32 %v324, %v645
  %v710 = vadd.f32 %v325, %v646
  %v711 = vadd.f32 %v326, %v647
  %v712 = vadd.f32 %v327, %v648
  %v713 = vadd.f32 %v328, %v649
  %v714 = vadd.f32 %v329, %v650
  %v715 = vadd.f32 %v330, %v651
  %v716 = vadd.f32 %v331, %v652
  %v717 = vadd.f32 %v332, %v653
  %v718 = vadd.f32 %v333, %v654
  %v719 = vadd.f32 %v334, %v655
  %v720 = vadd.f32 %v335, %v656
  %v721 = vadd.f32 %v336, %v657
  %v722 = vadd.f32 %v337, %v658
  %v723 = vadd.f32 %v338, %v659
  %v724 = vadd.f32 %v339, %v660
  %v725 = vperm.slane %v11, 6
  %v726 = vadd.f32 %v661, %v725
  %v727 = vadd.f32 %v662, %v725
  %v728 = vadd.f32 %v663, %v725
  %v729 = vadd.f32 %v664, %v725
  %v730 = vadd.f32 %v665, %v725
  %v731 = vadd.f32 %v666, %v725
  %v732 = vadd.f32 %v667, %v725
  %v733 = vadd.f32 %v668, %v725
  %v734 = vadd.f32 %v669, %v725
  %v735 = vadd.f32 %v670, %v725
  %v736 = vadd.f32 %v671, %v725
  %v737 = vadd.f32 %v672, %v725
  %v738 = vadd.f32 %v673, %v725
  %v739 = vadd.f32 %v674, %v725
  %v740 = vadd.f32 %v675, %v725
  %v741 = vadd.f32 %v676, %v725
  %v742 = vadd.f32 %v677, %v725
  %v743 = vadd.f32 %v678, %v725
  %v744 = vadd.f32 %v679, %v725
  %v745 = vadd.f32 %v680, %v725
  %v746 = vadd.f32 %v681, %v725
  %v747 = vadd.f32 %v682, %v725
  %v748 = vadd.f32 %v683, %v725
  %v749 = vadd.f32 %v684, %v725
  %v750 = vadd.f32 %v685, %v725
  %v751 = vadd.f32 %v686, %v725
  %v752 = vadd.f32 %v687, %v725
  %v753 = vadd.f32 %v688, %v725
  %v754 = vadd.f32 %v689, %v725
  %v755 = vadd.f32 %v690, %v725
  %v756 = vadd.f32 %v691, %v725
  %v757 = vadd.f32 %v692, %v725
  %v758 = vadd.f32 %v693, %v725
  %v759 = vadd.f32 %v694, %v725
  %v760 = vadd.f32 %v695, %v725
  %v761 = vadd.f32 %v696, %v725
  %v762 = vadd.f32 %v697, %v725
  %v763 = vadd.f32 %v698, %v725
  %v764 = vadd.f32 %v699, %v725
  %v765 = vadd.f32 %v700, %v725
  %v766 = vadd.f32 %v701, %v725
  %v767 = vadd.f32 %v702, %v725
  %v768 = vadd.f32 %v703, %v725
  %v769 = vadd.f32 %v704, %v725
  %v770 = vadd.f32 %v705, %v725
  %v771 = vadd.f32 %v706, %v725
  %v772 = vadd.f32 %v707, %v725
  %v773 = vadd.f32 %v708, %v725
  %v774 = vadd.f32 %v709, %v725
  %v775 = vadd.f32 %v710, %v725
  %v776 = vadd.f32 %v711, %v725
  %v777 = vadd.f32 %v712, %v725
  %v778 = vadd.f32 %v713, %v725
  %v779 = vadd.f32 %v714, %v725
  %v780 = vadd.f32 %v715, %v725
  %v781 = vadd.f32 %v716, %v725
  %v782 = vadd.f32 %v717, %v725
  %v783 = vadd.f32 %v718, %v725
  %v784 = vadd.f32 %v719, %v725
  %v785 = vadd.f32 %v720, %v725
  %v786 = vadd.f32 %v721, %v725
  %v787 = vadd.f32 %v722, %v725
  %v788 = vadd.f32 %v723, %v725
  %v789 = vadd.f32 %v724, %v725
  %v790 = vperm.slane %v11, 4
  %v791 = vmul.f32 %v790, %v142
  %v792 = vmul.f32 %v790, %v143
  %v793 = vmul.f32 %v790, %v144
  %v794 = vmul.f32 %v790, %v145
  %v795 = vmul.f32 %v790, %v146
  %v796 = vmul.f32 %v790, %v147
  %v797 = vmul.f32 %v790, %v148
  %v798 = vmul.f32 %v790, %v149
  %v799 = vmul.f32 %v790, %v150
  %v800 = vmul.f32 %v790, %v151
  %v801 = vmul.f32 %v790, %v152
  %v802 = vmul.f32 %v790, %v153
  %v803 = vmul.f32 %v790, %v154
  %v804 = vmul.f32 %v790, %v155
  %v805 = vmul.f32 %v790, %v156
  %v806 = vmul.f32 %v790, %v157
  %v807 = vmul.f32 %v790, %v158
  %v808 = vmul.f32 %v790, %v159
  %v809 = vmul.f32 %v790, %v160
  %v810 = vmul.f32 %v790, %v161
  %v811 = vmul.f32 %v790, %v162
  %v812 = vmul.f32 %v790, %v163
  %v813 = vmul.f32 %v790, %v164
  %v814 = vmul.f32 %v790, %v165
  %v815 = vmul.f32 %v790, %v166
  %v816 = vmul.f32 %v790, %v167
  %v817 = vmul.f32 %v790, %v168
  %v818 = vmul.f32 %v790, %v169
  %v819 = vmul.f32 %v790, %v170
  %v820 = vmul.f32 %v790, %v171
  %v821 = vmul.f32 %v790, %v172
  %v822 = vmul.f32 %v790, %v173
  %v823 = vmul.f32 %v790, %v174
  %v824 = vmul.f32 %v790, %v175
  %v825 = vmul.f32 %v790, %v176
  %v826 = vmul.f32 %v790, %v177
  %v827 = vmul.f32 %v790, %v178
  %v828 = vmul.f32 %v790, %v179
  %v829 = vmul.f32 %v790, %v180
  %v830 = vmul.f32 %v790, %v181
  %v831 = vmul.f32 %v790, %v182
  %v832 = vmul.f32 %v790, %v183
  %v833 = vmul.f32 %v790, %v184
  %v834 = vmul.f32 %v790, %v185
  %v835 = vmul.f32 %v790, %v186
  %v836 = vmul.f32 %v790, %v187
  %v837 = vmul.f32 %v790, %v188
  %v838 = vmul.f32 %v790, %v189
  %v839 = vmul.f32 %v790, %v190
  %v840 = vmul.f32 %v790, %v191
  %v841 = vmul.f32 %v790, %v192
  %v842 = vmul.f32 %v790, %v193
  %v843 = vmul.f32 %v790, %v194
  %v844 = vmul.f32 %v790, %v195
  %v845 = vmul.f32 %v790, %v196
  %v846 = vmul.f32 %v790, %v197
  %v847 = vmul.f32 %v790, %v198
  %v848 = vmul.f32 %v790, %v199
  %v849 = vmul.f32 %v790, %v200
  %v850 = vmul.f32 %v790, %v201
  %v851 = vmul.f32 %v790, %v202
  %v852 = vmul.f32 %v790, %v203
  %v853 = vmul.f32 %v790, %v204
  %v854 = vmul.f32 %v790, %v205
  %v855 = vperm.slane %v11, 5
  %v856 = vmul.f32 %v855, %v406
  %v857 = vmul.f32 %v855, %v408
  %v858 = vmul.f32 %v855, %v410
  %v859 = vmul.f32 %v855, %v412
  %v860 = vmul.f32 %v855, %v414
  %v861 = vmul.f32 %v855, %v416
  %v862 = vmul.f32 %v855, %v418
  %v863 = vmul.f32 %v855, %v420
  %v864 = vmul.f32 %v855, %v422
  %v865 = vmul.f32 %v855, %v424
  %v866 = vmul.f32 %v855, %v426
  %v867 = vmul.f32 %v855, %v428
  %v868 = vmul.f32 %v855, %v430
  %v869 = vmul.f32 %v855, %v432
  %v870 = vmul.f32 %v855, %v434
  %v871 = vmul.f32 %v855, %v436
  %v872 = vmul.f32 %v855, %v438
  %v873 = vmul.f32 %v855, %v440
  %v874 = vmul.f32 %v855, %v442
  %v875 = vmul.f32 %v855, %v444
  %v876 = vmul.f32 %v855, %v446
  %v877 = vmul.f32 %v855, %v448
  %v878 = vmul.f32 %v855, %v450
  %v879 = vmul.f32 %v855, %v452
  %v880 = vmul.f32 %v855, %v454
  %v881 = vmul.f32 %v855, %v456
  %v882 = vmul.f32 %v855, %v458
  %v883 = vmul.f32 %v855, %v460
  %v884 = vmul.f32 %v855, %v462
  %v885 = vmul.f32 %v855, %v464
  %v886 = vmul.f32 %v855, %v466
  %v887 = vmul.f32 %v855, %v468
  %v888 = vmul.f32 %v855, %v470
  %v889 = vmul.f32 %v855, %v472
  %v890 = vmul.f32 %v855, %v474
  %v891 = vmul.f32 %v855, %v476
  %v892 = vmul.f32 %v855, %v478
  %v893 = vmul.f32 %v855, %v480
  %v894 = vmul.f32 %v855, %v482
  %v895 = vmul.f32 %v855, %v484
  %v896 = vmul.f32 %v855, %v486
  %v897 = vmul.f32 %v855, %v488
  %v898 = vmul.f32 %v855, %v490
  %v899 = vmul.f32 %v855, %v492
  %v900 = vmul.f32 %v855, %v494
  %v901 = vmul.f32 %v855, %v496
  %v902 = vmul.f32 %v855, %v498
  %v903 = vmul.f32 %v855, %v500
  %v904 = vmul.f32 %v855, %v502
  %v905 = vmul.f32 %v855, %v504
  %v906 = vmul.f32 %v855, %v506
  %v907 = vmul.f32 %v855, %v508
  %v908 = vmul.f32 %v855, %v510
  %v909 = vmul.f32 %v855, %v512
  %v910 = vmul.f32 %v855, %v514
  %v911 = vmul.f32 %v855, %v516
  %v912 = vmul.f32 %v855, %v518
  %v913 = vmul.f32 %v855, %v520
  %v914 = vmul.f32 %v855, %v522
  %v915 = vmul.f32 %v855, %v524
  %v916 = vmul.f32 %v855, %v526
  %v917 = vmul.f32 %v855, %v528
  %v918 = vmul.f32 %v855, %v530
  %v919 = vmul.f32 %v855, %v532
  %v920 = vadd.f32 %v791, %v856
  %v921 = vadd.f32 %v792, %v857
  %v922 = vadd.f32 %v793, %v858
  %v923 = vadd.f32 %v794, %v859
  %v924 = vadd.f32 %v795, %v860
  %v925 = vadd.f32 %v796, %v861
  %v926 = vadd.f32 %v797, %v862
  %v927 = vadd.f32 %v798, %v863
  %v928 = vadd.f32 %v799, %v864
  %v929 = vadd.f32 %v800, %v865
  %v930 = vadd.f32 %v801, %v866
  %v931 = vadd.f32 %v802, %v867
  %v932 = vadd.f32 %v803, %v868
  %v933 = vadd.f32 %v804, %v869
  %v934 = vadd.f32 %v805, %v870
  %v935 = vadd.f32 %v806, %v871
  %v936 = vadd.f32 %v807, %v872
  %v937 = vadd.f32 %v808, %v873
  %v938 = vadd.f32 %v809, %v874
  %v939 = vadd.f32 %v810, %v875
  %v940 = vadd.f32 %v811, %v876
  %v941 = vadd.f32 %v812, %v877
  %v942 = vadd.f32 %v813, %v878
  %v943 = vadd.f32 %v814, %v879
  %v944 = vadd.f32 %v815, %v880
  %v945 = vadd.f32 %v816, %v881
  %v946 = vadd.f32 %v817, %v882
  %v947 = vadd.f32 %v818, %v883
  %v948 = vadd.f32 %v819, %v884
  %v949 = vadd.f32 %v820, %v885
  %v950 = vadd.f32 %v821, %v886
  %v951 = vadd.f32 %v822, %v887
  %v952 = vadd.f32 %v823, %v888
  %v953 = vadd.f32 %v824, %v889
  %v954 = vadd.f32 %v825, %v890
  %v955 = vadd.f32 %v826, %v891
  %v956 = vadd.f32 %v827, %v892
  %v957 = vadd.f32 %v828, %v893
  %v958 = vadd.f32 %v829, %v894
  %v959 = vadd.f32 %v830, %v895
  %v960 = vadd.f32 %v831, %v896
  %v961 = vadd.f32 %v832, %v897
  %v962 = vadd.f32 %v833, %v898
  %v963 = vadd.f32 %v834, %v899
  %v964 = vadd.f32 %v835, %v900
  %v965 = vadd.f32 %v836, %v901
  %v966 = vadd.f32 %v837, %v902
  %v967 = vadd.f32 %v838, %v903
  %v968 = vadd.f32 %v839, %v904
  %v969 = vadd.f32 %v840, %v905
  %v970 = vadd.f32 %v841, %v906
  %v971 = vadd.f32 %v842, %v907
  %v972 = vadd.f32 %v843, %v908
  %v973 = vadd.f32 %v844, %v909
  %v974 = vadd.f32 %v845, %v910
  %v975 = vadd.f32 %v846, %v911
  %v976 = vadd.f32 %v847, %v912
  %v977 = vadd.f32 %v848, %v913
  %v978 = vadd.f32 %v849, %v914
  %v979 = vadd.f32 %v850, %v915
  %v980 = vadd.f32 %v851, %v916
  %v981 = vadd.f32 %v852, %v917
  %v982 = vadd.f32 %v853, %v918
  %v983 = vadd.f32 %v854, %v919
  %v984 = vperm.slane %v11, 7
  %v985 = vadd.f32 %v920, %v984
  %v986 = vadd.f32 %v921, %v984
  %v987 = vadd.f32 %v922, %v984
  %v988 = vadd.f32 %v923, %v984
  %v989 = vadd.f32 %v924, %v984
  %v990 = vadd.f32 %v925, %v984
  %v991 = vadd.f32 %v926, %v984
  %v992 = vadd.f32 %v927, %v984
  %v993 = vadd.f32 %v928, %v984
  %v994 = vadd.f32 %v929, %v984
  %v995 = vadd.f32 %v930, %v984
  %v996 = vadd.f32 %v931, %v984
  %v997 = vadd.f32 %v932, %v984
  %v998 = vadd.f32 %v933, %v984
  %v999 = vadd.f32 %v934, %v984
  %v1000 = vadd.f32 %v935, %v984
  %v1001 = vadd.f32 %v936, %v984
  %v1002 = vadd.f32 %v937, %v984
  %v1003 = vadd.f32 %v938, %v984
  %v1004 = vadd.f32 %v939, %v984
  %v1005 = vadd.f32 %v940, %v984
  %v1006 = vadd.f32 %v941, %v984
  %v1007 = vadd.f32 %v942, %v984
  %v1008 = vadd.f32 %v943, %v984
  %v1009 = vadd.f32 %v944, %v984
  %v1010 = vadd.f32 %v945, %v984
  %v1011 = vadd.f32 %v946, %v984
  %v1012 = vadd.f32 %v947, %v984
  %v1013 = vadd.f32 %v948, %v984
  %v1014 = vadd.f32 %v949, %v984
  %v1015 = vadd.f32 %v950, %v984
  %v1016 = vadd.f32 %v951, %v984
  %v1017 = vadd.f32 %v952, %v984
  %v1018 = vadd.f32 %v953, %v984
  %v1019 = vadd.f32 %v954, %v984
  %v1020 = vadd.f32 %v955, %v984
  %v1021 = vadd.f32 %v956, %v984
  %v1022 = vadd.f32 %v957, %v984
  %v1023 = vadd.f32 %v958, %v984
  %v1024 = vadd.f32 %v959, %v984
  %v1025 = vadd.f32 %v960, %v984
  %v1026 = vadd.f32 %v961, %v984
  %v1027 = vadd.f32 %v962, %v984
  %v1028 = vadd.f32 %v963, %v984
  %v1029 = vadd.f32 %v964, %v984
  %v1030 = vadd.f32 %v965, %v984
  %v1031 = vadd.f32 %v966, %v984
  %v1032 = vadd.f32 %v967, %v984
  %v1033 = vadd.f32 %v968, %v984
  %v1034 = vadd.f32 %v969, %v984
  %v1035 = vadd.f32 %v970, %v984
  %v1036 = vadd.f32 %v971, %v984
  %v1037 = vadd.f32 %v972, %v984
  %v1038 = vadd.f32 %v973, %v984
  %v1039 = vadd.f32 %v974, %v984
  %v1040 = vadd.f32 %v975, %v984
  %v1041 = vadd.f32 %v976, %v984
  %v1042 = vadd.f32 %v977, %v984
  %v1043 = vadd.f32 %v978, %v984
  %v1044 = vadd.f32 %v979, %v984
  %v1045 = vadd.f32 %v980, %v984
  %v1046 = vadd.f32 %v981, %v984
  %v1047 = vadd.f32 %v982, %v984
  %v1048 = vadd.f32 %v983, %v984
  %v1049 = vmul.f32 %v726, %v726
  %v1050 = vmul.f32 %v727, %v727
  %v1051 = vmul.f32 %v728, %v728
  %v1052 = vmul.f32 %v729, %v729
  %v1053 = vmul.f32 %v730, %v730
  %v1054 = vmul.f32 %v731, %v731
  %v1055 = vmul.f32 %v732, %v732
  %v1056 = vmul.f32 %v733, %v733
  %v1057 = vmul.f32 %v734, %v734
  %v1058 = vmul.f32 %v735, %v735
  %v1059 = vmul.f32 %v736, %v736
  %v1060 = vmul.f32 %v737, %v737
  %v1061 = vmul.f32 %v738, %v738
  %v1062 = vmul.f32 %v739, %v739
  %v1063 = vmul.f32 %v740, %v740
  %v1064 = vmul.f32 %v741, %v741
  %v1065 = vmul.f32 %v742, %v742
  %v1066 = vmul.f32 %v743, %v743
  %v1067 = vmul.f32 %v744, %v744
  %v1068 = vmul.f32 %v745, %v745
  %v1069 = vmul.f32 %v746, %v746
  %v1070 = vmul.f32 %v747, %v747
  %v1071 = vmul.f32 %v748, %v748
  %v1072 = vmul.f32 %v749, %v749
  %v1073 = vmul.f32 %v750, %v750
  %v1074 = vmul.f32 %v751, %v751
  %v1075 = vmul.f32 %v752, %v752
  %v1076 = vmul.f32 %v753, %v753
  %v1077 = vmul.f32 %v754, %v754
  %v1078 = vmul.f32 %v755, %v755
  %v1079 = vmul.f32 %v756, %v756
  %v1080 = vmul.f32 %v757, %v757
  %v1081 = vmul.f32 %v758, %v758
  %v1082 = vmul.f32 %v759, %v759
  %v1083 = vmul.f32 %v760, %v760
  %v1084 = vmul.f32 %v761, %v761
  %v1085 = vmul.f32 %v762, %v762
  %v1086 = vmul.f32 %v763, %v763
  %v1087 = vmul.f32 %v764, %v764
  %v1088 = vmul.f32 %v765, %v765
  %v1089 = vmul.f32 %v766, %v766
  %v1090 = vmul.f32 %v767, %v767
  %v1091 = vmul.f32 %v768, %v768
  %v1092 = vmul.f32 %v769, %v769
  %v1093 = vmul.f32 %v770, %v770
  %v1094 = vmul.f32 %v771, %v771
  %v1095 = vmul.f32 %v772, %v772
  %v1096 = vmul.f32 %v773, %v773
  %v1097 = vmul.f32 %v774, %v774
  %v1098 = vmul.f32 %v775, %v775
  %v1099 = vmul.f32 %v776, %v776
  %v1100 = vmul.f32 %v777, %v777
  %v1101 = vmul.f32 %v778, %v778
  %v1102 = vmul.f32 %v779, %v779
  %v1103 = vmul.f32 %v780, %v780
  %v1104 = vmul.f32 %v781, %v781
  %v1105 = vmul.f32 %v782, %v782
  %v1106 = vmul.f32 %v783, %v783
  %v1107 = vmul.f32 %v784, %v784
  %v1108 = vmul.f32 %v785, %v785
  %v1109 = vmul.f32 %v786, %v786
  %v1110 = vmul.f32 %v787, %v787
  %v1111 = vmul.f32 %v788, %v788
  %v1112 = vmul.f32 %v789, %v789
  %v1113 = vmul.f32 %v985, %v985
  %v1114 = vmul.f32 %v986, %v986
  %v1115 = vmul.f32 %v987, %v987
  %v1116 = vmul.f32 %v988, %v988
  %v1117 = vmul.f32 %v989, %v989
  %v1118 = vmul.f32 %v990, %v990
  %v1119 = vmul.f32 %v991, %v991
  %v1120 = vmul.f32 %v992, %v992
  %v1121 = vmul.f32 %v993, %v993
  %v1122 = vmul.f32 %v994, %v994
  %v1123 = vmul.f32 %v995, %v995
  %v1124 = vmul.f32 %v996, %v996
  %v1125 = vmul.f32 %v997, %v997
  %v1126 = vmul.f32 %v998, %v998
  %v1127 = vmul.f32 %v999, %v999
  %v1128 = vmul.f32 %v1000, %v1000
  %v1129 = vmul.f32 %v1001, %v1001
  %v1130 = vmul.f32 %v1002, %v1002
  %v1131 = vmul.f32 %v1003, %v1003
  %v1132 = vmul.f32 %v1004, %v1004
  %v1133 = vmul.f32 %v1005, %v1005
  %v1134 = vmul.f32 %v1006, %v1006
  %v1135 = vmul.f32 %v1007, %v1007
  %v1136 = vmul.f32 %v1008, %v1008
  %v1137 = vmul.f32 %v1009, %v1009
  %v1138 = vmul.f32 %v1010, %v1010
  %v1139 = vmul.f32 %v1011, %v1011
  %v1140 = vmul.f32 %v1012, %v1012
  %v1141 = vmul.f32 %v1013, %v1013
  %v1142 = vmul.f32 %v1014, %v1014
  %v1143 = vmul.f32 %v1015, %v1015
  %v1144 = vmul.f32 %v1016, %v1016
  %v1145 = vmul.f32 %v1017, %v1017
  %v1146 = vmul.f32 %v1018, %v1018
  %v1147 = vmul.f32 %v1019, %v1019
  %v1148 = vmul.f32 %v1020, %v1020
  %v1149 = vmul.f32 %v1021, %v1021
  %v1150 = vmul.f32 %v1022, %v1022
  %v1151 = vmul.f32 %v1023, %v1023
  %v1152 = vmul.f32 %v1024, %v1024
  %v1153 = vmul.f32 %v1025, %v1025
  %v1154 = vmul.f32 %v1026, %v1026
  %v1155 = vmul.f32 %v1027, %v1027
  %v1156 = vmul.f32 %v1028, %v1028
  %v1157 = vmul.f32 %v1029, %v1029
  %v1158 = vmul.f32 %v1030, %v1030
  %v1159 = vmul.f32 %v1031, %v1031
  %v1160 = vmul.f32 %v1032, %v1032
  %v1161 = vmul.f32 %v1033, %v1033
  %v1162 = vmul.f32 %v1034, %v1034
  %v1163 = vmul.f32 %v1035, %v1035
  %v1164 = vmul.f32 %v1036, %v1036
  %v1165 = vmul.f32 %v1037, %v1037
  %v1166 = vmul.f32 %v1038, %v1038
  %v1167 = vmul.f32 %v1039, %v1039
  %v1168 = vmul.f32 %v1040, %v1040
  %v1169 = vmul.f32 %v1041, %v1041
  %v1170 = vmul.f32 %v1042, %v1042
  %v1171 = vmul.f32 %v1043, %v1043
  %v1172 = vmul.f32 %v1044, %v1044
  %v1173 = vmul.f32 %v1045, %v1045
  %v1174 = vmul.f32 %v1046, %v1046
  %v1175 = vmul.f32 %v1047, %v1047
  %v1176 = vmul.f32 %v1048, %v1048
  %v1177 = vadd.f32 %v1049, %v1113
  %v1178 = vadd.f32 %v1050, %v1114
  %v1179 = vadd.f32 %v1051, %v1115
  %v1180 = vadd.f32 %v1052, %v1116
  %v1181 = vadd.f32 %v1053, %v1117
  %v1182 = vadd.f32 %v1054, %v1118
  %v1183 = vadd.f32 %v1055, %v1119
  %v1184 = vadd.f32 %v1056, %v1120
  %v1185 = vadd.f32 %v1057, %v1121
  %v1186 = vadd.f32 %v1058, %v1122
  %v1187 = vadd.f32 %v1059, %v1123
  %v1188 = vadd.f32 %v1060, %v1124
  %v1189 = vadd.f32 %v1061, %v1125
  %v1190 = vadd.f32 %v1062, %v1126
  %v1191 = vadd.f32 %v1063, %v1127
  %v1192 = vadd.f32 %v1064, %v1128
  %v1193 = vadd.f32 %v1065, %v1129
  %v1194 = vadd.f32 %v1066, %v1130
  %v1195 = vadd.f32 %v1067, %v1131
  %v1196 = vadd.f32 %v1068, %v1132
  %v1197 = vadd.f32 %v1069, %v1133
  %v1198 = vadd.f32 %v1070, %v1134
  %v1199 = vadd.f32 %v1071, %v1135
  %v1200 = vadd.f32 %v1072, %v1136
  %v1201 = vadd.f32 %v1073, %v1137
  %v1202 = vadd.f32 %v1074, %v1138
  %v1203 = vadd.f32 %v1075, %v1139
  %v1204 = vadd.f32 %v1076, %v1140
  %v1205 = vadd.f32 %v1077, %v1141
  %v1206 = vadd.f32 %v1078, %v1142
  %v1207 = vadd.f32 %v1079, %v1143
  %v1208 = vadd.f32 %v1080, %v1144
  %v1209 = vadd.f32 %v1081, %v1145
  %v1210 = vadd.f32 %v1082, %v1146
  %v1211 = vadd.f32 %v1083, %v1147
  %v1212 = vadd.f32 %v1084, %v1148
  %v1213 = vadd.f32 %v1085, %v1149
  %v1214 = vadd.f32 %v1086, %v1150
  %v1215 = vadd.f32 %v1087, %v1151
  %v1216 = vadd.f32 %v1088, %v1152
  %v1217 = vadd.f32 %v1089, %v1153
  %v1218 = vadd.f32 %v1090, %v1154
  %v1219 = vadd.f32 %v1091, %v1155
  %v1220 = vadd.f32 %v1092, %v1156
  %v1221 = vadd.f32 %v1093, %v1157
  %v1222 = vadd.f32 %v1094, %v1158
  %v1223 = vadd.f32 %v1095, %v1159
  %v1224 = vadd.f32 %v1096, %v1160
  %v1225 = vadd.f32 %v1097, %v1161
  %v1226 = vadd.f32 %v1098, %v1162
  %v1227 = vadd.f32 %v1099, %v1163
  %v1228 = vadd.f32 %v1100, %v1164
  %v1229 = vadd.f32 %v1101, %v1165
  %v1230 = vadd.f32 %v1102, %v1166
  %v1231 = vadd.f32 %v1103, %v1167
  %v1232 = vadd.f32 %v1104, %v1168
  %v1233 = vadd.f32 %v1105, %v1169
  %v1234 = vadd.f32 %v1106, %v1170
  %v1235 = vadd.f32 %v1107, %v1171
  %v1236 = vadd.f32 %v1108, %v1172
  %v1237 = vadd.f32 %v1109, %v1173
  %v1238 = vadd.f32 %v1110, %v1174
  %v1239 = vadd.f32 %v1111, %v1175
  %v1240 = vadd.f32 %v1112, %v1176
  %v1241 = vadd.f32 %v1177, 1e-12
  %v1242 = vadd.f32 %v1178, 1e-12
  %v1243 = vadd.f32 %v1179, 1e-12
  %v1244 = vadd.f32 %v1180, 1e-12
  %v1245 = vadd.f32 %v1181, 1e-12
  %v1246 = vadd.f32 %v1182, 1e-12
  %v1247 = vadd.f32 %v1183, 1e-12
  %v1248 = vadd.f32 %v1184, 1e-12
  %v1249 = vadd.f32 %v1185, 1e-12
  %v1250 = vadd.f32 %v1186, 1e-12
  %v1251 = vadd.f32 %v1187, 1e-12
  %v1252 = vadd.f32 %v1188, 1e-12
  %v1253 = vadd.f32 %v1189, 1e-12
  %v1254 = vadd.f32 %v1190, 1e-12
  %v1255 = vadd.f32 %v1191, 1e-12
  %v1256 = vadd.f32 %v1192, 1e-12
  %v1257 = vadd.f32 %v1193, 1e-12
  %v1258 = vadd.f32 %v1194, 1e-12
  %v1259 = vadd.f32 %v1195, 1e-12
  %v1260 = vadd.f32 %v1196, 1e-12
  %v1261 = vadd.f32 %v1197, 1e-12
  %v1262 = vadd.f32 %v1198, 1e-12
  %v1263 = vadd.f32 %v1199, 1e-12
  %v1264 = vadd.f32 %v1200, 1e-12
  %v1265 = vadd.f32 %v1201, 1e-12
  %v1266 = vadd.f32 %v1202, 1e-12
  %v1267 = vadd.f32 %v1203, 1e-12
  %v1268 = vadd.f32 %v1204, 1e-12
  %v1269 = vadd.f32 %v1205, 1e-12
  %v1270 = vadd.f32 %v1206, 1e-12
  %v1271 = vadd.f32 %v1207, 1e-12
  %v1272 = vadd.f32 %v1208, 1e-12
  %v1273 = vadd.f32 %v1209, 1e-12
  %v1274 = vadd.f32 %v1210, 1e-12
  %v1275 = vadd.f32 %v1211, 1e-12
  %v1276 = vadd.f32 %v1212, 1e-12
  %v1277 = vadd.f32 %v1213, 1e-12
  %v1278 = vadd.f32 %v1214, 1e-12
  %v1279 = vadd.f32 %v1215, 1e-12
  %v1280 = vadd.f32 %v1216, 1e-12
  %v1281 = vadd.f32 %v1217, 1e-12
  %v1282 = vadd.f32 %v1218, 1e-12
  %v1283 = vadd.f32 %v1219, 1e-12
  %v1284 = vadd.f32 %v1220, 1e-12
  %v1285 = vadd.f32 %v1221, 1e-12
  %v1286 = vadd.f32 %v1222, 1e-12
  %v1287 = vadd.f32 %v1223, 1e-12
  %v1288 = vadd.f32 %v1224, 1e-12
  %v1289 = vadd.f32 %v1225, 1e-12
  %v1290 = vadd.f32 %v1226, 1e-12
  %v1291 = vadd.f32 %v1227, 1e-12
  %v1292 = vadd.f32 %v1228, 1e-12
  %v1293 = vadd.f32 %v1229, 1e-12
  %v1294 = vadd.f32 %v1230, 1e-12
  %v1295 = vadd.f32 %v1231, 1e-12
  %v1296 = vadd.f32 %v1232, 1e-12
  %v1297 = vadd.f32 %v1233, 1e-12
  %v1298 = vadd.f32 %v1234, 1e-12
  %v1299 = vadd.f32 %v1235, 1e-12
  %v1300 = vadd.f32 %v1236, 1e-12
  %v1301 = vadd.f32 %v1237, 1e-12
  %v1302 = vadd.f32 %v1238, 1e-12
  %v1303 = vadd.f32 %v1239, 1e-12
  %v1304 = vadd.f32 %v1240, 1e-12
  %v1305 = vrsqrt.pop %v1241
  %v1306 = vmul.f32 %v1305, %v1241
  %v1307 = vmul.f32 %v1306, %v1305
  %v1308 = vmul.f32 0.5, %v1307
  %v1309 = vsub.f32 1.5, %v1308
  %v1310 = vmul.f32 %v1305, %v1309
  %vm1311 = vweird.f32 %v1241
  %vm1312 = vweird.f32 %v1305
  %vm1313 = vmor %vm1311, %vm1312
  %v1314 = vsel %vm1313, %v1305, %v1310
  %v1315 = vrsqrt.pop %v1242
  %v1316 = vmul.f32 %v1315, %v1242
  %v1317 = vmul.f32 %v1316, %v1315
  %v1318 = vmul.f32 0.5, %v1317
  %v1319 = vsub.f32 1.5, %v1318
  %v1320 = vmul.f32 %v1315, %v1319
  %vm1321 = vweird.f32 %v1242
  %vm1322 = vweird.f32 %v1315
  %vm1323 = vmor %vm1321, %vm1322
  %v1324 = vsel %vm1323, %v1315, %v1320
  %v1325 = vrsqrt.pop %v1243
  %v1326 = vmul.f32 %v1325, %v1243
  %v1327 = vmul.f32 %v1326, %v1325
  %v1328 = vmul.f32 0.5, %v1327
  %v1329 = vsub.f32 1.5, %v1328
  %v1330 = vmul.f32 %v1325, %v1329
  %vm1331 = vweird.f32 %v1243
  %vm1332 = vweird.f32 %v1325
  %vm1333 = vmor %vm1331, %vm1332
  %v1334 = vsel %vm1333, %v1325, %v1330
  %v1335 = vrsqrt.pop %v1244
  %v1336 = vmul.f32 %v1335, %v1244
  %v1337 = vmul.f32 %v1336, %v1335
  %v1338 = vmul.f32 0.5, %v1337
  %v1339 = vsub.f32 1.5, %v1338
  %v1340 = vmul.f32 %v1335, %v1339
  %vm1341 = vweird.f32 %v1244
  %vm1342 = vweird.f32 %v1335
  %vm1343 = vmor %vm1341, %vm1342
  %v1344 = vsel %vm1343, %v1335, %v1340
  %v1345 = vrsqrt.pop %v1245
  %v1346 = vmul.f32 %v1345, %v1245
  %v1347 = vmul.f32 %v1346, %v1345
  %v1348 = vmul.f32 0.5, %v1347
  %v1349 = vsub.f32 1.5, %v1348
  %v1350 = vmul.f32 %v1345, %v1349
  %vm1351 = vweird.f32 %v1245
  %vm1352 = vweird.f32 %v1345
  %vm1353 = vmor %vm1351, %vm1352
  %v1354 = vsel %vm1353, %v1345, %v1350
  %v1355 = vrsqrt.pop %v1246
  %v1356 = vmul.f32 %v1355, %v1246
  %v1357 = vmul.f32 %v1356, %v1355
  %v1358 = vmul.f32 0.5, %v1357
  %v1359 = vsub.f32 1.5, %v1358
  %v1360 = vmul.f32 %v1355, %v1359
  %vm1361 = vweird.f32 %v1246
  %vm1362 = vweird.f32 %v1355
  %vm1363 = vmor %vm1361, %vm1362
  %v1364 = vsel %vm1363, %v1355, %v1360
  %v1365 = vrsqrt.pop %v1247
  %v1366 = vmul.f32 %v1365, %v1247
  %v1367 = vmul.f32 %v1366, %v1365
  %v1368 = vmul.f32 0.5, %v1367
  %v1369 = vsub.f32 1.5, %v1368
  %v1370 = vmul.f32 %v1365, %v1369
  %vm1371 = vweird.f32 %v1247
  %vm1372 = vweird.f32 %v1365
  %vm1373 = vmor %vm1371, %vm1372
  %v1374 = vsel %vm1373, %v1365, %v1370
  %v1375 = vrsqrt.pop %v1248
  %v1376 = vmul.f32 %v1375, %v1248
  %v1377 = vmul.f32 %v1376, %v1375
  %v1378 = vmul.f32 0.5, %v1377
  %v1379 = vsub.f32 1.5, %v1378
  %v1380 = vmul.f32 %v1375, %v1379
  %vm1381 = vweird.f32 %v1248
  %vm1382 = vweird.f32 %v1375
  %vm1383 = vmor %vm1381, %vm1382
  %v1384 = vsel %vm1383, %v1375, %v1380
  %v1385 = vrsqrt.pop %v1249
  %v1386 = vmul.f32 %v1385, %v1249
  %v1387 = vmul.f32 %v1386, %v1385
  %v1388 = vmul.f32 0.5, %v1387
  %v1389 = vsub.f32 1.5, %v1388
  %v1390 = vmul.f32 %v1385, %v1389
  %vm1391 = vweird.f32 %v1249
  %vm1392 = vweird.f32 %v1385
  %vm1393 = vmor %vm1391, %vm1392
  %v1394 = vsel %vm1393, %v1385, %v1390
  %v1395 = vrsqrt.pop %v1250
  %v1396 = vmul.f32 %v1395, %v1250
  %v1397 = vmul.f32 %v1396, %v1395
  %v1398 = vmul.f32 0.5, %v1397
  %v1399 = vsub.f32 1.5, %v1398
  %v1400 = vmul.f32 %v1395, %v1399
  %vm1401 = vweird.f32 %v1250
  %vm1402 = vweird.f32 %v1395
  %vm1403 = vmor %vm1401, %vm1402
  %v1404 = vsel %vm1403, %v1395, %v1400
  %v1405 = vrsqrt.pop %v1251
  %v1406 = vmul.f32 %v1405, %v1251
  %v1407 = vmul.f32 %v1406, %v1405
  %v1408 = vmul.f32 0.5, %v1407
  %v1409 = vsub.f32 1.5, %v1408
  %v1410 = vmul.f32 %v1405, %v1409
  %vm1411 = vweird.f32 %v1251
  %vm1412 = vweird.f32 %v1405
  %vm1413 = vmor %vm1411, %vm1412
  %v1414 = vsel %vm1413, %v1405, %v1410
  %v1415 = vrsqrt.pop %v1252
  %v1416 = vmul.f32 %v1415, %v1252
  %v1417 = vmul.f32 %v1416, %v1415
  %v1418 = vmul.f32 0.5, %v1417
  %v1419 = vsub.f32 1.5, %v1418
  %v1420 = vmul.f32 %v1415, %v1419
  %vm1421 = vweird.f32 %v1252
  %vm1422 = vweird.f32 %v1415
  %vm1423 = vmor %vm1421, %vm1422
  %v1424 = vsel %vm1423, %v1415, %v1420
  %v1425 = vrsqrt.pop %v1253
  %v1426 = vmul.f32 %v1425, %v1253
  %v1427 = vmul.f32 %v1426, %v1425
  %v1428 = vmul.f32 0.5, %v1427
  %v1429 = vsub.f32 1.5, %v1428
  %v1430 = vmul.f32 %v1425, %v1429
  %vm1431 = vweird.f32 %v1253
  %vm1432 = vweird.f32 %v1425
  %vm1433 = vmor %vm1431, %vm1432
  %v1434 = vsel %vm1433, %v1425, %v1430
  %v1435 = vrsqrt.pop %v1254
  %v1436 = vmul.f32 %v1435, %v1254
  %v1437 = vmul.f32 %v1436, %v1435
  %v1438 = vmul.f32 0.5, %v1437
  %v1439 = vsub.f32 1.5, %v1438
  %v1440 = vmul.f32 %v1435, %v1439
  %vm1441 = vweird.f32 %v1254
  %vm1442 = vweird.f32 %v1435
  %vm1443 = vmor %vm1441, %vm1442
  %v1444 = vsel %vm1443, %v1435, %v1440
  %v1445 = vrsqrt.pop %v1255
  %v1446 = vmul.f32 %v1445, %v1255
  %v1447 = vmul.f32 %v1446, %v1445
  %v1448 = vmul.f32 0.5, %v1447
  %v1449 = vsub.f32 1.5, %v1448
  %v1450 = vmul.f32 %v1445, %v1449
  %vm1451 = vweird.f32 %v1255
  %vm1452 = vweird.f32 %v1445
  %vm1453 = vmor %vm1451, %vm1452
  %v1454 = vsel %vm1453, %v1445, %v1450
  %v1455 = vrsqrt.pop %v1256
  %v1456 = vmul.f32 %v1455, %v1256
  %v1457 = vmul.f32 %v1456, %v1455
  %v1458 = vmul.f32 0.5, %v1457
  %v1459 = vsub.f32 1.5, %v1458
  %v1460 = vmul.f32 %v1455, %v1459
  %vm1461 = vweird.f32 %v1256
  %vm1462 = vweird.f32 %v1455
  %vm1463 = vmor %vm1461, %vm1462
  %v1464 = vsel %vm1463, %v1455, %v1460
  %v1465 = vrsqrt.pop %v1257
  %v1466 = vmul.f32 %v1465, %v1257
  %v1467 = vmul.f32 %v1466, %v1465
  %v1468 = vmul.f32 0.5, %v1467
  %v1469 = vsub.f32 1.5, %v1468
  %v1470 = vmul.f32 %v1465, %v1469
  %vm1471 = vweird.f32 %v1257
  %vm1472 = vweird.f32 %v1465
  %vm1473 = vmor %vm1471, %vm1472
  %v1474 = vsel %vm1473, %v1465, %v1470
  %v1475 = vrsqrt.pop %v1258
  %v1476 = vmul.f32 %v1475, %v1258
  %v1477 = vmul.f32 %v1476, %v1475
  %v1478 = vmul.f32 0.5, %v1477
  %v1479 = vsub.f32 1.5, %v1478
  %v1480 = vmul.f32 %v1475, %v1479
  %vm1481 = vweird.f32 %v1258
  %vm1482 = vweird.f32 %v1475
  %vm1483 = vmor %vm1481, %vm1482
  %v1484 = vsel %vm1483, %v1475, %v1480
  %v1485 = vrsqrt.pop %v1259
  %v1486 = vmul.f32 %v1485, %v1259
  %v1487 = vmul.f32 %v1486, %v1485
  %v1488 = vmul.f32 0.5, %v1487
  %v1489 = vsub.f32 1.5, %v1488
  %v1490 = vmul.f32 %v1485, %v1489
  %vm1491 = vweird.f32 %v1259
  %vm1492 = vweird.f32 %v1485
  %vm1493 = vmor %vm1491, %vm1492
  %v1494 = vsel %vm1493, %v1485, %v1490
  %v1495 = vrsqrt.pop %v1260
  %v1496 = vmul.f32 %v1495, %v1260
  %v1497 = vmul.f32 %v1496, %v1495
  %v1498 = vmul.f32 0.5, %v1497
  %v1499 = vsub.f32 1.5, %v1498
  %v1500 = vmul.f32 %v1495, %v1499
  %vm1501 = vweird.f32 %v1260
  %vm1502 = vweird.f32 %v1495
  %vm1503 = vmor %vm1501, %vm1502
  %v1504 = vsel %vm1503, %v1495, %v1500
  %v1505 = vrsqrt.pop %v1261
  %v1506 = vmul.f32 %v1505, %v1261
  %v1507 = vmul.f32 %v1506, %v1505
  %v1508 = vmul.f32 0.5, %v1507
  %v1509 = vsub.f32 1.5, %v1508
  %v1510 = vmul.f32 %v1505, %v1509
  %vm1511 = vweird.f32 %v1261
  %vm1512 = vweird.f32 %v1505
  %vm1513 = vmor %vm1511, %vm1512
  %v1514 = vsel %vm1513, %v1505, %v1510
  %v1515 = vrsqrt.pop %v1262
  %v1516 = vmul.f32 %v1515, %v1262
  %v1517 = vmul.f32 %v1516, %v1515
  %v1518 = vmul.f32 0.5, %v1517
  %v1519 = vsub.f32 1.5, %v1518
  %v1520 = vmul.f32 %v1515, %v1519
  %vm1521 = vweird.f32 %v1262
  %vm1522 = vweird.f32 %v1515
  %vm1523 = vmor %vm1521, %vm1522
  %v1524 = vsel %vm1523, %v1515, %v1520
  %v1525 = vrsqrt.pop %v1263
  %v1526 = vmul.f32 %v1525, %v1263
  %v1527 = vmul.f32 %v1526, %v1525
  %v1528 = vmul.f32 0.5, %v1527
  %v1529 = vsub.f32 1.5, %v1528
  %v1530 = vmul.f32 %v1525, %v1529
  %vm1531 = vweird.f32 %v1263
  %vm1532 = vweird.f32 %v1525
  %vm1533 = vmor %vm1531, %vm1532
  %v1534 = vsel %vm1533, %v1525, %v1530
  %v1535 = vrsqrt.pop %v1264
  %v1536 = vmul.f32 %v1535, %v1264
  %v1537 = vmul.f32 %v1536, %v1535
  %v1538 = vmul.f32 0.5, %v1537
  %v1539 = vsub.f32 1.5, %v1538
  %v1540 = vmul.f32 %v1535, %v1539
  %vm1541 = vweird.f32 %v1264
  %vm1542 = vweird.f32 %v1535
  %vm1543 = vmor %vm1541, %vm1542
  %v1544 = vsel %vm1543, %v1535, %v1540
  %v1545 = vrsqrt.pop %v1265
  %v1546 = vmul.f32 %v1545, %v1265
  %v1547 = vmul.f32 %v1546, %v1545
  %v1548 = vmul.f32 0.5, %v1547
  %v1549 = vsub.f32 1.5, %v1548
  %v1550 = vmul.f32 %v1545, %v1549
  %vm1551 = vweird.f32 %v1265
  %vm1552 = vweird.f32 %v1545
  %vm1553 = vmor %vm1551, %vm1552
  %v1554 = vsel %vm1553, %v1545, %v1550
  %v1555 = vrsqrt.pop %v1266
  %v1556 = vmul.f32 %v1555, %v1266
  %v1557 = vmul.f32 %v1556, %v1555
  %v1558 = vmul.f32 0.5, %v1557
  %v1559 = vsub.f32 1.5, %v1558
  %v1560 = vmul.f32 %v1555, %v1559
  %vm1561 = vweird.f32 %v1266
  %vm1562 = vweird.f32 %v1555
  %vm1563 = vmor %vm1561, %vm1562
  %v1564 = vsel %vm1563, %v1555, %v1560
  %v1565 = vrsqrt.pop %v1267
  %v1566 = vmul.f32 %v1565, %v1267
  %v1567 = vmul.f32 %v1566, %v1565
  %v1568 = vmul.f32 0.5, %v1567
  %v1569 = vsub.f32 1.5, %v1568
  %v1570 = vmul.f32 %v1565, %v1569
  %vm1571 = vweird.f32 %v1267
  %vm1572 = vweird.f32 %v1565
  %vm1573 = vmor %vm1571, %vm1572
  %v1574 = vsel %vm1573, %v1565, %v1570
  %v1575 = vrsqrt.pop %v1268
  %v1576 = vmul.f32 %v1575, %v1268
  %v1577 = vmul.f32 %v1576, %v1575
  %v1578 = vmul.f32 0.5, %v1577
  %v1579 = vsub.f32 1.5, %v1578
  %v1580 = vmul.f32 %v1575, %v1579
  %vm1581 = vweird.f32 %v1268
  %vm1582 = vweird.f32 %v1575
  %vm1583 = vmor %vm1581, %vm1582
  %v1584 = vsel %vm1583, %v1575, %v1580
  %v1585 = vrsqrt.pop %v1269
  %v1586 = vmul.f32 %v1585, %v1269
  %v1587 = vmul.f32 %v1586, %v1585
  %v1588 = vmul.f32 0.5, %v1587
  %v1589 = vsub.f32 1.5, %v1588
  %v1590 = vmul.f32 %v1585, %v1589
  %vm1591 = vweird.f32 %v1269
  %vm1592 = vweird.f32 %v1585
  %vm1593 = vmor %vm1591, %vm1592
  %v1594 = vsel %vm1593, %v1585, %v1590
  %v1595 = vrsqrt.pop %v1270
  %v1596 = vmul.f32 %v1595, %v1270
  %v1597 = vmul.f32 %v1596, %v1595
  %v1598 = vmul.f32 0.5, %v1597
  %v1599 = vsub.f32 1.5, %v1598
  %v1600 = vmul.f32 %v1595, %v1599
  %vm1601 = vweird.f32 %v1270
  %vm1602 = vweird.f32 %v1595
  %vm1603 = vmor %vm1601, %vm1602
  %v1604 = vsel %vm1603, %v1595, %v1600
  %v1605 = vrsqrt.pop %v1271
  %v1606 = vmul.f32 %v1605, %v1271
  %v1607 = vmul.f32 %v1606, %v1605
  %v1608 = vmul.f32 0.5, %v1607
  %v1609 = vsub.f32 1.5, %v1608
  %v1610 = vmul.f32 %v1605, %v1609
  %vm1611 = vweird.f32 %v1271
  %vm1612 = vweird.f32 %v1605
  %vm1613 = vmor %vm1611, %vm1612
  %v1614 = vsel %vm1613, %v1605, %v1610
  %v1615 = vrsqrt.pop %v1272
  %v1616 = vmul.f32 %v1615, %v1272
  %v1617 = vmul.f32 %v1616, %v1615
  %v1618 = vmul.f32 0.5, %v1617
  %v1619 = vsub.f32 1.5, %v1618
  %v1620 = vmul.f32 %v1615, %v1619
  %vm1621 = vweird.f32 %v1272
  %vm1622 = vweird.f32 %v1615
  %vm1623 = vmor %vm1621, %vm1622
  %v1624 = vsel %vm1623, %v1615, %v1620
  %v1625 = vrsqrt.pop %v1273
  %v1626 = vmul.f32 %v1625, %v1273
  %v1627 = vmul.f32 %v1626, %v1625
  %v1628 = vmul.f32 0.5, %v1627
  %v1629 = vsub.f32 1.5, %v1628
  %v1630 = vmul.f32 %v1625, %v1629
  %vm1631 = vweird.f32 %v1273
  %vm1632 = vweird.f32 %v1625
  %vm1633 = vmor %vm1631, %vm1632
  %v1634 = vsel %vm1633, %v1625, %v1630
  %v1635 = vrsqrt.pop %v1274
  %v1636 = vmul.f32 %v1635, %v1274
  %v1637 = vmul.f32 %v1636, %v1635
  %v1638 = vmul.f32 0.5, %v1637
  %v1639 = vsub.f32 1.5, %v1638
  %v1640 = vmul.f32 %v1635, %v1639
  %vm1641 = vweird.f32 %v1274
  %vm1642 = vweird.f32 %v1635
  %vm1643 = vmor %vm1641, %vm1642
  %v1644 = vsel %vm1643, %v1635, %v1640
  %v1645 = vrsqrt.pop %v1275
  %v1646 = vmul.f32 %v1645, %v1275
  %v1647 = vmul.f32 %v1646, %v1645
  %v1648 = vmul.f32 0.5, %v1647
  %v1649 = vsub.f32 1.5, %v1648
  %v1650 = vmul.f32 %v1645, %v1649
  %vm1651 = vweird.f32 %v1275
  %vm1652 = vweird.f32 %v1645
  %vm1653 = vmor %vm1651, %vm1652
  %v1654 = vsel %vm1653, %v1645, %v1650
  %v1655 = vrsqrt.pop %v1276
  %v1656 = vmul.f32 %v1655, %v1276
  %v1657 = vmul.f32 %v1656, %v1655
  %v1658 = vmul.f32 0.5, %v1657
  %v1659 = vsub.f32 1.5, %v1658
  %v1660 = vmul.f32 %v1655, %v1659
  %vm1661 = vweird.f32 %v1276
  %vm1662 = vweird.f32 %v1655
  %vm1663 = vmor %vm1661, %vm1662
  %v1664 = vsel %vm1663, %v1655, %v1660
  %v1665 = vrsqrt.pop %v1277
  %v1666 = vmul.f32 %v1665, %v1277
  %v1667 = vmul.f32 %v1666, %v1665
  %v1668 = vmul.f32 0.5, %v1667
  %v1669 = vsub.f32 1.5, %v1668
  %v1670 = vmul.f32 %v1665, %v1669
  %vm1671 = vweird.f32 %v1277
  %vm1672 = vweird.f32 %v1665
  %vm1673 = vmor %vm1671, %vm1672
  %v1674 = vsel %vm1673, %v1665, %v1670
  %v1675 = vrsqrt.pop %v1278
  %v1676 = vmul.f32 %v1675, %v1278
  %v1677 = vmul.f32 %v1676, %v1675
  %v1678 = vmul.f32 0.5, %v1677
  %v1679 = vsub.f32 1.5, %v1678
  %v1680 = vmul.f32 %v1675, %v1679
  %vm1681 = vweird.f32 %v1278
  %vm1682 = vweird.f32 %v1675
  %vm1683 = vmor %vm1681, %vm1682
  %v1684 = vsel %vm1683, %v1675, %v1680
  %v1685 = vrsqrt.pop %v1279
  %v1686 = vmul.f32 %v1685, %v1279
  %v1687 = vmul.f32 %v1686, %v1685
  %v1688 = vmul.f32 0.5, %v1687
  %v1689 = vsub.f32 1.5, %v1688
  %v1690 = vmul.f32 %v1685, %v1689
  %vm1691 = vweird.f32 %v1279
  %vm1692 = vweird.f32 %v1685
  %vm1693 = vmor %vm1691, %vm1692
  %v1694 = vsel %vm1693, %v1685, %v1690
  %v1695 = vrsqrt.pop %v1280
  %v1696 = vmul.f32 %v1695, %v1280
  %v1697 = vmul.f32 %v1696, %v1695
  %v1698 = vmul.f32 0.5, %v1697
  %v1699 = vsub.f32 1.5, %v1698
  %v1700 = vmul.f32 %v1695, %v1699
  %vm1701 = vweird.f32 %v1280
  %vm1702 = vweird.f32 %v1695
  %vm1703 = vmor %vm1701, %vm1702
  %v1704 = vsel %vm1703, %v1695, %v1700
  %v1705 = vrsqrt.pop %v1281
  %v1706 = vmul.f32 %v1705, %v1281
  %v1707 = vmul.f32 %v1706, %v1705
  %v1708 = vmul.f32 0.5, %v1707
  %v1709 = vsub.f32 1.5, %v1708
  %v1710 = vmul.f32 %v1705, %v1709
  %vm1711 = vweird.f32 %v1281
  %vm1712 = vweird.f32 %v1705
  %vm1713 = vmor %vm1711, %vm1712
  %v1714 = vsel %vm1713, %v1705, %v1710
  %v1715 = vrsqrt.pop %v1282
  %v1716 = vmul.f32 %v1715, %v1282
  %v1717 = vmul.f32 %v1716, %v1715
  %v1718 = vmul.f32 0.5, %v1717
  %v1719 = vsub.f32 1.5, %v1718
  %v1720 = vmul.f32 %v1715, %v1719
  %vm1721 = vweird.f32 %v1282
  %vm1722 = vweird.f32 %v1715
  %vm1723 = vmor %vm1721, %vm1722
  %v1724 = vsel %vm1723, %v1715, %v1720
  %v1725 = vrsqrt.pop %v1283
  %v1726 = vmul.f32 %v1725, %v1283
  %v1727 = vmul.f32 %v1726, %v1725
  %v1728 = vmul.f32 0.5, %v1727
  %v1729 = vsub.f32 1.5, %v1728
  %v1730 = vmul.f32 %v1725, %v1729
  %vm1731 = vweird.f32 %v1283
  %vm1732 = vweird.f32 %v1725
  %vm1733 = vmor %vm1731, %vm1732
  %v1734 = vsel %vm1733, %v1725, %v1730
  %v1735 = vrsqrt.pop %v1284
  %v1736 = vmul.f32 %v1735, %v1284
  %v1737 = vmul.f32 %v1736, %v1735
  %v1738 = vmul.f32 0.5, %v1737
  %v1739 = vsub.f32 1.5, %v1738
  %v1740 = vmul.f32 %v1735, %v1739
  %vm1741 = vweird.f32 %v1284
  %vm1742 = vweird.f32 %v1735
  %vm1743 = vmor %vm1741, %vm1742
  %v1744 = vsel %vm1743, %v1735, %v1740
  %v1745 = vrsqrt.pop %v1285
  %v1746 = vmul.f32 %v1745, %v1285
  %v1747 = vmul.f32 %v1746, %v1745
  %v1748 = vmul.f32 0.5, %v1747
  %v1749 = vsub.f32 1.5, %v1748
  %v1750 = vmul.f32 %v1745, %v1749
  %vm1751 = vweird.f32 %v1285
  %vm1752 = vweird.f32 %v1745
  %vm1753 = vmor %vm1751, %vm1752
  %v1754 = vsel %vm1753, %v1745, %v1750
  %v1755 = vrsqrt.pop %v1286
  %v1756 = vmul.f32 %v1755, %v1286
  %v1757 = vmul.f32 %v1756, %v1755
  %v1758 = vmul.f32 0.5, %v1757
  %v1759 = vsub.f32 1.5, %v1758
  %v1760 = vmul.f32 %v1755, %v1759
  %vm1761 = vweird.f32 %v1286
  %vm1762 = vweird.f32 %v1755
  %vm1763 = vmor %vm1761, %vm1762
  %v1764 = vsel %vm1763, %v1755, %v1760
  %v1765 = vrsqrt.pop %v1287
  %v1766 = vmul.f32 %v1765, %v1287
  %v1767 = vmul.f32 %v1766, %v1765
  %v1768 = vmul.f32 0.5, %v1767
  %v1769 = vsub.f32 1.5, %v1768
  %v1770 = vmul.f32 %v1765, %v1769
  %vm1771 = vweird.f32 %v1287
  %vm1772 = vweird.f32 %v1765
  %vm1773 = vmor %vm1771, %vm1772
  %v1774 = vsel %vm1773, %v1765, %v1770
  %v1775 = vrsqrt.pop %v1288
  %v1776 = vmul.f32 %v1775, %v1288
  %v1777 = vmul.f32 %v1776, %v1775
  %v1778 = vmul.f32 0.5, %v1777
  %v1779 = vsub.f32 1.5, %v1778
  %v1780 = vmul.f32 %v1775, %v1779
  %vm1781 = vweird.f32 %v1288
  %vm1782 = vweird.f32 %v1775
  %vm1783 = vmor %vm1781, %vm1782
  %v1784 = vsel %vm1783, %v1775, %v1780
  %v1785 = vrsqrt.pop %v1289
  %v1786 = vmul.f32 %v1785, %v1289
  %v1787 = vmul.f32 %v1786, %v1785
  %v1788 = vmul.f32 0.5, %v1787
  %v1789 = vsub.f32 1.5, %v1788
  %v1790 = vmul.f32 %v1785, %v1789
  %vm1791 = vweird.f32 %v1289
  %vm1792 = vweird.f32 %v1785
  %vm1793 = vmor %vm1791, %vm1792
  %v1794 = vsel %vm1793, %v1785, %v1790
  %v1795 = vrsqrt.pop %v1290
  %v1796 = vmul.f32 %v1795, %v1290
  %v1797 = vmul.f32 %v1796, %v1795
  %v1798 = vmul.f32 0.5, %v1797
  %v1799 = vsub.f32 1.5, %v1798
  %v1800 = vmul.f32 %v1795, %v1799
  %vm1801 = vweird.f32 %v1290
  %vm1802 = vweird.f32 %v1795
  %vm1803 = vmor %vm1801, %vm1802
  %v1804 = vsel %vm1803, %v1795, %v1800
  %v1805 = vrsqrt.pop %v1291
  %v1806 = vmul.f32 %v1805, %v1291
  %v1807 = vmul.f32 %v1806, %v1805
  %v1808 = vmul.f32 0.5, %v1807
  %v1809 = vsub.f32 1.5, %v1808
  %v1810 = vmul.f32 %v1805, %v1809
  %vm1811 = vweird.f32 %v1291
  %vm1812 = vweird.f32 %v1805
  %vm1813 = vmor %vm1811, %vm1812
  %v1814 = vsel %vm1813, %v1805, %v1810
  %v1815 = vrsqrt.pop %v1292
  %v1816 = vmul.f32 %v1815, %v1292
  %v1817 = vmul.f32 %v1816, %v1815
  %v1818 = vmul.f32 0.5, %v1817
  %v1819 = vsub.f32 1.5, %v1818
  %v1820 = vmul.f32 %v1815, %v1819
  %vm1821 = vweird.f32 %v1292
  %vm1822 = vweird.f32 %v1815
  %vm1823 = vmor %vm1821, %vm1822
  %v1824 = vsel %vm1823, %v1815, %v1820
  %v1825 = vrsqrt.pop %v1293
  %v1826 = vmul.f32 %v1825, %v1293
  %v1827 = vmul.f32 %v1826, %v1825
  %v1828 = vmul.f32 0.5, %v1827
  %v1829 = vsub.f32 1.5, %v1828
  %v1830 = vmul.f32 %v1825, %v1829
  %vm1831 = vweird.f32 %v1293
  %vm1832 = vweird.f32 %v1825
  %vm1833 = vmor %vm1831, %vm1832
  %v1834 = vsel %vm1833, %v1825, %v1830
  %v1835 = vrsqrt.pop %v1294
  %v1836 = vmul.f32 %v1835, %v1294
  %v1837 = vmul.f32 %v1836, %v1835
  %v1838 = vmul.f32 0.5, %v1837
  %v1839 = vsub.f32 1.5, %v1838
  %v1840 = vmul.f32 %v1835, %v1839
  %vm1841 = vweird.f32 %v1294
  %vm1842 = vweird.f32 %v1835
  %vm1843 = vmor %vm1841, %vm1842
  %v1844 = vsel %vm1843, %v1835, %v1840
  %v1845 = vrsqrt.pop %v1295
  %v1846 = vmul.f32 %v1845, %v1295
  %v1847 = vmul.f32 %v1846, %v1845
  %v1848 = vmul.f32 0.5, %v1847
  %v1849 = vsub.f32 1.5, %v1848
  %v1850 = vmul.f32 %v1845, %v1849
  %vm1851 = vweird.f32 %v1295
  %vm1852 = vweird.f32 %v1845
  %vm1853 = vmor %vm1851, %vm1852
  %v1854 = vsel %vm1853, %v1845, %v1850
  %v1855 = vrsqrt.pop %v1296
  %v1856 = vmul.f32 %v1855, %v1296
  %v1857 = vmul.f32 %v1856, %v1855
  %v1858 = vmul.f32 0.5, %v1857
  %v1859 = vsub.f32 1.5, %v1858
  %v1860 = vmul.f32 %v1855, %v1859
  %vm1861 = vweird.f32 %v1296
  %vm1862 = vweird.f32 %v1855
  %vm1863 = vmor %vm1861, %vm1862
  %v1864 = vsel %vm1863, %v1855, %v1860
  %v1865 = vrsqrt.pop %v1297
  %v1866 = vmul.f32 %v1865, %v1297
  %v1867 = vmul.f32 %v1866, %v1865
  %v1868 = vmul.f32 0.5, %v1867
  %v1869 = vsub.f32 1.5, %v1868
  %v1870 = vmul.f32 %v1865, %v1869
  %vm1871 = vweird.f32 %v1297
  %vm1872 = vweird.f32 %v1865
  %vm1873 = vmor %vm1871, %vm1872
  %v1874 = vsel %vm1873, %v1865, %v1870
  %v1875 = vrsqrt.pop %v1298
  %v1876 = vmul.f32 %v1875, %v1298
  %v1877 = vmul.f32 %v1876, %v1875
  %v1878 = vmul.f32 0.5, %v1877
  %v1879 = vsub.f32 1.5, %v1878
  %v1880 = vmul.f32 %v1875, %v1879
  %vm1881 = vweird.f32 %v1298
  %vm1882 = vweird.f32 %v1875
  %vm1883 = vmor %vm1881, %vm1882
  %v1884 = vsel %vm1883, %v1875, %v1880
  %v1885 = vrsqrt.pop %v1299
  %v1886 = vmul.f32 %v1885, %v1299
  %v1887 = vmul.f32 %v1886, %v1885
  %v1888 = vmul.f32 0.5, %v1887
  %v1889 = vsub.f32 1.5, %v1888
  %v1890 = vmul.f32 %v1885, %v1889
  %vm1891 = vweird.f32 %v1299
  %vm1892 = vweird.f32 %v1885
  %vm1893 = vmor %vm1891, %vm1892
  %v1894 = vsel %vm1893, %v1885, %v1890
  %v1895 = vrsqrt.pop %v1300
  %v1896 = vmul.f32 %v1895, %v1300
  %v1897 = vmul.f32 %v1896, %v1895
  %v1898 = vmul.f32 0.5, %v1897
  %v1899 = vsub.f32 1.5, %v1898
  %v1900 = vmul.f32 %v1895, %v1899
  %vm1901 = vweird.f32 %v1300
  %vm1902 = vweird.f32 %v1895
  %vm1903 = vmor %vm1901, %vm1902
  %v1904 = vsel %vm1903, %v1895, %v1900
  %v1905 = vrsqrt.pop %v1301
  %v1906 = vmul.f32 %v1905, %v1301
  %v1907 = vmul.f32 %v1906, %v1905
  %v1908 = vmul.f32 0.5, %v1907
  %v1909 = vsub.f32 1.5, %v1908
  %v1910 = vmul.f32 %v1905, %v1909
  %vm1911 = vweird.f32 %v1301
  %vm1912 = vweird.f32 %v1905
  %vm1913 = vmor %vm1911, %vm1912
  %v1914 = vsel %vm1913, %v1905, %v1910
  %v1915 = vrsqrt.pop %v1302
  %v1916 = vmul.f32 %v1915, %v1302
  %v1917 = vmul.f32 %v1916, %v1915
  %v1918 = vmul.f32 0.5, %v1917
  %v1919 = vsub.f32 1.5, %v1918
  %v1920 = vmul.f32 %v1915, %v1919
  %vm1921 = vweird.f32 %v1302
  %vm1922 = vweird.f32 %v1915
  %vm1923 = vmor %vm1921, %vm1922
  %v1924 = vsel %vm1923, %v1915, %v1920
  %v1925 = vrsqrt.pop %v1303
  %v1926 = vmul.f32 %v1925, %v1303
  %v1927 = vmul.f32 %v1926, %v1925
  %v1928 = vmul.f32 0.5, %v1927
  %v1929 = vsub.f32 1.5, %v1928
  %v1930 = vmul.f32 %v1925, %v1929
  %vm1931 = vweird.f32 %v1303
  %vm1932 = vweird.f32 %v1925
  %vm1933 = vmor %vm1931, %vm1932
  %v1934 = vsel %vm1933, %v1925, %v1930
  %v1935 = vrsqrt.pop %v1304
  %v1936 = vmul.f32 %v1935, %v1304
  %v1937 = vmul.f32 %v1936, %v1935
  %v1938 = vmul.f32 0.5, %v1937
  %v1939 = vsub.f32 1.5, %v1938
  %v1940 = vmul.f32 %v1935, %v1939
  %vm1941 = vweird.f32 %v1304
  %vm1942 = vweird.f32 %v1935
  %vm1943 = vmor %vm1941, %vm1942
  %v1944 = vsel %vm1943, %v1935, %v1940
  %v1945 = vmul.f32 %v1177, %v1314
  %v1946 = vmul.f32 %v1178, %v1324
  %v1947 = vmul.f32 %v1179, %v1334
  %v1948 = vmul.f32 %v1180, %v1344
  %v1949 = vmul.f32 %v1181, %v1354
  %v1950 = vmul.f32 %v1182, %v1364
  %v1951 = vmul.f32 %v1183, %v1374
  %v1952 = vmul.f32 %v1184, %v1384
  %v1953 = vmul.f32 %v1185, %v1394
  %v1954 = vmul.f32 %v1186, %v1404
  %v1955 = vmul.f32 %v1187, %v1414
  %v1956 = vmul.f32 %v1188, %v1424
  %v1957 = vmul.f32 %v1189, %v1434
  %v1958 = vmul.f32 %v1190, %v1444
  %v1959 = vmul.f32 %v1191, %v1454
  %v1960 = vmul.f32 %v1192, %v1464
  %v1961 = vmul.f32 %v1193, %v1474
  %v1962 = vmul.f32 %v1194, %v1484
  %v1963 = vmul.f32 %v1195, %v1494
  %v1964 = vmul.f32 %v1196, %v1504
  %v1965 = vmul.f32 %v1197, %v1514
  %v1966 = vmul.f32 %v1198, %v1524
  %v1967 = vmul.f32 %v1199, %v1534
  %v1968 = vmul.f32 %v1200, %v1544
  %v1969 = vmul.f32 %v1201, %v1554
  %v1970 = vmul.f32 %v1202, %v1564
  %v1971 = vmul.f32 %v1203, %v1574
  %v1972 = vmul.f32 %v1204, %v1584
  %v1973 = vmul.f32 %v1205, %v1594
  %v1974 = vmul.f32 %v1206, %v1604
  %v1975 = vmul.f32 %v1207, %v1614
  %v1976 = vmul.f32 %v1208, %v1624
  %v1977 = vmul.f32 %v1209, %v1634
  %v1978 = vmul.f32 %v1210, %v1644
  %v1979 = vmul.f32 %v1211, %v1654
  %v1980 = vmul.f32 %v1212, %v1664
  %v1981 = vmul.f32 %v1213, %v1674
  %v1982 = vmul.f32 %v1214, %v1684
  %v1983 = vmul.f32 %v1215, %v1694
  %v1984 = vmul.f32 %v1216, %v1704
  %v1985 = vmul.f32 %v1217, %v1714
  %v1986 = vmul.f32 %v1218, %v1724
  %v1987 = vmul.f32 %v1219, %v1734
  %v1988 = vmul.f32 %v1220, %v1744
  %v1989 = vmul.f32 %v1221, %v1754
  %v1990 = vmul.f32 %v1222, %v1764
  %v1991 = vmul.f32 %v1223, %v1774
  %v1992 = vmul.f32 %v1224, %v1784
  %v1993 = vmul.f32 %v1225, %v1794
  %v1994 = vmul.f32 %v1226, %v1804
  %v1995 = vmul.f32 %v1227, %v1814
  %v1996 = vmul.f32 %v1228, %v1824
  %v1997 = vmul.f32 %v1229, %v1834
  %v1998 = vmul.f32 %v1230, %v1844
  %v1999 = vmul.f32 %v1231, %v1854
  %v2000 = vmul.f32 %v1232, %v1864
  %v2001 = vmul.f32 %v1233, %v1874
  %v2002 = vmul.f32 %v1234, %v1884
  %v2003 = vmul.f32 %v1235, %v1894
  %v2004 = vmul.f32 %v1236, %v1904
  %v2005 = vmul.f32 %v1237, %v1914
  %v2006 = vmul.f32 %v1238, %v1924
  %v2007 = vmul.f32 %v1239, %v1934
  %v2008 = vmul.f32 %v1240, %v1944
  %v2009 = vperm.slane %v12, 0
  %v2010 = vadd.f32 %v1945, %v2009
  %v2011 = vadd.f32 %v1946, %v2009
  %v2012 = vadd.f32 %v1947, %v2009
  %v2013 = vadd.f32 %v1948, %v2009
  %v2014 = vadd.f32 %v1949, %v2009
  %v2015 = vadd.f32 %v1950, %v2009
  %v2016 = vadd.f32 %v1951, %v2009
  %v2017 = vadd.f32 %v1952, %v2009
  %v2018 = vadd.f32 %v1953, %v2009
  %v2019 = vadd.f32 %v1954, %v2009
  %v2020 = vadd.f32 %v1955, %v2009
  %v2021 = vadd.f32 %v1956, %v2009
  %v2022 = vadd.f32 %v1957, %v2009
  %v2023 = vadd.f32 %v1958, %v2009
  %v2024 = vadd.f32 %v1959, %v2009
  %v2025 = vadd.f32 %v1960, %v2009
  %v2026 = vadd.f32 %v1961, %v2009
  %v2027 = vadd.f32 %v1962, %v2009
  %v2028 = vadd.f32 %v1963, %v2009
  %v2029 = vadd.f32 %v1964, %v2009
  %v2030 = vadd.f32 %v1965, %v2009
  %v2031 = vadd.f32 %v1966, %v2009
  %v2032 = vadd.f32 %v1967, %v2009
  %v2033 = vadd.f32 %v1968, %v2009
  %v2034 = vadd.f32 %v1969, %v2009
  %v2035 = vadd.f32 %v1970, %v2009
  %v2036 = vadd.f32 %v1971, %v2009
  %v2037 = vadd.f32 %v1972, %v2009
  %v2038 = vadd.f32 %v1973, %v2009
  %v2039 = vadd.f32 %v1974, %v2009
  %v2040 = vadd.f32 %v1975, %v2009
  %v2041 = vadd.f32 %v1976, %v2009
  %v2042 = vadd.f32 %v1977, %v2009
  %v2043 = vadd.f32 %v1978, %v2009
  %v2044 = vadd.f32 %v1979, %v2009
  %v2045 = vadd.f32 %v1980, %v2009
  %v2046 = vadd.f32 %v1981, %v2009
  %v2047 = vadd.f32 %v1982, %v2009
  %v2048 = vadd.f32 %v1983, %v2009
  %v2049 = vadd.f32 %v1984, %v2009
  %v2050 = vadd.f32 %v1985, %v2009
  %v2051 = vadd.f32 %v1986, %v2009
  %v2052 = vadd.f32 %v1987, %v2009
  %v2053 = vadd.f32 %v1988, %v2009
  %v2054 = vadd.f32 %v1989, %v2009
  %v2055 = vadd.f32 %v1990, %v2009
  %v2056 = vadd.f32 %v1991, %v2009
  %v2057 = vadd.f32 %v1992, %v2009
  %v2058 = vadd.f32 %v1993, %v2009
  %v2059 = vadd.f32 %v1994, %v2009
  %v2060 = vadd.f32 %v1995, %v2009
  %v2061 = vadd.f32 %v1996, %v2009
  %v2062 = vadd.f32 %v1997, %v2009
  %v2063 = vadd.f32 %v1998, %v2009
  %v2064 = vadd.f32 %v1999, %v2009
  %v2065 = vadd.f32 %v2000, %v2009
  %v2066 = vadd.f32 %v2001, %v2009
  %v2067 = vadd.f32 %v2002, %v2009
  %v2068 = vadd.f32 %v2003, %v2009
  %v2069 = vadd.f32 %v2004, %v2009
  %v2070 = vadd.f32 %v2005, %v2009
  %v2071 = vadd.f32 %v2006, %v2009
  %v2072 = vadd.f32 %v2007, %v2009
  %v2073 = vadd.f32 %v2008, %v2009
  %v2074 = vmax.f32 %v2010, 0.0
  %v2075 = vmax.f32 %v2011, 0.0
  %v2076 = vmax.f32 %v2012, 0.0
  %v2077 = vmax.f32 %v2013, 0.0
  %v2078 = vmax.f32 %v2014, 0.0
  %v2079 = vmax.f32 %v2015, 0.0
  %v2080 = vmax.f32 %v2016, 0.0
  %v2081 = vmax.f32 %v2017, 0.0
  %v2082 = vmax.f32 %v2018, 0.0
  %v2083 = vmax.f32 %v2019, 0.0
  %v2084 = vmax.f32 %v2020, 0.0
  %v2085 = vmax.f32 %v2021, 0.0
  %v2086 = vmax.f32 %v2022, 0.0
  %v2087 = vmax.f32 %v2023, 0.0
  %v2088 = vmax.f32 %v2024, 0.0
  %v2089 = vmax.f32 %v2025, 0.0
  %v2090 = vmax.f32 %v2026, 0.0
  %v2091 = vmax.f32 %v2027, 0.0
  %v2092 = vmax.f32 %v2028, 0.0
  %v2093 = vmax.f32 %v2029, 0.0
  %v2094 = vmax.f32 %v2030, 0.0
  %v2095 = vmax.f32 %v2031, 0.0
  %v2096 = vmax.f32 %v2032, 0.0
  %v2097 = vmax.f32 %v2033, 0.0
  %v2098 = vmax.f32 %v2034, 0.0
  %v2099 = vmax.f32 %v2035, 0.0
  %v2100 = vmax.f32 %v2036, 0.0
  %v2101 = vmax.f32 %v2037, 0.0
  %v2102 = vmax.f32 %v2038, 0.0
  %v2103 = vmax.f32 %v2039, 0.0
  %v2104 = vmax.f32 %v2040, 0.0
  %v2105 = vmax.f32 %v2041, 0.0
  %v2106 = vmax.f32 %v2042, 0.0
  %v2107 = vmax.f32 %v2043, 0.0
  %v2108 = vmax.f32 %v2044, 0.0
  %v2109 = vmax.f32 %v2045, 0.0
  %v2110 = vmax.f32 %v2046, 0.0
  %v2111 = vmax.f32 %v2047, 0.0
  %v2112 = vmax.f32 %v2048, 0.0
  %v2113 = vmax.f32 %v2049, 0.0
  %v2114 = vmax.f32 %v2050, 0.0
  %v2115 = vmax.f32 %v2051, 0.0
  %v2116 = vmax.f32 %v2052, 0.0
  %v2117 = vmax.f32 %v2053, 0.0
  %v2118 = vmax.f32 %v2054, 0.0
  %v2119 = vmax.f32 %v2055, 0.0
  %v2120 = vmax.f32 %v2056, 0.0
  %v2121 = vmax.f32 %v2057, 0.0
  %v2122 = vmax.f32 %v2058, 0.0
  %v2123 = vmax.f32 %v2059, 0.0
  %v2124 = vmax.f32 %v2060, 0.0
  %v2125 = vmax.f32 %v2061, 0.0
  %v2126 = vmax.f32 %v2062, 0.0
  %v2127 = vmax.f32 %v2063, 0.0
  %v2128 = vmax.f32 %v2064, 0.0
  %v2129 = vmax.f32 %v2065, 0.0
  %v2130 = vmax.f32 %v2066, 0.0
  %v2131 = vmax.f32 %v2067, 0.0
  %v2132 = vmax.f32 %v2068, 0.0
  %v2133 = vmax.f32 %v2069, 0.0
  %v2134 = vmax.f32 %v2070, 0.0
  %v2135 = vmax.f32 %v2071, 0.0
  %v2136 = vmax.f32 %v2072, 0.0
  %v2137 = vmax.f32 %v2073, 0.0
  %v2138 = vmul.f32 %v2074, %v1314
  %v2139 = vmul.f32 %v2075, %v1324
  %v2140 = vmul.f32 %v2076, %v1334
  %v2141 = vmul.f32 %v2077, %v1344
  %v2142 = vmul.f32 %v2078, %v1354
  %v2143 = vmul.f32 %v2079, %v1364
  %v2144 = vmul.f32 %v2080, %v1374
  %v2145 = vmul.f32 %v2081, %v1384
  %v2146 = vmul.f32 %v2082, %v1394
  %v2147 = vmul.f32 %v2083, %v1404
  %v2148 = vmul.f32 %v2084, %v1414
  %v2149 = vmul.f32 %v2085, %v1424
  %v2150 = vmul.f32 %v2086, %v1434
  %v2151 = vmul.f32 %v2087, %v1444
  %v2152 = vmul.f32 %v2088, %v1454
  %v2153 = vmul.f32 %v2089, %v1464
  %v2154 = vmul.f32 %v2090, %v1474
  %v2155 = vmul.f32 %v2091, %v1484
  %v2156 = vmul.f32 %v2092, %v1494
  %v2157 = vmul.f32 %v2093, %v1504
  %v2158 = vmul.f32 %v2094, %v1514
  %v2159 = vmul.f32 %v2095, %v1524
  %v2160 = vmul.f32 %v2096, %v1534
  %v2161 = vmul.f32 %v2097, %v1544
  %v2162 = vmul.f32 %v2098, %v1554
  %v2163 = vmul.f32 %v2099, %v1564
  %v2164 = vmul.f32 %v2100, %v1574
  %v2165 = vmul.f32 %v2101, %v1584
  %v2166 = vmul.f32 %v2102, %v1594
  %v2167 = vmul.f32 %v2103, %v1604
  %v2168 = vmul.f32 %v2104, %v1614
  %v2169 = vmul.f32 %v2105, %v1624
  %v2170 = vmul.f32 %v2106, %v1634
  %v2171 = vmul.f32 %v2107, %v1644
  %v2172 = vmul.f32 %v2108, %v1654
  %v2173 = vmul.f32 %v2109, %v1664
  %v2174 = vmul.f32 %v2110, %v1674
  %v2175 = vmul.f32 %v2111, %v1684
  %v2176 = vmul.f32 %v2112, %v1694
  %v2177 = vmul.f32 %v2113, %v1704
  %v2178 = vmul.f32 %v2114, %v1714
  %v2179 = vmul.f32 %v2115, %v1724
  %v2180 = vmul.f32 %v2116, %v1734
  %v2181 = vmul.f32 %v2117, %v1744
  %v2182 = vmul.f32 %v2118, %v1754
  %v2183 = vmul.f32 %v2119, %v1764
  %v2184 = vmul.f32 %v2120, %v1774
  %v2185 = vmul.f32 %v2121, %v1784
  %v2186 = vmul.f32 %v2122, %v1794
  %v2187 = vmul.f32 %v2123, %v1804
  %v2188 = vmul.f32 %v2124, %v1814
  %v2189 = vmul.f32 %v2125, %v1824
  %v2190 = vmul.f32 %v2126, %v1834
  %v2191 = vmul.f32 %v2127, %v1844
  %v2192 = vmul.f32 %v2128, %v1854
  %v2193 = vmul.f32 %v2129, %v1864
  %v2194 = vmul.f32 %v2130, %v1874
  %v2195 = vmul.f32 %v2131, %v1884
  %v2196 = vmul.f32 %v2132, %v1894
  %v2197 = vmul.f32 %v2133, %v1904
  %v2198 = vmul.f32 %v2134, %v1914
  %v2199 = vmul.f32 %v2135, %v1924
  %v2200 = vmul.f32 %v2136, %v1934
  %v2201 = vmul.f32 %v2137, %v1944
  %v2202 = vmul.f32 %v726, %v2138
  %v2203 = vmul.f32 %v727, %v2139
  %v2204 = vmul.f32 %v728, %v2140
  %v2205 = vmul.f32 %v729, %v2141
  %v2206 = vmul.f32 %v730, %v2142
  %v2207 = vmul.f32 %v731, %v2143
  %v2208 = vmul.f32 %v732, %v2144
  %v2209 = vmul.f32 %v733, %v2145
  %v2210 = vmul.f32 %v734, %v2146
  %v2211 = vmul.f32 %v735, %v2147
  %v2212 = vmul.f32 %v736, %v2148
  %v2213 = vmul.f32 %v737, %v2149
  %v2214 = vmul.f32 %v738, %v2150
  %v2215 = vmul.f32 %v739, %v2151
  %v2216 = vmul.f32 %v740, %v2152
  %v2217 = vmul.f32 %v741, %v2153
  %v2218 = vmul.f32 %v742, %v2154
  %v2219 = vmul.f32 %v743, %v2155
  %v2220 = vmul.f32 %v744, %v2156
  %v2221 = vmul.f32 %v745, %v2157
  %v2222 = vmul.f32 %v746, %v2158
  %v2223 = vmul.f32 %v747, %v2159
  %v2224 = vmul.f32 %v748, %v2160
  %v2225 = vmul.f32 %v749, %v2161
  %v2226 = vmul.f32 %v750, %v2162
  %v2227 = vmul.f32 %v751, %v2163
  %v2228 = vmul.f32 %v752, %v2164
  %v2229 = vmul.f32 %v753, %v2165
  %v2230 = vmul.f32 %v754, %v2166
  %v2231 = vmul.f32 %v755, %v2167
  %v2232 = vmul.f32 %v756, %v2168
  %v2233 = vmul.f32 %v757, %v2169
  %v2234 = vmul.f32 %v758, %v2170
  %v2235 = vmul.f32 %v759, %v2171
  %v2236 = vmul.f32 %v760, %v2172
  %v2237 = vmul.f32 %v761, %v2173
  %v2238 = vmul.f32 %v762, %v2174
  %v2239 = vmul.f32 %v763, %v2175
  %v2240 = vmul.f32 %v764, %v2176
  %v2241 = vmul.f32 %v765, %v2177
  %v2242 = vmul.f32 %v766, %v2178
  %v2243 = vmul.f32 %v767, %v2179
  %v2244 = vmul.f32 %v768, %v2180
  %v2245 = vmul.f32 %v769, %v2181
  %v2246 = vmul.f32 %v770, %v2182
  %v2247 = vmul.f32 %v771, %v2183
  %v2248 = vmul.f32 %v772, %v2184
  %v2249 = vmul.f32 %v773, %v2185
  %v2250 = vmul.f32 %v774, %v2186
  %v2251 = vmul.f32 %v775, %v2187
  %v2252 = vmul.f32 %v776, %v2188
  %v2253 = vmul.f32 %v777, %v2189
  %v2254 = vmul.f32 %v778, %v2190
  %v2255 = vmul.f32 %v779, %v2191
  %v2256 = vmul.f32 %v780, %v2192
  %v2257 = vmul.f32 %v781, %v2193
  %v2258 = vmul.f32 %v782, %v2194
  %v2259 = vmul.f32 %v783, %v2195
  %v2260 = vmul.f32 %v784, %v2196
  %v2261 = vmul.f32 %v785, %v2197
  %v2262 = vmul.f32 %v786, %v2198
  %v2263 = vmul.f32 %v787, %v2199
  %v2264 = vmul.f32 %v788, %v2200
  %v2265 = vmul.f32 %v789, %v2201
  %vm2266 = vcmask 523264
  %2267 = vst.msk [vmem:[%s2] sm:$0xff] %vm2266, %v2202
  %2268 = vst.msk [vmem:[%s2 + $0x8] sm:$0xff] %vm2266, %v2203
  %2269 = vst.msk [vmem:[%s2 + $0x10] sm:$0xff] %vm2266, %v2204
  %2270 = vst.msk [vmem:[%s2 + $0x18] sm:$0xff] %vm2266, %v2205
  %2271 = vst.msk [vmem:[%s2 + $0x20] sm:$0xff] %vm2266, %v2206
  %2272 = vst.msk [vmem:[%s2 + $0x28] sm:$0xff] %vm2266, %v2207
  %2273 = vst.msk [vmem:[%s2 + $0x30] sm:$0xff] %vm2266, %v2208
  %2274 = vst.msk [vmem:[%s2 + $0x38] sm:$0xff] %vm2266, %v2209
  %2275 = vst.msk [vmem:[%s2 + $0x40] sm:$0xff] %vm2266, %v2210
  %2276 = vst.msk [vmem:[%s2 + $0x48] sm:$0xff] %vm2266, %v2211
  %2277 = vst.msk [vmem:[%s2 + $0x50] sm:$0xff] %vm2266, %v2212
  %2278 = vst.msk [vmem:[%s2 + $0x58] sm:$0xff] %vm2266, %v2213
  %2279 = vst.msk [vmem:[%s2 + $0x60] sm:$0xff] %vm2266, %v2214
  %2280 = vst.msk [vmem:[%s2 + $0x68] sm:$0xff] %vm2266, %v2215
  %2281 = vst.msk [vmem:[%s2 + $0x70] sm:$0xff] %vm2266, %v2216
  %2282 = vst.msk [vmem:[%s2 + $0x78] sm:$0xff] %vm2266, %v2217
  %2283 = vst.msk [vmem:[%s2 + $0x80] sm:$0xff] %vm2266, %v2218
  %2284 = vst.msk [vmem:[%s2 + $0x88] sm:$0xff] %vm2266, %v2219
  %2285 = vst.msk [vmem:[%s2 + $0x90] sm:$0xff] %vm2266, %v2220
  %2286 = vst.msk [vmem:[%s2 + $0x98] sm:$0xff] %vm2266, %v2221
  %2287 = vst.msk [vmem:[%s2 + $0xa0] sm:$0xff] %vm2266, %v2222
  %2288 = vst.msk [vmem:[%s2 + $0xa8] sm:$0xff] %vm2266, %v2223
  %2289 = vst.msk [vmem:[%s2 + $0xb0] sm:$0xff] %vm2266, %v2224
  %2290 = vst.msk [vmem:[%s2 + $0xb8] sm:$0xff] %vm2266, %v2225
  %2291 = vst.msk [vmem:[%s2 + $0xc0] sm:$0xff] %vm2266, %v2226
  %2292 = vst.msk [vmem:[%s2 + $0xc8] sm:$0xff] %vm2266, %v2227
  %2293 = vst.msk [vmem:[%s2 + $0xd0] sm:$0xff] %vm2266, %v2228
  %2294 = vst.msk [vmem:[%s2 + $0xd8] sm:$0xff] %vm2266, %v2229
  %2295 = vst.msk [vmem:[%s2 + $0xe0] sm:$0xff] %vm2266, %v2230
  %2296 = vst.msk [vmem:[%s2 + $0xe8] sm:$0xff] %vm2266, %v2231
  %2297 = vst.msk [vmem:[%s2 + $0xf0] sm:$0xff] %vm2266, %v2232
  %2298 = vst.msk [vmem:[%s2 + $0xf8] sm:$0xff] %vm2266, %v2233
  %2299 = vst.msk [vmem:[%s2 + $0x100] sm:$0xff] %vm2266, %v2234
  %2300 = vst.msk [vmem:[%s2 + $0x108] sm:$0xff] %vm2266, %v2235
  %2301 = vst.msk [vmem:[%s2 + $0x110] sm:$0xff] %vm2266, %v2236
  %2302 = vst.msk [vmem:[%s2 + $0x118] sm:$0xff] %vm2266, %v2237
  %2303 = vst.msk [vmem:[%s2 + $0x120] sm:$0xff] %vm2266, %v2238
  %2304 = vst.msk [vmem:[%s2 + $0x128] sm:$0xff] %vm2266, %v2239
  %2305 = vst.msk [vmem:[%s2 + $0x130] sm:$0xff] %vm2266, %v2240
  %2306 = vst.msk [vmem:[%s2 + $0x138] sm:$0xff] %vm2266, %v2241
  %2307 = vst.msk [vmem:[%s2 + $0x140] sm:$0xff] %vm2266, %v2242
  %2308 = vst.msk [vmem:[%s2 + $0x148] sm:$0xff] %vm2266, %v2243
  %2309 = vst.msk [vmem:[%s2 + $0x150] sm:$0xff] %vm2266, %v2244
  %2310 = vst.msk [vmem:[%s2 + $0x158] sm:$0xff] %vm2266, %v2245
  %2311 = vst.msk [vmem:[%s2 + $0x160] sm:$0xff] %vm2266, %v2246
  %2312 = vst.msk [vmem:[%s2 + $0x168] sm:$0xff] %vm2266, %v2247
  %2313 = vst.msk [vmem:[%s2 + $0x170] sm:$0xff] %vm2266, %v2248
  %2314 = vst.msk [vmem:[%s2 + $0x178] sm:$0xff] %vm2266, %v2249
  %2315 = vst.msk [vmem:[%s2 + $0x180] sm:$0xff] %vm2266, %v2250
  %2316 = vst.msk [vmem:[%s2 + $0x188] sm:$0xff] %vm2266, %v2251
  %2317 = vst.msk [vmem:[%s2 + $0x190] sm:$0xff] %vm2266, %v2252
  %2318 = vst.msk [vmem:[%s2 + $0x198] sm:$0xff] %vm2266, %v2253
  %2319 = vst.msk [vmem:[%s2 + $0x1a0] sm:$0xff] %vm2266, %v2254
  %2320 = vst.msk [vmem:[%s2 + $0x1a8] sm:$0xff] %vm2266, %v2255
  %2321 = vst.msk [vmem:[%s2 + $0x1b0] sm:$0xff] %vm2266, %v2256
  %2322 = vst.msk [vmem:[%s2 + $0x1b8] sm:$0xff] %vm2266, %v2257
  %2323 = vst.msk [vmem:[%s2 + $0x1c0] sm:$0xff] %vm2266, %v2258
  %2324 = vst.msk [vmem:[%s2 + $0x1c8] sm:$0xff] %vm2266, %v2259
  %2325 = vst.msk [vmem:[%s2 + $0x1d0] sm:$0xff] %vm2266, %v2260
  %2326 = vst.msk [vmem:[%s2 + $0x1d8] sm:$0xff] %vm2266, %v2261
  %2327 = vst.msk [vmem:[%s2 + $0x1e0] sm:$0xff] %vm2266, %v2262
  %2328 = vst.msk [vmem:[%s2 + $0x1e8] sm:$0xff] %vm2266, %v2263
  %2329 = vst.msk [vmem:[%s2 + $0x1f0] sm:$0xff] %vm2266, %v2264
  %2330 = vst.msk [vmem:[%s2 + $0x1f8] sm:$0xff] %vm2266, %v2265
  %v2331 = vmul.f32 %v985, %v2138
  %v2332 = vmul.f32 %v986, %v2139
  %v2333 = vmul.f32 %v987, %v2140
  %v2334 = vmul.f32 %v988, %v2141
  %v2335 = vmul.f32 %v989, %v2142
  %v2336 = vmul.f32 %v990, %v2143
  %v2337 = vmul.f32 %v991, %v2144
  %v2338 = vmul.f32 %v992, %v2145
  %v2339 = vmul.f32 %v993, %v2146
  %v2340 = vmul.f32 %v994, %v2147
  %v2341 = vmul.f32 %v995, %v2148
  %v2342 = vmul.f32 %v996, %v2149
  %v2343 = vmul.f32 %v997, %v2150
  %v2344 = vmul.f32 %v998, %v2151
  %v2345 = vmul.f32 %v999, %v2152
  %v2346 = vmul.f32 %v1000, %v2153
  %v2347 = vmul.f32 %v1001, %v2154
  %v2348 = vmul.f32 %v1002, %v2155
  %v2349 = vmul.f32 %v1003, %v2156
  %v2350 = vmul.f32 %v1004, %v2157
  %v2351 = vmul.f32 %v1005, %v2158
  %v2352 = vmul.f32 %v1006, %v2159
  %v2353 = vmul.f32 %v1007, %v2160
  %v2354 = vmul.f32 %v1008, %v2161
  %v2355 = vmul.f32 %v1009, %v2162
  %v2356 = vmul.f32 %v1010, %v2163
  %v2357 = vmul.f32 %v1011, %v2164
  %v2358 = vmul.f32 %v1012, %v2165
  %v2359 = vmul.f32 %v1013, %v2166
  %v2360 = vmul.f32 %v1014, %v2167
  %v2361 = vmul.f32 %v1015, %v2168
  %v2362 = vmul.f32 %v1016, %v2169
  %v2363 = vmul.f32 %v1017, %v2170
  %v2364 = vmul.f32 %v1018, %v2171
  %v2365 = vmul.f32 %v1019, %v2172
  %v2366 = vmul.f32 %v1020, %v2173
  %v2367 = vmul.f32 %v1021, %v2174
  %v2368 = vmul.f32 %v1022, %v2175
  %v2369 = vmul.f32 %v1023, %v2176
  %v2370 = vmul.f32 %v1024, %v2177
  %v2371 = vmul.f32 %v1025, %v2178
  %v2372 = vmul.f32 %v1026, %v2179
  %v2373 = vmul.f32 %v1027, %v2180
  %v2374 = vmul.f32 %v1028, %v2181
  %v2375 = vmul.f32 %v1029, %v2182
  %v2376 = vmul.f32 %v1030, %v2183
  %v2377 = vmul.f32 %v1031, %v2184
  %v2378 = vmul.f32 %v1032, %v2185
  %v2379 = vmul.f32 %v1033, %v2186
  %v2380 = vmul.f32 %v1034, %v2187
  %v2381 = vmul.f32 %v1035, %v2188
  %v2382 = vmul.f32 %v1036, %v2189
  %v2383 = vmul.f32 %v1037, %v2190
  %v2384 = vmul.f32 %v1038, %v2191
  %v2385 = vmul.f32 %v1039, %v2192
  %v2386 = vmul.f32 %v1040, %v2193
  %v2387 = vmul.f32 %v1041, %v2194
  %v2388 = vmul.f32 %v1042, %v2195
  %v2389 = vmul.f32 %v1043, %v2196
  %v2390 = vmul.f32 %v1044, %v2197
  %v2391 = vmul.f32 %v1045, %v2198
  %v2392 = vmul.f32 %v1046, %v2199
  %v2393 = vmul.f32 %v1047, %v2200
  %v2394 = vmul.f32 %v1048, %v2201
  %2459 = vrot.lane.b32.xlu0 %v2331, 64
  %v2460 = vpop.permute.xlu0 %2459
  %2461 = vrot.lane.b32.xlu0 %v2332, 64
  %v2462 = vpop.permute.xlu0 %2461
  %2463 = vrot.lane.b32.xlu0 %v2333, 64
  %v2464 = vpop.permute.xlu0 %2463
  %2465 = vrot.lane.b32.xlu0 %v2334, 64
  %v2466 = vpop.permute.xlu0 %2465
  %2467 = vrot.lane.b32.xlu0 %v2335, 64
  %v2468 = vpop.permute.xlu0 %2467
  %2469 = vrot.lane.b32.xlu0 %v2336, 64
  %v2470 = vpop.permute.xlu0 %2469
  %2471 = vrot.lane.b32.xlu0 %v2337, 64
  %v2472 = vpop.permute.xlu0 %2471
  %2473 = vrot.lane.b32.xlu0 %v2338, 64
  %v2474 = vpop.permute.xlu0 %2473
  %2475 = vrot.lane.b32.xlu0 %v2339, 64
  %v2476 = vpop.permute.xlu0 %2475
  %2477 = vrot.lane.b32.xlu0 %v2340, 64
  %v2478 = vpop.permute.xlu0 %2477
  %2479 = vrot.lane.b32.xlu0 %v2341, 64
  %v2480 = vpop.permute.xlu0 %2479
  %2481 = vrot.lane.b32.xlu0 %v2342, 64
  %v2482 = vpop.permute.xlu0 %2481
  %2483 = vrot.lane.b32.xlu0 %v2343, 64
  %v2484 = vpop.permute.xlu0 %2483
  %2485 = vrot.lane.b32.xlu0 %v2344, 64
  %v2486 = vpop.permute.xlu0 %2485
  %2487 = vrot.lane.b32.xlu0 %v2345, 64
  %v2488 = vpop.permute.xlu0 %2487
  %2489 = vrot.lane.b32.xlu0 %v2346, 64
  %v2490 = vpop.permute.xlu0 %2489
  %2491 = vrot.lane.b32.xlu0 %v2347, 64
  %v2492 = vpop.permute.xlu0 %2491
  %2493 = vrot.lane.b32.xlu0 %v2348, 64
  %v2494 = vpop.permute.xlu0 %2493
  %2495 = vrot.lane.b32.xlu0 %v2349, 64
  %v2496 = vpop.permute.xlu0 %2495
  %2497 = vrot.lane.b32.xlu0 %v2350, 64
  %v2498 = vpop.permute.xlu0 %2497
  %2499 = vrot.lane.b32.xlu0 %v2351, 64
  %v2500 = vpop.permute.xlu0 %2499
  %2501 = vrot.lane.b32.xlu0 %v2352, 64
  %v2502 = vpop.permute.xlu0 %2501
  %2503 = vrot.lane.b32.xlu0 %v2353, 64
  %v2504 = vpop.permute.xlu0 %2503
  %2505 = vrot.lane.b32.xlu0 %v2354, 64
  %v2506 = vpop.permute.xlu0 %2505
  %2507 = vrot.lane.b32.xlu0 %v2355, 64
  %v2508 = vpop.permute.xlu0 %2507
  %2509 = vrot.lane.b32.xlu0 %v2356, 64
  %v2510 = vpop.permute.xlu0 %2509
  %2511 = vrot.lane.b32.xlu0 %v2357, 64
  %v2512 = vpop.permute.xlu0 %2511
  %2513 = vrot.lane.b32.xlu0 %v2358, 64
  %v2514 = vpop.permute.xlu0 %2513
  %2515 = vrot.lane.b32.xlu0 %v2359, 64
  %v2516 = vpop.permute.xlu0 %2515
  %2517 = vrot.lane.b32.xlu0 %v2360, 64
  %v2518 = vpop.permute.xlu0 %2517
  %2519 = vrot.lane.b32.xlu0 %v2361, 64
  %v2520 = vpop.permute.xlu0 %2519
  %2521 = vrot.lane.b32.xlu0 %v2362, 64
  %v2522 = vpop.permute.xlu0 %2521
  %2523 = vrot.lane.b32.xlu0 %v2363, 64
  %v2524 = vpop.permute.xlu0 %2523
  %2525 = vrot.lane.b32.xlu0 %v2364, 64
  %v2526 = vpop.permute.xlu0 %2525
  %2527 = vrot.lane.b32.xlu0 %v2365, 64
  %v2528 = vpop.permute.xlu0 %2527
  %2529 = vrot.lane.b32.xlu0 %v2366, 64
  %v2530 = vpop.permute.xlu0 %2529
  %2531 = vrot.lane.b32.xlu0 %v2367, 64
  %v2532 = vpop.permute.xlu0 %2531
  %2533 = vrot.lane.b32.xlu0 %v2368, 64
  %v2534 = vpop.permute.xlu0 %2533
  %2535 = vrot.lane.b32.xlu0 %v2369, 64
  %v2536 = vpop.permute.xlu0 %2535
  %2537 = vrot.lane.b32.xlu0 %v2370, 64
  %v2538 = vpop.permute.xlu0 %2537
  %2539 = vrot.lane.b32.xlu0 %v2371, 64
  %v2540 = vpop.permute.xlu0 %2539
  %2541 = vrot.lane.b32.xlu0 %v2372, 64
  %v2542 = vpop.permute.xlu0 %2541
  %2543 = vrot.lane.b32.xlu0 %v2373, 64
  %v2544 = vpop.permute.xlu0 %2543
  %2545 = vrot.lane.b32.xlu0 %v2374, 64
  %v2546 = vpop.permute.xlu0 %2545
  %2547 = vrot.lane.b32.xlu0 %v2375, 64
  %v2548 = vpop.permute.xlu0 %2547
  %2549 = vrot.lane.b32.xlu0 %v2376, 64
  %v2550 = vpop.permute.xlu0 %2549
  %2551 = vrot.lane.b32.xlu0 %v2377, 64
  %v2552 = vpop.permute.xlu0 %2551
  %2553 = vrot.lane.b32.xlu0 %v2378, 64
  %v2554 = vpop.permute.xlu0 %2553
  %2555 = vrot.lane.b32.xlu0 %v2379, 64
  %v2556 = vpop.permute.xlu0 %2555
  %2557 = vrot.lane.b32.xlu0 %v2380, 64
  %v2558 = vpop.permute.xlu0 %2557
  %2559 = vrot.lane.b32.xlu0 %v2381, 64
  %v2560 = vpop.permute.xlu0 %2559
  %2561 = vrot.lane.b32.xlu0 %v2382, 64
  %v2562 = vpop.permute.xlu0 %2561
  %2563 = vrot.lane.b32.xlu0 %v2383, 64
  %v2564 = vpop.permute.xlu0 %2563
  %2565 = vrot.lane.b32.xlu0 %v2384, 64
  %v2566 = vpop.permute.xlu0 %2565
  %2567 = vrot.lane.b32.xlu0 %v2385, 64
  %v2568 = vpop.permute.xlu0 %2567
  %2569 = vrot.lane.b32.xlu0 %v2386, 64
  %v2570 = vpop.permute.xlu0 %2569
  %2571 = vrot.lane.b32.xlu0 %v2387, 64
  %v2572 = vpop.permute.xlu0 %2571
  %2573 = vrot.lane.b32.xlu0 %v2388, 64
  %v2574 = vpop.permute.xlu0 %2573
  %2575 = vrot.lane.b32.xlu0 %v2389, 64
  %v2576 = vpop.permute.xlu0 %2575
  %2577 = vrot.lane.b32.xlu0 %v2390, 64
  %v2578 = vpop.permute.xlu0 %2577
  %2579 = vrot.lane.b32.xlu0 %v2391, 64
  %v2580 = vpop.permute.xlu0 %2579
  %2581 = vrot.lane.b32.xlu0 %v2392, 64
  %v2582 = vpop.permute.xlu0 %2581
  %2583 = vrot.lane.b32.xlu0 %v2393, 64
  %v2584 = vpop.permute.xlu0 %2583
  %2585 = vrot.lane.b32.xlu0 %v2394, 64
  %v2586 = vpop.permute.xlu0 %2585
  %vm2651 = vcmask 1048064
  %2652 = vst.msk [vmem:[%s2] sm:$0xff] %vm2651, %v2460
  %2653 = vst.msk [vmem:[%s2 + $0x8] sm:$0xff] %vm2651, %v2462
  %2654 = vst.msk [vmem:[%s2 + $0x10] sm:$0xff] %vm2651, %v2464
  %2655 = vst.msk [vmem:[%s2 + $0x18] sm:$0xff] %vm2651, %v2466
  %2656 = vst.msk [vmem:[%s2 + $0x20] sm:$0xff] %vm2651, %v2468
  %2657 = vst.msk [vmem:[%s2 + $0x28] sm:$0xff] %vm2651, %v2470
  %2658 = vst.msk [vmem:[%s2 + $0x30] sm:$0xff] %vm2651, %v2472
  %2659 = vst.msk [vmem:[%s2 + $0x38] sm:$0xff] %vm2651, %v2474
  %2660 = vst.msk [vmem:[%s2 + $0x40] sm:$0xff] %vm2651, %v2476
  %2661 = vst.msk [vmem:[%s2 + $0x48] sm:$0xff] %vm2651, %v2478
  %2662 = vst.msk [vmem:[%s2 + $0x50] sm:$0xff] %vm2651, %v2480
  %2663 = vst.msk [vmem:[%s2 + $0x58] sm:$0xff] %vm2651, %v2482
  %2664 = vst.msk [vmem:[%s2 + $0x60] sm:$0xff] %vm2651, %v2484
  %2665 = vst.msk [vmem:[%s2 + $0x68] sm:$0xff] %vm2651, %v2486
  %2666 = vst.msk [vmem:[%s2 + $0x70] sm:$0xff] %vm2651, %v2488
  %2667 = vst.msk [vmem:[%s2 + $0x78] sm:$0xff] %vm2651, %v2490
  %2668 = vst.msk [vmem:[%s2 + $0x80] sm:$0xff] %vm2651, %v2492
  %2669 = vst.msk [vmem:[%s2 + $0x88] sm:$0xff] %vm2651, %v2494
  %2670 = vst.msk [vmem:[%s2 + $0x90] sm:$0xff] %vm2651, %v2496
  %2671 = vst.msk [vmem:[%s2 + $0x98] sm:$0xff] %vm2651, %v2498
  %2672 = vst.msk [vmem:[%s2 + $0xa0] sm:$0xff] %vm2651, %v2500
  %2673 = vst.msk [vmem:[%s2 + $0xa8] sm:$0xff] %vm2651, %v2502
  %2674 = vst.msk [vmem:[%s2 + $0xb0] sm:$0xff] %vm2651, %v2504
  %2675 = vst.msk [vmem:[%s2 + $0xb8] sm:$0xff] %vm2651, %v2506
  %2676 = vst.msk [vmem:[%s2 + $0xc0] sm:$0xff] %vm2651, %v2508
  %2677 = vst.msk [vmem:[%s2 + $0xc8] sm:$0xff] %vm2651, %v2510
  %2678 = vst.msk [vmem:[%s2 + $0xd0] sm:$0xff] %vm2651, %v2512
  %2679 = vst.msk [vmem:[%s2 + $0xd8] sm:$0xff] %vm2651, %v2514
  %2680 = vst.msk [vmem:[%s2 + $0xe0] sm:$0xff] %vm2651, %v2516
  %2681 = vst.msk [vmem:[%s2 + $0xe8] sm:$0xff] %vm2651, %v2518
  %2682 = vst.msk [vmem:[%s2 + $0xf0] sm:$0xff] %vm2651, %v2520
  %2683 = vst.msk [vmem:[%s2 + $0xf8] sm:$0xff] %vm2651, %v2522
  %2684 = vst.msk [vmem:[%s2 + $0x100] sm:$0xff] %vm2651, %v2524
  %2685 = vst.msk [vmem:[%s2 + $0x108] sm:$0xff] %vm2651, %v2526
  %2686 = vst.msk [vmem:[%s2 + $0x110] sm:$0xff] %vm2651, %v2528
  %2687 = vst.msk [vmem:[%s2 + $0x118] sm:$0xff] %vm2651, %v2530
  %2688 = vst.msk [vmem:[%s2 + $0x120] sm:$0xff] %vm2651, %v2532
  %2689 = vst.msk [vmem:[%s2 + $0x128] sm:$0xff] %vm2651, %v2534
  %2690 = vst.msk [vmem:[%s2 + $0x130] sm:$0xff] %vm2651, %v2536
  %2691 = vst.msk [vmem:[%s2 + $0x138] sm:$0xff] %vm2651, %v2538
  %2692 = vst.msk [vmem:[%s2 + $0x140] sm:$0xff] %vm2651, %v2540
  %2693 = vst.msk [vmem:[%s2 + $0x148] sm:$0xff] %vm2651, %v2542
  %2694 = vst.msk [vmem:[%s2 + $0x150] sm:$0xff] %vm2651, %v2544
  %2695 = vst.msk [vmem:[%s2 + $0x158] sm:$0xff] %vm2651, %v2546
  %2696 = vst.msk [vmem:[%s2 + $0x160] sm:$0xff] %vm2651, %v2548
  %2697 = vst.msk [vmem:[%s2 + $0x168] sm:$0xff] %vm2651, %v2550
  %2698 = vst.msk [vmem:[%s2 + $0x170] sm:$0xff] %vm2651, %v2552
  %2699 = vst.msk [vmem:[%s2 + $0x178] sm:$0xff] %vm2651, %v2554
  %2700 = vst.msk [vmem:[%s2 + $0x180] sm:$0xff] %vm2651, %v2556
  %2701 = vst.msk [vmem:[%s2 + $0x188] sm:$0xff] %vm2651, %v2558
  %2702 = vst.msk [vmem:[%s2 + $0x190] sm:$0xff] %vm2651, %v2560
  %2703 = vst.msk [vmem:[%s2 + $0x198] sm:$0xff] %vm2651, %v2562
  %2704 = vst.msk [vmem:[%s2 + $0x1a0] sm:$0xff] %vm2651, %v2564
  %2705 = vst.msk [vmem:[%s2 + $0x1a8] sm:$0xff] %vm2651, %v2566
  %2706 = vst.msk [vmem:[%s2 + $0x1b0] sm:$0xff] %vm2651, %v2568
  %2707 = vst.msk [vmem:[%s2 + $0x1b8] sm:$0xff] %vm2651, %v2570
  %2708 = vst.msk [vmem:[%s2 + $0x1c0] sm:$0xff] %vm2651, %v2572
  %2709 = vst.msk [vmem:[%s2 + $0x1c8] sm:$0xff] %vm2651, %v2574
  %2710 = vst.msk [vmem:[%s2 + $0x1d0] sm:$0xff] %vm2651, %v2576
  %2711 = vst.msk [vmem:[%s2 + $0x1d8] sm:$0xff] %vm2651, %v2578
  %2712 = vst.msk [vmem:[%s2 + $0x1e0] sm:$0xff] %vm2651, %v2580
  %2713 = vst.msk [vmem:[%s2 + $0x1e8] sm:$0xff] %vm2651, %v2582
  %2714 = vst.msk [vmem:[%s2 + $0x1f0] sm:$0xff] %vm2651, %v2584
  %2715 = vst.msk [vmem:[%s2 + $0x1f8] sm:$0xff] %vm2651, %v2586
  // Predicated region
  $region10: #{conv_stem_forward.7} parent=0 // pred_check
    _
  $region11: #{conv_stem_forward.7} parent=0 // pred_check_branch
    %2717 = sbr.rel (0) target = $region13
  $region12: #{conv_stem_forward.7} parent=0 // pred_region
    _
  $region13: #{conv_stem_forward.7} parent=0 // pred_fallthru
    _
  // Predicated region
  $region14: #{conv_stem_forward.7} parent=0 // pred_check
    _
  $region15: #{conv_stem_forward.7} parent=0 // pred_check_branch
    %2719 = sbr.rel (0) target = $region17
  $region16: #{conv_stem_forward.7} parent=0 // pred_region
    _
  $region17: #{conv_stem_forward.7} parent=0 // pred_fallthru
    _

</llo_original>
